<compile_context>
chip_gen: v7x
topology: tpu7x:2x2x1
jax: 0.10.0
libtpu: 0.0.40
codegen_flags: <defaults>
</compile_context>

<pallas_src>
import functools

import jax
import jax.numpy as jnp
import numpy as np
from jax import lax
from jax.experimental import pallas as pl
from jax.experimental.pallas import tpu as pltpu

EPS = 1e-5


def _round_up(x, m):
    return (x + m - 1) // m * m


def _split_hi_lo(a):
    hi = a.astype(jnp.bfloat16)
    lo = (a - hi.astype(jnp.float32)).astype(jnp.bfloat16)
    return hi, lo


# --------------------------------- kernel ------------------------------------

def _make_kernel(*, n, ho, wo, stride, cin_p, planes, np_, has_proj):
    mb = ho * wo
    s = stride
    inv_cnt = 1.0 / float(n * mb)
    taps = [(dh, dw) for dh in range(3) for dw in range(3)]

    def dot3(ah, al, bh, bl):
        # f32-accurate matmul: 3 bf16 MXU passes, f32 accumulation (lo*lo dropped).
        mm = lambda u, v: jnp.dot(u, v, preferred_element_type=jnp.float32)
        return mm(ah, bh) + mm(al, bh) + mm(ah, bl)

    def gather(x_ref, dh, dw):
        # Tap (dh, dw) window of the stride-parity-split input: contiguous slice.
        pi = (dh % s) * s + (dw % s)
        r0, c0 = dh // s, dw // s
        return x_ref[pi, r0:r0 + ho, c0:c0 + wo, :].reshape(mb, cin_p)

    def bn_affine(st_ref, row, prm_ref):
        # scale/shift of training-mode BN from the global sum / sumsq rows.
        mean = st_ref[row:row + 1, :] * inv_cnt
        var = st_ref[row + 1:row + 2, :] * inv_cnt - mean * mean
        scale = lax.rsqrt(var + EPS) * prm_ref[0:1, :]
        shift = prm_ref[1:2, :] - mean * scale
        return scale, shift

    def kernel(xh_ref, xl_ref, w1h_ref, w1l_ref, w2h_ref, w2l_ref,
               bn1_ref, bn2_ref, *rest):
        if has_proj:
            (wsh_ref, wsl_ref, bns_ref,
             o_ref, y_ref, padh_ref, padl_ref, st_ref) = rest
        else:
            o_ref, y_ref, padh_ref, padl_ref, st_ref = rest

        p = pl.program_id(0)   # phase
        b = pl.program_id(1)   # batch element

        # -------- phase 0: conv1 raw (+ shortcut conv) + stats accumulation ----
        @pl.when((p == 0) & (b == 0))
        def _():
            st_ref[...] = jnp.zeros(st_ref.shape, st_ref.dtype)

        @pl.when(p == 0)
        def _():
            acc = jnp.zeros((mb, np_), jnp.float32)
            for t, (dh, dw) in enumerate(taps):
                acc = acc + dot3(gather(xh_ref, dh, dw), gather(xl_ref, dh, dw),
                                 w1h_ref[t], w1l_ref[t])
            y_ref[b] = acc
            st_ref[0:1, :] += jnp.sum(acc, axis=0, keepdims=True)
            st_ref[1:2, :] += jnp.sum(acc * acc, axis=0, keepdims=True)
            if has_proj:
                sc = dot3(gather(xh_ref, 1, 1), gather(xl_ref, 1, 1),
                          wsh_ref[...], wsl_ref[...])
                st_ref[4:5, :] += jnp.sum(sc, axis=0, keepdims=True)
                st_ref[5:6, :] += jnp.sum(sc * sc, axis=0, keepdims=True)

        # -------- phase 1: bn1 + relu, conv2 raw from bf16 hi/lo pads ----------
        @pl.when((p == 1) & (b == 0))
        def _():
            # Zero once: only the 1-pixel halo is relied upon later; the
            # interior is fully rewritten for every batch element.
            padh_ref[...] = jnp.zeros(padh_ref.shape, padh_ref.dtype)
            padl_ref[...] = jnp.zeros(padl_ref.shape, padl_ref.dtype)

        @pl.when(p == 1)
        def _():
            scale1, shift1 = bn_affine(st_ref, 0, bn1_ref)
            a1 = jnp.maximum(y_ref[b] * scale1 + shift1, 0.0)
            a_hi = a1.astype(jnp.bfloat16)
            a_lo = (a1 - a_hi.astype(jnp.float32)).astype(jnp.bfloat16)
            padh_ref[1:1 + ho, 1:1 + wo, :] = a_hi.reshape(ho, wo, np_)
            padl_ref[1:1 + ho, 1:1 + wo, :] = a_lo.reshape(ho, wo, np_)

            acc = jnp.zeros((mb, np_), jnp.float32)
            for t, (dh, dw) in enumerate(taps):
                yh = padh_ref[dh:dh + ho, dw:dw + wo, :].reshape(mb, np_)
                yl = padl_ref[dh:dh + ho, dw:dw + wo, :].reshape(mb, np_)
                acc = acc + dot3(yh, yl, w2h_ref[t], w2l_ref[t])
            y_ref[b] = acc            # conv1 activations no longer needed
            st_ref[2:3, :] += jnp.sum(acc, axis=0, keepdims=True)
            st_ref[3:4, :] += jnp.sum(acc * acc, axis=0, keepdims=True)

        # -------- phase 2: bn2 + shortcut + residual add + final relu ----------
        @pl.when(p == 2)
        def _():
            scale2, shift2 = bn_affine(st_ref, 2, bn2_ref)
            res = y_ref[b] * scale2 + shift2
            if has_proj:
                scs, shs = bn_affine(st_ref, 4, bns_ref)
                sc = dot3(gather(xh_ref, 1, 1), gather(xl_ref, 1, 1),
                          wsh_ref[...], wsl_ref[...])
                res = res + (sc * scs + shs)
                o_ref[...] = jnp.maximum(res, 0.0)[:, :planes]
            else:
                xc = (gather(xh_ref, 1, 1).astype(jnp.float32)
                      + gather(xl_ref, 1, 1).astype(jnp.float32))
                o_ref[...] = jnp.maximum(res[:, :planes] + xc[:, :planes], 0.0)

    return kernel


# --------------------------------- wrapper ------------------------------------

@functools.partial(jax.jit, static_argnums=(2,))
def basic_block_forward(x_nchw, params, stride):
    x = jnp.transpose(x_nchw, (0, 2, 3, 1)).astype(jnp.float32)    # NHWC
    n, h, w, cin = x.shape
    planes = params["w1"].shape[0]
    s = stride
    ho = (h + 2 - 3) // s + 1
    wo = (w + 2 - 3) // s + 1
    mb = ho * wo
    cp = _round_up(cin, 8)            # sublane-friendly K for conv1 / shortcut
    np_ = _round_up(planes, 128)      # lane-dense output channels (128/256/...)
    has_proj = (s != 1) or (cin != planes)

    # Spatial +1 halo pad, channel pad, then split into s*s stride-parity planes
    # so every conv1 tap becomes a plain contiguous slice inside the kernel
    # (x is shipped to the kernel exactly once, as bf16 hi/lo).
    hp = _round_up(h + 2, s) // s
    wp = _round_up(w + 2, s) // s
    x_pad = jnp.pad(x, ((0, 0), (1, hp * s - h - 1), (1, wp * s - w - 1),
                        (0, cp - cin)))
    x_ph = x_pad.reshape(n, hp, s, wp, s, cp).transpose(0, 2, 4, 1, 3, 5)
    x_ph = x_ph.reshape(n, s * s, hp, wp, cp)
    xh, xl = _split_hi_lo(x_ph)

    def conv3_w(wt, ci):
        # (O, I, 3, 3) -> (9, ci, np_), rows = input channels, cols = out chans.
        t = jnp.transpose(wt, (2, 3, 1, 0))
        t = jnp.pad(t, ((0, 0), (0, 0), (0, ci - wt.shape[1]),
                        (0, np_ - wt.shape[0])))
        return t.reshape(9, ci, np_)

    def bn_prm(g, bt):
        # padded lanes get gamma = 0 so they provably stay zero downstream
        return jnp.stack([jnp.pad(g, (0, np_ - g.shape[0])),
                          jnp.pad(bt, (0, np_ - bt.shape[0]))])

    w1h, w1l = _split_hi_lo(conv3_w(params["w1"], cp))
    w2h, w2l = _split_hi_lo(conv3_w(params["w2"], np_))
    args = [xh, xl, w1h, w1l, w2h, w2l,
            bn_prm(params["g1"], params["b1"]),
            bn_prm(params["g2"], params["b2"])]

    in_specs = [
        pl.BlockSpec((None, s * s, hp, wp, cp), lambda p, b: (b, 0, 0, 0, 0)),
        pl.BlockSpec((None, s * s, hp, wp, cp), lambda p, b: (b, 0, 0, 0, 0)),
        pl.BlockSpec((9, cp, np_), lambda p, b: (0, 0, 0)),
        pl.BlockSpec((9, cp, np_), lambda p, b: (0, 0, 0)),
        pl.BlockSpec((9, np_, np_), lambda p, b: (0, 0, 0)),
        pl.BlockSpec((9, np_, np_), lambda p, b: (0, 0, 0)),
        pl.BlockSpec((2, np_), lambda p, b: (0, 0)),
        pl.BlockSpec((2, np_), lambda p, b: (0, 0)),
    ]
    if has_proj:
        wsm = jnp.pad(jnp.transpose(params["ws"][:, :, 0, 0], (1, 0)),
                      ((0, cp - cin), (0, np_ - planes)))
        wsh, wsl = _split_hi_lo(wsm)
        args += [wsh, wsl, bn_prm(params["gs"], params["bs"])]
        in_specs += [
            pl.BlockSpec((cp, np_), lambda p, b: (0, 0)),
            pl.BlockSpec((cp, np_), lambda p, b: (0, 0)),
            pl.BlockSpec((2, np_), lambda p, b: (0, 0)),
        ]

    wop = _round_up(wo + 2, 16)       # sublane-friendly padded conv2 scratch
    kernel = _make_kernel(n=n, ho=ho, wo=wo, stride=s, cin_p=cp,
                          planes=planes, np_=np_, has_proj=has_proj)

    flops = 3 * 2 * n * mb * (9 * cp * np_ + 9 * np_ * np_
                              + (2 * cp * np_ if has_proj else 0))
    bytes_accessed = int(sum(a.size * a.dtype.itemsize for a in args)
                         + n * mb * planes * 4)

    out = pl.pallas_call(
        kernel,
        grid=(3, n),
        out_shape=jax.ShapeDtypeStruct((n, mb, planes), jnp.float32),
        in_specs=in_specs,
        # Output block only advances during phase 2 -> exactly N HBM writes.
        out_specs=pl.BlockSpec((None, mb, planes),
                               lambda p, b: (jnp.where(p == 2, b, 0), 0, 0)),
        scratch_shapes=[
            pltpu.VMEM((n, mb, np_), jnp.float32),         # conv1 raw -> conv2 raw
            pltpu.VMEM((ho + 2, wop, np_), jnp.bfloat16),  # bn1+relu pad, hi
            pltpu.VMEM((ho + 2, wop, np_), jnp.bfloat16),  # bn1+relu pad, lo
            pltpu.VMEM((8, np_), jnp.float32),             # BN sum / sumsq rows
        ],
        compiler_params=pltpu.CompilerParams(
            dimension_semantics=("arbitrary", "arbitrary")),
        cost_estimate=pl.CostEstimate(flops=flops, transcendentals=0,
                                      bytes_accessed=bytes_accessed),
    )(*args)

    out = out.reshape(n, ho, wo, planes)
    return jnp.transpose(out, (0, 3, 1, 2))                        # NCHW


# --------------------------- parameters & reference ---------------------------

def init_params(key, in_planes, planes, stride):
    ks = jax.random.split(key, 8)
    p = {
        "w1": 0.1 * jax.random.normal(ks[0], (planes, in_planes, 3, 3), jnp.float32),
        "g1": 1.0 + 0.1 * jax.random.normal(ks[1], (planes,), jnp.float32),
        "b1": 0.1 * jax.random.normal(ks[2], (planes,), jnp.float32),
        "w2": 0.1 * jax.random.normal(ks[3], (planes, planes, 3, 3), jnp.float32),
        "g2": 1.0 + 0.1 * jax.random.normal(ks[4], (planes,), jnp.float32),
        "b2": 0.1 * jax.random.normal(ks[5], (planes,), jnp.float32),
    }
    if stride != 1 or in_planes != planes:
        p["ws"] = 0.1 * jax.random.normal(ks[6], (planes, in_planes, 1, 1), jnp.float32)
        p["gs"] = 1.0 + 0.05 * jax.random.normal(ks[7], (planes,), jnp.float32)
        p["bs"] = 0.05 * jax.random.normal(ks[7], (planes,), jnp.float32)
    return p


def reference_forward(x, p, stride):
    prec = jax.lax.Precision.HIGHEST

    def conv(x, w, s, pad):
        return jax.lax.conv_general_dilated(
            x, w, (s, s), ((pad, pad), (pad, pad)),
            dimension_numbers=("NCHW", "OIHW", "NCHW"), precision=prec)

    def bn(y, gamma, beta):
        mean = jnp.mean(y, axis=(0, 2, 3), keepdims=True)
        var = jnp.mean(jnp.square(y - mean), axis=(0, 2, 3), keepdims=True)
        return ((y - mean) * jax.lax.rsqrt(var + EPS)
                * gamma.reshape(1, -1, 1, 1) + beta.reshape(1, -1, 1, 1))

    out = jax.nn.relu(bn(conv(x, p["w1"], stride, 1), p["g1"], p["b1"]))
    out = bn(conv(out, p["w2"], 1, 1), p["g2"], p["b2"])
    sc = bn(conv(x, p["ws"], stride, 0), p["gs"], p["bs"]) if "ws" in p else x
    return jax.nn.relu(out + sc)


# ------------------------------------- main -----------------------------------

if __name__ == "__main__":
    key = jax.random.PRNGKey(0)
    kx1, kx2, kp1, kp2 = jax.random.split(key, 4)

    # Case 1: stride=2 + channel expansion -> projection (conv1x1 + bn) shortcut
    x1 = jax.random.normal(kx1, (2, 4, 16, 16), jnp.float32)
    prm1 = init_params(kp1, 4, 8, 2)
    y1 = jax.block_until_ready(basic_block_forward(x1, prm1, 2))
    r1 = reference_forward(x1, prm1, 2)
    assert y1.shape == (2, 8, 8, 8)
    np.testing.assert_allclose(np.asarray(y1), np.asarray(r1), atol=1e-3, rtol=1e-3)

    # Case 2: stride=1, in_planes == planes -> identity shortcut
    x2 = jax.random.normal(kx2, (2, 8, 16, 16), jnp.float32)
    prm2 = init_params(kp2, 8, 8, 1)
    y2 = jax.block_until_ready(basic_block_forward(x2, prm2, 1))
    r2 = reference_forward(x2, prm2, 1)
    assert y2.shape == (2, 8, 16, 16)
    np.testing.assert_allclose(np.asarray(y2), np.asarray(r2), atol=1e-3, rtol=1e-3)

    print("KERNEL_OK")
</pallas_src>

<mosaic_0001>
module attributes {stable_mosaic.version = 11 : i64} {
  func.func @kernel(%arg0: i32, %arg1: i32, %arg2: memref<1x4x9x9x8xbf16, #tpu.memory_space<vmem>>, %arg3: memref<1x4x9x9x8xbf16, #tpu.memory_space<vmem>>, %arg4: memref<9x8x128xbf16, #tpu.memory_space<vmem>>, %arg5: memref<9x8x128xbf16, #tpu.memory_space<vmem>>, %arg6: memref<9x128x128xbf16, #tpu.memory_space<vmem>>, %arg7: memref<9x128x128xbf16, #tpu.memory_space<vmem>>, %arg8: memref<2x128xf32, #tpu.memory_space<vmem>>, %arg9: memref<2x128xf32, #tpu.memory_space<vmem>>, %arg10: memref<8x128xbf16, #tpu.memory_space<vmem>>, %arg11: memref<8x128xbf16, #tpu.memory_space<vmem>>, %arg12: memref<2x128xf32, #tpu.memory_space<vmem>>, %arg13: memref<1x64x8xf32, #tpu.memory_space<vmem>>, %arg14: memref<2x64x128xf32, #tpu.memory_space<vmem>>, %arg15: memref<10x16x128xbf16, #tpu.memory_space<vmem>>, %arg16: memref<10x16x128xbf16, #tpu.memory_space<vmem>>, %arg17: memref<8x128xf32, #tpu.memory_space<vmem>>) attributes {dimension_semantics = [#tpu.dimension_semantics<arbitrary>, #tpu.dimension_semantics<arbitrary>], iteration_bounds = array<i64: 3, 2>, scalar_prefetch = 0 : i64, scratch_operands = 4 : i64, tpu.core_type = #tpu.core_type<tc>, window_params = [{transform_indices = @transform_0, window_bounds = array<i64: 1, 4, 9, 9, 8>}, {transform_indices = @transform_1, window_bounds = array<i64: 1, 4, 9, 9, 8>}, {pipeline_mode = #tpu.pipeline_mode<synchronous>, transform_indices = @transform_2, window_bounds = array<i64: 9, 8, 128>}, {pipeline_mode = #tpu.pipeline_mode<synchronous>, transform_indices = @transform_3, window_bounds = array<i64: 9, 8, 128>}, {pipeline_mode = #tpu.pipeline_mode<synchronous>, transform_indices = @transform_4, window_bounds = array<i64: 9, 128, 128>}, {pipeline_mode = #tpu.pipeline_mode<synchronous>, transform_indices = @transform_5, window_bounds = array<i64: 9, 128, 128>}, {pipeline_mode = #tpu.pipeline_mode<synchronous>, transform_indices = @transform_6, window_bounds = array<i64: 2, 128>}, {pipeline_mode = #tpu.pipeline_mode<synchronous>, transform_indices = @transform_7, window_bounds = array<i64: 2, 128>}, {pipeline_mode = #tpu.pipeline_mode<synchronous>, transform_indices = @transform_8, window_bounds = array<i64: 8, 128>}, {pipeline_mode = #tpu.pipeline_mode<synchronous>, transform_indices = @transform_9, window_bounds = array<i64: 8, 128>}, {pipeline_mode = #tpu.pipeline_mode<synchronous>, transform_indices = @transform_10, window_bounds = array<i64: 2, 128>}, {transform_indices = @transform_11, window_bounds = array<i64: 1, 64, 8>}]} {
    %c0_i32 = arith.constant 0 : i32
    %0 = arith.cmpi eq, %arg0, %c0_i32 : i32
    %c0_i32_0 = arith.constant 0 : i32
    %1 = arith.cmpi eq, %arg1, %c0_i32_0 : i32
    %2 = arith.andi %0, %1 : i1
    %3 = arith.extui %2 : i1 to i32
    %c0_i32_1 = arith.constant 0 : i32
    %4 = arith.cmpi ne, %3, %c0_i32_1 : i32
    scf.if %4 {
      %cst = arith.constant 0.000000e+00 : f32
      %19 = vector.broadcast %cst : f32 to vector<8x128xf32>
      %c0 = arith.constant 0 : index
      %c0_9 = arith.constant 0 : index
      %20 = vector.load %arg17[%c0, %c0_9] : memref<8x128xf32, #tpu.memory_space<vmem>>, vector<8x128xf32>
      tpu.vector_store %arg17[%c0, %c0_9], %19 {strides = array<i32>} : memref<8x128xf32, #tpu.memory_space<vmem>>, vector<8x128xf32>,
    } else {
    }
    %c0_i32_2 = arith.constant 0 : i32
    %5 = arith.cmpi eq, %arg0, %c0_i32_2 : i32
    %6 = arith.extui %5 : i1 to i32
    %c0_i32_3 = arith.constant 0 : i32
    %7 = arith.cmpi ne, %6, %c0_i32_3 : i32
    scf.if %7 {
      %cst = arith.constant 0.000000e+00 : f32
      %19 = vector.broadcast %cst : f32 to vector<64x128xf32>
      %c0 = arith.constant 0 : index
      %c0_9 = arith.constant 0 : index
      %c0_10 = arith.constant 0 : index
      %c0_11 = arith.constant 0 : index
      %c0_12 = arith.constant 0 : index
      %20 = vector.load %arg2[%c0, %c0_9, %c0_10, %c0_11, %c0_12] : memref<1x4x9x9x8xbf16, #tpu.memory_space<vmem>>, vector<1x1x8x8x8xbf16>
      %21 = vector.shape_cast %20 : vector<1x1x8x8x8xbf16> to vector<8x8x8xbf16>
      %22 = vector.shape_cast %21 : vector<8x8x8xbf16> to vector<64x8xbf16>
      %c0_13 = arith.constant 0 : index
      %c0_14 = arith.constant 0 : index
      %c0_15 = arith.constant 0 : index
      %c0_16 = arith.constant 0 : index
      %c0_17 = arith.constant 0 : index
      %23 = vector.load %arg3[%c0_13, %c0_14, %c0_15, %c0_16, %c0_17] : memref<1x4x9x9x8xbf16, #tpu.memory_space<vmem>>, vector<1x1x8x8x8xbf16>
      %24 = vector.shape_cast %23 : vector<1x1x8x8x8xbf16> to vector<8x8x8xbf16>
      %25 = vector.shape_cast %24 : vector<8x8x8xbf16> to vector<64x8xbf16>
      %c0_18 = arith.constant 0 : index
      %c0_19 = arith.constant 0 : index
      %c0_20 = arith.constant 0 : index
      %26 = vector.load %arg4[%c0_18, %c0_19, %c0_20] : memref<9x8x128xbf16, #tpu.memory_space<vmem>>, vector<1x8x128xbf16>
      %27 = vector.shape_cast %26 : vector<1x8x128xbf16> to vector<8x128xbf16>
      %c0_21 = arith.constant 0 : index
      %c0_22 = arith.constant 0 : index
      %c0_23 = arith.constant 0 : index
      %28 = vector.load %arg5[%c0_21, %c0_22, %c0_23] : memref<9x8x128xbf16, #tpu.memory_space<vmem>>, vector<1x8x128xbf16>
      %29 = vector.shape_cast %28 : vector<1x8x128xbf16> to vector<8x128xbf16>
      %cst_24 = arith.constant dense<0.000000e+00> : vector<64x128xf32>
      %30 = tpu.matmul %22, %27, %cst_24 {dimension_numbers = #tpu.dot_dimension_numbers<[1], [0], [0], [1], [0, 0, 1, 1], [], []>} : vector<64x8xbf16>, vector<8x128xbf16>, vector<64x128xf32> -> vector<64x128xf32>
      %cst_25 = arith.constant dense<0.000000e+00> : vector<64x128xf32>
      %31 = tpu.matmul %25, %27, %cst_25 {dimension_numbers = #tpu.dot_dimension_numbers<[1], [0], [0], [1], [0, 0, 1, 1], [], []>} : vector<64x8xbf16>, vector<8x128xbf16>, vector<64x128xf32> -> vector<64x128xf32>
      %32 = arith.addf %30, %31 : vector<64x128xf32>
      %cst_26 = arith.constant dense<0.000000e+00> : vector<64x128xf32>
      %33 = tpu.matmul %22, %29, %cst_26 {dimension_numbers = #tpu.dot_dimension_numbers<[1], [0], [0], [1], [0, 0, 1, 1], [], []>} : vector<64x8xbf16>, vector<8x128xbf16>, vector<64x128xf32> -> vector<64x128xf32>
      %34 = arith.addf %32, %33 : vector<64x128xf32>
      %35 = arith.addf %19, %34 : vector<64x128xf32>
      %c0_27 = arith.constant 0 : index
      %c1 = arith.constant 1 : index
      %c0_28 = arith.constant 0 : index
      %c0_29 = arith.constant 0 : index
      %c0_30 = arith.constant 0 : index
      %36 = vector.load %arg2[%c0_27, %c1, %c0_28, %c0_29, %c0_30] : memref<1x4x9x9x8xbf16, #tpu.memory_space<vmem>>, vector<1x1x8x8x8xbf16>
      %37 = vector.shape_cast %36 : vector<1x1x8x8x8xbf16> to vector<8x8x8xbf16>
      %38 = vector.shape_cast %37 : vector<8x8x8xbf16> to vector<64x8xbf16>
      %c0_31 = arith.constant 0 : index
      %c1_32 = arith.constant 1 : index
      %c0_33 = arith.constant 0 : index
      %c0_34 = arith.constant 0 : index
      %c0_35 = arith.constant 0 : index
      %39 = vector.load %arg3[%c0_31, %c1_32, %c0_33, %c0_34, %c0_35] : memref<1x4x9x9x8xbf16, #tpu.memory_space<vmem>>, vector<1x1x8x8x8xbf16>
      %40 = vector.shape_cast %39 : vector<1x1x8x8x8xbf16> to vector<8x8x8xbf16>
      %41 = vector.shape_cast %40 : vector<8x8x8xbf16> to vector<64x8xbf16>
      %c1_36 = arith.constant 1 : index
      %c0_37 = arith.constant 0 : index
      %c0_38 = arith.constant 0 : index
      %42 = vector.load %arg4[%c1_36, %c0_37, %c0_38] : memref<9x8x128xbf16, #tpu.memory_space<vmem>>, vector<1x8x128xbf16>
      %43 = vector.shape_cast %42 : vector<1x8x128xbf16> to vector<8x128xbf16>
      %c1_39 = arith.constant 1 : index
      %c0_40 = arith.constant 0 : index
      %c0_41 = arith.constant 0 : index
      %44 = vector.load %arg5[%c1_39, %c0_40, %c0_41] : memref<9x8x128xbf16, #tpu.memory_space<vmem>>, vector<1x8x128xbf16>
      %45 = vector.shape_cast %44 : vector<1x8x128xbf16> to vector<8x128xbf16>
      %cst_42 = arith.constant dense<0.000000e+00> : vector<64x128xf32>
      %46 = tpu.matmul %38, %43, %cst_42 {dimension_numbers = #tpu.dot_dimension_numbers<[1], [0], [0], [1], [0, 0, 1, 1], [], []>} : vector<64x8xbf16>, vector<8x128xbf16>, vector<64x128xf32> -> vector<64x128xf32>
      %cst_43 = arith.constant dense<0.000000e+00> : vector<64x128xf32>
      %47 = tpu.matmul %41, %43, %cst_43 {dimension_numbers = #tpu.dot_dimension_numbers<[1], [0], [0], [1], [0, 0, 1, 1], [], []>} : vector<64x8xbf16>, vector<8x128xbf16>, vector<64x128xf32> -> vector<64x128xf32>
      %48 = arith.addf %46, %47 : vector<64x128xf32>
      %cst_44 = arith.constant dense<0.000000e+00> : vector<64x128xf32>
      %49 = tpu.matmul %38, %45, %cst_44 {dimension_numbers = #tpu.dot_dimension_numbers<[1], [0], [0], [1], [0, 0, 1, 1], [], []>} : vector<64x8xbf16>, vector<8x128xbf16>, vector<64x128xf32> -> vector<64x128xf32>
      %50 = arith.addf %48, %49 : vector<64x128xf32>
      %51 = arith.addf %35, %50 : vector<64x128xf32>
      %c0_45 = arith.constant 0 : index
      %c0_46 = arith.constant 0 : index
      %c0_47 = arith.constant 0 : index
      %c1_48 = arith.constant 1 : index
      %c0_49 = arith.constant 0 : index
      %52 = vector.load %arg2[%c0_45, %c0_46, %c0_47, %c1_48, %c0_49] : memref<1x4x9x9x8xbf16, #tpu.memory_space<vmem>>, vector<1x1x8x8x8xbf16>
      %53 = vector.shape_cast %52 : vector<1x1x8x8x8xbf16> to vector<8x8x8xbf16>
      %54 = vector.shape_cast %53 : vector<8x8x8xbf16> to vector<64x8xbf16>
      %c0_50 = arith.constant 0 : index
      %c0_51 = arith.constant 0 : index
      %c0_52 = arith.constant 0 : index
      %c1_53 = arith.constant 1 : index
      %c0_54 = arith.constant 0 : index
      %55 = vector.load %arg3[%c0_50, %c0_51, %c0_52, %c1_53, %c0_54] : memref<1x4x9x9x8xbf16, #tpu.memory_space<vmem>>, vector<1x1x8x8x8xbf16>
      %56 = vector.shape_cast %55 : vector<1x1x8x8x8xbf16> to vector<8x8x8xbf16>
      %57 = vector.shape_cast %56 : vector<8x8x8xbf16> to vector<64x8xbf16>
      %c2 = arith.constant 2 : index
      %c0_55 = arith.constant 0 : index
      %c0_56 = arith.constant 0 : index
      %58 = vector.load %arg4[%c2, %c0_55, %c0_56] : memref<9x8x128xbf16, #tpu.memory_space<vmem>>, vector<1x8x128xbf16>
      %59 = vector.shape_cast %58 : vector<1x8x128xbf16> to vector<8x128xbf16>
      %c2_57 = arith.constant 2 : index
      %c0_58 = arith.constant 0 : index
      %c0_59 = arith.constant 0 : index
      %60 = vector.load %arg5[%c2_57, %c0_58, %c0_59] : memref<9x8x128xbf16, #tpu.memory_space<vmem>>, vector<1x8x128xbf16>
      %61 = vector.shape_cast %60 : vector<1x8x128xbf16> to vector<8x128xbf16>
      %cst_60 = arith.constant dense<0.000000e+00> : vector<64x128xf32>
      %62 = tpu.matmul %54, %59, %cst_60 {dimension_numbers = #tpu.dot_dimension_numbers<[1], [0], [0], [1], [0, 0, 1, 1], [], []>} : vector<64x8xbf16>, vector<8x128xbf16>, vector<64x128xf32> -> vector<64x128xf32>
      %cst_61 = arith.constant dense<0.000000e+00> : vector<64x128xf32>
      %63 = tpu.matmul %57, %59, %cst_61 {dimension_numbers = #tpu.dot_dimension_numbers<[1], [0], [0], [1], [0, 0, 1, 1], [], []>} : vector<64x8xbf16>, vector<8x128xbf16>, vector<64x128xf32> -> vector<64x128xf32>
      %64 = arith.addf %62, %63 : vector<64x128xf32>
      %cst_62 = arith.constant dense<0.000000e+00> : vector<64x128xf32>
      %65 = tpu.matmul %54, %61, %cst_62 {dimension_numbers = #tpu.dot_dimension_numbers<[1], [0], [0], [1], [0, 0, 1, 1], [], []>} : vector<64x8xbf16>, vector<8x128xbf16>, vector<64x128xf32> -> vector<64x128xf32>
      %66 = arith.addf %64, %65 : vector<64x128xf32>
      %67 = arith.addf %51, %66 : vector<64x128xf32>
      %c0_63 = arith.constant 0 : index
      %c2_64 = arith.constant 2 : index
      %c0_65 = arith.constant 0 : index
      %c0_66 = arith.constant 0 : index
      %c0_67 = arith.constant 0 : index
      %68 = vector.load %arg2[%c0_63, %c2_64, %c0_65, %c0_66, %c0_67] : memref<1x4x9x9x8xbf16, #tpu.memory_space<vmem>>, vector<1x1x8x8x8xbf16>
      %69 = vector.shape_cast %68 : vector<1x1x8x8x8xbf16> to vector<8x8x8xbf16>
      %70 = vector.shape_cast %69 : vector<8x8x8xbf16> to vector<64x8xbf16>
      %c0_68 = arith.constant 0 : index
      %c2_69 = arith.constant 2 : index
      %c0_70 = arith.constant 0 : index
      %c0_71 = arith.constant 0 : index
      %c0_72 = arith.constant 0 : index
      %71 = vector.load %arg3[%c0_68, %c2_69, %c0_70, %c0_71, %c0_72] : memref<1x4x9x9x8xbf16, #tpu.memory_space<vmem>>, vector<1x1x8x8x8xbf16>
      %72 = vector.shape_cast %71 : vector<1x1x8x8x8xbf16> to vector<8x8x8xbf16>
      %73 = vector.shape_cast %72 : vector<8x8x8xbf16> to vector<64x8xbf16>
      %c3 = arith.constant 3 : index
      %c0_73 = arith.constant 0 : index
      %c0_74 = arith.constant 0 : index
      %74 = vector.load %arg4[%c3, %c0_73, %c0_74] : memref<9x8x128xbf16, #tpu.memory_space<vmem>>, vector<1x8x128xbf16>
      %75 = vector.shape_cast %74 : vector<1x8x128xbf16> to vector<8x128xbf16>
      %c3_75 = arith.constant 3 : index
      %c0_76 = arith.constant 0 : index
      %c0_77 = arith.constant 0 : index
      %76 = vector.load %arg5[%c3_75, %c0_76, %c0_77] : memref<9x8x128xbf16, #tpu.memory_space<vmem>>, vector<1x8x128xbf16>
      %77 = vector.shape_cast %76 : vector<1x8x128xbf16> to vector<8x128xbf16>
      %cst_78 = arith.constant dense<0.000000e+00> : vector<64x128xf32>
      %78 = tpu.matmul %70, %75, %cst_78 {dimension_numbers = #tpu.dot_dimension_numbers<[1], [0], [0], [1], [0, 0, 1, 1], [], []>} : vector<64x8xbf16>, vector<8x128xbf16>, vector<64x128xf32> -> vector<64x128xf32>
      %cst_79 = arith.constant dense<0.000000e+00> : vector<64x128xf32>
      %79 = tpu.matmul %73, %75, %cst_79 {dimension_numbers = #tpu.dot_dimension_numbers<[1], [0], [0], [1], [0, 0, 1, 1], [], []>} : vector<64x8xbf16>, vector<8x128xbf16>, vector<64x128xf32> -> vector<64x128xf32>
      %80 = arith.addf %78, %79 : vector<64x128xf32>
      %cst_80 = arith.constant dense<0.000000e+00> : vector<64x128xf32>
      %81 = tpu.matmul %70, %77, %cst_80 {dimension_numbers = #tpu.dot_dimension_numbers<[1], [0], [0], [1], [0, 0, 1, 1], [], []>} : vector<64x8xbf16>, vector<8x128xbf16>, vector<64x128xf32> -> vector<64x128xf32>
      %82 = arith.addf %80, %81 : vector<64x128xf32>
      %83 = arith.addf %67, %82 : vector<64x128xf32>
      %c0_81 = arith.constant 0 : index
      %c3_82 = arith.constant 3 : index
      %c0_83 = arith.constant 0 : index
      %c0_84 = arith.constant 0 : index
      %c0_85 = arith.constant 0 : index
      %84 = vector.load %arg2[%c0_81, %c3_82, %c0_83, %c0_84, %c0_85] : memref<1x4x9x9x8xbf16, #tpu.memory_space<vmem>>, vector<1x1x8x8x8xbf16>
      %85 = vector.shape_cast %84 : vector<1x1x8x8x8xbf16> to vector<8x8x8xbf16>
      %86 = vector.shape_cast %85 : vector<8x8x8xbf16> to vector<64x8xbf16>
      %c0_86 = arith.constant 0 : index
      %c3_87 = arith.constant 3 : index
      %c0_88 = arith.constant 0 : index
      %c0_89 = arith.constant 0 : index
      %c0_90 = arith.constant 0 : index
      %87 = vector.load %arg3[%c0_86, %c3_87, %c0_88, %c0_89, %c0_90] : memref<1x4x9x9x8xbf16, #tpu.memory_space<vmem>>, vector<1x1x8x8x8xbf16>
      %88 = vector.shape_cast %87 : vector<1x1x8x8x8xbf16> to vector<8x8x8xbf16>
      %89 = vector.shape_cast %88 : vector<8x8x8xbf16> to vector<64x8xbf16>
      %c4 = arith.constant 4 : index
      %c0_91 = arith.constant 0 : index
      %c0_92 = arith.constant 0 : index
      %90 = vector.load %arg4[%c4, %c0_91, %c0_92] : memref<9x8x128xbf16, #tpu.memory_space<vmem>>, vector<1x8x128xbf16>
      %91 = vector.shape_cast %90 : vector<1x8x128xbf16> to vector<8x128xbf16>
      %c4_93 = arith.constant 4 : index
      %c0_94 = arith.constant 0 : index
      %c0_95 = arith.constant 0 : index
      %92 = vector.load %arg5[%c4_93, %c0_94, %c0_95] : memref<9x8x128xbf16, #tpu.memory_space<vmem>>, vector<1x8x128xbf16>
      %93 = vector.shape_cast %92 : vector<1x8x128xbf16> to vector<8x128xbf16>
      %cst_96 = arith.constant dense<0.000000e+00> : vector<64x128xf32>
      %94 = tpu.matmul %86, %91, %cst_96 {dimension_numbers = #tpu.dot_dimension_numbers<[1], [0], [0], [1], [0, 0, 1, 1], [], []>} : vector<64x8xbf16>, vector<8x128xbf16>, vector<64x128xf32> -> vector<64x128xf32>
      %cst_97 = arith.constant dense<0.000000e+00> : vector<64x128xf32>
      %95 = tpu.matmul %89, %91, %cst_97 {dimension_numbers = #tpu.dot_dimension_numbers<[1], [0], [0], [1], [0, 0, 1, 1], [], []>} : vector<64x8xbf16>, vector<8x128xbf16>, vector<64x128xf32> -> vector<64x128xf32>
      %96 = arith.addf %94, %95 : vector<64x128xf32>
      %cst_98 = arith.constant dense<0.000000e+00> : vector<64x128xf32>
      %97 = tpu.matmul %86, %93, %cst_98 {dimension_numbers = #tpu.dot_dimension_numbers<[1], [0], [0], [1], [0, 0, 1, 1], [], []>} : vector<64x8xbf16>, vector<8x128xbf16>, vector<64x128xf32> -> vector<64x128xf32>
      %98 = arith.addf %96, %97 : vector<64x128xf32>
      %99 = arith.addf %83, %98 : vector<64x128xf32>
      %c0_99 = arith.constant 0 : index
      %c2_100 = arith.constant 2 : index
      %c0_101 = arith.constant 0 : index
      %c1_102 = arith.constant 1 : index
      %c0_103 = arith.constant 0 : index
      %100 = vector.load %arg2[%c0_99, %c2_100, %c0_101, %c1_102, %c0_103] : memref<1x4x9x9x8xbf16, #tpu.memory_space<vmem>>, vector<1x1x8x8x8xbf16>
      %101 = vector.shape_cast %100 : vector<1x1x8x8x8xbf16> to vector<8x8x8xbf16>
      %102 = vector.shape_cast %101 : vector<8x8x8xbf16> to vector<64x8xbf16>
      %c0_104 = arith.constant 0 : index
      %c2_105 = arith.constant 2 : index
      %c0_106 = arith.constant 0 : index
      %c1_107 = arith.constant 1 : index
      %c0_108 = arith.constant 0 : index
      %103 = vector.load %arg3[%c0_104, %c2_105, %c0_106, %c1_107, %c0_108] : memref<1x4x9x9x8xbf16, #tpu.memory_space<vmem>>, vector<1x1x8x8x8xbf16>
      %104 = vector.shape_cast %103 : vector<1x1x8x8x8xbf16> to vector<8x8x8xbf16>
      %105 = vector.shape_cast %104 : vector<8x8x8xbf16> to vector<64x8xbf16>
      %c5 = arith.constant 5 : index
      %c0_109 = arith.constant 0 : index
      %c0_110 = arith.constant 0 : index
      %106 = vector.load %arg4[%c5, %c0_109, %c0_110] : memref<9x8x128xbf16, #tpu.memory_space<vmem>>, vector<1x8x128xbf16>
      %107 = vector.shape_cast %106 : vector<1x8x128xbf16> to vector<8x128xbf16>
      %c5_111 = arith.constant 5 : index
      %c0_112 = arith.constant 0 : index
      %c0_113 = arith.constant 0 : index
      %108 = vector.load %arg5[%c5_111, %c0_112, %c0_113] : memref<9x8x128xbf16, #tpu.memory_space<vmem>>, vector<1x8x128xbf16>
      %109 = vector.shape_cast %108 : vector<1x8x128xbf16> to vector<8x128xbf16>
      %cst_114 = arith.constant dense<0.000000e+00> : vector<64x128xf32>
      %110 = tpu.matmul %102, %107, %cst_114 {dimension_numbers = #tpu.dot_dimension_numbers<[1], [0], [0], [1], [0, 0, 1, 1], [], []>} : vector<64x8xbf16>, vector<8x128xbf16>, vector<64x128xf32> -> vector<64x128xf32>
      %cst_115 = arith.constant dense<0.000000e+00> : vector<64x128xf32>
      %111 = tpu.matmul %105, %107, %cst_115 {dimension_numbers = #tpu.dot_dimension_numbers<[1], [0], [0], [1], [0, 0, 1, 1], [], []>} : vector<64x8xbf16>, vector<8x128xbf16>, vector<64x128xf32> -> vector<64x128xf32>
      %112 = arith.addf %110, %111 : vector<64x128xf32>
      %cst_116 = arith.constant dense<0.000000e+00> : vector<64x128xf32>
      %113 = tpu.matmul %102, %109, %cst_116 {dimension_numbers = #tpu.dot_dimension_numbers<[1], [0], [0], [1], [0, 0, 1, 1], [], []>} : vector<64x8xbf16>, vector<8x128xbf16>, vector<64x128xf32> -> vector<64x128xf32>
      %114 = arith.addf %112, %113 : vector<64x128xf32>
      %115 = arith.addf %99, %114 : vector<64x128xf32>
      %c0_117 = arith.constant 0 : index
      %c0_118 = arith.constant 0 : index
      %c1_119 = arith.constant 1 : index
      %c0_120 = arith.constant 0 : index
      %c0_121 = arith.constant 0 : index
      %116 = vector.load %arg2[%c0_117, %c0_118, %c1_119, %c0_120, %c0_121] : memref<1x4x9x9x8xbf16, #tpu.memory_space<vmem>>, vector<1x1x8x8x8xbf16>
      %117 = vector.shape_cast %116 : vector<1x1x8x8x8xbf16> to vector<8x8x8xbf16>
      %118 = vector.shape_cast %117 : vector<8x8x8xbf16> to vector<64x8xbf16>
      %c0_122 = arith.constant 0 : index
      %c0_123 = arith.constant 0 : index
      %c1_124 = arith.constant 1 : index
      %c0_125 = arith.constant 0 : index
      %c0_126 = arith.constant 0 : index
      %119 = vector.load %arg3[%c0_122, %c0_123, %c1_124, %c0_125, %c0_126] : memref<1x4x9x9x8xbf16, #tpu.memory_space<vmem>>, vector<1x1x8x8x8xbf16>
      %120 = vector.shape_cast %119 : vector<1x1x8x8x8xbf16> to vector<8x8x8xbf16>
      %121 = vector.shape_cast %120 : vector<8x8x8xbf16> to vector<64x8xbf16>
      %c6 = arith.constant 6 : index
      %c0_127 = arith.constant 0 : index
      %c0_128 = arith.constant 0 : index
      %122 = vector.load %arg4[%c6, %c0_127, %c0_128] : memref<9x8x128xbf16, #tpu.memory_space<vmem>>, vector<1x8x128xbf16>
      %123 = vector.shape_cast %122 : vector<1x8x128xbf16> to vector<8x128xbf16>
      %c6_129 = arith.constant 6 : index
      %c0_130 = arith.constant 0 : index
      %c0_131 = arith.constant 0 : index
      %124 = vector.load %arg5[%c6_129, %c0_130, %c0_131] : memref<9x8x128xbf16, #tpu.memory_space<vmem>>, vector<1x8x128xbf16>
      %125 = vector.shape_cast %124 : vector<1x8x128xbf16> to vector<8x128xbf16>
      %cst_132 = arith.constant dense<0.000000e+00> : vector<64x128xf32>
      %126 = tpu.matmul %118, %123, %cst_132 {dimension_numbers = #tpu.dot_dimension_numbers<[1], [0], [0], [1], [0, 0, 1, 1], [], []>} : vector<64x8xbf16>, vector<8x128xbf16>, vector<64x128xf32> -> vector<64x128xf32>
      %cst_133 = arith.constant dense<0.000000e+00> : vector<64x128xf32>
      %127 = tpu.matmul %121, %123, %cst_133 {dimension_numbers = #tpu.dot_dimension_numbers<[1], [0], [0], [1], [0, 0, 1, 1], [], []>} : vector<64x8xbf16>, vector<8x128xbf16>, vector<64x128xf32> -> vector<64x128xf32>
      %128 = arith.addf %126, %127 : vector<64x128xf32>
      %cst_134 = arith.constant dense<0.000000e+00> : vector<64x128xf32>
      %129 = tpu.matmul %118, %125, %cst_134 {dimension_numbers = #tpu.dot_dimension_numbers<[1], [0], [0], [1], [0, 0, 1, 1], [], []>} : vector<64x8xbf16>, vector<8x128xbf16>, vector<64x128xf32> -> vector<64x128xf32>
      %130 = arith.addf %128, %129 : vector<64x128xf32>
      %131 = arith.addf %115, %130 : vector<64x128xf32>
      %c0_135 = arith.constant 0 : index
      %c1_136 = arith.constant 1 : index
      %c1_137 = arith.constant 1 : index
      %c0_138 = arith.constant 0 : index
      %c0_139 = arith.constant 0 : index
      %132 = vector.load %arg2[%c0_135, %c1_136, %c1_137, %c0_138, %c0_139] : memref<1x4x9x9x8xbf16, #tpu.memory_space<vmem>>, vector<1x1x8x8x8xbf16>
      %133 = vector.shape_cast %132 : vector<1x1x8x8x8xbf16> to vector<8x8x8xbf16>
      %134 = vector.shape_cast %133 : vector<8x8x8xbf16> to vector<64x8xbf16>
      %c0_140 = arith.constant 0 : index
      %c1_141 = arith.constant 1 : index
      %c1_142 = arith.constant 1 : index
      %c0_143 = arith.constant 0 : index
      %c0_144 = arith.constant 0 : index
      %135 = vector.load %arg3[%c0_140, %c1_141, %c1_142, %c0_143, %c0_144] : memref<1x4x9x9x8xbf16, #tpu.memory_space<vmem>>, vector<1x1x8x8x8xbf16>
      %136 = vector.shape_cast %135 : vector<1x1x8x8x8xbf16> to vector<8x8x8xbf16>
      %137 = vector.shape_cast %136 : vector<8x8x8xbf16> to vector<64x8xbf16>
      %c7 = arith.constant 7 : index
      %c0_145 = arith.constant 0 : index
      %c0_146 = arith.constant 0 : index
      %138 = vector.load %arg4[%c7, %c0_145, %c0_146] : memref<9x8x128xbf16, #tpu.memory_space<vmem>>, vector<1x8x128xbf16>
      %139 = vector.shape_cast %138 : vector<1x8x128xbf16> to vector<8x128xbf16>
      %c7_147 = arith.constant 7 : index
      %c0_148 = arith.constant 0 : index
      %c0_149 = arith.constant 0 : index
      %140 = vector.load %arg5[%c7_147, %c0_148, %c0_149] : memref<9x8x128xbf16, #tpu.memory_space<vmem>>, vector<1x8x128xbf16>
      %141 = vector.shape_cast %140 : vector<1x8x128xbf16> to vector<8x128xbf16>
      %cst_150 = arith.constant dense<0.000000e+00> : vector<64x128xf32>
      %142 = tpu.matmul %134, %139, %cst_150 {dimension_numbers = #tpu.dot_dimension_numbers<[1], [0], [0], [1], [0, 0, 1, 1], [], []>} : vector<64x8xbf16>, vector<8x128xbf16>, vector<64x128xf32> -> vector<64x128xf32>
      %cst_151 = arith.constant dense<0.000000e+00> : vector<64x128xf32>
      %143 = tpu.matmul %137, %139, %cst_151 {dimension_numbers = #tpu.dot_dimension_numbers<[1], [0], [0], [1], [0, 0, 1, 1], [], []>} : vector<64x8xbf16>, vector<8x128xbf16>, vector<64x128xf32> -> vector<64x128xf32>
      %144 = arith.addf %142, %143 : vector<64x128xf32>
      %cst_152 = arith.constant dense<0.000000e+00> : vector<64x128xf32>
      %145 = tpu.matmul %134, %141, %cst_152 {dimension_numbers = #tpu.dot_dimension_numbers<[1], [0], [0], [1], [0, 0, 1, 1], [], []>} : vector<64x8xbf16>, vector<8x128xbf16>, vector<64x128xf32> -> vector<64x128xf32>
      %146 = arith.addf %144, %145 : vector<64x128xf32>
      %147 = arith.addf %131, %146 : vector<64x128xf32>
      %c0_153 = arith.constant 0 : index
      %c0_154 = arith.constant 0 : index
      %c1_155 = arith.constant 1 : index
      %c1_156 = arith.constant 1 : index
      %c0_157 = arith.constant 0 : index
      %148 = vector.load %arg2[%c0_153, %c0_154, %c1_155, %c1_156, %c0_157] : memref<1x4x9x9x8xbf16, #tpu.memory_space<vmem>>, vector<1x1x8x8x8xbf16>
      %149 = vector.shape_cast %148 : vector<1x1x8x8x8xbf16> to vector<8x8x8xbf16>
      %150 = vector.shape_cast %149 : vector<8x8x8xbf16> to vector<64x8xbf16>
      %c0_158 = arith.constant 0 : index
      %c0_159 = arith.constant 0 : index
      %c1_160 = arith.constant 1 : index
      %c1_161 = arith.constant 1 : index
      %c0_162 = arith.constant 0 : index
      %151 = vector.load %arg3[%c0_158, %c0_159, %c1_160, %c1_161, %c0_162] : memref<1x4x9x9x8xbf16, #tpu.memory_space<vmem>>, vector<1x1x8x8x8xbf16>
      %152 = vector.shape_cast %151 : vector<1x1x8x8x8xbf16> to vector<8x8x8xbf16>
      %153 = vector.shape_cast %152 : vector<8x8x8xbf16> to vector<64x8xbf16>
      %c8 = arith.constant 8 : index
      %c0_163 = arith.constant 0 : index
      %c0_164 = arith.constant 0 : index
      %154 = vector.load %arg4[%c8, %c0_163, %c0_164] : memref<9x8x128xbf16, #tpu.memory_space<vmem>>, vector<1x8x128xbf16>
      %155 = vector.shape_cast %154 : vector<1x8x128xbf16> to vector<8x128xbf16>
      %c8_165 = arith.constant 8 : index
      %c0_166 = arith.constant 0 : index
      %c0_167 = arith.constant 0 : index
      %156 = vector.load %arg5[%c8_165, %c0_166, %c0_167] : memref<9x8x128xbf16, #tpu.memory_space<vmem>>, vector<1x8x128xbf16>
      %157 = vector.shape_cast %156 : vector<1x8x128xbf16> to vector<8x128xbf16>
      %cst_168 = arith.constant dense<0.000000e+00> : vector<64x128xf32>
      %158 = tpu.matmul %150, %155, %cst_168 {dimension_numbers = #tpu.dot_dimension_numbers<[1], [0], [0], [1], [0, 0, 1, 1], [], []>} : vector<64x8xbf16>, vector<8x128xbf16>, vector<64x128xf32> -> vector<64x128xf32>
      %cst_169 = arith.constant dense<0.000000e+00> : vector<64x128xf32>
      %159 = tpu.matmul %153, %155, %cst_169 {dimension_numbers = #tpu.dot_dimension_numbers<[1], [0], [0], [1], [0, 0, 1, 1], [], []>} : vector<64x8xbf16>, vector<8x128xbf16>, vector<64x128xf32> -> vector<64x128xf32>
      %160 = arith.addf %158, %159 : vector<64x128xf32>
      %cst_170 = arith.constant dense<0.000000e+00> : vector<64x128xf32>
      %161 = tpu.matmul %150, %157, %cst_170 {dimension_numbers = #tpu.dot_dimension_numbers<[1], [0], [0], [1], [0, 0, 1, 1], [], []>} : vector<64x8xbf16>, vector<8x128xbf16>, vector<64x128xf32> -> vector<64x128xf32>
      %162 = arith.addf %160, %161 : vector<64x128xf32>
      %163 = arith.addf %147, %162 : vector<64x128xf32>
      %164 = arith.index_cast %arg1 : i32 to index
      %c0_171 = arith.constant 0 : index
      %c0_172 = arith.constant 0 : index
      %165 = vector.load %arg14[%164, %c0_171, %c0_172] : memref<2x64x128xf32, #tpu.memory_space<vmem>>, vector<1x64x128xf32>
      %166 = vector.shape_cast %165 : vector<1x64x128xf32> to vector<64x128xf32>
      %167 = vector.shape_cast %163 : vector<64x128xf32> to vector<1x64x128xf32>
      tpu.vector_store %arg14[%164, %c0_171, %c0_172], %167 {strides = array<i32>} : memref<2x64x128xf32, #tpu.memory_space<vmem>>, vector<1x64x128xf32>,
      %c0_173 = arith.constant 0 : index
      %c0_174 = arith.constant 0 : index
      %168 = vector.load %arg17[%c0_173, %c0_174] : memref<8x128xf32, #tpu.memory_space<vmem>>, vector<1x128xf32>
      %cst_175 = arith.constant dense<0.000000e+00> : vector<128xf32>
      %169 = vector.multi_reduction <add>, %163, %cst_175 [0] : vector<64x128xf32> to vector<128xf32>
      %170 = vector.shape_cast %169 : vector<128xf32> to vector<1x128xf32>
      %171 = arith.addf %168, %170 : vector<1x128xf32>
      %c0_176 = arith.constant 0 : index
      %c0_177 = arith.constant 0 : index
      %172 = vector.load %arg17[%c0_176, %c0_177] : memref<8x128xf32, #tpu.memory_space<vmem>>, vector<1x128xf32>
      tpu.vector_store %arg17[%c0_176, %c0_177], %171 {strides = array<i32>} : memref<8x128xf32, #tpu.memory_space<vmem>>, vector<1x128xf32>,
      %c1_178 = arith.constant 1 : index
      %c0_179 = arith.constant 0 : index
      %173 = vector.load %arg17[%c1_178, %c0_179] : memref<8x128xf32, #tpu.memory_space<vmem>>, vector<1x128xf32>
      %174 = arith.mulf %163, %163 : vector<64x128xf32>
      %cst_180 = arith.constant dense<0.000000e+00> : vector<128xf32>
      %175 = vector.multi_reduction <add>, %174, %cst_180 [0] : vector<64x128xf32> to vector<128xf32>
      %176 = vector.shape_cast %175 : vector<128xf32> to vector<1x128xf32>
      %177 = arith.addf %173, %176 : vector<1x128xf32>
      %c1_181 = arith.constant 1 : index
      %c0_182 = arith.constant 0 : index
      %178 = vector.load %arg17[%c1_181, %c0_182] : memref<8x128xf32, #tpu.memory_space<vmem>>, vector<1x128xf32>
      tpu.vector_store %arg17[%c1_181, %c0_182], %177 {strides = array<i32>} : memref<8x128xf32, #tpu.memory_space<vmem>>, vector<1x128xf32>,
      %c0_183 = arith.constant 0 : index
      %c3_184 = arith.constant 3 : index
      %c0_185 = arith.constant 0 : index
      %c0_186 = arith.constant 0 : index
      %c0_187 = arith.constant 0 : index
      %179 = vector.load %arg2[%c0_183, %c3_184, %c0_185, %c0_186, %c0_187] : memref<1x4x9x9x8xbf16, #tpu.memory_space<vmem>>, vector<1x1x8x8x8xbf16>
      %180 = vector.shape_cast %179 : vector<1x1x8x8x8xbf16> to vector<8x8x8xbf16>
      %181 = vector.shape_cast %180 : vector<8x8x8xbf16> to vector<64x8xbf16>
      %c0_188 = arith.constant 0 : index
      %c3_189 = arith.constant 3 : index
      %c0_190 = arith.constant 0 : index
      %c0_191 = arith.constant 0 : index
      %c0_192 = arith.constant 0 : index
      %182 = vector.load %arg3[%c0_188, %c3_189, %c0_190, %c0_191, %c0_192] : memref<1x4x9x9x8xbf16, #tpu.memory_space<vmem>>, vector<1x1x8x8x8xbf16>
      %183 = vector.shape_cast %182 : vector<1x1x8x8x8xbf16> to vector<8x8x8xbf16>
      %184 = vector.shape_cast %183 : vector<8x8x8xbf16> to vector<64x8xbf16>
      %c0_193 = arith.constant 0 : index
      %c0_194 = arith.constant 0 : index
      %185 = vector.load %arg10[%c0_193, %c0_194] : memref<8x128xbf16, #tpu.memory_space<vmem>>, vector<8x128xbf16>
      %c0_195 = arith.constant 0 : index
      %c0_196 = arith.constant 0 : index
      %186 = vector.load %arg11[%c0_195, %c0_196] : memref<8x128xbf16, #tpu.memory_space<vmem>>, vector<8x128xbf16>
      %cst_197 = arith.constant dense<0.000000e+00> : vector<64x128xf32>
      %187 = tpu.matmul %181, %185, %cst_197 {dimension_numbers = #tpu.dot_dimension_numbers<[1], [0], [0], [1], [0, 0, 1, 1], [], []>} : vector<64x8xbf16>, vector<8x128xbf16>, vector<64x128xf32> -> vector<64x128xf32>
      %cst_198 = arith.constant dense<0.000000e+00> : vector<64x128xf32>
      %188 = tpu.matmul %184, %185, %cst_198 {dimension_numbers = #tpu.dot_dimension_numbers<[1], [0], [0], [1], [0, 0, 1, 1], [], []>} : vector<64x8xbf16>, vector<8x128xbf16>, vector<64x128xf32> -> vector<64x128xf32>
      %189 = arith.addf %187, %188 : vector<64x128xf32>
      %cst_199 = arith.constant dense<0.000000e+00> : vector<64x128xf32>
      %190 = tpu.matmul %181, %186, %cst_199 {dimension_numbers = #tpu.dot_dimension_numbers<[1], [0], [0], [1], [0, 0, 1, 1], [], []>} : vector<64x8xbf16>, vector<8x128xbf16>, vector<64x128xf32> -> vector<64x128xf32>
      %191 = arith.addf %189, %190 : vector<64x128xf32>
      %c4_200 = arith.constant 4 : index
      %c0_201 = arith.constant 0 : index
      %192 = vector.load %arg17[%c4_200, %c0_201] : memref<8x128xf32, #tpu.memory_space<vmem>>, vector<1x128xf32>
      %cst_202 = arith.constant dense<0.000000e+00> : vector<128xf32>
      %193 = vector.multi_reduction <add>, %191, %cst_202 [0] : vector<64x128xf32> to vector<128xf32>
      %194 = vector.shape_cast %193 : vector<128xf32> to vector<1x128xf32>
      %195 = arith.addf %192, %194 : vector<1x128xf32>
      %c4_203 = arith.constant 4 : index
      %c0_204 = arith.constant 0 : index
      %196 = vector.load %arg17[%c4_203, %c0_204] : memref<8x128xf32, #tpu.memory_space<vmem>>, vector<1x128xf32>
      tpu.vector_store %arg17[%c4_203, %c0_204], %195 {strides = array<i32>} : memref<8x128xf32, #tpu.memory_space<vmem>>, vector<1x128xf32>,
      %c5_205 = arith.constant 5 : index
      %c0_206 = arith.constant 0 : index
      %197 = vector.load %arg17[%c5_205, %c0_206] : memref<8x128xf32, #tpu.memory_space<vmem>>, vector<1x128xf32>
      %198 = arith.mulf %191, %191 : vector<64x128xf32>
      %cst_207 = arith.constant dense<0.000000e+00> : vector<128xf32>
      %199 = vector.multi_reduction <add>, %198, %cst_207 [0] : vector<64x128xf32> to vector<128xf32>
      %200 = vector.shape_cast %199 : vector<128xf32> to vector<1x128xf32>
      %201 = arith.addf %197, %200 : vector<1x128xf32>
      %c5_208 = arith.constant 5 : index
      %c0_209 = arith.constant 0 : index
      %202 = vector.load %arg17[%c5_208, %c0_209] : memref<8x128xf32, #tpu.memory_space<vmem>>, vector<1x128xf32>
      tpu.vector_store %arg17[%c5_208, %c0_209], %201 {strides = array<i32>} : memref<8x128xf32, #tpu.memory_space<vmem>>, vector<1x128xf32>,
    } else {
    }
    %c1_i32 = arith.constant 1 : i32
    %8 = arith.cmpi eq, %arg0, %c1_i32 : i32
    %c0_i32_4 = arith.constant 0 : i32
    %9 = arith.cmpi eq, %arg1, %c0_i32_4 : i32
    %10 = arith.andi %8, %9 : i1
    %11 = arith.extui %10 : i1 to i32
    %c0_i32_5 = arith.constant 0 : i32
    %12 = arith.cmpi ne, %11, %c0_i32_5 : i32
    scf.if %12 {
      %cst = arith.constant 0.000000e+00 : bf16
      %19 = vector.broadcast %cst : bf16 to vector<10x16x128xbf16>
      %c0 = arith.constant 0 : index
      %c0_9 = arith.constant 0 : index
      %c0_10 = arith.constant 0 : index
      %20 = vector.load %arg15[%c0, %c0_9, %c0_10] : memref<10x16x128xbf16, #tpu.memory_space<vmem>>, vector<10x16x128xbf16>
      tpu.vector_store %arg15[%c0, %c0_9, %c0_10], %19 {strides = array<i32>} : memref<10x16x128xbf16, #tpu.memory_space<vmem>>, vector<10x16x128xbf16>,
      %cst_11 = arith.constant 0.000000e+00 : bf16
      %21 = vector.broadcast %cst_11 : bf16 to vector<10x16x128xbf16>
      %c0_12 = arith.constant 0 : index
      %c0_13 = arith.constant 0 : index
      %c0_14 = arith.constant 0 : index
      %22 = vector.load %arg16[%c0_12, %c0_13, %c0_14] : memref<10x16x128xbf16, #tpu.memory_space<vmem>>, vector<10x16x128xbf16>
      tpu.vector_store %arg16[%c0_12, %c0_13, %c0_14], %21 {strides = array<i32>} : memref<10x16x128xbf16, #tpu.memory_space<vmem>>, vector<10x16x128xbf16>,
    } else {
    }
    %c1_i32_6 = arith.constant 1 : i32
    %13 = arith.cmpi eq, %arg0, %c1_i32_6 : i32
    %14 = arith.extui %13 : i1 to i32
    %c0_i32_7 = arith.constant 0 : i32
    %15 = arith.cmpi ne, %14, %c0_i32_7 : i32
    scf.if %15 {
      %c0 = arith.constant 0 : index
      %c0_9 = arith.constant 0 : index
      %19 = vector.load %arg17[%c0, %c0_9] : memref<8x128xf32, #tpu.memory_space<vmem>>, vector<1x128xf32>
      %cst = arith.constant 7.812500e-03 : f32
      %20 = vector.broadcast %cst : f32 to vector<1x128xf32>
      %21 = arith.mulf %19, %20 : vector<1x128xf32>
      %c1 = arith.constant 1 : index
      %c0_10 = arith.constant 0 : index
      %22 = vector.load %arg17[%c1, %c0_10] : memref<8x128xf32, #tpu.memory_space<vmem>>, vector<1x128xf32>
      %cst_11 = arith.constant 7.812500e-03 : f32
      %23 = vector.broadcast %cst_11 : f32 to vector<1x128xf32>
      %24 = arith.mulf %22, %23 : vector<1x128xf32>
      %25 = arith.mulf %21, %21 : vector<1x128xf32>
      %26 = arith.subf %24, %25 : vector<1x128xf32>
      %cst_12 = arith.constant 9.99999974E-6 : f32
      %27 = vector.broadcast %cst_12 : f32 to vector<1x128xf32>
      %28 = arith.addf %26, %27 : vector<1x128xf32>
      %29 = math.rsqrt %28 : vector<1x128xf32>
      %c0_13 = arith.constant 0 : index
      %c0_14 = arith.constant 0 : index
      %30 = vector.load %arg8[%c0_13, %c0_14] : memref<2x128xf32, #tpu.memory_space<vmem>>, vector<1x128xf32>
      %31 = arith.mulf %29, %30 : vector<1x128xf32>
      %c1_15 = arith.constant 1 : index
      %c0_16 = arith.constant 0 : index
      %32 = vector.load %arg8[%c1_15, %c0_16] : memref<2x128xf32, #tpu.memory_space<vmem>>, vector<1x128xf32>
      %33 = arith.mulf %21, %31 : vector<1x128xf32>
      %34 = arith.subf %32, %33 : vector<1x128xf32>
      %35 = arith.index_cast %arg1 : i32 to index
      %c0_17 = arith.constant 0 : index
      %c0_18 = arith.constant 0 : index
      %36 = vector.load %arg14[%35, %c0_17, %c0_18] : memref<2x64x128xf32, #tpu.memory_space<vmem>>, vector<1x64x128xf32>
      %37 = vector.shape_cast %36 : vector<1x64x128xf32> to vector<64x128xf32>
      %38 = vector.broadcast %31 : vector<1x128xf32> to vector<64x128xf32>
      %39 = arith.mulf %37, %38 : vector<64x128xf32>
      %40 = vector.broadcast %34 : vector<1x128xf32> to vector<64x128xf32>
      %41 = arith.addf %39, %40 : vector<64x128xf32>
      %cst_19 = arith.constant 0.000000e+00 : f32
      %42 = vector.broadcast %cst_19 : f32 to vector<64x128xf32>
      %43 = arith.maximumf %41, %42 : vector<64x128xf32>
      %44 = arith.truncf %43 : vector<64x128xf32> to vector<64x128xbf16>
      %45 = arith.extf %44 : vector<64x128xbf16> to vector<64x128xf32>
      %46 = arith.subf %43, %45 : vector<64x128xf32>
      %47 = arith.truncf %46 : vector<64x128xf32> to vector<64x128xbf16>
      %48 = vector.shape_cast %44 : vector<64x128xbf16> to vector<8x8x128xbf16>
      %c1_20 = arith.constant 1 : index
      %c1_21 = arith.constant 1 : index
      %c0_22 = arith.constant 0 : index
      %49 = vector.load %arg15[%c1_20, %c1_21, %c0_22] : memref<10x16x128xbf16, #tpu.memory_space<vmem>>, vector<8x8x128xbf16>
      tpu.vector_store %arg15[%c1_20, %c1_21, %c0_22], %48 {strides = array<i32>} : memref<10x16x128xbf16, #tpu.memory_space<vmem>>, vector<8x8x128xbf16>,
      %50 = vector.shape_cast %47 : vector<64x128xbf16> to vector<8x8x128xbf16>
      %c1_23 = arith.constant 1 : index
      %c1_24 = arith.constant 1 : index
      %c0_25 = arith.constant 0 : index
      %51 = vector.load %arg16[%c1_23, %c1_24, %c0_25] : memref<10x16x128xbf16, #tpu.memory_space<vmem>>, vector<8x8x128xbf16>
      tpu.vector_store %arg16[%c1_23, %c1_24, %c0_25], %50 {strides = array<i32>} : memref<10x16x128xbf16, #tpu.memory_space<vmem>>, vector<8x8x128xbf16>,
      %cst_26 = arith.constant 0.000000e+00 : f32
      %52 = vector.broadcast %cst_26 : f32 to vector<64x128xf32>
      %c0_27 = arith.constant 0 : index
      %c0_28 = arith.constant 0 : index
      %c0_29 = arith.constant 0 : index
      %53 = vector.load %arg15[%c0_27, %c0_28, %c0_29] : memref<10x16x128xbf16, #tpu.memory_space<vmem>>, vector<8x8x128xbf16>
      %54 = vector.shape_cast %53 : vector<8x8x128xbf16> to vector<64x128xbf16>
      %c0_30 = arith.constant 0 : index
      %c0_31 = arith.constant 0 : index
      %c0_32 = arith.constant 0 : index
      %55 = vector.load %arg16[%c0_30, %c0_31, %c0_32] : memref<10x16x128xbf16, #tpu.memory_space<vmem>>, vector<8x8x128xbf16>
      %56 = vector.shape_cast %55 : vector<8x8x128xbf16> to vector<64x128xbf16>
      %c0_33 = arith.constant 0 : index
      %c0_34 = arith.constant 0 : index
      %c0_35 = arith.constant 0 : index
      %57 = vector.load %arg6[%c0_33, %c0_34, %c0_35] : memref<9x128x128xbf16, #tpu.memory_space<vmem>>, vector<1x128x128xbf16>
      %58 = vector.shape_cast %57 : vector<1x128x128xbf16> to vector<128x128xbf16>
      %c0_36 = arith.constant 0 : index
      %c0_37 = arith.constant 0 : index
      %c0_38 = arith.constant 0 : index
      %59 = vector.load %arg7[%c0_36, %c0_37, %c0_38] : memref<9x128x128xbf16, #tpu.memory_space<vmem>>, vector<1x128x128xbf16>
      %60 = vector.shape_cast %59 : vector<1x128x128xbf16> to vector<128x128xbf16>
      %cst_39 = arith.constant dense<0.000000e+00> : vector<64x128xf32>
      %61 = tpu.matmul %54, %58, %cst_39 {dimension_numbers = #tpu.dot_dimension_numbers<[1], [0], [0], [1], [0, 0, 1, 1], [], []>} : vector<64x128xbf16>, vector<128x128xbf16>, vector<64x128xf32> -> vector<64x128xf32>
      %cst_40 = arith.constant dense<0.000000e+00> : vector<64x128xf32>
      %62 = tpu.matmul %56, %58, %cst_40 {dimension_numbers = #tpu.dot_dimension_numbers<[1], [0], [0], [1], [0, 0, 1, 1], [], []>} : vector<64x128xbf16>, vector<128x128xbf16>, vector<64x128xf32> -> vector<64x128xf32>
      %63 = arith.addf %61, %62 : vector<64x128xf32>
      %cst_41 = arith.constant dense<0.000000e+00> : vector<64x128xf32>
      %64 = tpu.matmul %54, %60, %cst_41 {dimension_numbers = #tpu.dot_dimension_numbers<[1], [0], [0], [1], [0, 0, 1, 1], [], []>} : vector<64x128xbf16>, vector<128x128xbf16>, vector<64x128xf32> -> vector<64x128xf32>
      %65 = arith.addf %63, %64 : vector<64x128xf32>
      %66 = arith.addf %52, %65 : vector<64x128xf32>
      %c0_42 = arith.constant 0 : index
      %c1_43 = arith.constant 1 : index
      %c0_44 = arith.constant 0 : index
      %67 = vector.load %arg15[%c0_42, %c1_43, %c0_44] : memref<10x16x128xbf16, #tpu.memory_space<vmem>>, vector<8x8x128xbf16>
      %68 = vector.shape_cast %67 : vector<8x8x128xbf16> to vector<64x128xbf16>
      %c0_45 = arith.constant 0 : index
      %c1_46 = arith.constant 1 : index
      %c0_47 = arith.constant 0 : index
      %69 = vector.load %arg16[%c0_45, %c1_46, %c0_47] : memref<10x16x128xbf16, #tpu.memory_space<vmem>>, vector<8x8x128xbf16>
      %70 = vector.shape_cast %69 : vector<8x8x128xbf16> to vector<64x128xbf16>
      %c1_48 = arith.constant 1 : index
      %c0_49 = arith.constant 0 : index
      %c0_50 = arith.constant 0 : index
      %71 = vector.load %arg6[%c1_48, %c0_49, %c0_50] : memref<9x128x128xbf16, #tpu.memory_space<vmem>>, vector<1x128x128xbf16>
      %72 = vector.shape_cast %71 : vector<1x128x128xbf16> to vector<128x128xbf16>
      %c1_51 = arith.constant 1 : index
      %c0_52 = arith.constant 0 : index
      %c0_53 = arith.constant 0 : index
      %73 = vector.load %arg7[%c1_51, %c0_52, %c0_53] : memref<9x128x128xbf16, #tpu.memory_space<vmem>>, vector<1x128x128xbf16>
      %74 = vector.shape_cast %73 : vector<1x128x128xbf16> to vector<128x128xbf16>
      %cst_54 = arith.constant dense<0.000000e+00> : vector<64x128xf32>
      %75 = tpu.matmul %68, %72, %cst_54 {dimension_numbers = #tpu.dot_dimension_numbers<[1], [0], [0], [1], [0, 0, 1, 1], [], []>} : vector<64x128xbf16>, vector<128x128xbf16>, vector<64x128xf32> -> vector<64x128xf32>
      %cst_55 = arith.constant dense<0.000000e+00> : vector<64x128xf32>
      %76 = tpu.matmul %70, %72, %cst_55 {dimension_numbers = #tpu.dot_dimension_numbers<[1], [0], [0], [1], [0, 0, 1, 1], [], []>} : vector<64x128xbf16>, vector<128x128xbf16>, vector<64x128xf32> -> vector<64x128xf32>
      %77 = arith.addf %75, %76 : vector<64x128xf32>
      %cst_56 = arith.constant dense<0.000000e+00> : vector<64x128xf32>
      %78 = tpu.matmul %68, %74, %cst_56 {dimension_numbers = #tpu.dot_dimension_numbers<[1], [0], [0], [1], [0, 0, 1, 1], [], []>} : vector<64x128xbf16>, vector<128x128xbf16>, vector<64x128xf32> -> vector<64x128xf32>
      %79 = arith.addf %77, %78 : vector<64x128xf32>
      %80 = arith.addf %66, %79 : vector<64x128xf32>
      %c0_57 = arith.constant 0 : index
      %c2 = arith.constant 2 : index
      %c0_58 = arith.constant 0 : index
      %81 = vector.load %arg15[%c0_57, %c2, %c0_58] : memref<10x16x128xbf16, #tpu.memory_space<vmem>>, vector<8x8x128xbf16>
      %82 = vector.shape_cast %81 : vector<8x8x128xbf16> to vector<64x128xbf16>
      %c0_59 = arith.constant 0 : index
      %c2_60 = arith.constant 2 : index
      %c0_61 = arith.constant 0 : index
      %83 = vector.load %arg16[%c0_59, %c2_60, %c0_61] : memref<10x16x128xbf16, #tpu.memory_space<vmem>>, vector<8x8x128xbf16>
      %84 = vector.shape_cast %83 : vector<8x8x128xbf16> to vector<64x128xbf16>
      %c2_62 = arith.constant 2 : index
      %c0_63 = arith.constant 0 : index
      %c0_64 = arith.constant 0 : index
      %85 = vector.load %arg6[%c2_62, %c0_63, %c0_64] : memref<9x128x128xbf16, #tpu.memory_space<vmem>>, vector<1x128x128xbf16>
      %86 = vector.shape_cast %85 : vector<1x128x128xbf16> to vector<128x128xbf16>
      %c2_65 = arith.constant 2 : index
      %c0_66 = arith.constant 0 : index
      %c0_67 = arith.constant 0 : index
      %87 = vector.load %arg7[%c2_65, %c0_66, %c0_67] : memref<9x128x128xbf16, #tpu.memory_space<vmem>>, vector<1x128x128xbf16>
      %88 = vector.shape_cast %87 : vector<1x128x128xbf16> to vector<128x128xbf16>
      %cst_68 = arith.constant dense<0.000000e+00> : vector<64x128xf32>
      %89 = tpu.matmul %82, %86, %cst_68 {dimension_numbers = #tpu.dot_dimension_numbers<[1], [0], [0], [1], [0, 0, 1, 1], [], []>} : vector<64x128xbf16>, vector<128x128xbf16>, vector<64x128xf32> -> vector<64x128xf32>
      %cst_69 = arith.constant dense<0.000000e+00> : vector<64x128xf32>
      %90 = tpu.matmul %84, %86, %cst_69 {dimension_numbers = #tpu.dot_dimension_numbers<[1], [0], [0], [1], [0, 0, 1, 1], [], []>} : vector<64x128xbf16>, vector<128x128xbf16>, vector<64x128xf32> -> vector<64x128xf32>
      %91 = arith.addf %89, %90 : vector<64x128xf32>
      %cst_70 = arith.constant dense<0.000000e+00> : vector<64x128xf32>
      %92 = tpu.matmul %82, %88, %cst_70 {dimension_numbers = #tpu.dot_dimension_numbers<[1], [0], [0], [1], [0, 0, 1, 1], [], []>} : vector<64x128xbf16>, vector<128x128xbf16>, vector<64x128xf32> -> vector<64x128xf32>
      %93 = arith.addf %91, %92 : vector<64x128xf32>
      %94 = arith.addf %80, %93 : vector<64x128xf32>
      %c1_71 = arith.constant 1 : index
      %c0_72 = arith.constant 0 : index
      %c0_73 = arith.constant 0 : index
      %95 = vector.load %arg15[%c1_71, %c0_72, %c0_73] : memref<10x16x128xbf16, #tpu.memory_space<vmem>>, vector<8x8x128xbf16>
      %96 = vector.shape_cast %95 : vector<8x8x128xbf16> to vector<64x128xbf16>
      %c1_74 = arith.constant 1 : index
      %c0_75 = arith.constant 0 : index
      %c0_76 = arith.constant 0 : index
      %97 = vector.load %arg16[%c1_74, %c0_75, %c0_76] : memref<10x16x128xbf16, #tpu.memory_space<vmem>>, vector<8x8x128xbf16>
      %98 = vector.shape_cast %97 : vector<8x8x128xbf16> to vector<64x128xbf16>
      %c3 = arith.constant 3 : index
      %c0_77 = arith.constant 0 : index
      %c0_78 = arith.constant 0 : index
      %99 = vector.load %arg6[%c3, %c0_77, %c0_78] : memref<9x128x128xbf16, #tpu.memory_space<vmem>>, vector<1x128x128xbf16>
      %100 = vector.shape_cast %99 : vector<1x128x128xbf16> to vector<128x128xbf16>
      %c3_79 = arith.constant 3 : index
      %c0_80 = arith.constant 0 : index
      %c0_81 = arith.constant 0 : index
      %101 = vector.load %arg7[%c3_79, %c0_80, %c0_81] : memref<9x128x128xbf16, #tpu.memory_space<vmem>>, vector<1x128x128xbf16>
      %102 = vector.shape_cast %101 : vector<1x128x128xbf16> to vector<128x128xbf16>
      %cst_82 = arith.constant dense<0.000000e+00> : vector<64x128xf32>
      %103 = tpu.matmul %96, %100, %cst_82 {dimension_numbers = #tpu.dot_dimension_numbers<[1], [0], [0], [1], [0, 0, 1, 1], [], []>} : vector<64x128xbf16>, vector<128x128xbf16>, vector<64x128xf32> -> vector<64x128xf32>
      %cst_83 = arith.constant dense<0.000000e+00> : vector<64x128xf32>
      %104 = tpu.matmul %98, %100, %cst_83 {dimension_numbers = #tpu.dot_dimension_numbers<[1], [0], [0], [1], [0, 0, 1, 1], [], []>} : vector<64x128xbf16>, vector<128x128xbf16>, vector<64x128xf32> -> vector<64x128xf32>
      %105 = arith.addf %103, %104 : vector<64x128xf32>
      %cst_84 = arith.constant dense<0.000000e+00> : vector<64x128xf32>
      %106 = tpu.matmul %96, %102, %cst_84 {dimension_numbers = #tpu.dot_dimension_numbers<[1], [0], [0], [1], [0, 0, 1, 1], [], []>} : vector<64x128xbf16>, vector<128x128xbf16>, vector<64x128xf32> -> vector<64x128xf32>
      %107 = arith.addf %105, %106 : vector<64x128xf32>
      %108 = arith.addf %94, %107 : vector<64x128xf32>
      %c1_85 = arith.constant 1 : index
      %c1_86 = arith.constant 1 : index
      %c0_87 = arith.constant 0 : index
      %109 = vector.load %arg15[%c1_85, %c1_86, %c0_87] : memref<10x16x128xbf16, #tpu.memory_space<vmem>>, vector<8x8x128xbf16>
      %110 = vector.shape_cast %109 : vector<8x8x128xbf16> to vector<64x128xbf16>
      %c1_88 = arith.constant 1 : index
      %c1_89 = arith.constant 1 : index
      %c0_90 = arith.constant 0 : index
      %111 = vector.load %arg16[%c1_88, %c1_89, %c0_90] : memref<10x16x128xbf16, #tpu.memory_space<vmem>>, vector<8x8x128xbf16>
      %112 = vector.shape_cast %111 : vector<8x8x128xbf16> to vector<64x128xbf16>
      %c4 = arith.constant 4 : index
      %c0_91 = arith.constant 0 : index
      %c0_92 = arith.constant 0 : index
      %113 = vector.load %arg6[%c4, %c0_91, %c0_92] : memref<9x128x128xbf16, #tpu.memory_space<vmem>>, vector<1x128x128xbf16>
      %114 = vector.shape_cast %113 : vector<1x128x128xbf16> to vector<128x128xbf16>
      %c4_93 = arith.constant 4 : index
      %c0_94 = arith.constant 0 : index
      %c0_95 = arith.constant 0 : index
      %115 = vector.load %arg7[%c4_93, %c0_94, %c0_95] : memref<9x128x128xbf16, #tpu.memory_space<vmem>>, vector<1x128x128xbf16>
      %116 = vector.shape_cast %115 : vector<1x128x128xbf16> to vector<128x128xbf16>
      %cst_96 = arith.constant dense<0.000000e+00> : vector<64x128xf32>
      %117 = tpu.matmul %110, %114, %cst_96 {dimension_numbers = #tpu.dot_dimension_numbers<[1], [0], [0], [1], [0, 0, 1, 1], [], []>} : vector<64x128xbf16>, vector<128x128xbf16>, vector<64x128xf32> -> vector<64x128xf32>
      %cst_97 = arith.constant dense<0.000000e+00> : vector<64x128xf32>
      %118 = tpu.matmul %112, %114, %cst_97 {dimension_numbers = #tpu.dot_dimension_numbers<[1], [0], [0], [1], [0, 0, 1, 1], [], []>} : vector<64x128xbf16>, vector<128x128xbf16>, vector<64x128xf32> -> vector<64x128xf32>
      %119 = arith.addf %117, %118 : vector<64x128xf32>
      %cst_98 = arith.constant dense<0.000000e+00> : vector<64x128xf32>
      %120 = tpu.matmul %110, %116, %cst_98 {dimension_numbers = #tpu.dot_dimension_numbers<[1], [0], [0], [1], [0, 0, 1, 1], [], []>} : vector<64x128xbf16>, vector<128x128xbf16>, vector<64x128xf32> -> vector<64x128xf32>
      %121 = arith.addf %119, %120 : vector<64x128xf32>
      %122 = arith.addf %108, %121 : vector<64x128xf32>
      %c1_99 = arith.constant 1 : index
      %c2_100 = arith.constant 2 : index
      %c0_101 = arith.constant 0 : index
      %123 = vector.load %arg15[%c1_99, %c2_100, %c0_101] : memref<10x16x128xbf16, #tpu.memory_space<vmem>>, vector<8x8x128xbf16>
      %124 = vector.shape_cast %123 : vector<8x8x128xbf16> to vector<64x128xbf16>
      %c1_102 = arith.constant 1 : index
      %c2_103 = arith.constant 2 : index
      %c0_104 = arith.constant 0 : index
      %125 = vector.load %arg16[%c1_102, %c2_103, %c0_104] : memref<10x16x128xbf16, #tpu.memory_space<vmem>>, vector<8x8x128xbf16>
      %126 = vector.shape_cast %125 : vector<8x8x128xbf16> to vector<64x128xbf16>
      %c5 = arith.constant 5 : index
      %c0_105 = arith.constant 0 : index
      %c0_106 = arith.constant 0 : index
      %127 = vector.load %arg6[%c5, %c0_105, %c0_106] : memref<9x128x128xbf16, #tpu.memory_space<vmem>>, vector<1x128x128xbf16>
      %128 = vector.shape_cast %127 : vector<1x128x128xbf16> to vector<128x128xbf16>
      %c5_107 = arith.constant 5 : index
      %c0_108 = arith.constant 0 : index
      %c0_109 = arith.constant 0 : index
      %129 = vector.load %arg7[%c5_107, %c0_108, %c0_109] : memref<9x128x128xbf16, #tpu.memory_space<vmem>>, vector<1x128x128xbf16>
      %130 = vector.shape_cast %129 : vector<1x128x128xbf16> to vector<128x128xbf16>
      %cst_110 = arith.constant dense<0.000000e+00> : vector<64x128xf32>
      %131 = tpu.matmul %124, %128, %cst_110 {dimension_numbers = #tpu.dot_dimension_numbers<[1], [0], [0], [1], [0, 0, 1, 1], [], []>} : vector<64x128xbf16>, vector<128x128xbf16>, vector<64x128xf32> -> vector<64x128xf32>
      %cst_111 = arith.constant dense<0.000000e+00> : vector<64x128xf32>
      %132 = tpu.matmul %126, %128, %cst_111 {dimension_numbers = #tpu.dot_dimension_numbers<[1], [0], [0], [1], [0, 0, 1, 1], [], []>} : vector<64x128xbf16>, vector<128x128xbf16>, vector<64x128xf32> -> vector<64x128xf32>
      %133 = arith.addf %131, %132 : vector<64x128xf32>
      %cst_112 = arith.constant dense<0.000000e+00> : vector<64x128xf32>
      %134 = tpu.matmul %124, %130, %cst_112 {dimension_numbers = #tpu.dot_dimension_numbers<[1], [0], [0], [1], [0, 0, 1, 1], [], []>} : vector<64x128xbf16>, vector<128x128xbf16>, vector<64x128xf32> -> vector<64x128xf32>
      %135 = arith.addf %133, %134 : vector<64x128xf32>
      %136 = arith.addf %122, %135 : vector<64x128xf32>
      %c2_113 = arith.constant 2 : index
      %c0_114 = arith.constant 0 : index
      %c0_115 = arith.constant 0 : index
      %137 = vector.load %arg15[%c2_113, %c0_114, %c0_115] : memref<10x16x128xbf16, #tpu.memory_space<vmem>>, vector<8x8x128xbf16>
      %138 = vector.shape_cast %137 : vector<8x8x128xbf16> to vector<64x128xbf16>
      %c2_116 = arith.constant 2 : index
      %c0_117 = arith.constant 0 : index
      %c0_118 = arith.constant 0 : index
      %139 = vector.load %arg16[%c2_116, %c0_117, %c0_118] : memref<10x16x128xbf16, #tpu.memory_space<vmem>>, vector<8x8x128xbf16>
      %140 = vector.shape_cast %139 : vector<8x8x128xbf16> to vector<64x128xbf16>
      %c6 = arith.constant 6 : index
      %c0_119 = arith.constant 0 : index
      %c0_120 = arith.constant 0 : index
      %141 = vector.load %arg6[%c6, %c0_119, %c0_120] : memref<9x128x128xbf16, #tpu.memory_space<vmem>>, vector<1x128x128xbf16>
      %142 = vector.shape_cast %141 : vector<1x128x128xbf16> to vector<128x128xbf16>
      %c6_121 = arith.constant 6 : index
      %c0_122 = arith.constant 0 : index
      %c0_123 = arith.constant 0 : index
      %143 = vector.load %arg7[%c6_121, %c0_122, %c0_123] : memref<9x128x128xbf16, #tpu.memory_space<vmem>>, vector<1x128x128xbf16>
      %144 = vector.shape_cast %143 : vector<1x128x128xbf16> to vector<128x128xbf16>
      %cst_124 = arith.constant dense<0.000000e+00> : vector<64x128xf32>
      %145 = tpu.matmul %138, %142, %cst_124 {dimension_numbers = #tpu.dot_dimension_numbers<[1], [0], [0], [1], [0, 0, 1, 1], [], []>} : vector<64x128xbf16>, vector<128x128xbf16>, vector<64x128xf32> -> vector<64x128xf32>
      %cst_125 = arith.constant dense<0.000000e+00> : vector<64x128xf32>
      %146 = tpu.matmul %140, %142, %cst_125 {dimension_numbers = #tpu.dot_dimension_numbers<[1], [0], [0], [1], [0, 0, 1, 1], [], []>} : vector<64x128xbf16>, vector<128x128xbf16>, vector<64x128xf32> -> vector<64x128xf32>
      %147 = arith.addf %145, %146 : vector<64x128xf32>
      %cst_126 = arith.constant dense<0.000000e+00> : vector<64x128xf32>
      %148 = tpu.matmul %138, %144, %cst_126 {dimension_numbers = #tpu.dot_dimension_numbers<[1], [0], [0], [1], [0, 0, 1, 1], [], []>} : vector<64x128xbf16>, vector<128x128xbf16>, vector<64x128xf32> -> vector<64x128xf32>
      %149 = arith.addf %147, %148 : vector<64x128xf32>
      %150 = arith.addf %136, %149 : vector<64x128xf32>
      %c2_127 = arith.constant 2 : index
      %c1_128 = arith.constant 1 : index
      %c0_129 = arith.constant 0 : index
      %151 = vector.load %arg15[%c2_127, %c1_128, %c0_129] : memref<10x16x128xbf16, #tpu.memory_space<vmem>>, vector<8x8x128xbf16>
      %152 = vector.shape_cast %151 : vector<8x8x128xbf16> to vector<64x128xbf16>
      %c2_130 = arith.constant 2 : index
      %c1_131 = arith.constant 1 : index
      %c0_132 = arith.constant 0 : index
      %153 = vector.load %arg16[%c2_130, %c1_131, %c0_132] : memref<10x16x128xbf16, #tpu.memory_space<vmem>>, vector<8x8x128xbf16>
      %154 = vector.shape_cast %153 : vector<8x8x128xbf16> to vector<64x128xbf16>
      %c7 = arith.constant 7 : index
      %c0_133 = arith.constant 0 : index
      %c0_134 = arith.constant 0 : index
      %155 = vector.load %arg6[%c7, %c0_133, %c0_134] : memref<9x128x128xbf16, #tpu.memory_space<vmem>>, vector<1x128x128xbf16>
      %156 = vector.shape_cast %155 : vector<1x128x128xbf16> to vector<128x128xbf16>
      %c7_135 = arith.constant 7 : index
      %c0_136 = arith.constant 0 : index
      %c0_137 = arith.constant 0 : index
      %157 = vector.load %arg7[%c7_135, %c0_136, %c0_137] : memref<9x128x128xbf16, #tpu.memory_space<vmem>>, vector<1x128x128xbf16>
      %158 = vector.shape_cast %157 : vector<1x128x128xbf16> to vector<128x128xbf16>
      %cst_138 = arith.constant dense<0.000000e+00> : vector<64x128xf32>
      %159 = tpu.matmul %152, %156, %cst_138 {dimension_numbers = #tpu.dot_dimension_numbers<[1], [0], [0], [1], [0, 0, 1, 1], [], []>} : vector<64x128xbf16>, vector<128x128xbf16>, vector<64x128xf32> -> vector<64x128xf32>
      %cst_139 = arith.constant dense<0.000000e+00> : vector<64x128xf32>
      %160 = tpu.matmul %154, %156, %cst_139 {dimension_numbers = #tpu.dot_dimension_numbers<[1], [0], [0], [1], [0, 0, 1, 1], [], []>} : vector<64x128xbf16>, vector<128x128xbf16>, vector<64x128xf32> -> vector<64x128xf32>
      %161 = arith.addf %159, %160 : vector<64x128xf32>
      %cst_140 = arith.constant dense<0.000000e+00> : vector<64x128xf32>
      %162 = tpu.matmul %152, %158, %cst_140 {dimension_numbers = #tpu.dot_dimension_numbers<[1], [0], [0], [1], [0, 0, 1, 1], [], []>} : vector<64x128xbf16>, vector<128x128xbf16>, vector<64x128xf32> -> vector<64x128xf32>
      %163 = arith.addf %161, %162 : vector<64x128xf32>
      %164 = arith.addf %150, %163 : vector<64x128xf32>
      %c2_141 = arith.constant 2 : index
      %c2_142 = arith.constant 2 : index
      %c0_143 = arith.constant 0 : index
      %165 = vector.load %arg15[%c2_141, %c2_142, %c0_143] : memref<10x16x128xbf16, #tpu.memory_space<vmem>>, vector<8x8x128xbf16>
      %166 = vector.shape_cast %165 : vector<8x8x128xbf16> to vector<64x128xbf16>
      %c2_144 = arith.constant 2 : index
      %c2_145 = arith.constant 2 : index
      %c0_146 = arith.constant 0 : index
      %167 = vector.load %arg16[%c2_144, %c2_145, %c0_146] : memref<10x16x128xbf16, #tpu.memory_space<vmem>>, vector<8x8x128xbf16>
      %168 = vector.shape_cast %167 : vector<8x8x128xbf16> to vector<64x128xbf16>
      %c8 = arith.constant 8 : index
      %c0_147 = arith.constant 0 : index
      %c0_148 = arith.constant 0 : index
      %169 = vector.load %arg6[%c8, %c0_147, %c0_148] : memref<9x128x128xbf16, #tpu.memory_space<vmem>>, vector<1x128x128xbf16>
      %170 = vector.shape_cast %169 : vector<1x128x128xbf16> to vector<128x128xbf16>
      %c8_149 = arith.constant 8 : index
      %c0_150 = arith.constant 0 : index
      %c0_151 = arith.constant 0 : index
      %171 = vector.load %arg7[%c8_149, %c0_150, %c0_151] : memref<9x128x128xbf16, #tpu.memory_space<vmem>>, vector<1x128x128xbf16>
      %172 = vector.shape_cast %171 : vector<1x128x128xbf16> to vector<128x128xbf16>
      %cst_152 = arith.constant dense<0.000000e+00> : vector<64x128xf32>
      %173 = tpu.matmul %166, %170, %cst_152 {dimension_numbers = #tpu.dot_dimension_numbers<[1], [0], [0], [1], [0, 0, 1, 1], [], []>} : vector<64x128xbf16>, vector<128x128xbf16>, vector<64x128xf32> -> vector<64x128xf32>
      %cst_153 = arith.constant dense<0.000000e+00> : vector<64x128xf32>
      %174 = tpu.matmul %168, %170, %cst_153 {dimension_numbers = #tpu.dot_dimension_numbers<[1], [0], [0], [1], [0, 0, 1, 1], [], []>} : vector<64x128xbf16>, vector<128x128xbf16>, vector<64x128xf32> -> vector<64x128xf32>
      %175 = arith.addf %173, %174 : vector<64x128xf32>
      %cst_154 = arith.constant dense<0.000000e+00> : vector<64x128xf32>
      %176 = tpu.matmul %166, %172, %cst_154 {dimension_numbers = #tpu.dot_dimension_numbers<[1], [0], [0], [1], [0, 0, 1, 1], [], []>} : vector<64x128xbf16>, vector<128x128xbf16>, vector<64x128xf32> -> vector<64x128xf32>
      %177 = arith.addf %175, %176 : vector<64x128xf32>
      %178 = arith.addf %164, %177 : vector<64x128xf32>
      %179 = arith.index_cast %arg1 : i32 to index
      %c0_155 = arith.constant 0 : index
      %c0_156 = arith.constant 0 : index
      %180 = vector.load %arg14[%179, %c0_155, %c0_156] : memref<2x64x128xf32, #tpu.memory_space<vmem>>, vector<1x64x128xf32>
      %181 = vector.shape_cast %180 : vector<1x64x128xf32> to vector<64x128xf32>
      %182 = vector.shape_cast %178 : vector<64x128xf32> to vector<1x64x128xf32>
      tpu.vector_store %arg14[%179, %c0_155, %c0_156], %182 {strides = array<i32>} : memref<2x64x128xf32, #tpu.memory_space<vmem>>, vector<1x64x128xf32>,
      %c2_157 = arith.constant 2 : index
      %c0_158 = arith.constant 0 : index
      %183 = vector.load %arg17[%c2_157, %c0_158] : memref<8x128xf32, #tpu.memory_space<vmem>>, vector<1x128xf32>
      %cst_159 = arith.constant dense<0.000000e+00> : vector<128xf32>
      %184 = vector.multi_reduction <add>, %178, %cst_159 [0] : vector<64x128xf32> to vector<128xf32>
      %185 = vector.shape_cast %184 : vector<128xf32> to vector<1x128xf32>
      %186 = arith.addf %183, %185 : vector<1x128xf32>
      %c2_160 = arith.constant 2 : index
      %c0_161 = arith.constant 0 : index
      %187 = vector.load %arg17[%c2_160, %c0_161] : memref<8x128xf32, #tpu.memory_space<vmem>>, vector<1x128xf32>
      tpu.vector_store %arg17[%c2_160, %c0_161], %186 {strides = array<i32>} : memref<8x128xf32, #tpu.memory_space<vmem>>, vector<1x128xf32>,
      %c3_162 = arith.constant 3 : index
      %c0_163 = arith.constant 0 : index
      %188 = vector.load %arg17[%c3_162, %c0_163] : memref<8x128xf32, #tpu.memory_space<vmem>>, vector<1x128xf32>
      %189 = arith.mulf %178, %178 : vector<64x128xf32>
      %cst_164 = arith.constant dense<0.000000e+00> : vector<128xf32>
      %190 = vector.multi_reduction <add>, %189, %cst_164 [0] : vector<64x128xf32> to vector<128xf32>
      %191 = vector.shape_cast %190 : vector<128xf32> to vector<1x128xf32>
      %192 = arith.addf %188, %191 : vector<1x128xf32>
      %c3_165 = arith.constant 3 : index
      %c0_166 = arith.constant 0 : index
      %193 = vector.load %arg17[%c3_165, %c0_166] : memref<8x128xf32, #tpu.memory_space<vmem>>, vector<1x128xf32>
      tpu.vector_store %arg17[%c3_165, %c0_166], %192 {strides = array<i32>} : memref<8x128xf32, #tpu.memory_space<vmem>>, vector<1x128xf32>,
    } else {
    }
    %c2_i32 = arith.constant 2 : i32
    %16 = arith.cmpi eq, %arg0, %c2_i32 : i32
    %17 = arith.extui %16 : i1 to i32
    %c0_i32_8 = arith.constant 0 : i32
    %18 = arith.cmpi ne, %17, %c0_i32_8 : i32
    scf.if %18 {
      %c2 = arith.constant 2 : index
      %c0 = arith.constant 0 : index
      %19 = vector.load %arg17[%c2, %c0] : memref<8x128xf32, #tpu.memory_space<vmem>>, vector<1x128xf32>
      %cst = arith.constant 7.812500e-03 : f32
      %20 = vector.broadcast %cst : f32 to vector<1x128xf32>
      %21 = arith.mulf %19, %20 : vector<1x128xf32>
      %c3 = arith.constant 3 : index
      %c0_9 = arith.constant 0 : index
      %22 = vector.load %arg17[%c3, %c0_9] : memref<8x128xf32, #tpu.memory_space<vmem>>, vector<1x128xf32>
      %cst_10 = arith.constant 7.812500e-03 : f32
      %23 = vector.broadcast %cst_10 : f32 to vector<1x128xf32>
      %24 = arith.mulf %22, %23 : vector<1x128xf32>
      %25 = arith.mulf %21, %21 : vector<1x128xf32>
      %26 = arith.subf %24, %25 : vector<1x128xf32>
      %cst_11 = arith.constant 9.99999974E-6 : f32
      %27 = vector.broadcast %cst_11 : f32 to vector<1x128xf32>
      %28 = arith.addf %26, %27 : vector<1x128xf32>
      %29 = math.rsqrt %28 : vector<1x128xf32>
      %c0_12 = arith.constant 0 : index
      %c0_13 = arith.constant 0 : index
      %30 = vector.load %arg9[%c0_12, %c0_13] : memref<2x128xf32, #tpu.memory_space<vmem>>, vector<1x128xf32>
      %31 = arith.mulf %29, %30 : vector<1x128xf32>
      %c1 = arith.constant 1 : index
      %c0_14 = arith.constant 0 : index
      %32 = vector.load %arg9[%c1, %c0_14] : memref<2x128xf32, #tpu.memory_space<vmem>>, vector<1x128xf32>
      %33 = arith.mulf %21, %31 : vector<1x128xf32>
      %34 = arith.subf %32, %33 : vector<1x128xf32>
      %35 = arith.index_cast %arg1 : i32 to index
      %c0_15 = arith.constant 0 : index
      %c0_16 = arith.constant 0 : index
      %36 = vector.load %arg14[%35, %c0_15, %c0_16] : memref<2x64x128xf32, #tpu.memory_space<vmem>>, vector<1x64x128xf32>
      %37 = vector.shape_cast %36 : vector<1x64x128xf32> to vector<64x128xf32>
      %38 = vector.broadcast %31 : vector<1x128xf32> to vector<64x128xf32>
      %39 = arith.mulf %37, %38 : vector<64x128xf32>
      %40 = vector.broadcast %34 : vector<1x128xf32> to vector<64x128xf32>
      %41 = arith.addf %39, %40 : vector<64x128xf32>
      %c4 = arith.constant 4 : index
      %c0_17 = arith.constant 0 : index
      %42 = vector.load %arg17[%c4, %c0_17] : memref<8x128xf32, #tpu.memory_space<vmem>>, vector<1x128xf32>
      %cst_18 = arith.constant 7.812500e-03 : f32
      %43 = vector.broadcast %cst_18 : f32 to vector<1x128xf32>
      %44 = arith.mulf %42, %43 : vector<1x128xf32>
      %c5 = arith.constant 5 : index
      %c0_19 = arith.constant 0 : index
      %45 = vector.load %arg17[%c5, %c0_19] : memref<8x128xf32, #tpu.memory_space<vmem>>, vector<1x128xf32>
      %cst_20 = arith.constant 7.812500e-03 : f32
      %46 = vector.broadcast %cst_20 : f32 to vector<1x128xf32>
      %47 = arith.mulf %45, %46 : vector<1x128xf32>
      %48 = arith.mulf %44, %44 : vector<1x128xf32>
      %49 = arith.subf %47, %48 : vector<1x128xf32>
      %cst_21 = arith.constant 9.99999974E-6 : f32
      %50 = vector.broadcast %cst_21 : f32 to vector<1x128xf32>
      %51 = arith.addf %49, %50 : vector<1x128xf32>
      %52 = math.rsqrt %51 : vector<1x128xf32>
      %c0_22 = arith.constant 0 : index
      %c0_23 = arith.constant 0 : index
      %53 = vector.load %arg12[%c0_22, %c0_23] : memref<2x128xf32, #tpu.memory_space<vmem>>, vector<1x128xf32>
      %54 = arith.mulf %52, %53 : vector<1x128xf32>
      %c1_24 = arith.constant 1 : index
      %c0_25 = arith.constant 0 : index
      %55 = vector.load %arg12[%c1_24, %c0_25] : memref<2x128xf32, #tpu.memory_space<vmem>>, vector<1x128xf32>
      %56 = arith.mulf %44, %54 : vector<1x128xf32>
      %57 = arith.subf %55, %56 : vector<1x128xf32>
      %c0_26 = arith.constant 0 : index
      %c3_27 = arith.constant 3 : index
      %c0_28 = arith.constant 0 : index
      %c0_29 = arith.constant 0 : index
      %c0_30 = arith.constant 0 : index
      %58 = vector.load %arg2[%c0_26, %c3_27, %c0_28, %c0_29, %c0_30] : memref<1x4x9x9x8xbf16, #tpu.memory_space<vmem>>, vector<1x1x8x8x8xbf16>
      %59 = vector.shape_cast %58 : vector<1x1x8x8x8xbf16> to vector<8x8x8xbf16>
      %60 = vector.shape_cast %59 : vector<8x8x8xbf16> to vector<64x8xbf16>
      %c0_31 = arith.constant 0 : index
      %c3_32 = arith.constant 3 : index
      %c0_33 = arith.constant 0 : index
      %c0_34 = arith.constant 0 : index
      %c0_35 = arith.constant 0 : index
      %61 = vector.load %arg3[%c0_31, %c3_32, %c0_33, %c0_34, %c0_35] : memref<1x4x9x9x8xbf16, #tpu.memory_space<vmem>>, vector<1x1x8x8x8xbf16>
      %62 = vector.shape_cast %61 : vector<1x1x8x8x8xbf16> to vector<8x8x8xbf16>
      %63 = vector.shape_cast %62 : vector<8x8x8xbf16> to vector<64x8xbf16>
      %c0_36 = arith.constant 0 : index
      %c0_37 = arith.constant 0 : index
      %64 = vector.load %arg10[%c0_36, %c0_37] : memref<8x128xbf16, #tpu.memory_space<vmem>>, vector<8x128xbf16>
      %c0_38 = arith.constant 0 : index
      %c0_39 = arith.constant 0 : index
      %65 = vector.load %arg11[%c0_38, %c0_39] : memref<8x128xbf16, #tpu.memory_space<vmem>>, vector<8x128xbf16>
      %cst_40 = arith.constant dense<0.000000e+00> : vector<64x128xf32>
      %66 = tpu.matmul %60, %64, %cst_40 {dimension_numbers = #tpu.dot_dimension_numbers<[1], [0], [0], [1], [0, 0, 1, 1], [], []>} : vector<64x8xbf16>, vector<8x128xbf16>, vector<64x128xf32> -> vector<64x128xf32>
      %cst_41 = arith.constant dense<0.000000e+00> : vector<64x128xf32>
      %67 = tpu.matmul %63, %64, %cst_41 {dimension_numbers = #tpu.dot_dimension_numbers<[1], [0], [0], [1], [0, 0, 1, 1], [], []>} : vector<64x8xbf16>, vector<8x128xbf16>, vector<64x128xf32> -> vector<64x128xf32>
      %68 = arith.addf %66, %67 : vector<64x128xf32>
      %cst_42 = arith.constant dense<0.000000e+00> : vector<64x128xf32>
      %69 = tpu.matmul %60, %65, %cst_42 {dimension_numbers = #tpu.dot_dimension_numbers<[1], [0], [0], [1], [0, 0, 1, 1], [], []>} : vector<64x8xbf16>, vector<8x128xbf16>, vector<64x128xf32> -> vector<64x128xf32>
      %70 = arith.addf %68, %69 : vector<64x128xf32>
      %71 = vector.broadcast %54 : vector<1x128xf32> to vector<64x128xf32>
      %72 = arith.mulf %70, %71 : vector<64x128xf32>
      %73 = vector.broadcast %57 : vector<1x128xf32> to vector<64x128xf32>
      %74 = arith.addf %72, %73 : vector<64x128xf32>
      %75 = arith.addf %41, %74 : vector<64x128xf32>
      %cst_43 = arith.constant 0.000000e+00 : f32
      %76 = vector.broadcast %cst_43 : f32 to vector<64x128xf32>
      %77 = arith.maximumf %75, %76 : vector<64x128xf32>
      %78 = vector.extract_strided_slice %77 {offsets = [0, 0], sizes = [64, 8], strides = [1, 1]} : vector<64x128xf32> to vector<64x8xf32>
      %c0_44 = arith.constant 0 : index
      %c0_45 = arith.constant 0 : index
      %c0_46 = arith.constant 0 : index
      %79 = vector.load %arg13[%c0_44, %c0_45, %c0_46] : memref<1x64x8xf32, #tpu.memory_space<vmem>>, vector<1x64x8xf32>
      %80 = vector.shape_cast %79 : vector<1x64x8xf32> to vector<64x8xf32>
      %81 = vector.shape_cast %78 : vector<64x8xf32> to vector<1x64x8xf32>
      tpu.vector_store %arg13[%c0_44, %c0_45, %c0_46], %81 {strides = array<i32>} : memref<1x64x8xf32, #tpu.memory_space<vmem>>, vector<1x64x8xf32>,
    } else {
    }
    return
  }
  func.func @transform_0(%arg0: i32, %arg1: i32) -> (i32, i32, i32, i32, i32) {
    %c0_i32 = arith.constant 0 : i32
    %c0_i32_0 = arith.constant 0 : i32
    %c0_i32_1 = arith.constant 0 : i32
    %c0_i32_2 = arith.constant 0 : i32
    %c0_i32_3 = arith.constant 0 : i32
    return %arg1, %c0_i32, %c0_i32_0, %c0_i32_1, %c0_i32_2 : i32, i32, i32, i32, i32
  }
  func.func @transform_1(%arg0: i32, %arg1: i32) -> (i32, i32, i32, i32, i32) {
    %c0_i32 = arith.constant 0 : i32
    %c0_i32_0 = arith.constant 0 : i32
    %c0_i32_1 = arith.constant 0 : i32
    %c0_i32_2 = arith.constant 0 : i32
    %c0_i32_3 = arith.constant 0 : i32
    return %arg1, %c0_i32, %c0_i32_0, %c0_i32_1, %c0_i32_2 : i32, i32, i32, i32, i32
  }
  func.func @transform_2(%arg0: i32, %arg1: i32) -> (i32, i32, i32) {
    %c0_i32 = arith.constant 0 : i32
    %c0_i32_0 = arith.constant 0 : i32
    %c0_i32_1 = arith.constant 0 : i32
    %c0_i32_2 = arith.constant 0 : i32
    return %c0_i32, %c0_i32_0, %c0_i32_1 : i32, i32, i32
  }
  func.func @transform_3(%arg0: i32, %arg1: i32) -> (i32, i32, i32) {
    %c0_i32 = arith.constant 0 : i32
    %c0_i32_0 = arith.constant 0 : i32
    %c0_i32_1 = arith.constant 0 : i32
    %c0_i32_2 = arith.constant 0 : i32
    return %c0_i32, %c0_i32_0, %c0_i32_1 : i32, i32, i32
  }
  func.func @transform_4(%arg0: i32, %arg1: i32) -> (i32, i32, i32) {
    %c0_i32 = arith.constant 0 : i32
    %c0_i32_0 = arith.constant 0 : i32
    %c0_i32_1 = arith.constant 0 : i32
    %c0_i32_2 = arith.constant 0 : i32
    return %c0_i32, %c0_i32_0, %c0_i32_1 : i32, i32, i32
  }
  func.func @transform_5(%arg0: i32, %arg1: i32) -> (i32, i32, i32) {
    %c0_i32 = arith.constant 0 : i32
    %c0_i32_0 = arith.constant 0 : i32
    %c0_i32_1 = arith.constant 0 : i32
    %c0_i32_2 = arith.constant 0 : i32
    return %c0_i32, %c0_i32_0, %c0_i32_1 : i32, i32, i32
  }
  func.func @transform_6(%arg0: i32, %arg1: i32) -> (i32, i32) {
    %c0_i32 = arith.constant 0 : i32
    %c0_i32_0 = arith.constant 0 : i32
    %c0_i32_1 = arith.constant 0 : i32
    return %c0_i32, %c0_i32_0 : i32, i32
  }
  func.func @transform_7(%arg0: i32, %arg1: i32) -> (i32, i32) {
    %c0_i32 = arith.constant 0 : i32
    %c0_i32_0 = arith.constant 0 : i32
    %c0_i32_1 = arith.constant 0 : i32
    return %c0_i32, %c0_i32_0 : i32, i32
  }
  func.func @transform_8(%arg0: i32, %arg1: i32) -> (i32, i32) {
    %c0_i32 = arith.constant 0 : i32
    %c0_i32_0 = arith.constant 0 : i32
    %c0_i32_1 = arith.constant 0 : i32
    return %c0_i32, %c0_i32_0 : i32, i32
  }
  func.func @transform_9(%arg0: i32, %arg1: i32) -> (i32, i32) {
    %c0_i32 = arith.constant 0 : i32
    %c0_i32_0 = arith.constant 0 : i32
    %c0_i32_1 = arith.constant 0 : i32
    return %c0_i32, %c0_i32_0 : i32, i32
  }
  func.func @transform_10(%arg0: i32, %arg1: i32) -> (i32, i32) {
    %c0_i32 = arith.constant 0 : i32
    %c0_i32_0 = arith.constant 0 : i32
    %c0_i32_1 = arith.constant 0 : i32
    return %c0_i32, %c0_i32_0 : i32, i32
  }
  func.func @transform_11(%arg0: i32, %arg1: i32) -> (i32, i32, i32) {
    %c2_i32 = arith.constant 2 : i32
    %0 = arith.cmpi eq, %arg0, %c2_i32 : i32
    %c0_i32 = arith.constant 0 : i32
    %1 = arith.select %0, %arg1, %c0_i32 : i32
    %c0_i32_0 = arith.constant 0 : i32
    %c0_i32_1 = arith.constant 0 : i32
    %c0_i32_2 = arith.constant 0 : i32
    return %1, %c0_i32_0, %c0_i32_1 : i32, i32, i32
  }
}

</mosaic_0001>

<llo_original>
// kernel: basic_block_forward.1
$region0: #{basic_block_forward.1}
  #allocation0 [shape = 'u32[]', space=smem, size = 0x4, offset = 0x4, fixed_abs, tag = 'smem constant byte address 0x4 - core index']
  #allocation1 [shape = 'u32[144,128]{1,0:T(1,128)}', space=vmem, size = 0x12000, scoped, tag = 'internal scratch']
  #allocation2 [shape = 'f32[2,64,128]{2,1,0:T(8,128)}', space=vmem, size = 0x10000, scoped, tag = 'scratch operand']
  #allocation3 [shape = 'bf16[10,16,128]{2,1,0:T(16,128)(2,1)}', space=vmem, size = 0xa000, scoped, tag = 'scratch operand']
  #allocation4 [shape = 'bf16[10,16,128]{2,1,0:T(16,128)(2,1)}', space=vmem, size = 0xa000, scoped, tag = 'scratch operand']
  #allocation5 [shape = 'f32[8,128]{1,0:T(8,128)}', space=vmem, size = 0x1000, scoped, tag = 'scratch operand']
  %s0 = inlined_call_operand.vmem [shape: bf16[2,4,9,9,8], index: 0, kind: input, shape index: {}]
  %s1 = inlined_call_operand.vmem [shape: bf16[2,4,9,9,8], index: 1, kind: input, shape index: {}]
  %s2 = inlined_call_operand.vmem [shape: bf16[9,8,128], index: 2, kind: input, shape index: {}]
  %s3 = inlined_call_operand.vmem [shape: bf16[9,8,128], index: 3, kind: input, shape index: {}]
  %s4 = inlined_call_operand.vmem [shape: bf16[9,128,128], index: 4, kind: input, shape index: {}]
  %s5 = inlined_call_operand.vmem [shape: bf16[9,128,128], index: 5, kind: input, shape index: {}]
  %s6 = inlined_call_operand.vmem [shape: f32[2,128], index: 6, kind: input, shape index: {}]
  %s7 = inlined_call_operand.vmem [shape: f32[2,128], index: 7, kind: input, shape index: {}]
  %s8 = inlined_call_operand.vmem [shape: bf16[8,128], index: 8, kind: input, shape index: {}]
  %s9 = inlined_call_operand.vmem [shape: bf16[8,128], index: 9, kind: input, shape index: {}]
  %s10 = inlined_call_operand.vmem [shape: f32[2,128], index: 10, kind: input, shape index: {}]
  %s11 = inlined_call_operand.vmem [shape: f32[2,64,8], index: 11, kind: output, shape index: {}]
  %s12 = sld [smem:[#allocation0]]
  $region97: #{basic_block_forward.1} parent=0
    _
  %s14 = ssub.s32 1, %s12
  %s15 = scalar_select 0, %s14, %s12
  loop: start=0, step=1, limit=8
  $region2: #{basic_block_forward.1} parent=0 // loop_pre_header
    _
  $region3: #{basic_block_forward.1} parent=0 // loop_header
    %s17 = sphi 0, %s21
    %p18 = scmp.ge.s32.totalorder %s17, 8
    %s24 = sphi 0, %s36
    %s25 = sphi 0, %s32
    %s26 = sphi 0, %s24
    %s27 = sphi 0, %s25
    %s28 = sphi 0, %s26
    %s29 = sphi 0, %s27
    %s39 = sphi 0, %s41
    %s42 = sphi 0, %s39
    %s43 = sphi 0, %s42
    %s59 = sphi 0, %s43
    %s65 = sphi 0, %s67
    %s68 = sphi 0, %s65
    %s69 = sphi 0, %s68
    %s85 = sphi 0, %s69
    %s89 = sphi 0, %s89
    %s91 = sphi 0, %s89
    %s92 = sphi 0, %s91
    %s106 = sphi 0, %s92
    %s110 = sphi 0, %s110
    %s112 = sphi 0, %s110
    %s113 = sphi 0, %s112
    %s127 = sphi 0, %s113
    %s131 = sphi 0, %s131
    %s133 = sphi 0, %s131
    %s134 = sphi 0, %s133
    %s148 = sphi 0, %s134
    %s152 = sphi 0, %s152
    %s154 = sphi 0, %s152
    %s155 = sphi 0, %s154
    %s169 = sphi 0, %s155
    %s173 = sphi 0, %s173
    %s175 = sphi 0, %s173
    %s176 = sphi 0, %s175
    %s190 = sphi 0, %s176
    %s194 = sphi 0, %s194
    %s196 = sphi 0, %s194
    %s197 = sphi 0, %s196
    %s211 = sphi 0, %s197
    %s215 = sphi 0, %s215
    %s217 = sphi 0, %s215
    %s218 = sphi 0, %s217
    %s232 = sphi 0, %s218
    %s236 = sphi 0, %s236
    %s238 = sphi 0, %s236
    %s239 = sphi 0, %s238
    %s253 = sphi 0, %s239
    %s257 = sphi 0, %s257
    %s259 = sphi 0, %s257
    %s260 = sphi 0, %s259
    %s274 = sphi 0, %s260
    %s284 = sphi 0, %s286
    %s287 = sphi 0, %s284
    %s288 = sphi 0, %s287
    %s304 = sphi 0, %s288
  $region4: #{basic_block_forward.1} parent=0 // loop_header_branch
    %20 = sbr.rel (%p18) target = $region8
  $region5: #{basic_block_forward.1} parent=0 // loop_body
    %s22 = ssub.s32 %s17, 1
    %s23 = ssub.s32 %s17, 2
    %s30 = sadd.s32 1, %s25
    %p31 = scmp.ge.s32.totalorder %s30, 2
    %s32 = scalar_select %p31, 0, %s30
    %s33 = sadd.s32 1, %s24
    %s34 = scalar_select %p31, %s33, %s24
    %p35 = scmp.ge.s32.totalorder %s34, 3
    %s36 = scalar_select %p35, 0, %s34
    %s37 = ssub.s32 %s25, %s32
    %p38 = scmp.eq.s32.totalorder %s37, 0
    %s40 = sadd.s32 %s39, 1
    %s41 = scalar_select %p38, %s39, %s40
    %p44 = pneg %p38
    %p45 = scmp.eq.s32.totalorder %s17, 5
    %p46 = por %p44, %p45
    %p47 = scmp.ne.s32.totalorder %s39, %s42
    %p48 = scmp.eq.s32.totalorder %s17, 0
    %p49 = por %p47, %p48
    %p50 = scmp.ne.s32.totalorder %s39, %s42
    %p51 = scmp.eq.s32.totalorder %s22, 5
    %p52 = por %p50, %p51
    %p53 = scmp.ne.s32.totalorder %s42, %s43
    %p54 = scmp.eq.s32.totalorder %s22, 0
    %p55 = por %p53, %p54
    %p56 = scmp.ne.s32.totalorder %s42, %s43
    %p57 = scmp.eq.s32.totalorder %s23, 5
    %p58 = por %p56, %p57
    %p60 = scmp.ne.s32.totalorder %s43, %s59
    %p61 = scmp.eq.s32.totalorder %s23, 0
    %p62 = por %p60, %p61
    %s63 = ssub.s32 %s25, %s32
    %p64 = scmp.eq.s32.totalorder %s63, 0
    %s66 = sadd.s32 %s65, 1
    %s67 = scalar_select %p64, %s65, %s66
    %p70 = pneg %p64
    %p71 = scmp.eq.s32.totalorder %s17, 5
    %p72 = por %p70, %p71
    %p73 = scmp.ne.s32.totalorder %s65, %s68
    %p74 = scmp.eq.s32.totalorder %s17, 0
    %p75 = por %p73, %p74
    %p76 = scmp.ne.s32.totalorder %s65, %s68
    %p77 = scmp.eq.s32.totalorder %s22, 5
    %p78 = por %p76, %p77
    %p79 = scmp.ne.s32.totalorder %s68, %s69
    %p80 = scmp.eq.s32.totalorder %s22, 0
    %p81 = por %p79, %p80
    %p82 = scmp.ne.s32.totalorder %s68, %s69
    %p83 = scmp.eq.s32.totalorder %s23, 5
    %p84 = por %p82, %p83
    %p86 = scmp.ne.s32.totalorder %s69, %s85
    %p87 = scmp.eq.s32.totalorder %s23, 0
    %p88 = por %p86, %p87
    %s90 = sadd.s32 %s89, 1
    %p93 = scmp.eq.s32.totalorder %s17, 5
    %p94 = scmp.ne.s32.totalorder %s89, %s91
    %p95 = scmp.eq.s32.totalorder %s17, 0
    %p96 = por %p94, %p95
    %p97 = scmp.ne.s32.totalorder %s89, %s91
    %p98 = scmp.eq.s32.totalorder %s22, 5
    %p99 = por %p97, %p98
    %p100 = scmp.ne.s32.totalorder %s91, %s92
    %p101 = scmp.eq.s32.totalorder %s22, 0
    %p102 = por %p100, %p101
    %p103 = scmp.ne.s32.totalorder %s91, %s92
    %p104 = scmp.eq.s32.totalorder %s23, 5
    %p105 = por %p103, %p104
    %p107 = scmp.ne.s32.totalorder %s92, %s106
    %p108 = scmp.eq.s32.totalorder %s23, 0
    %p109 = por %p107, %p108
    %s111 = sadd.s32 %s110, 1
    %p114 = scmp.eq.s32.totalorder %s17, 5
    %p115 = scmp.ne.s32.totalorder %s110, %s112
    %p116 = scmp.eq.s32.totalorder %s17, 0
    %p117 = por %p115, %p116
    %p118 = scmp.ne.s32.totalorder %s110, %s112
    %p119 = scmp.eq.s32.totalorder %s22, 5
    %p120 = por %p118, %p119
    %p121 = scmp.ne.s32.totalorder %s112, %s113
    %p122 = scmp.eq.s32.totalorder %s22, 0
    %p123 = por %p121, %p122
    %p124 = scmp.ne.s32.totalorder %s112, %s113
    %p125 = scmp.eq.s32.totalorder %s23, 5
    %p126 = por %p124, %p125
    %p128 = scmp.ne.s32.totalorder %s113, %s127
    %p129 = scmp.eq.s32.totalorder %s23, 0
    %p130 = por %p128, %p129
    %s132 = sadd.s32 %s131, 1
    %p135 = scmp.eq.s32.totalorder %s17, 5
    %p136 = scmp.ne.s32.totalorder %s131, %s133
    %p137 = scmp.eq.s32.totalorder %s17, 0
    %p138 = por %p136, %p137
    %p139 = scmp.ne.s32.totalorder %s131, %s133
    %p140 = scmp.eq.s32.totalorder %s22, 5
    %p141 = por %p139, %p140
    %p142 = scmp.ne.s32.totalorder %s133, %s134
    %p143 = scmp.eq.s32.totalorder %s22, 0
    %p144 = por %p142, %p143
    %p145 = scmp.ne.s32.totalorder %s133, %s134
    %p146 = scmp.eq.s32.totalorder %s23, 5
    %p147 = por %p145, %p146
    %p149 = scmp.ne.s32.totalorder %s134, %s148
    %p150 = scmp.eq.s32.totalorder %s23, 0
    %p151 = por %p149, %p150
    %s153 = sadd.s32 %s152, 1
    %p156 = scmp.eq.s32.totalorder %s17, 5
    %p157 = scmp.ne.s32.totalorder %s152, %s154
    %p158 = scmp.eq.s32.totalorder %s17, 0
    %p159 = por %p157, %p158
    %p160 = scmp.ne.s32.totalorder %s152, %s154
    %p161 = scmp.eq.s32.totalorder %s22, 5
    %p162 = por %p160, %p161
    %p163 = scmp.ne.s32.totalorder %s154, %s155
    %p164 = scmp.eq.s32.totalorder %s22, 0
    %p165 = por %p163, %p164
    %p166 = scmp.ne.s32.totalorder %s154, %s155
    %p167 = scmp.eq.s32.totalorder %s23, 5
    %p168 = por %p166, %p167
    %p170 = scmp.ne.s32.totalorder %s155, %s169
    %p171 = scmp.eq.s32.totalorder %s23, 0
    %p172 = por %p170, %p171
    %s174 = sadd.s32 %s173, 1
    %p177 = scmp.eq.s32.totalorder %s17, 5
    %p178 = scmp.ne.s32.totalorder %s173, %s175
    %p179 = scmp.eq.s32.totalorder %s17, 0
    %p180 = por %p178, %p179
    %p181 = scmp.ne.s32.totalorder %s173, %s175
    %p182 = scmp.eq.s32.totalorder %s22, 5
    %p183 = por %p181, %p182
    %p184 = scmp.ne.s32.totalorder %s175, %s176
    %p185 = scmp.eq.s32.totalorder %s22, 0
    %p186 = por %p184, %p185
    %p187 = scmp.ne.s32.totalorder %s175, %s176
    %p188 = scmp.eq.s32.totalorder %s23, 5
    %p189 = por %p187, %p188
    %p191 = scmp.ne.s32.totalorder %s176, %s190
    %p192 = scmp.eq.s32.totalorder %s23, 0
    %p193 = por %p191, %p192
    %s195 = sadd.s32 %s194, 1
    %p198 = scmp.eq.s32.totalorder %s17, 5
    %p199 = scmp.ne.s32.totalorder %s194, %s196
    %p200 = scmp.eq.s32.totalorder %s17, 0
    %p201 = por %p199, %p200
    %p202 = scmp.ne.s32.totalorder %s194, %s196
    %p203 = scmp.eq.s32.totalorder %s22, 5
    %p204 = por %p202, %p203
    %p205 = scmp.ne.s32.totalorder %s196, %s197
    %p206 = scmp.eq.s32.totalorder %s22, 0
    %p207 = por %p205, %p206
    %p208 = scmp.ne.s32.totalorder %s196, %s197
    %p209 = scmp.eq.s32.totalorder %s23, 5
    %p210 = por %p208, %p209
    %p212 = scmp.ne.s32.totalorder %s197, %s211
    %p213 = scmp.eq.s32.totalorder %s23, 0
    %p214 = por %p212, %p213
    %s216 = sadd.s32 %s215, 1
    %p219 = scmp.eq.s32.totalorder %s17, 5
    %p220 = scmp.ne.s32.totalorder %s215, %s217
    %p221 = scmp.eq.s32.totalorder %s17, 0
    %p222 = por %p220, %p221
    %p223 = scmp.ne.s32.totalorder %s215, %s217
    %p224 = scmp.eq.s32.totalorder %s22, 5
    %p225 = por %p223, %p224
    %p226 = scmp.ne.s32.totalorder %s217, %s218
    %p227 = scmp.eq.s32.totalorder %s22, 0
    %p228 = por %p226, %p227
    %p229 = scmp.ne.s32.totalorder %s217, %s218
    %p230 = scmp.eq.s32.totalorder %s23, 5
    %p231 = por %p229, %p230
    %p233 = scmp.ne.s32.totalorder %s218, %s232
    %p234 = scmp.eq.s32.totalorder %s23, 0
    %p235 = por %p233, %p234
    %s237 = sadd.s32 %s236, 1
    %p240 = scmp.eq.s32.totalorder %s17, 5
    %p241 = scmp.ne.s32.totalorder %s236, %s238
    %p242 = scmp.eq.s32.totalorder %s17, 0
    %p243 = por %p241, %p242
    %p244 = scmp.ne.s32.totalorder %s236, %s238
    %p245 = scmp.eq.s32.totalorder %s22, 5
    %p246 = por %p244, %p245
    %p247 = scmp.ne.s32.totalorder %s238, %s239
    %p248 = scmp.eq.s32.totalorder %s22, 0
    %p249 = por %p247, %p248
    %p250 = scmp.ne.s32.totalorder %s238, %s239
    %p251 = scmp.eq.s32.totalorder %s23, 5
    %p252 = por %p250, %p251
    %p254 = scmp.ne.s32.totalorder %s239, %s253
    %p255 = scmp.eq.s32.totalorder %s23, 0
    %p256 = por %p254, %p255
    %s258 = sadd.s32 %s257, 1
    %p261 = scmp.eq.s32.totalorder %s17, 5
    %p262 = scmp.ne.s32.totalorder %s257, %s259
    %p263 = scmp.eq.s32.totalorder %s17, 0
    %p264 = por %p262, %p263
    %p265 = scmp.ne.s32.totalorder %s257, %s259
    %p266 = scmp.eq.s32.totalorder %s22, 5
    %p267 = por %p265, %p266
    %p268 = scmp.ne.s32.totalorder %s259, %s260
    %p269 = scmp.eq.s32.totalorder %s22, 0
    %p270 = por %p268, %p269
    %p271 = scmp.ne.s32.totalorder %s259, %s260
    %p272 = scmp.eq.s32.totalorder %s23, 5
    %p273 = por %p271, %p272
    %p275 = scmp.ne.s32.totalorder %s260, %s274
    %p276 = scmp.eq.s32.totalorder %s23, 0
    %p277 = por %p275, %p276
    %p278 = scmp.eq.s32.totalorder %s24, 2
    %s279 = scalar_select %p278, %s25, 0
    %p280 = scmp.eq.s32.totalorder %s36, 2
    %s281 = scalar_select %p280, %s32, 0
    %s282 = ssub.s32 %s279, %s281
    %p283 = scmp.eq.s32.totalorder %s282, 0
    %s285 = sadd.s32 %s284, 1
    %s286 = scalar_select %p283, %s284, %s285
    %p289 = pneg %p283
    %p290 = scmp.eq.s32.totalorder %s17, 5
    %p291 = por %p289, %p290
    %p292 = scmp.ne.s32.totalorder %s284, %s287
    %p293 = scmp.eq.s32.totalorder %s17, 0
    %p294 = por %p292, %p293
    %p295 = scmp.ne.s32.totalorder %s284, %s287
    %p296 = scmp.eq.s32.totalorder %s22, 5
    %p297 = por %p295, %p296
    %p298 = scmp.ne.s32.totalorder %s287, %s288
    %p299 = scmp.eq.s32.totalorder %s22, 0
    %p300 = por %p298, %p299
    %p301 = scmp.ne.s32.totalorder %s287, %s288
    %p302 = scmp.eq.s32.totalorder %s23, 5
    %p303 = por %p301, %p302
    %p305 = scmp.ne.s32.totalorder %s288, %s304
    %p306 = scmp.eq.s32.totalorder %s23, 0
    %p307 = por %p305, %p306
    %p308 = scmp.le.s32.totalorder 1, %s17
    %p309 = scmp.lt.s32.totalorder %s17, 7
    %p310 = pnand %p308, %p309
    %p311 = pneg %p310
    // Predicated region
    $region9: #{basic_block_forward.1} parent=5 // pred_check
      _
    $region10: #{basic_block_forward.1} parent=5 // pred_check_branch
      %313 = sbr.rel (%p310) target = $region12
    $region11: #{basic_block_forward.1} parent=5 // pred_region
      %s314 = ssub.s32 %s17, 1
      // Predicated region
      $region13: #{basic_block_forward.1} parent=11 // pred_check
        %p315 = pneg %p102
      $region14: #{basic_block_forward.1} parent=11 // pred_check_branch
        %317 = sbr.rel (%p315) target = $region16
      $region15: #{basic_block_forward.1} parent=11 // pred_region
        _
      $region16: #{basic_block_forward.1} parent=11 // pred_fallthru
        _
      // Predicated region
      $region17: #{basic_block_forward.1} parent=11 // pred_check
        %p318 = pneg %p123
      $region18: #{basic_block_forward.1} parent=11 // pred_check_branch
        %320 = sbr.rel (%p318) target = $region20
      $region19: #{basic_block_forward.1} parent=11 // pred_region
        _
      $region20: #{basic_block_forward.1} parent=11 // pred_fallthru
        _
      // Predicated region
      $region21: #{basic_block_forward.1} parent=11 // pred_check
        %p321 = pneg %p144
      $region22: #{basic_block_forward.1} parent=11 // pred_check_branch
        %323 = sbr.rel (%p321) target = $region24
      $region23: #{basic_block_forward.1} parent=11 // pred_region
        _
      $region24: #{basic_block_forward.1} parent=11 // pred_fallthru
        _
      // Predicated region
      $region25: #{basic_block_forward.1} parent=11 // pred_check
        %p324 = pneg %p165
      $region26: #{basic_block_forward.1} parent=11 // pred_check_branch
        %326 = sbr.rel (%p324) target = $region28
      $region27: #{basic_block_forward.1} parent=11 // pred_region
        _
      $region28: #{basic_block_forward.1} parent=11 // pred_fallthru
        _
      // Predicated region
      $region29: #{basic_block_forward.1} parent=11 // pred_check
        %p327 = pneg %p186
      $region30: #{basic_block_forward.1} parent=11 // pred_check_branch
        %329 = sbr.rel (%p327) target = $region32
      $region31: #{basic_block_forward.1} parent=11 // pred_region
        _
      $region32: #{basic_block_forward.1} parent=11 // pred_fallthru
        _
      // Predicated region
      $region33: #{basic_block_forward.1} parent=11 // pred_check
        %p330 = pneg %p207
      $region34: #{basic_block_forward.1} parent=11 // pred_check_branch
        %332 = sbr.rel (%p330) target = $region36
      $region35: #{basic_block_forward.1} parent=11 // pred_region
        _
      $region36: #{basic_block_forward.1} parent=11 // pred_fallthru
        _
      // Predicated region
      $region37: #{basic_block_forward.1} parent=11 // pred_check
        %p333 = pneg %p228
      $region38: #{basic_block_forward.1} parent=11 // pred_check_branch
        %335 = sbr.rel (%p333) target = $region40
      $region39: #{basic_block_forward.1} parent=11 // pred_region
        _
      $region40: #{basic_block_forward.1} parent=11 // pred_fallthru
        _
      // Predicated region
      $region41: #{basic_block_forward.1} parent=11 // pred_check
        %p336 = pneg %p249
      $region42: #{basic_block_forward.1} parent=11 // pred_check_branch
        %338 = sbr.rel (%p336) target = $region44
      $region43: #{basic_block_forward.1} parent=11 // pred_region
        _
      $region44: #{basic_block_forward.1} parent=11 // pred_fallthru
        _
      // Predicated region
      $region45: #{basic_block_forward.1} parent=11 // pred_check
        %p339 = pneg %p270
      $region46: #{basic_block_forward.1} parent=11 // pred_check_branch
        %341 = sbr.rel (%p339) target = $region48
      $region47: #{basic_block_forward.1} parent=11 // pred_region
        _
      $region48: #{basic_block_forward.1} parent=11 // pred_fallthru
        _
    $region12: #{basic_block_forward.1} parent=5 // pred_fallthru
      _
    %p342 = scmp.lt.s32.totalorder %s17, 6
    // Predicated region
    $region49: #{basic_block_forward.1} parent=5 // pred_check
      %p343 = pneg %p342
    $region50: #{basic_block_forward.1} parent=5 // pred_check_branch
      %345 = sbr.rel (%p343) target = $region52
    $region51: #{basic_block_forward.1} parent=5 // pred_region
      // Predicated region
      $region53: #{basic_block_forward.1} parent=51 // pred_check
        %p346 = pneg %p49
      $region54: #{basic_block_forward.1} parent=51 // pred_check_branch
        %348 = sbr.rel (%p346) target = $region56
      $region55: #{basic_block_forward.1} parent=51 // pred_region
        %p349 = scmp.lt.s32.totalorder %s25, 1
        %s350 = scalar_select %p349, %s25, 1
        %s351 = smul.addr %s350, 72
        %s352 = smul.addr %s351, 4
        %s353 = scalar_lea.vmem %s0, %s352
      $region56: #{basic_block_forward.1} parent=51 // pred_fallthru
        _
      // Predicated region
      $region57: #{basic_block_forward.1} parent=51 // pred_check
        %p354 = pneg %p75
      $region58: #{basic_block_forward.1} parent=51 // pred_check_branch
        %356 = sbr.rel (%p354) target = $region60
      $region59: #{basic_block_forward.1} parent=51 // pred_region
        %p357 = scmp.lt.s32.totalorder %s25, 1
        %s358 = scalar_select %p357, %s25, 1
        %s359 = smul.addr %s358, 72
        %s360 = smul.addr %s359, 4
        %s361 = scalar_lea.vmem %s1, %s360
      $region60: #{basic_block_forward.1} parent=51 // pred_fallthru
        _
    $region52: #{basic_block_forward.1} parent=5 // pred_fallthru
      _
    %p362 = scmp.le.s32.totalorder 1, %s17
    %p363 = scmp.lt.s32.totalorder %s17, 7
    %p364 = pnand %p362, %p363
    %p365 = pneg %p364
    // Predicated region
    $region61: #{basic_block_forward.1} parent=5 // pred_check
      _
    $region62: #{basic_block_forward.1} parent=5 // pred_check_branch
      %367 = sbr.rel (%p364) target = $region64
    $region63: #{basic_block_forward.1} parent=5 // pred_region
      %s368 = ssub.s32 %s17, 1
      %p369 = scmp.lt.s32.totalorder %s27, 1
      %s370 = scalar_select %p369, %s27, 1
      %s371 = smul.addr %s370, 72
      %s372 = smul.addr %s371, 4
      %s373 = scalar_lea.vmem %s0, %s372
      %p374 = pneg %p55
      %p375 = pneg %p52
      %p376 = scmp.lt.s32.totalorder %s27, 1
      %s377 = scalar_select %p376, %s27, 1
      %s378 = smul.addr %s377, 72
      %s379 = smul.addr %s378, 4
      %s380 = scalar_lea.vmem %s1, %s379
      %p381 = pneg %p81
      %p382 = pneg %p78
      %p383 = pneg %p102
      %p384 = pneg %p99
      %p385 = pneg %p123
      %p386 = pneg %p120
      %p387 = pneg %p144
      %p388 = pneg %p141
      %p389 = pneg %p165
      %p390 = pneg %p162
      %p391 = pneg %p186
      %p392 = pneg %p183
      %p393 = pneg %p207
      %p394 = pneg %p204
      %p395 = pneg %p228
      %p396 = pneg %p225
      %p397 = pneg %p249
      %p398 = pneg %p246
      %p399 = pneg %p270
      %p400 = pneg %p267
      %p401 = pneg %p300
      %p402 = pneg %p297
      %p403 = scmp.eq.s32.totalorder %s26, 2
      %s404 = scalar_select %p403, %s27, 0
      %p405 = scmp.lt.s32.totalorder %s404, 1
      %s406 = scalar_select %p405, %s404, 1
      %s407 = smul.addr %s406, 8
      %s408 = smul.addr %s407, 8
      %s409 = scalar_lea.vmem %s11, %s408
      %p410 = scmp.lt.s32.totalorder %s27, 1
      %s411 = scalar_select %p410, %s27, 1
      %s412 = smul.addr %s411, 72
      %s413 = smul.addr %s412, 4
      %s414 = scalar_lea.vmem %s0, %s413
      %p415 = scmp.lt.s32.totalorder %s27, 1
      %s416 = scalar_select %p415, %s27, 1
      %s417 = smul.addr %s416, 72
      %s418 = smul.addr %s417, 4
      %s419 = scalar_lea.vmem %s1, %s418
      %p420 = scmp.eq.s32.totalorder %s26, 2
      %s421 = scalar_select %p420, %s27, 0
      %p422 = scmp.lt.s32.totalorder %s421, 1
      %s423 = scalar_select %p422, %s421, 1
      %s424 = smul.addr %s423, 8
      %s425 = smul.addr %s424, 8
      %s426 = scalar_lea.vmem %s11, %s425
      %p427 = scmp.eq.s32.totalorder %s26, 2
      %s428 = scalar_select %p427, %s27, 0
      %p430 = scmp.eq.s32.totalorder %s26, 0
      %p431 = scmp.eq.s32.totalorder %s27, 0
      %p432 = pnand %p430, %p431
      %p433 = pneg %p432
      // Predicated region
      $region65: #{basic_block_forward.1} parent=63 // pred_check
        _
      $region66: #{basic_block_forward.1} parent=63 // pred_check_branch
        %435 = sbr.rel (%p432) target = $region68
      $region67: #{basic_block_forward.1} parent=63 // pred_region
        %436 = vst [vmem:[#allocation5] sm:$0xff] 0.0
      $region68: #{basic_block_forward.1} parent=63 // pred_fallthru
        _
      // Predicated region
      $region69: #{basic_block_forward.1} parent=63 // pred_check
        %p437 = pneg %p430
      $region70: #{basic_block_forward.1} parent=63 // pred_check_branch
        %439 = sbr.rel (%p437) target = $region72
      $region71: #{basic_block_forward.1} parent=63 // pred_region
        %v440 = vld [vmem:[%s414] sm:$0xf]
        %v441 = vld [vmem:[%s414 + $0x8] sm:$0xf]
        %v442 = vld [vmem:[%s414 + $0x10] sm:$0xf]
        %v443 = vld [vmem:[%s414 + $0x18] sm:$0xf]
        %v444 = vld [vmem:[%s414 + $0x20] sm:$0xf]
        %v445 = vld [vmem:[%s414 + $0x28] sm:$0xf]
        %v446 = vld [vmem:[%s414 + $0x30] sm:$0xf]
        %v447 = vld [vmem:[%s414 + $0x38] sm:$0xf]
        %v448 = vld [vmem:[%s419] sm:$0xf]
        %v449 = vld [vmem:[%s419 + $0x8] sm:$0xf]
        %v450 = vld [vmem:[%s419 + $0x10] sm:$0xf]
        %v451 = vld [vmem:[%s419 + $0x18] sm:$0xf]
        %v452 = vld [vmem:[%s419 + $0x20] sm:$0xf]
        %v453 = vld [vmem:[%s419 + $0x28] sm:$0xf]
        %v454 = vld [vmem:[%s419 + $0x30] sm:$0xf]
        %v455 = vld [vmem:[%s419 + $0x38] sm:$0xf]
        %v456 = vld [vmem:[%s2] sm:$0xf]
        %v457 = vld [vmem:[%s3] sm:$0xf]
        %v466 = vunpack.c.l.b16 %v448
        %v467 = vunpack.c.l.b16 %v449
        %v468 = vunpack.c.l.b16 %v450
        %v469 = vunpack.c.l.b16 %v451
        %v470 = vunpack.c.l.b16 %v452
        %v471 = vunpack.c.l.b16 %v453
        %v472 = vunpack.c.l.b16 %v454
        %v473 = vunpack.c.l.b16 %v455
        %v474 = vpack.c.b16 %v467, %v466
        %v475 = vpack.c.b16 %v469, %v468
        %v476 = vpack.c.b16 %v471, %v470
        %v477 = vpack.c.b16 %v473, %v472
        %vm478 = vcmask 64512
        %v480 = vsel %vm478, %v474, 0
        %v483 = vsel %vm478, %v475, 0
        %v486 = vsel %vm478, %v476, 0
        %v489 = vsel %vm478, %v477, 0
        %vm491 = vcmask 1043456
        %v493 = vsel %vm491, %v456, 0
        %495 = vmatprep.subr.bf16.mxu0 0
        %496 = vmatpush1.bf16.msra.mxu0 %v493
        %497 = vmatprep.subr.bf16.mxu0 0
        %498 = vmatpush1.bf16.msra.mxu0 0
        %499 = vmatprep.subr.bf16.mxu0 0
        %500 = vmatpush1.bf16.msra.mxu0 0
        %501 = vmatprep.subr.bf16.mxu0 0
        %502 = vmatpush1.bf16.msra.mxu0 0
        %503 = vmatprep.subr.bf16.mxu0 0
        %504 = vmatpush1.bf16.msra.mxu0 0
        %505 = vmatprep.subr.bf16.mxu0 0
        %506 = vmatpush1.bf16.msra.mxu0 0
        %507 = vmatprep.subr.bf16.mxu0 0
        %508 = vmatpush1.bf16.msra.mxu0 0
        %509 = vmatprep.subr.bf16.mxu0 0
        %510 = vmatpush1.bf16.msra.mxu0 0
        %511 = vmatprep.subr.bf16.mxu0 0
        %512 = vmatpush1.bf16.msra.mxu0 0
        %513 = vmatprep.subr.bf16.mxu0 0
        %514 = vmatpush1.bf16.msra.mxu0 0
        %515 = vmatprep.subr.bf16.mxu0 0
        %516 = vmatpush1.bf16.msra.mxu0 0
        %517 = vmatprep.subr.bf16.mxu0 0
        %518 = vmatpush1.bf16.msra.mxu0 0
        %519 = vmatprep.subr.bf16.mxu0 0
        %520 = vmatpush1.bf16.msra.mxu0 0
        %521 = vmatprep.subr.bf16.mxu0 0
        %522 = vmatpush1.bf16.msra.mxu0 0
        %523 = vmatprep.subr.bf16.mxu0 0
        %524 = vmatpush1.bf16.msra.mxu0 0
        %525 = vmatprep.subr.bf16.mxu0 0
        %526 = vmatpush1.bf16.msra.mxu0 0
        %527 = vmatprep.mubr.bf16.mxu0 0
        %528 = vmatmul.mubr.bf16.gmra.mrb[0].mxu0 %v480
        %v529 = vpop.f32.mrb[0].mxu0
        %v530 = vadd.f32 0.0, %v529
        %v531 = vpop.f32.mrb[0].mxu0
        %v532 = vpop.f32.mrb[0].mxu0
        %v533 = vadd.f32 0.0, %v532
        %v534 = vpop.f32.mrb[0].mxu0
        %535 = vmatprep.mubr.bf16.mxu0 0
        %536 = vmatmul.mubr.bf16.gmra.mrb[0].mxu0 %v483
        %v537 = vpop.f32.mrb[0].mxu0
        %v538 = vadd.f32 0.0, %v537
        %v539 = vpop.f32.mrb[0].mxu0
        %v540 = vpop.f32.mrb[0].mxu0
        %v541 = vadd.f32 0.0, %v540
        %v542 = vpop.f32.mrb[0].mxu0
        %543 = vmatprep.mubr.bf16.mxu0 0
        %544 = vmatmul.mubr.bf16.gmra.mrb[0].mxu0 %v486
        %v545 = vpop.f32.mrb[0].mxu0
        %v546 = vadd.f32 0.0, %v545
        %v547 = vpop.f32.mrb[0].mxu0
        %v548 = vpop.f32.mrb[0].mxu0
        %v549 = vadd.f32 0.0, %v548
        %v550 = vpop.f32.mrb[0].mxu0
        %551 = vmatprep.mubr.bf16.mxu0 0
        %552 = vmatmul.mubr.bf16.gmra.mrb[0].mxu0 %v489
        %v553 = vpop.f32.mrb[0].mxu0
        %v554 = vadd.f32 0.0, %v553
        %v555 = vpop.f32.mrb[0].mxu0
        %v556 = vpop.f32.mrb[0].mxu0
        %v557 = vadd.f32 0.0, %v556
        %v558 = vpop.f32.mrb[0].mxu0
        %559 = vdwg.mxu0
        %v568 = vunpack.c.l.b16 %v440
        %v569 = vunpack.c.l.b16 %v441
        %v570 = vunpack.c.l.b16 %v442
        %v571 = vunpack.c.l.b16 %v443
        %v572 = vunpack.c.l.b16 %v444
        %v573 = vunpack.c.l.b16 %v445
        %v574 = vunpack.c.l.b16 %v446
        %v575 = vunpack.c.l.b16 %v447
        %v576 = vpack.c.b16 %v569, %v568
        %v577 = vpack.c.b16 %v571, %v570
        %v578 = vpack.c.b16 %v573, %v572
        %v579 = vpack.c.b16 %v575, %v574
        %v581 = vsel %vm478, %v576, 0
        %v584 = vsel %vm478, %v577, 0
        %v587 = vsel %vm478, %v578, 0
        %v590 = vsel %vm478, %v579, 0
        %592 = vmatprep.subr.bf16.mxu0 0
        %593 = vmatpush1.bf16.msra.mxu0 %v493
        %594 = vmatprep.subr.bf16.mxu0 0
        %595 = vmatpush1.bf16.msra.mxu0 0
        %596 = vmatprep.subr.bf16.mxu0 0
        %597 = vmatpush1.bf16.msra.mxu0 0
        %598 = vmatprep.subr.bf16.mxu0 0
        %599 = vmatpush1.bf16.msra.mxu0 0
        %600 = vmatprep.subr.bf16.mxu0 0
        %601 = vmatpush1.bf16.msra.mxu0 0
        %602 = vmatprep.subr.bf16.mxu0 0
        %603 = vmatpush1.bf16.msra.mxu0 0
        %604 = vmatprep.subr.bf16.mxu0 0
        %605 = vmatpush1.bf16.msra.mxu0 0
        %606 = vmatprep.subr.bf16.mxu0 0
        %607 = vmatpush1.bf16.msra.mxu0 0
        %608 = vmatprep.subr.bf16.mxu0 0
        %609 = vmatpush1.bf16.msra.mxu0 0
        %610 = vmatprep.subr.bf16.mxu0 0
        %611 = vmatpush1.bf16.msra.mxu0 0
        %612 = vmatprep.subr.bf16.mxu0 0
        %613 = vmatpush1.bf16.msra.mxu0 0
        %614 = vmatprep.subr.bf16.mxu0 0
        %615 = vmatpush1.bf16.msra.mxu0 0
        %616 = vmatprep.subr.bf16.mxu0 0
        %617 = vmatpush1.bf16.msra.mxu0 0
        %618 = vmatprep.subr.bf16.mxu0 0
        %619 = vmatpush1.bf16.msra.mxu0 0
        %620 = vmatprep.subr.bf16.mxu0 0
        %621 = vmatpush1.bf16.msra.mxu0 0
        %622 = vmatprep.subr.bf16.mxu0 0
        %623 = vmatpush1.bf16.msra.mxu0 0
        %624 = vmatprep.mubr.bf16.mxu0 0
        %625 = vmatmul.mubr.bf16.gmra.mrb[0].mxu0 %v581
        %v626 = vpop.f32.mrb[0].mxu0
        %v627 = vadd.f32 %v530, %v626
        %v628 = vpop.f32.mrb[0].mxu0
        %v629 = vpop.f32.mrb[0].mxu0
        %v630 = vadd.f32 %v533, %v629
        %v631 = vpop.f32.mrb[0].mxu0
        %632 = vmatprep.mubr.bf16.mxu0 0
        %633 = vmatmul.mubr.bf16.gmra.mrb[0].mxu0 %v584
        %v634 = vpop.f32.mrb[0].mxu0
        %v635 = vadd.f32 %v538, %v634
        %v636 = vpop.f32.mrb[0].mxu0
        %v637 = vpop.f32.mrb[0].mxu0
        %v638 = vadd.f32 %v541, %v637
        %v639 = vpop.f32.mrb[0].mxu0
        %640 = vmatprep.mubr.bf16.mxu0 0
        %641 = vmatmul.mubr.bf16.gmra.mrb[0].mxu0 %v587
        %v642 = vpop.f32.mrb[0].mxu0
        %v643 = vadd.f32 %v546, %v642
        %v644 = vpop.f32.mrb[0].mxu0
        %v645 = vpop.f32.mrb[0].mxu0
        %v646 = vadd.f32 %v549, %v645
        %v647 = vpop.f32.mrb[0].mxu0
        %648 = vmatprep.mubr.bf16.mxu0 0
        %649 = vmatmul.mubr.bf16.gmra.mrb[0].mxu0 %v590
        %v650 = vpop.f32.mrb[0].mxu0
        %v651 = vadd.f32 %v554, %v650
        %v652 = vpop.f32.mrb[0].mxu0
        %v653 = vpop.f32.mrb[0].mxu0
        %v654 = vadd.f32 %v557, %v653
        %v655 = vpop.f32.mrb[0].mxu0
        %656 = vdwg.mxu0
        %v658 = vsel %vm491, %v457, 0
        %660 = vmatprep.subr.bf16.mxu0 0
        %661 = vmatpush1.bf16.msra.mxu0 %v658
        %662 = vmatprep.subr.bf16.mxu0 0
        %663 = vmatpush1.bf16.msra.mxu0 0
        %664 = vmatprep.subr.bf16.mxu0 0
        %665 = vmatpush1.bf16.msra.mxu0 0
        %666 = vmatprep.subr.bf16.mxu0 0
        %667 = vmatpush1.bf16.msra.mxu0 0
        %668 = vmatprep.subr.bf16.mxu0 0
        %669 = vmatpush1.bf16.msra.mxu0 0
        %670 = vmatprep.subr.bf16.mxu0 0
        %671 = vmatpush1.bf16.msra.mxu0 0
        %672 = vmatprep.subr.bf16.mxu0 0
        %673 = vmatpush1.bf16.msra.mxu0 0
        %674 = vmatprep.subr.bf16.mxu0 0
        %675 = vmatpush1.bf16.msra.mxu0 0
        %676 = vmatprep.subr.bf16.mxu0 0
        %677 = vmatpush1.bf16.msra.mxu0 0
        %678 = vmatprep.subr.bf16.mxu0 0
        %679 = vmatpush1.bf16.msra.mxu0 0
        %680 = vmatprep.subr.bf16.mxu0 0
        %681 = vmatpush1.bf16.msra.mxu0 0
        %682 = vmatprep.subr.bf16.mxu0 0
        %683 = vmatpush1.bf16.msra.mxu0 0
        %684 = vmatprep.subr.bf16.mxu0 0
        %685 = vmatpush1.bf16.msra.mxu0 0
        %686 = vmatprep.subr.bf16.mxu0 0
        %687 = vmatpush1.bf16.msra.mxu0 0
        %688 = vmatprep.subr.bf16.mxu0 0
        %689 = vmatpush1.bf16.msra.mxu0 0
        %690 = vmatprep.subr.bf16.mxu0 0
        %691 = vmatpush1.bf16.msra.mxu0 0
        %692 = vmatprep.mubr.bf16.mxu0 0
        %693 = vmatmul.mubr.bf16.gmra.mrb[0].mxu0 %v581
        %v694 = vpop.f32.mrb[0].mxu0
        %v695 = vadd.f32 0.0, %v694
        %v696 = vpop.f32.mrb[0].mxu0
        %v697 = vpop.f32.mrb[0].mxu0
        %v698 = vadd.f32 0.0, %v697
        %v699 = vpop.f32.mrb[0].mxu0
        %700 = vmatprep.mubr.bf16.mxu0 0
        %701 = vmatmul.mubr.bf16.gmra.mrb[0].mxu0 %v584
        %v702 = vpop.f32.mrb[0].mxu0
        %v703 = vadd.f32 0.0, %v702
        %v704 = vpop.f32.mrb[0].mxu0
        %v705 = vpop.f32.mrb[0].mxu0
        %v706 = vadd.f32 0.0, %v705
        %v707 = vpop.f32.mrb[0].mxu0
        %708 = vmatprep.mubr.bf16.mxu0 0
        %709 = vmatmul.mubr.bf16.gmra.mrb[0].mxu0 %v587
        %v710 = vpop.f32.mrb[0].mxu0
        %v711 = vadd.f32 0.0, %v710
        %v712 = vpop.f32.mrb[0].mxu0
        %v713 = vpop.f32.mrb[0].mxu0
        %v714 = vadd.f32 0.0, %v713
        %v715 = vpop.f32.mrb[0].mxu0
        %716 = vmatprep.mubr.bf16.mxu0 0
        %717 = vmatmul.mubr.bf16.gmra.mrb[0].mxu0 %v590
        %v718 = vpop.f32.mrb[0].mxu0
        %v719 = vadd.f32 0.0, %v718
        %v720 = vpop.f32.mrb[0].mxu0
        %v721 = vpop.f32.mrb[0].mxu0
        %v722 = vadd.f32 0.0, %v721
        %v723 = vpop.f32.mrb[0].mxu0
        %724 = vdwg.mxu0
        %v725 = vadd.f32 %v627, %v695
        %v726 = vadd.f32 %v630, %v698
        %v727 = vadd.f32 %v635, %v703
        %v728 = vadd.f32 %v638, %v706
        %v729 = vadd.f32 %v643, %v711
        %v730 = vadd.f32 %v646, %v714
        %v731 = vadd.f32 %v651, %v719
        %v732 = vadd.f32 %v654, %v722
        %v733 = vadd.f32 %v725, 0.0
        %v734 = vadd.f32 %v726, 0.0
        %v735 = vadd.f32 %v727, 0.0
        %v736 = vadd.f32 %v728, 0.0
        %v737 = vadd.f32 %v729, 0.0
        %v738 = vadd.f32 %v730, 0.0
        %v739 = vadd.f32 %v731, 0.0
        %v740 = vadd.f32 %v732, 0.0
        %s741 = scalar_lea.vmem %s414, 72
        %v742 = vld [vmem:[%s741] sm:$0xf]
        %v743 = vld [vmem:[%s741 + $0x8] sm:$0xf]
        %v744 = vld [vmem:[%s741 + $0x10] sm:$0xf]
        %v745 = vld [vmem:[%s741 + $0x18] sm:$0xf]
        %v746 = vld [vmem:[%s741 + $0x20] sm:$0xf]
        %v747 = vld [vmem:[%s741 + $0x28] sm:$0xf]
        %v748 = vld [vmem:[%s741 + $0x30] sm:$0xf]
        %v749 = vld [vmem:[%s741 + $0x38] sm:$0xf]
        %s750 = scalar_lea.vmem %s419, 72
        %v751 = vld [vmem:[%s750] sm:$0xf]
        %v752 = vld [vmem:[%s750 + $0x8] sm:$0xf]
        %v753 = vld [vmem:[%s750 + $0x10] sm:$0xf]
        %v754 = vld [vmem:[%s750 + $0x18] sm:$0xf]
        %v755 = vld [vmem:[%s750 + $0x20] sm:$0xf]
        %v756 = vld [vmem:[%s750 + $0x28] sm:$0xf]
        %v757 = vld [vmem:[%s750 + $0x30] sm:$0xf]
        %v758 = vld [vmem:[%s750 + $0x38] sm:$0xf]
        %s759 = scalar_lea.vmem %s2, 4
        %v760 = vld [vmem:[%s759] sm:$0xf]
        %s761 = scalar_lea.vmem %s3, 4
        %v762 = vld [vmem:[%s761] sm:$0xf]
        %v771 = vunpack.c.l.b16 %v751
        %v772 = vunpack.c.l.b16 %v752
        %v773 = vunpack.c.l.b16 %v753
        %v774 = vunpack.c.l.b16 %v754
        %v775 = vunpack.c.l.b16 %v755
        %v776 = vunpack.c.l.b16 %v756
        %v777 = vunpack.c.l.b16 %v757
        %v778 = vunpack.c.l.b16 %v758
        %v779 = vpack.c.b16 %v772, %v771
        %v780 = vpack.c.b16 %v774, %v773
        %v781 = vpack.c.b16 %v776, %v775
        %v782 = vpack.c.b16 %v778, %v777
        %v784 = vsel %vm478, %v779, 0
        %v787 = vsel %vm478, %v780, 0
        %v790 = vsel %vm478, %v781, 0
        %v793 = vsel %vm478, %v782, 0
        %v796 = vsel %vm491, %v760, 0
        %798 = vmatprep.subr.bf16.mxu0 0
        %799 = vmatpush1.bf16.msra.mxu0 %v796
        %800 = vmatprep.subr.bf16.mxu0 0
        %801 = vmatpush1.bf16.msra.mxu0 0
        %802 = vmatprep.subr.bf16.mxu0 0
        %803 = vmatpush1.bf16.msra.mxu0 0
        %804 = vmatprep.subr.bf16.mxu0 0
        %805 = vmatpush1.bf16.msra.mxu0 0
        %806 = vmatprep.subr.bf16.mxu0 0
        %807 = vmatpush1.bf16.msra.mxu0 0
        %808 = vmatprep.subr.bf16.mxu0 0
        %809 = vmatpush1.bf16.msra.mxu0 0
        %810 = vmatprep.subr.bf16.mxu0 0
        %811 = vmatpush1.bf16.msra.mxu0 0
        %812 = vmatprep.subr.bf16.mxu0 0
        %813 = vmatpush1.bf16.msra.mxu0 0
        %814 = vmatprep.subr.bf16.mxu0 0
        %815 = vmatpush1.bf16.msra.mxu0 0
        %816 = vmatprep.subr.bf16.mxu0 0
        %817 = vmatpush1.bf16.msra.mxu0 0
        %818 = vmatprep.subr.bf16.mxu0 0
        %819 = vmatpush1.bf16.msra.mxu0 0
        %820 = vmatprep.subr.bf16.mxu0 0
        %821 = vmatpush1.bf16.msra.mxu0 0
        %822 = vmatprep.subr.bf16.mxu0 0
        %823 = vmatpush1.bf16.msra.mxu0 0
        %824 = vmatprep.subr.bf16.mxu0 0
        %825 = vmatpush1.bf16.msra.mxu0 0
        %826 = vmatprep.subr.bf16.mxu0 0
        %827 = vmatpush1.bf16.msra.mxu0 0
        %828 = vmatprep.subr.bf16.mxu0 0
        %829 = vmatpush1.bf16.msra.mxu0 0
        %830 = vmatprep.mubr.bf16.mxu0 0
        %831 = vmatmul.mubr.bf16.gmra.mrb[0].mxu0 %v784
        %v832 = vpop.f32.mrb[0].mxu0
        %v833 = vadd.f32 0.0, %v832
        %v834 = vpop.f32.mrb[0].mxu0
        %v835 = vpop.f32.mrb[0].mxu0
        %v836 = vadd.f32 0.0, %v835
        %v837 = vpop.f32.mrb[0].mxu0
        %838 = vmatprep.mubr.bf16.mxu0 0
        %839 = vmatmul.mubr.bf16.gmra.mrb[0].mxu0 %v787
        %v840 = vpop.f32.mrb[0].mxu0
        %v841 = vadd.f32 0.0, %v840
        %v842 = vpop.f32.mrb[0].mxu0
        %v843 = vpop.f32.mrb[0].mxu0
        %v844 = vadd.f32 0.0, %v843
        %v845 = vpop.f32.mrb[0].mxu0
        %846 = vmatprep.mubr.bf16.mxu0 0
        %847 = vmatmul.mubr.bf16.gmra.mrb[0].mxu0 %v790
        %v848 = vpop.f32.mrb[0].mxu0
        %v849 = vadd.f32 0.0, %v848
        %v850 = vpop.f32.mrb[0].mxu0
        %v851 = vpop.f32.mrb[0].mxu0
        %v852 = vadd.f32 0.0, %v851
        %v853 = vpop.f32.mrb[0].mxu0
        %854 = vmatprep.mubr.bf16.mxu0 0
        %855 = vmatmul.mubr.bf16.gmra.mrb[0].mxu0 %v793
        %v856 = vpop.f32.mrb[0].mxu0
        %v857 = vadd.f32 0.0, %v856
        %v858 = vpop.f32.mrb[0].mxu0
        %v859 = vpop.f32.mrb[0].mxu0
        %v860 = vadd.f32 0.0, %v859
        %v861 = vpop.f32.mrb[0].mxu0
        %862 = vdwg.mxu0
        %v871 = vunpack.c.l.b16 %v742
        %v872 = vunpack.c.l.b16 %v743
        %v873 = vunpack.c.l.b16 %v744
        %v874 = vunpack.c.l.b16 %v745
        %v875 = vunpack.c.l.b16 %v746
        %v876 = vunpack.c.l.b16 %v747
        %v877 = vunpack.c.l.b16 %v748
        %v878 = vunpack.c.l.b16 %v749
        %v879 = vpack.c.b16 %v872, %v871
        %v880 = vpack.c.b16 %v874, %v873
        %v881 = vpack.c.b16 %v876, %v875
        %v882 = vpack.c.b16 %v878, %v877
        %v884 = vsel %vm478, %v879, 0
        %v887 = vsel %vm478, %v880, 0
        %v890 = vsel %vm478, %v881, 0
        %v893 = vsel %vm478, %v882, 0
        %895 = vmatprep.subr.bf16.mxu0 0
        %896 = vmatpush1.bf16.msra.mxu0 %v796
        %897 = vmatprep.subr.bf16.mxu0 0
        %898 = vmatpush1.bf16.msra.mxu0 0
        %899 = vmatprep.subr.bf16.mxu0 0
        %900 = vmatpush1.bf16.msra.mxu0 0
        %901 = vmatprep.subr.bf16.mxu0 0
        %902 = vmatpush1.bf16.msra.mxu0 0
        %903 = vmatprep.subr.bf16.mxu0 0
        %904 = vmatpush1.bf16.msra.mxu0 0
        %905 = vmatprep.subr.bf16.mxu0 0
        %906 = vmatpush1.bf16.msra.mxu0 0
        %907 = vmatprep.subr.bf16.mxu0 0
        %908 = vmatpush1.bf16.msra.mxu0 0
        %909 = vmatprep.subr.bf16.mxu0 0
        %910 = vmatpush1.bf16.msra.mxu0 0
        %911 = vmatprep.subr.bf16.mxu0 0
        %912 = vmatpush1.bf16.msra.mxu0 0
        %913 = vmatprep.subr.bf16.mxu0 0
        %914 = vmatpush1.bf16.msra.mxu0 0
        %915 = vmatprep.subr.bf16.mxu0 0
        %916 = vmatpush1.bf16.msra.mxu0 0
        %917 = vmatprep.subr.bf16.mxu0 0
        %918 = vmatpush1.bf16.msra.mxu0 0
        %919 = vmatprep.subr.bf16.mxu0 0
        %920 = vmatpush1.bf16.msra.mxu0 0
        %921 = vmatprep.subr.bf16.mxu0 0
        %922 = vmatpush1.bf16.msra.mxu0 0
        %923 = vmatprep.subr.bf16.mxu0 0
        %924 = vmatpush1.bf16.msra.mxu0 0
        %925 = vmatprep.subr.bf16.mxu0 0
        %926 = vmatpush1.bf16.msra.mxu0 0
        %927 = vmatprep.mubr.bf16.mxu0 0
        %928 = vmatmul.mubr.bf16.gmra.mrb[0].mxu0 %v884
        %v929 = vpop.f32.mrb[0].mxu0
        %v930 = vadd.f32 %v833, %v929
        %v931 = vpop.f32.mrb[0].mxu0
        %v932 = vpop.f32.mrb[0].mxu0
        %v933 = vadd.f32 %v836, %v932
        %v934 = vpop.f32.mrb[0].mxu0
        %935 = vmatprep.mubr.bf16.mxu0 0
        %936 = vmatmul.mubr.bf16.gmra.mrb[0].mxu0 %v887
        %v937 = vpop.f32.mrb[0].mxu0
        %v938 = vadd.f32 %v841, %v937
        %v939 = vpop.f32.mrb[0].mxu0
        %v940 = vpop.f32.mrb[0].mxu0
        %v941 = vadd.f32 %v844, %v940
        %v942 = vpop.f32.mrb[0].mxu0
        %943 = vmatprep.mubr.bf16.mxu0 0
        %944 = vmatmul.mubr.bf16.gmra.mrb[0].mxu0 %v890
        %v945 = vpop.f32.mrb[0].mxu0
        %v946 = vadd.f32 %v849, %v945
        %v947 = vpop.f32.mrb[0].mxu0
        %v948 = vpop.f32.mrb[0].mxu0
        %v949 = vadd.f32 %v852, %v948
        %v950 = vpop.f32.mrb[0].mxu0
        %951 = vmatprep.mubr.bf16.mxu0 0
        %952 = vmatmul.mubr.bf16.gmra.mrb[0].mxu0 %v893
        %v953 = vpop.f32.mrb[0].mxu0
        %v954 = vadd.f32 %v857, %v953
        %v955 = vpop.f32.mrb[0].mxu0
        %v956 = vpop.f32.mrb[0].mxu0
        %v957 = vadd.f32 %v860, %v956
        %v958 = vpop.f32.mrb[0].mxu0
        %959 = vdwg.mxu0
        %v961 = vsel %vm491, %v762, 0
        %963 = vmatprep.subr.bf16.mxu0 0
        %964 = vmatpush1.bf16.msra.mxu0 %v961
        %965 = vmatprep.subr.bf16.mxu0 0
        %966 = vmatpush1.bf16.msra.mxu0 0
        %967 = vmatprep.subr.bf16.mxu0 0
        %968 = vmatpush1.bf16.msra.mxu0 0
        %969 = vmatprep.subr.bf16.mxu0 0
        %970 = vmatpush1.bf16.msra.mxu0 0
        %971 = vmatprep.subr.bf16.mxu0 0
        %972 = vmatpush1.bf16.msra.mxu0 0
        %973 = vmatprep.subr.bf16.mxu0 0
        %974 = vmatpush1.bf16.msra.mxu0 0
        %975 = vmatprep.subr.bf16.mxu0 0
        %976 = vmatpush1.bf16.msra.mxu0 0
        %977 = vmatprep.subr.bf16.mxu0 0
        %978 = vmatpush1.bf16.msra.mxu0 0
        %979 = vmatprep.subr.bf16.mxu0 0
        %980 = vmatpush1.bf16.msra.mxu0 0
        %981 = vmatprep.subr.bf16.mxu0 0
        %982 = vmatpush1.bf16.msra.mxu0 0
        %983 = vmatprep.subr.bf16.mxu0 0
        %984 = vmatpush1.bf16.msra.mxu0 0
        %985 = vmatprep.subr.bf16.mxu0 0
        %986 = vmatpush1.bf16.msra.mxu0 0
        %987 = vmatprep.subr.bf16.mxu0 0
        %988 = vmatpush1.bf16.msra.mxu0 0
        %989 = vmatprep.subr.bf16.mxu0 0
        %990 = vmatpush1.bf16.msra.mxu0 0
        %991 = vmatprep.subr.bf16.mxu0 0
        %992 = vmatpush1.bf16.msra.mxu0 0
        %993 = vmatprep.subr.bf16.mxu0 0
        %994 = vmatpush1.bf16.msra.mxu0 0
        %995 = vmatprep.mubr.bf16.mxu0 0
        %996 = vmatmul.mubr.bf16.gmra.mrb[0].mxu0 %v884
        %v997 = vpop.f32.mrb[0].mxu0
        %v998 = vadd.f32 0.0, %v997
        %v999 = vpop.f32.mrb[0].mxu0
        %v1000 = vpop.f32.mrb[0].mxu0
        %v1001 = vadd.f32 0.0, %v1000
        %v1002 = vpop.f32.mrb[0].mxu0
        %1003 = vmatprep.mubr.bf16.mxu0 0
        %1004 = vmatmul.mubr.bf16.gmra.mrb[0].mxu0 %v887
        %v1005 = vpop.f32.mrb[0].mxu0
        %v1006 = vadd.f32 0.0, %v1005
        %v1007 = vpop.f32.mrb[0].mxu0
        %v1008 = vpop.f32.mrb[0].mxu0
        %v1009 = vadd.f32 0.0, %v1008
        %v1010 = vpop.f32.mrb[0].mxu0
        %1011 = vmatprep.mubr.bf16.mxu0 0
        %1012 = vmatmul.mubr.bf16.gmra.mrb[0].mxu0 %v890
        %v1013 = vpop.f32.mrb[0].mxu0
        %v1014 = vadd.f32 0.0, %v1013
        %v1015 = vpop.f32.mrb[0].mxu0
        %v1016 = vpop.f32.mrb[0].mxu0
        %v1017 = vadd.f32 0.0, %v1016
        %v1018 = vpop.f32.mrb[0].mxu0
        %1019 = vmatprep.mubr.bf16.mxu0 0
        %1020 = vmatmul.mubr.bf16.gmra.mrb[0].mxu0 %v893
        %v1021 = vpop.f32.mrb[0].mxu0
        %v1022 = vadd.f32 0.0, %v1021
        %v1023 = vpop.f32.mrb[0].mxu0
        %v1024 = vpop.f32.mrb[0].mxu0
        %v1025 = vadd.f32 0.0, %v1024
        %v1026 = vpop.f32.mrb[0].mxu0
        %1027 = vdwg.mxu0
        %v1028 = vadd.f32 %v930, %v998
        %v1029 = vadd.f32 %v933, %v1001
        %v1030 = vadd.f32 %v938, %v1006
        %v1031 = vadd.f32 %v941, %v1009
        %v1032 = vadd.f32 %v946, %v1014
        %v1033 = vadd.f32 %v949, %v1017
        %v1034 = vadd.f32 %v954, %v1022
        %v1035 = vadd.f32 %v957, %v1025
        %v1036 = vadd.f32 %v733, %v1028
        %v1037 = vadd.f32 %v734, %v1029
        %v1038 = vadd.f32 %v735, %v1030
        %v1039 = vadd.f32 %v736, %v1031
        %v1040 = vadd.f32 %v737, %v1032
        %v1041 = vadd.f32 %v738, %v1033
        %v1042 = vadd.f32 %v739, %v1034
        %v1043 = vadd.f32 %v740, %v1035
        %v1044 = vld [vmem:[%s414] sm:$0xf]
        %v1045 = vld [vmem:[%s414 + $0x4] sm:$0x1]
        %v1046 = vld [vmem:[%s414 + $0x8] sm:$0xf]
        %v1047 = vld [vmem:[%s414 + $0xc] sm:$0x1]
        %v1048 = vld [vmem:[%s414 + $0x10] sm:$0xf]
        %v1049 = vld [vmem:[%s414 + $0x14] sm:$0x1]
        %v1050 = vld [vmem:[%s414 + $0x18] sm:$0xf]
        %v1051 = vld [vmem:[%s414 + $0x1c] sm:$0x1]
        %v1052 = vld [vmem:[%s414 + $0x20] sm:$0xf]
        %v1053 = vld [vmem:[%s414 + $0x24] sm:$0x1]
        %v1054 = vld [vmem:[%s414 + $0x28] sm:$0xf]
        %v1055 = vld [vmem:[%s414 + $0x2c] sm:$0x1]
        %v1056 = vld [vmem:[%s414 + $0x30] sm:$0xf]
        %v1057 = vld [vmem:[%s414 + $0x34] sm:$0x1]
        %v1058 = vld [vmem:[%s414 + $0x38] sm:$0xf]
        %v1059 = vld [vmem:[%s414 + $0x3c] sm:$0x1]
        %vm1060 = vsmask.f32 3328
        %vm1061 = vsmask.f32 7440
        %vm1062 = vmor %vm1060, %vm1061
        %v1064 = vshrl.u32 %v1044, 16
        %v1066 = vrot.slane %v1064, 4
        %v1067 = vshll.u32 %v1044, 16
        %v1069 = vrot.slane %v1067, 5
        %v1070 = vor.u32 %v1066, %v1069
        %v1071 = vrot.slane %v1070, 4
        %v1073 = vshll.u32 %v1045, 16
        %v1075 = vrot.slane %v1073, 5
        %v1076 = vsel %vm1062, %v1071, %v1075
        %v1078 = vshrl.u32 %v1046, 16
        %v1080 = vrot.slane %v1078, 4
        %v1081 = vshll.u32 %v1046, 16
        %v1083 = vrot.slane %v1081, 5
        %v1084 = vor.u32 %v1080, %v1083
        %v1085 = vrot.slane %v1084, 4
        %v1087 = vshll.u32 %v1047, 16
        %v1089 = vrot.slane %v1087, 5
        %v1090 = vsel %vm1062, %v1085, %v1089
        %v1092 = vshrl.u32 %v1048, 16
        %v1094 = vrot.slane %v1092, 4
        %v1095 = vshll.u32 %v1048, 16
        %v1097 = vrot.slane %v1095, 5
        %v1098 = vor.u32 %v1094, %v1097
        %v1099 = vrot.slane %v1098, 4
        %v1101 = vshll.u32 %v1049, 16
        %v1103 = vrot.slane %v1101, 5
        %v1104 = vsel %vm1062, %v1099, %v1103
        %v1106 = vshrl.u32 %v1050, 16
        %v1108 = vrot.slane %v1106, 4
        %v1109 = vshll.u32 %v1050, 16
        %v1111 = vrot.slane %v1109, 5
        %v1112 = vor.u32 %v1108, %v1111
        %v1113 = vrot.slane %v1112, 4
        %v1115 = vshll.u32 %v1051, 16
        %v1117 = vrot.slane %v1115, 5
        %v1118 = vsel %vm1062, %v1113, %v1117
        %v1120 = vshrl.u32 %v1052, 16
        %v1122 = vrot.slane %v1120, 4
        %v1123 = vshll.u32 %v1052, 16
        %v1125 = vrot.slane %v1123, 5
        %v1126 = vor.u32 %v1122, %v1125
        %v1127 = vrot.slane %v1126, 4
        %v1129 = vshll.u32 %v1053, 16
        %v1131 = vrot.slane %v1129, 5
        %v1132 = vsel %vm1062, %v1127, %v1131
        %v1134 = vshrl.u32 %v1054, 16
        %v1136 = vrot.slane %v1134, 4
        %v1137 = vshll.u32 %v1054, 16
        %v1139 = vrot.slane %v1137, 5
        %v1140 = vor.u32 %v1136, %v1139
        %v1141 = vrot.slane %v1140, 4
        %v1143 = vshll.u32 %v1055, 16
        %v1145 = vrot.slane %v1143, 5
        %v1146 = vsel %vm1062, %v1141, %v1145
        %v1148 = vshrl.u32 %v1056, 16
        %v1150 = vrot.slane %v1148, 4
        %v1151 = vshll.u32 %v1056, 16
        %v1153 = vrot.slane %v1151, 5
        %v1154 = vor.u32 %v1150, %v1153
        %v1155 = vrot.slane %v1154, 4
        %v1157 = vshll.u32 %v1057, 16
        %v1159 = vrot.slane %v1157, 5
        %v1160 = vsel %vm1062, %v1155, %v1159
        %v1162 = vshrl.u32 %v1058, 16
        %v1164 = vrot.slane %v1162, 4
        %v1165 = vshll.u32 %v1058, 16
        %v1167 = vrot.slane %v1165, 5
        %v1168 = vor.u32 %v1164, %v1167
        %v1169 = vrot.slane %v1168, 4
        %v1171 = vshll.u32 %v1059, 16
        %v1173 = vrot.slane %v1171, 5
        %v1174 = vsel %vm1062, %v1169, %v1173
        %v1175 = vld [vmem:[%s419] sm:$0xf]
        %v1176 = vld [vmem:[%s419 + $0x4] sm:$0x1]
        %v1177 = vld [vmem:[%s419 + $0x8] sm:$0xf]
        %v1178 = vld [vmem:[%s419 + $0xc] sm:$0x1]
        %v1179 = vld [vmem:[%s419 + $0x10] sm:$0xf]
        %v1180 = vld [vmem:[%s419 + $0x14] sm:$0x1]
        %v1181 = vld [vmem:[%s419 + $0x18] sm:$0xf]
        %v1182 = vld [vmem:[%s419 + $0x1c] sm:$0x1]
        %v1183 = vld [vmem:[%s419 + $0x20] sm:$0xf]
        %v1184 = vld [vmem:[%s419 + $0x24] sm:$0x1]
        %v1185 = vld [vmem:[%s419 + $0x28] sm:$0xf]
        %v1186 = vld [vmem:[%s419 + $0x2c] sm:$0x1]
        %v1187 = vld [vmem:[%s419 + $0x30] sm:$0xf]
        %v1188 = vld [vmem:[%s419 + $0x34] sm:$0x1]
        %v1189 = vld [vmem:[%s419 + $0x38] sm:$0xf]
        %v1190 = vld [vmem:[%s419 + $0x3c] sm:$0x1]
        %v1192 = vshrl.u32 %v1175, 16
        %v1194 = vrot.slane %v1192, 4
        %v1195 = vshll.u32 %v1175, 16
        %v1197 = vrot.slane %v1195, 5
        %v1198 = vor.u32 %v1194, %v1197
        %v1199 = vrot.slane %v1198, 4
        %v1201 = vshll.u32 %v1176, 16
        %v1203 = vrot.slane %v1201, 5
        %v1204 = vsel %vm1062, %v1199, %v1203
        %v1206 = vshrl.u32 %v1177, 16
        %v1208 = vrot.slane %v1206, 4
        %v1209 = vshll.u32 %v1177, 16
        %v1211 = vrot.slane %v1209, 5
        %v1212 = vor.u32 %v1208, %v1211
        %v1213 = vrot.slane %v1212, 4
        %v1215 = vshll.u32 %v1178, 16
        %v1217 = vrot.slane %v1215, 5
        %v1218 = vsel %vm1062, %v1213, %v1217
        %v1220 = vshrl.u32 %v1179, 16
        %v1222 = vrot.slane %v1220, 4
        %v1223 = vshll.u32 %v1179, 16
        %v1225 = vrot.slane %v1223, 5
        %v1226 = vor.u32 %v1222, %v1225
        %v1227 = vrot.slane %v1226, 4
        %v1229 = vshll.u32 %v1180, 16
        %v1231 = vrot.slane %v1229, 5
        %v1232 = vsel %vm1062, %v1227, %v1231
        %v1234 = vshrl.u32 %v1181, 16
        %v1236 = vrot.slane %v1234, 4
        %v1237 = vshll.u32 %v1181, 16
        %v1239 = vrot.slane %v1237, 5
        %v1240 = vor.u32 %v1236, %v1239
        %v1241 = vrot.slane %v1240, 4
        %v1243 = vshll.u32 %v1182, 16
        %v1245 = vrot.slane %v1243, 5
        %v1246 = vsel %vm1062, %v1241, %v1245
        %v1248 = vshrl.u32 %v1183, 16
        %v1250 = vrot.slane %v1248, 4
        %v1251 = vshll.u32 %v1183, 16
        %v1253 = vrot.slane %v1251, 5
        %v1254 = vor.u32 %v1250, %v1253
        %v1255 = vrot.slane %v1254, 4
        %v1257 = vshll.u32 %v1184, 16
        %v1259 = vrot.slane %v1257, 5
        %v1260 = vsel %vm1062, %v1255, %v1259
        %v1262 = vshrl.u32 %v1185, 16
        %v1264 = vrot.slane %v1262, 4
        %v1265 = vshll.u32 %v1185, 16
        %v1267 = vrot.slane %v1265, 5
        %v1268 = vor.u32 %v1264, %v1267
        %v1269 = vrot.slane %v1268, 4
        %v1271 = vshll.u32 %v1186, 16
        %v1273 = vrot.slane %v1271, 5
        %v1274 = vsel %vm1062, %v1269, %v1273
        %v1276 = vshrl.u32 %v1187, 16
        %v1278 = vrot.slane %v1276, 4
        %v1279 = vshll.u32 %v1187, 16
        %v1281 = vrot.slane %v1279, 5
        %v1282 = vor.u32 %v1278, %v1281
        %v1283 = vrot.slane %v1282, 4
        %v1285 = vshll.u32 %v1188, 16
        %v1287 = vrot.slane %v1285, 5
        %v1288 = vsel %vm1062, %v1283, %v1287
        %v1290 = vshrl.u32 %v1189, 16
        %v1292 = vrot.slane %v1290, 4
        %v1293 = vshll.u32 %v1189, 16
        %v1295 = vrot.slane %v1293, 5
        %v1296 = vor.u32 %v1292, %v1295
        %v1297 = vrot.slane %v1296, 4
        %v1299 = vshll.u32 %v1190, 16
        %v1301 = vrot.slane %v1299, 5
        %v1302 = vsel %vm1062, %v1297, %v1301
        %s1303 = scalar_lea.vmem %s2, 8
        %v1304 = vld [vmem:[%s1303] sm:$0xf]
        %s1305 = scalar_lea.vmem %s3, 8
        %v1306 = vld [vmem:[%s1305] sm:$0xf]
        %v1307 = vunpack.c.l.b16 %v1204
        %v1308 = vunpack.c.l.b16 %v1218
        %v1309 = vunpack.c.l.b16 %v1232
        %v1310 = vunpack.c.l.b16 %v1246
        %v1311 = vunpack.c.l.b16 %v1260
        %v1312 = vunpack.c.l.b16 %v1274
        %v1313 = vunpack.c.l.b16 %v1288
        %v1314 = vunpack.c.l.b16 %v1302
        %v1315 = vpack.c.b16 %v1308, %v1307
        %v1316 = vpack.c.b16 %v1310, %v1309
        %v1317 = vpack.c.b16 %v1312, %v1311
        %v1318 = vpack.c.b16 %v1314, %v1313
        %v1320 = vsel %vm478, %v1315, 0
        %v1323 = vsel %vm478, %v1316, 0
        %v1326 = vsel %vm478, %v1317, 0
        %v1329 = vsel %vm478, %v1318, 0
        %v1332 = vsel %vm491, %v1304, 0
        %1334 = vmatprep.subr.bf16.mxu0 0
        %1335 = vmatpush1.bf16.msra.mxu0 %v1332
        %1336 = vmatprep.subr.bf16.mxu0 0
        %1337 = vmatpush1.bf16.msra.mxu0 0
        %1338 = vmatprep.subr.bf16.mxu0 0
        %1339 = vmatpush1.bf16.msra.mxu0 0
        %1340 = vmatprep.subr.bf16.mxu0 0
        %1341 = vmatpush1.bf16.msra.mxu0 0
        %1342 = vmatprep.subr.bf16.mxu0 0
        %1343 = vmatpush1.bf16.msra.mxu0 0
        %1344 = vmatprep.subr.bf16.mxu0 0
        %1345 = vmatpush1.bf16.msra.mxu0 0
        %1346 = vmatprep.subr.bf16.mxu0 0
        %1347 = vmatpush1.bf16.msra.mxu0 0
        %1348 = vmatprep.subr.bf16.mxu0 0
        %1349 = vmatpush1.bf16.msra.mxu0 0
        %1350 = vmatprep.subr.bf16.mxu0 0
        %1351 = vmatpush1.bf16.msra.mxu0 0
        %1352 = vmatprep.subr.bf16.mxu0 0
        %1353 = vmatpush1.bf16.msra.mxu0 0
        %1354 = vmatprep.subr.bf16.mxu0 0
        %1355 = vmatpush1.bf16.msra.mxu0 0
        %1356 = vmatprep.subr.bf16.mxu0 0
        %1357 = vmatpush1.bf16.msra.mxu0 0
        %1358 = vmatprep.subr.bf16.mxu0 0
        %1359 = vmatpush1.bf16.msra.mxu0 0
        %1360 = vmatprep.subr.bf16.mxu0 0
        %1361 = vmatpush1.bf16.msra.mxu0 0
        %1362 = vmatprep.subr.bf16.mxu0 0
        %1363 = vmatpush1.bf16.msra.mxu0 0
        %1364 = vmatprep.subr.bf16.mxu0 0
        %1365 = vmatpush1.bf16.msra.mxu0 0
        %1366 = vmatprep.mubr.bf16.mxu0 0
        %1367 = vmatmul.mubr.bf16.gmra.mrb[0].mxu0 %v1320
        %v1368 = vpop.f32.mrb[0].mxu0
        %v1369 = vadd.f32 0.0, %v1368
        %v1370 = vpop.f32.mrb[0].mxu0
        %v1371 = vpop.f32.mrb[0].mxu0
        %v1372 = vadd.f32 0.0, %v1371
        %v1373 = vpop.f32.mrb[0].mxu0
        %1374 = vmatprep.mubr.bf16.mxu0 0
        %1375 = vmatmul.mubr.bf16.gmra.mrb[0].mxu0 %v1323
        %v1376 = vpop.f32.mrb[0].mxu0
        %v1377 = vadd.f32 0.0, %v1376
        %v1378 = vpop.f32.mrb[0].mxu0
        %v1379 = vpop.f32.mrb[0].mxu0
        %v1380 = vadd.f32 0.0, %v1379
        %v1381 = vpop.f32.mrb[0].mxu0
        %1382 = vmatprep.mubr.bf16.mxu0 0
        %1383 = vmatmul.mubr.bf16.gmra.mrb[0].mxu0 %v1326
        %v1384 = vpop.f32.mrb[0].mxu0
        %v1385 = vadd.f32 0.0, %v1384
        %v1386 = vpop.f32.mrb[0].mxu0
        %v1387 = vpop.f32.mrb[0].mxu0
        %v1388 = vadd.f32 0.0, %v1387
        %v1389 = vpop.f32.mrb[0].mxu0
        %1390 = vmatprep.mubr.bf16.mxu0 0
        %1391 = vmatmul.mubr.bf16.gmra.mrb[0].mxu0 %v1329
        %v1392 = vpop.f32.mrb[0].mxu0
        %v1393 = vadd.f32 0.0, %v1392
        %v1394 = vpop.f32.mrb[0].mxu0
        %v1395 = vpop.f32.mrb[0].mxu0
        %v1396 = vadd.f32 0.0, %v1395
        %v1397 = vpop.f32.mrb[0].mxu0
        %1398 = vdwg.mxu0
        %v1399 = vunpack.c.l.b16 %v1076
        %v1400 = vunpack.c.l.b16 %v1090
        %v1401 = vunpack.c.l.b16 %v1104
        %v1402 = vunpack.c.l.b16 %v1118
        %v1403 = vunpack.c.l.b16 %v1132
        %v1404 = vunpack.c.l.b16 %v1146
        %v1405 = vunpack.c.l.b16 %v1160
        %v1406 = vunpack.c.l.b16 %v1174
        %v1407 = vpack.c.b16 %v1400, %v1399
        %v1408 = vpack.c.b16 %v1402, %v1401
        %v1409 = vpack.c.b16 %v1404, %v1403
        %v1410 = vpack.c.b16 %v1406, %v1405
        %v1412 = vsel %vm478, %v1407, 0
        %v1415 = vsel %vm478, %v1408, 0
        %v1418 = vsel %vm478, %v1409, 0
        %v1421 = vsel %vm478, %v1410, 0
        %1423 = vmatprep.subr.bf16.mxu0 0
        %1424 = vmatpush1.bf16.msra.mxu0 %v1332
        %1425 = vmatprep.subr.bf16.mxu0 0
        %1426 = vmatpush1.bf16.msra.mxu0 0
        %1427 = vmatprep.subr.bf16.mxu0 0
        %1428 = vmatpush1.bf16.msra.mxu0 0
        %1429 = vmatprep.subr.bf16.mxu0 0
        %1430 = vmatpush1.bf16.msra.mxu0 0
        %1431 = vmatprep.subr.bf16.mxu0 0
        %1432 = vmatpush1.bf16.msra.mxu0 0
        %1433 = vmatprep.subr.bf16.mxu0 0
        %1434 = vmatpush1.bf16.msra.mxu0 0
        %1435 = vmatprep.subr.bf16.mxu0 0
        %1436 = vmatpush1.bf16.msra.mxu0 0
        %1437 = vmatprep.subr.bf16.mxu0 0
        %1438 = vmatpush1.bf16.msra.mxu0 0
        %1439 = vmatprep.subr.bf16.mxu0 0
        %1440 = vmatpush1.bf16.msra.mxu0 0
        %1441 = vmatprep.subr.bf16.mxu0 0
        %1442 = vmatpush1.bf16.msra.mxu0 0
        %1443 = vmatprep.subr.bf16.mxu0 0
        %1444 = vmatpush1.bf16.msra.mxu0 0
        %1445 = vmatprep.subr.bf16.mxu0 0
        %1446 = vmatpush1.bf16.msra.mxu0 0
        %1447 = vmatprep.subr.bf16.mxu0 0
        %1448 = vmatpush1.bf16.msra.mxu0 0
        %1449 = vmatprep.subr.bf16.mxu0 0
        %1450 = vmatpush1.bf16.msra.mxu0 0
        %1451 = vmatprep.subr.bf16.mxu0 0
        %1452 = vmatpush1.bf16.msra.mxu0 0
        %1453 = vmatprep.subr.bf16.mxu0 0
        %1454 = vmatpush1.bf16.msra.mxu0 0
        %1455 = vmatprep.mubr.bf16.mxu0 0
        %1456 = vmatmul.mubr.bf16.gmra.mrb[0].mxu0 %v1412
        %v1457 = vpop.f32.mrb[0].mxu0
        %v1458 = vadd.f32 %v1369, %v1457
        %v1459 = vpop.f32.mrb[0].mxu0
        %v1460 = vpop.f32.mrb[0].mxu0
        %v1461 = vadd.f32 %v1372, %v1460
        %v1462 = vpop.f32.mrb[0].mxu0
        %1463 = vmatprep.mubr.bf16.mxu0 0
        %1464 = vmatmul.mubr.bf16.gmra.mrb[0].mxu0 %v1415
        %v1465 = vpop.f32.mrb[0].mxu0
        %v1466 = vadd.f32 %v1377, %v1465
        %v1467 = vpop.f32.mrb[0].mxu0
        %v1468 = vpop.f32.mrb[0].mxu0
        %v1469 = vadd.f32 %v1380, %v1468
        %v1470 = vpop.f32.mrb[0].mxu0
        %1471 = vmatprep.mubr.bf16.mxu0 0
        %1472 = vmatmul.mubr.bf16.gmra.mrb[0].mxu0 %v1418
        %v1473 = vpop.f32.mrb[0].mxu0
        %v1474 = vadd.f32 %v1385, %v1473
        %v1475 = vpop.f32.mrb[0].mxu0
        %v1476 = vpop.f32.mrb[0].mxu0
        %v1477 = vadd.f32 %v1388, %v1476
        %v1478 = vpop.f32.mrb[0].mxu0
        %1479 = vmatprep.mubr.bf16.mxu0 0
        %1480 = vmatmul.mubr.bf16.gmra.mrb[0].mxu0 %v1421
        %v1481 = vpop.f32.mrb[0].mxu0
        %v1482 = vadd.f32 %v1393, %v1481
        %v1483 = vpop.f32.mrb[0].mxu0
        %v1484 = vpop.f32.mrb[0].mxu0
        %v1485 = vadd.f32 %v1396, %v1484
        %v1486 = vpop.f32.mrb[0].mxu0
        %1487 = vdwg.mxu0
        %v1489 = vsel %vm491, %v1306, 0
        %1491 = vmatprep.subr.bf16.mxu0 0
        %1492 = vmatpush1.bf16.msra.mxu0 %v1489
        %1493 = vmatprep.subr.bf16.mxu0 0
        %1494 = vmatpush1.bf16.msra.mxu0 0
        %1495 = vmatprep.subr.bf16.mxu0 0
        %1496 = vmatpush1.bf16.msra.mxu0 0
        %1497 = vmatprep.subr.bf16.mxu0 0
        %1498 = vmatpush1.bf16.msra.mxu0 0
        %1499 = vmatprep.subr.bf16.mxu0 0
        %1500 = vmatpush1.bf16.msra.mxu0 0
        %1501 = vmatprep.subr.bf16.mxu0 0
        %1502 = vmatpush1.bf16.msra.mxu0 0
        %1503 = vmatprep.subr.bf16.mxu0 0
        %1504 = vmatpush1.bf16.msra.mxu0 0
        %1505 = vmatprep.subr.bf16.mxu0 0
        %1506 = vmatpush1.bf16.msra.mxu0 0
        %1507 = vmatprep.subr.bf16.mxu0 0
        %1508 = vmatpush1.bf16.msra.mxu0 0
        %1509 = vmatprep.subr.bf16.mxu0 0
        %1510 = vmatpush1.bf16.msra.mxu0 0
        %1511 = vmatprep.subr.bf16.mxu0 0
        %1512 = vmatpush1.bf16.msra.mxu0 0
        %1513 = vmatprep.subr.bf16.mxu0 0
        %1514 = vmatpush1.bf16.msra.mxu0 0
        %1515 = vmatprep.subr.bf16.mxu0 0
        %1516 = vmatpush1.bf16.msra.mxu0 0
        %1517 = vmatprep.subr.bf16.mxu0 0
        %1518 = vmatpush1.bf16.msra.mxu0 0
        %1519 = vmatprep.subr.bf16.mxu0 0
        %1520 = vmatpush1.bf16.msra.mxu0 0
        %1521 = vmatprep.subr.bf16.mxu0 0
        %1522 = vmatpush1.bf16.msra.mxu0 0
        %1523 = vmatprep.mubr.bf16.mxu0 0
        %1524 = vmatmul.mubr.bf16.gmra.mrb[0].mxu0 %v1412
        %v1525 = vpop.f32.mrb[0].mxu0
        %v1526 = vadd.f32 0.0, %v1525
        %v1527 = vpop.f32.mrb[0].mxu0
        %v1528 = vpop.f32.mrb[0].mxu0
        %v1529 = vadd.f32 0.0, %v1528
        %v1530 = vpop.f32.mrb[0].mxu0
        %1531 = vmatprep.mubr.bf16.mxu0 0
        %1532 = vmatmul.mubr.bf16.gmra.mrb[0].mxu0 %v1415
        %v1533 = vpop.f32.mrb[0].mxu0
        %v1534 = vadd.f32 0.0, %v1533
        %v1535 = vpop.f32.mrb[0].mxu0
        %v1536 = vpop.f32.mrb[0].mxu0
        %v1537 = vadd.f32 0.0, %v1536
        %v1538 = vpop.f32.mrb[0].mxu0
        %1539 = vmatprep.mubr.bf16.mxu0 0
        %1540 = vmatmul.mubr.bf16.gmra.mrb[0].mxu0 %v1418
        %v1541 = vpop.f32.mrb[0].mxu0
        %v1542 = vadd.f32 0.0, %v1541
        %v1543 = vpop.f32.mrb[0].mxu0
        %v1544 = vpop.f32.mrb[0].mxu0
        %v1545 = vadd.f32 0.0, %v1544
        %v1546 = vpop.f32.mrb[0].mxu0
        %1547 = vmatprep.mubr.bf16.mxu0 0
        %1548 = vmatmul.mubr.bf16.gmra.mrb[0].mxu0 %v1421
        %v1549 = vpop.f32.mrb[0].mxu0
        %v1550 = vadd.f32 0.0, %v1549
        %v1551 = vpop.f32.mrb[0].mxu0
        %v1552 = vpop.f32.mrb[0].mxu0
        %v1553 = vadd.f32 0.0, %v1552
        %v1554 = vpop.f32.mrb[0].mxu0
        %1555 = vdwg.mxu0
        %v1556 = vadd.f32 %v1458, %v1526
        %v1557 = vadd.f32 %v1461, %v1529
        %v1558 = vadd.f32 %v1466, %v1534
        %v1559 = vadd.f32 %v1469, %v1537
        %v1560 = vadd.f32 %v1474, %v1542
        %v1561 = vadd.f32 %v1477, %v1545
        %v1562 = vadd.f32 %v1482, %v1550
        %v1563 = vadd.f32 %v1485, %v1553
        %v1564 = vadd.f32 %v1036, %v1556
        %v1565 = vadd.f32 %v1037, %v1557
        %v1566 = vadd.f32 %v1038, %v1558
        %v1567 = vadd.f32 %v1039, %v1559
        %v1568 = vadd.f32 %v1040, %v1560
        %v1569 = vadd.f32 %v1041, %v1561
        %v1570 = vadd.f32 %v1042, %v1562
        %v1571 = vadd.f32 %v1043, %v1563
        %s1572 = scalar_lea.vmem %s414, 144
        %v1573 = vld [vmem:[%s1572] sm:$0xf]
        %v1574 = vld [vmem:[%s1572 + $0x8] sm:$0xf]
        %v1575 = vld [vmem:[%s1572 + $0x10] sm:$0xf]
        %v1576 = vld [vmem:[%s1572 + $0x18] sm:$0xf]
        %v1577 = vld [vmem:[%s1572 + $0x20] sm:$0xf]
        %v1578 = vld [vmem:[%s1572 + $0x28] sm:$0xf]
        %v1579 = vld [vmem:[%s1572 + $0x30] sm:$0xf]
        %v1580 = vld [vmem:[%s1572 + $0x38] sm:$0xf]
        %s1581 = scalar_lea.vmem %s419, 144
        %v1582 = vld [vmem:[%s1581] sm:$0xf]
        %v1583 = vld [vmem:[%s1581 + $0x8] sm:$0xf]
        %v1584 = vld [vmem:[%s1581 + $0x10] sm:$0xf]
        %v1585 = vld [vmem:[%s1581 + $0x18] sm:$0xf]
        %v1586 = vld [vmem:[%s1581 + $0x20] sm:$0xf]
        %v1587 = vld [vmem:[%s1581 + $0x28] sm:$0xf]
        %v1588 = vld [vmem:[%s1581 + $0x30] sm:$0xf]
        %v1589 = vld [vmem:[%s1581 + $0x38] sm:$0xf]
        %s1590 = scalar_lea.vmem %s2, 12
        %v1591 = vld [vmem:[%s1590] sm:$0xf]
        %s1592 = scalar_lea.vmem %s3, 12
        %v1593 = vld [vmem:[%s1592] sm:$0xf]
        %v1602 = vunpack.c.l.b16 %v1582
        %v1603 = vunpack.c.l.b16 %v1583
        %v1604 = vunpack.c.l.b16 %v1584
        %v1605 = vunpack.c.l.b16 %v1585
        %v1606 = vunpack.c.l.b16 %v1586
        %v1607 = vunpack.c.l.b16 %v1587
        %v1608 = vunpack.c.l.b16 %v1588
        %v1609 = vunpack.c.l.b16 %v1589
        %v1610 = vpack.c.b16 %v1603, %v1602
        %v1611 = vpack.c.b16 %v1605, %v1604
        %v1612 = vpack.c.b16 %v1607, %v1606
        %v1613 = vpack.c.b16 %v1609, %v1608
        %v1615 = vsel %vm478, %v1610, 0
        %v1618 = vsel %vm478, %v1611, 0
        %v1621 = vsel %vm478, %v1612, 0
        %v1624 = vsel %vm478, %v1613, 0
        %v1627 = vsel %vm491, %v1591, 0
        %1629 = vmatprep.subr.bf16.mxu0 0
        %1630 = vmatpush1.bf16.msra.mxu0 %v1627
        %1631 = vmatprep.subr.bf16.mxu0 0
        %1632 = vmatpush1.bf16.msra.mxu0 0
        %1633 = vmatprep.subr.bf16.mxu0 0
        %1634 = vmatpush1.bf16.msra.mxu0 0
        %1635 = vmatprep.subr.bf16.mxu0 0
        %1636 = vmatpush1.bf16.msra.mxu0 0
        %1637 = vmatprep.subr.bf16.mxu0 0
        %1638 = vmatpush1.bf16.msra.mxu0 0
        %1639 = vmatprep.subr.bf16.mxu0 0
        %1640 = vmatpush1.bf16.msra.mxu0 0
        %1641 = vmatprep.subr.bf16.mxu0 0
        %1642 = vmatpush1.bf16.msra.mxu0 0
        %1643 = vmatprep.subr.bf16.mxu0 0
        %1644 = vmatpush1.bf16.msra.mxu0 0
        %1645 = vmatprep.subr.bf16.mxu0 0
        %1646 = vmatpush1.bf16.msra.mxu0 0
        %1647 = vmatprep.subr.bf16.mxu0 0
        %1648 = vmatpush1.bf16.msra.mxu0 0
        %1649 = vmatprep.subr.bf16.mxu0 0
        %1650 = vmatpush1.bf16.msra.mxu0 0
        %1651 = vmatprep.subr.bf16.mxu0 0
        %1652 = vmatpush1.bf16.msra.mxu0 0
        %1653 = vmatprep.subr.bf16.mxu0 0
        %1654 = vmatpush1.bf16.msra.mxu0 0
        %1655 = vmatprep.subr.bf16.mxu0 0
        %1656 = vmatpush1.bf16.msra.mxu0 0
        %1657 = vmatprep.subr.bf16.mxu0 0
        %1658 = vmatpush1.bf16.msra.mxu0 0
        %1659 = vmatprep.subr.bf16.mxu0 0
        %1660 = vmatpush1.bf16.msra.mxu0 0
        %1661 = vmatprep.mubr.bf16.mxu0 0
        %1662 = vmatmul.mubr.bf16.gmra.mrb[0].mxu0 %v1615
        %v1663 = vpop.f32.mrb[0].mxu0
        %v1664 = vadd.f32 0.0, %v1663
        %v1665 = vpop.f32.mrb[0].mxu0
        %v1666 = vpop.f32.mrb[0].mxu0
        %v1667 = vadd.f32 0.0, %v1666
        %v1668 = vpop.f32.mrb[0].mxu0
        %1669 = vmatprep.mubr.bf16.mxu0 0
        %1670 = vmatmul.mubr.bf16.gmra.mrb[0].mxu0 %v1618
        %v1671 = vpop.f32.mrb[0].mxu0
        %v1672 = vadd.f32 0.0, %v1671
        %v1673 = vpop.f32.mrb[0].mxu0
        %v1674 = vpop.f32.mrb[0].mxu0
        %v1675 = vadd.f32 0.0, %v1674
        %v1676 = vpop.f32.mrb[0].mxu0
        %1677 = vmatprep.mubr.bf16.mxu0 0
        %1678 = vmatmul.mubr.bf16.gmra.mrb[0].mxu0 %v1621
        %v1679 = vpop.f32.mrb[0].mxu0
        %v1680 = vadd.f32 0.0, %v1679
        %v1681 = vpop.f32.mrb[0].mxu0
        %v1682 = vpop.f32.mrb[0].mxu0
        %v1683 = vadd.f32 0.0, %v1682
        %v1684 = vpop.f32.mrb[0].mxu0
        %1685 = vmatprep.mubr.bf16.mxu0 0
        %1686 = vmatmul.mubr.bf16.gmra.mrb[0].mxu0 %v1624
        %v1687 = vpop.f32.mrb[0].mxu0
        %v1688 = vadd.f32 0.0, %v1687
        %v1689 = vpop.f32.mrb[0].mxu0
        %v1690 = vpop.f32.mrb[0].mxu0
        %v1691 = vadd.f32 0.0, %v1690
        %v1692 = vpop.f32.mrb[0].mxu0
        %1693 = vdwg.mxu0
        %v1702 = vunpack.c.l.b16 %v1573
        %v1703 = vunpack.c.l.b16 %v1574
        %v1704 = vunpack.c.l.b16 %v1575
        %v1705 = vunpack.c.l.b16 %v1576
        %v1706 = vunpack.c.l.b16 %v1577
        %v1707 = vunpack.c.l.b16 %v1578
        %v1708 = vunpack.c.l.b16 %v1579
        %v1709 = vunpack.c.l.b16 %v1580
        %v1710 = vpack.c.b16 %v1703, %v1702
        %v1711 = vpack.c.b16 %v1705, %v1704
        %v1712 = vpack.c.b16 %v1707, %v1706
        %v1713 = vpack.c.b16 %v1709, %v1708
        %v1715 = vsel %vm478, %v1710, 0
        %v1718 = vsel %vm478, %v1711, 0
        %v1721 = vsel %vm478, %v1712, 0
        %v1724 = vsel %vm478, %v1713, 0
        %1726 = vmatprep.subr.bf16.mxu0 0
        %1727 = vmatpush1.bf16.msra.mxu0 %v1627
        %1728 = vmatprep.subr.bf16.mxu0 0
        %1729 = vmatpush1.bf16.msra.mxu0 0
        %1730 = vmatprep.subr.bf16.mxu0 0
        %1731 = vmatpush1.bf16.msra.mxu0 0
        %1732 = vmatprep.subr.bf16.mxu0 0
        %1733 = vmatpush1.bf16.msra.mxu0 0
        %1734 = vmatprep.subr.bf16.mxu0 0
        %1735 = vmatpush1.bf16.msra.mxu0 0
        %1736 = vmatprep.subr.bf16.mxu0 0
        %1737 = vmatpush1.bf16.msra.mxu0 0
        %1738 = vmatprep.subr.bf16.mxu0 0
        %1739 = vmatpush1.bf16.msra.mxu0 0
        %1740 = vmatprep.subr.bf16.mxu0 0
        %1741 = vmatpush1.bf16.msra.mxu0 0
        %1742 = vmatprep.subr.bf16.mxu0 0
        %1743 = vmatpush1.bf16.msra.mxu0 0
        %1744 = vmatprep.subr.bf16.mxu0 0
        %1745 = vmatpush1.bf16.msra.mxu0 0
        %1746 = vmatprep.subr.bf16.mxu0 0
        %1747 = vmatpush1.bf16.msra.mxu0 0
        %1748 = vmatprep.subr.bf16.mxu0 0
        %1749 = vmatpush1.bf16.msra.mxu0 0
        %1750 = vmatprep.subr.bf16.mxu0 0
        %1751 = vmatpush1.bf16.msra.mxu0 0
        %1752 = vmatprep.subr.bf16.mxu0 0
        %1753 = vmatpush1.bf16.msra.mxu0 0
        %1754 = vmatprep.subr.bf16.mxu0 0
        %1755 = vmatpush1.bf16.msra.mxu0 0
        %1756 = vmatprep.subr.bf16.mxu0 0
        %1757 = vmatpush1.bf16.msra.mxu0 0
        %1758 = vmatprep.mubr.bf16.mxu0 0
        %1759 = vmatmul.mubr.bf16.gmra.mrb[0].mxu0 %v1715
        %v1760 = vpop.f32.mrb[0].mxu0
        %v1761 = vadd.f32 %v1664, %v1760
        %v1762 = vpop.f32.mrb[0].mxu0
        %v1763 = vpop.f32.mrb[0].mxu0
        %v1764 = vadd.f32 %v1667, %v1763
        %v1765 = vpop.f32.mrb[0].mxu0
        %1766 = vmatprep.mubr.bf16.mxu0 0
        %1767 = vmatmul.mubr.bf16.gmra.mrb[0].mxu0 %v1718
        %v1768 = vpop.f32.mrb[0].mxu0
        %v1769 = vadd.f32 %v1672, %v1768
        %v1770 = vpop.f32.mrb[0].mxu0
        %v1771 = vpop.f32.mrb[0].mxu0
        %v1772 = vadd.f32 %v1675, %v1771
        %v1773 = vpop.f32.mrb[0].mxu0
        %1774 = vmatprep.mubr.bf16.mxu0 0
        %1775 = vmatmul.mubr.bf16.gmra.mrb[0].mxu0 %v1721
        %v1776 = vpop.f32.mrb[0].mxu0
        %v1777 = vadd.f32 %v1680, %v1776
        %v1778 = vpop.f32.mrb[0].mxu0
        %v1779 = vpop.f32.mrb[0].mxu0
        %v1780 = vadd.f32 %v1683, %v1779
        %v1781 = vpop.f32.mrb[0].mxu0
        %1782 = vmatprep.mubr.bf16.mxu0 0
        %1783 = vmatmul.mubr.bf16.gmra.mrb[0].mxu0 %v1724
        %v1784 = vpop.f32.mrb[0].mxu0
        %v1785 = vadd.f32 %v1688, %v1784
        %v1786 = vpop.f32.mrb[0].mxu0
        %v1787 = vpop.f32.mrb[0].mxu0
        %v1788 = vadd.f32 %v1691, %v1787
        %v1789 = vpop.f32.mrb[0].mxu0
        %1790 = vdwg.mxu0
        %v1792 = vsel %vm491, %v1593, 0
        %1794 = vmatprep.subr.bf16.mxu0 0
        %1795 = vmatpush1.bf16.msra.mxu0 %v1792
        %1796 = vmatprep.subr.bf16.mxu0 0
        %1797 = vmatpush1.bf16.msra.mxu0 0
        %1798 = vmatprep.subr.bf16.mxu0 0
        %1799 = vmatpush1.bf16.msra.mxu0 0
        %1800 = vmatprep.subr.bf16.mxu0 0
        %1801 = vmatpush1.bf16.msra.mxu0 0
        %1802 = vmatprep.subr.bf16.mxu0 0
        %1803 = vmatpush1.bf16.msra.mxu0 0
        %1804 = vmatprep.subr.bf16.mxu0 0
        %1805 = vmatpush1.bf16.msra.mxu0 0
        %1806 = vmatprep.subr.bf16.mxu0 0
        %1807 = vmatpush1.bf16.msra.mxu0 0
        %1808 = vmatprep.subr.bf16.mxu0 0
        %1809 = vmatpush1.bf16.msra.mxu0 0
        %1810 = vmatprep.subr.bf16.mxu0 0
        %1811 = vmatpush1.bf16.msra.mxu0 0
        %1812 = vmatprep.subr.bf16.mxu0 0
        %1813 = vmatpush1.bf16.msra.mxu0 0
        %1814 = vmatprep.subr.bf16.mxu0 0
        %1815 = vmatpush1.bf16.msra.mxu0 0
        %1816 = vmatprep.subr.bf16.mxu0 0
        %1817 = vmatpush1.bf16.msra.mxu0 0
        %1818 = vmatprep.subr.bf16.mxu0 0
        %1819 = vmatpush1.bf16.msra.mxu0 0
        %1820 = vmatprep.subr.bf16.mxu0 0
        %1821 = vmatpush1.bf16.msra.mxu0 0
        %1822 = vmatprep.subr.bf16.mxu0 0
        %1823 = vmatpush1.bf16.msra.mxu0 0
        %1824 = vmatprep.subr.bf16.mxu0 0
        %1825 = vmatpush1.bf16.msra.mxu0 0
        %1826 = vmatprep.mubr.bf16.mxu0 0
        %1827 = vmatmul.mubr.bf16.gmra.mrb[0].mxu0 %v1715
        %v1828 = vpop.f32.mrb[0].mxu0
        %v1829 = vadd.f32 0.0, %v1828
        %v1830 = vpop.f32.mrb[0].mxu0
        %v1831 = vpop.f32.mrb[0].mxu0
        %v1832 = vadd.f32 0.0, %v1831
        %v1833 = vpop.f32.mrb[0].mxu0
        %1834 = vmatprep.mubr.bf16.mxu0 0
        %1835 = vmatmul.mubr.bf16.gmra.mrb[0].mxu0 %v1718
        %v1836 = vpop.f32.mrb[0].mxu0
        %v1837 = vadd.f32 0.0, %v1836
        %v1838 = vpop.f32.mrb[0].mxu0
        %v1839 = vpop.f32.mrb[0].mxu0
        %v1840 = vadd.f32 0.0, %v1839
        %v1841 = vpop.f32.mrb[0].mxu0
        %1842 = vmatprep.mubr.bf16.mxu0 0
        %1843 = vmatmul.mubr.bf16.gmra.mrb[0].mxu0 %v1721
        %v1844 = vpop.f32.mrb[0].mxu0
        %v1845 = vadd.f32 0.0, %v1844
        %v1846 = vpop.f32.mrb[0].mxu0
        %v1847 = vpop.f32.mrb[0].mxu0
        %v1848 = vadd.f32 0.0, %v1847
        %v1849 = vpop.f32.mrb[0].mxu0
        %1850 = vmatprep.mubr.bf16.mxu0 0
        %1851 = vmatmul.mubr.bf16.gmra.mrb[0].mxu0 %v1724
        %v1852 = vpop.f32.mrb[0].mxu0
        %v1853 = vadd.f32 0.0, %v1852
        %v1854 = vpop.f32.mrb[0].mxu0
        %v1855 = vpop.f32.mrb[0].mxu0
        %v1856 = vadd.f32 0.0, %v1855
        %v1857 = vpop.f32.mrb[0].mxu0
        %1858 = vdwg.mxu0
        %v1859 = vadd.f32 %v1761, %v1829
        %v1860 = vadd.f32 %v1764, %v1832
        %v1861 = vadd.f32 %v1769, %v1837
        %v1862 = vadd.f32 %v1772, %v1840
        %v1863 = vadd.f32 %v1777, %v1845
        %v1864 = vadd.f32 %v1780, %v1848
        %v1865 = vadd.f32 %v1785, %v1853
        %v1866 = vadd.f32 %v1788, %v1856
        %v1867 = vadd.f32 %v1564, %v1859
        %v1868 = vadd.f32 %v1565, %v1860
        %v1869 = vadd.f32 %v1566, %v1861
        %v1870 = vadd.f32 %v1567, %v1862
        %v1871 = vadd.f32 %v1568, %v1863
        %v1872 = vadd.f32 %v1569, %v1864
        %v1873 = vadd.f32 %v1570, %v1865
        %v1874 = vadd.f32 %v1571, %v1866
        %s1875 = scalar_lea.vmem %s414, 216
        %v1876 = vld [vmem:[%s1875] sm:$0xf]
        %v1877 = vld [vmem:[%s1875 + $0x8] sm:$0xf]
        %v1878 = vld [vmem:[%s1875 + $0x10] sm:$0xf]
        %v1879 = vld [vmem:[%s1875 + $0x18] sm:$0xf]
        %v1880 = vld [vmem:[%s1875 + $0x20] sm:$0xf]
        %v1881 = vld [vmem:[%s1875 + $0x28] sm:$0xf]
        %v1882 = vld [vmem:[%s1875 + $0x30] sm:$0xf]
        %v1883 = vld [vmem:[%s1875 + $0x38] sm:$0xf]
        %s1884 = scalar_lea.vmem %s419, 216
        %v1885 = vld [vmem:[%s1884] sm:$0xf]
        %v1886 = vld [vmem:[%s1884 + $0x8] sm:$0xf]
        %v1887 = vld [vmem:[%s1884 + $0x10] sm:$0xf]
        %v1888 = vld [vmem:[%s1884 + $0x18] sm:$0xf]
        %v1889 = vld [vmem:[%s1884 + $0x20] sm:$0xf]
        %v1890 = vld [vmem:[%s1884 + $0x28] sm:$0xf]
        %v1891 = vld [vmem:[%s1884 + $0x30] sm:$0xf]
        %v1892 = vld [vmem:[%s1884 + $0x38] sm:$0xf]
        %s1893 = scalar_lea.vmem %s2, 16
        %v1894 = vld [vmem:[%s1893] sm:$0xf]
        %s1895 = scalar_lea.vmem %s3, 16
        %v1896 = vld [vmem:[%s1895] sm:$0xf]
        %v1905 = vunpack.c.l.b16 %v1885
        %v1906 = vunpack.c.l.b16 %v1886
        %v1907 = vunpack.c.l.b16 %v1887
        %v1908 = vunpack.c.l.b16 %v1888
        %v1909 = vunpack.c.l.b16 %v1889
        %v1910 = vunpack.c.l.b16 %v1890
        %v1911 = vunpack.c.l.b16 %v1891
        %v1912 = vunpack.c.l.b16 %v1892
        %v1913 = vpack.c.b16 %v1906, %v1905
        %v1914 = vpack.c.b16 %v1908, %v1907
        %v1915 = vpack.c.b16 %v1910, %v1909
        %v1916 = vpack.c.b16 %v1912, %v1911
        %v1918 = vsel %vm478, %v1913, 0
        %v1921 = vsel %vm478, %v1914, 0
        %v1924 = vsel %vm478, %v1915, 0
        %v1927 = vsel %vm478, %v1916, 0
        %v1930 = vsel %vm491, %v1894, 0
        %1932 = vmatprep.subr.bf16.mxu0 0
        %1933 = vmatpush1.bf16.msra.mxu0 %v1930
        %1934 = vmatprep.subr.bf16.mxu0 0
        %1935 = vmatpush1.bf16.msra.mxu0 0
        %1936 = vmatprep.subr.bf16.mxu0 0
        %1937 = vmatpush1.bf16.msra.mxu0 0
        %1938 = vmatprep.subr.bf16.mxu0 0
        %1939 = vmatpush1.bf16.msra.mxu0 0
        %1940 = vmatprep.subr.bf16.mxu0 0
        %1941 = vmatpush1.bf16.msra.mxu0 0
        %1942 = vmatprep.subr.bf16.mxu0 0
        %1943 = vmatpush1.bf16.msra.mxu0 0
        %1944 = vmatprep.subr.bf16.mxu0 0
        %1945 = vmatpush1.bf16.msra.mxu0 0
        %1946 = vmatprep.subr.bf16.mxu0 0
        %1947 = vmatpush1.bf16.msra.mxu0 0
        %1948 = vmatprep.subr.bf16.mxu0 0
        %1949 = vmatpush1.bf16.msra.mxu0 0
        %1950 = vmatprep.subr.bf16.mxu0 0
        %1951 = vmatpush1.bf16.msra.mxu0 0
        %1952 = vmatprep.subr.bf16.mxu0 0
        %1953 = vmatpush1.bf16.msra.mxu0 0
        %1954 = vmatprep.subr.bf16.mxu0 0
        %1955 = vmatpush1.bf16.msra.mxu0 0
        %1956 = vmatprep.subr.bf16.mxu0 0
        %1957 = vmatpush1.bf16.msra.mxu0 0
        %1958 = vmatprep.subr.bf16.mxu0 0
        %1959 = vmatpush1.bf16.msra.mxu0 0
        %1960 = vmatprep.subr.bf16.mxu0 0
        %1961 = vmatpush1.bf16.msra.mxu0 0
        %1962 = vmatprep.subr.bf16.mxu0 0
        %1963 = vmatpush1.bf16.msra.mxu0 0
        %1964 = vmatprep.mubr.bf16.mxu0 0
        %1965 = vmatmul.mubr.bf16.gmra.mrb[0].mxu0 %v1918
        %v1966 = vpop.f32.mrb[0].mxu0
        %v1967 = vadd.f32 0.0, %v1966
        %v1968 = vpop.f32.mrb[0].mxu0
        %v1969 = vpop.f32.mrb[0].mxu0
        %v1970 = vadd.f32 0.0, %v1969
        %v1971 = vpop.f32.mrb[0].mxu0
        %1972 = vmatprep.mubr.bf16.mxu0 0
        %1973 = vmatmul.mubr.bf16.gmra.mrb[0].mxu0 %v1921
        %v1974 = vpop.f32.mrb[0].mxu0
        %v1975 = vadd.f32 0.0, %v1974
        %v1976 = vpop.f32.mrb[0].mxu0
        %v1977 = vpop.f32.mrb[0].mxu0
        %v1978 = vadd.f32 0.0, %v1977
        %v1979 = vpop.f32.mrb[0].mxu0
        %1980 = vmatprep.mubr.bf16.mxu0 0
        %1981 = vmatmul.mubr.bf16.gmra.mrb[0].mxu0 %v1924
        %v1982 = vpop.f32.mrb[0].mxu0
        %v1983 = vadd.f32 0.0, %v1982
        %v1984 = vpop.f32.mrb[0].mxu0
        %v1985 = vpop.f32.mrb[0].mxu0
        %v1986 = vadd.f32 0.0, %v1985
        %v1987 = vpop.f32.mrb[0].mxu0
        %1988 = vmatprep.mubr.bf16.mxu0 0
        %1989 = vmatmul.mubr.bf16.gmra.mrb[0].mxu0 %v1927
        %v1990 = vpop.f32.mrb[0].mxu0
        %v1991 = vadd.f32 0.0, %v1990
        %v1992 = vpop.f32.mrb[0].mxu0
        %v1993 = vpop.f32.mrb[0].mxu0
        %v1994 = vadd.f32 0.0, %v1993
        %v1995 = vpop.f32.mrb[0].mxu0
        %1996 = vdwg.mxu0
        %v2005 = vunpack.c.l.b16 %v1876
        %v2006 = vunpack.c.l.b16 %v1877
        %v2007 = vunpack.c.l.b16 %v1878
        %v2008 = vunpack.c.l.b16 %v1879
        %v2009 = vunpack.c.l.b16 %v1880
        %v2010 = vunpack.c.l.b16 %v1881
        %v2011 = vunpack.c.l.b16 %v1882
        %v2012 = vunpack.c.l.b16 %v1883
        %v2013 = vpack.c.b16 %v2006, %v2005
        %v2014 = vpack.c.b16 %v2008, %v2007
        %v2015 = vpack.c.b16 %v2010, %v2009
        %v2016 = vpack.c.b16 %v2012, %v2011
        %v2018 = vsel %vm478, %v2013, 0
        %v2021 = vsel %vm478, %v2014, 0
        %v2024 = vsel %vm478, %v2015, 0
        %v2027 = vsel %vm478, %v2016, 0
        %2029 = vmatprep.subr.bf16.mxu0 0
        %2030 = vmatpush1.bf16.msra.mxu0 %v1930
        %2031 = vmatprep.subr.bf16.mxu0 0
        %2032 = vmatpush1.bf16.msra.mxu0 0
        %2033 = vmatprep.subr.bf16.mxu0 0
        %2034 = vmatpush1.bf16.msra.mxu0 0
        %2035 = vmatprep.subr.bf16.mxu0 0
        %2036 = vmatpush1.bf16.msra.mxu0 0
        %2037 = vmatprep.subr.bf16.mxu0 0
        %2038 = vmatpush1.bf16.msra.mxu0 0
        %2039 = vmatprep.subr.bf16.mxu0 0
        %2040 = vmatpush1.bf16.msra.mxu0 0
        %2041 = vmatprep.subr.bf16.mxu0 0
        %2042 = vmatpush1.bf16.msra.mxu0 0
        %2043 = vmatprep.subr.bf16.mxu0 0
        %2044 = vmatpush1.bf16.msra.mxu0 0
        %2045 = vmatprep.subr.bf16.mxu0 0
        %2046 = vmatpush1.bf16.msra.mxu0 0
        %2047 = vmatprep.subr.bf16.mxu0 0
        %2048 = vmatpush1.bf16.msra.mxu0 0
        %2049 = vmatprep.subr.bf16.mxu0 0
        %2050 = vmatpush1.bf16.msra.mxu0 0
        %2051 = vmatprep.subr.bf16.mxu0 0
        %2052 = vmatpush1.bf16.msra.mxu0 0
        %2053 = vmatprep.subr.bf16.mxu0 0
        %2054 = vmatpush1.bf16.msra.mxu0 0
        %2055 = vmatprep.subr.bf16.mxu0 0
        %2056 = vmatpush1.bf16.msra.mxu0 0
        %2057 = vmatprep.subr.bf16.mxu0 0
        %2058 = vmatpush1.bf16.msra.mxu0 0
        %2059 = vmatprep.subr.bf16.mxu0 0
        %2060 = vmatpush1.bf16.msra.mxu0 0
        %2061 = vmatprep.mubr.bf16.mxu0 0
        %2062 = vmatmul.mubr.bf16.gmra.mrb[0].mxu0 %v2018
        %v2063 = vpop.f32.mrb[0].mxu0
        %v2064 = vadd.f32 %v1967, %v2063
        %v2065 = vpop.f32.mrb[0].mxu0
        %v2066 = vpop.f32.mrb[0].mxu0
        %v2067 = vadd.f32 %v1970, %v2066
        %v2068 = vpop.f32.mrb[0].mxu0
        %2069 = vmatprep.mubr.bf16.mxu0 0
        %2070 = vmatmul.mubr.bf16.gmra.mrb[0].mxu0 %v2021
        %v2071 = vpop.f32.mrb[0].mxu0
        %v2072 = vadd.f32 %v1975, %v2071
        %v2073 = vpop.f32.mrb[0].mxu0
        %v2074 = vpop.f32.mrb[0].mxu0
        %v2075 = vadd.f32 %v1978, %v2074
        %v2076 = vpop.f32.mrb[0].mxu0
        %2077 = vmatprep.mubr.bf16.mxu0 0
        %2078 = vmatmul.mubr.bf16.gmra.mrb[0].mxu0 %v2024
        %v2079 = vpop.f32.mrb[0].mxu0
        %v2080 = vadd.f32 %v1983, %v2079
        %v2081 = vpop.f32.mrb[0].mxu0
        %v2082 = vpop.f32.mrb[0].mxu0
        %v2083 = vadd.f32 %v1986, %v2082
        %v2084 = vpop.f32.mrb[0].mxu0
        %2085 = vmatprep.mubr.bf16.mxu0 0
        %2086 = vmatmul.mubr.bf16.gmra.mrb[0].mxu0 %v2027
        %v2087 = vpop.f32.mrb[0].mxu0
        %v2088 = vadd.f32 %v1991, %v2087
        %v2089 = vpop.f32.mrb[0].mxu0
        %v2090 = vpop.f32.mrb[0].mxu0
        %v2091 = vadd.f32 %v1994, %v2090
        %v2092 = vpop.f32.mrb[0].mxu0
        %2093 = vdwg.mxu0
        %v2095 = vsel %vm491, %v1896, 0
        %2097 = vmatprep.subr.bf16.mxu0 0
        %2098 = vmatpush1.bf16.msra.mxu0 %v2095
        %2099 = vmatprep.subr.bf16.mxu0 0
        %2100 = vmatpush1.bf16.msra.mxu0 0
        %2101 = vmatprep.subr.bf16.mxu0 0
        %2102 = vmatpush1.bf16.msra.mxu0 0
        %2103 = vmatprep.subr.bf16.mxu0 0
        %2104 = vmatpush1.bf16.msra.mxu0 0
        %2105 = vmatprep.subr.bf16.mxu0 0
        %2106 = vmatpush1.bf16.msra.mxu0 0
        %2107 = vmatprep.subr.bf16.mxu0 0
        %2108 = vmatpush1.bf16.msra.mxu0 0
        %2109 = vmatprep.subr.bf16.mxu0 0
        %2110 = vmatpush1.bf16.msra.mxu0 0
        %2111 = vmatprep.subr.bf16.mxu0 0
        %2112 = vmatpush1.bf16.msra.mxu0 0
        %2113 = vmatprep.subr.bf16.mxu0 0
        %2114 = vmatpush1.bf16.msra.mxu0 0
        %2115 = vmatprep.subr.bf16.mxu0 0
        %2116 = vmatpush1.bf16.msra.mxu0 0
        %2117 = vmatprep.subr.bf16.mxu0 0
        %2118 = vmatpush1.bf16.msra.mxu0 0
        %2119 = vmatprep.subr.bf16.mxu0 0
        %2120 = vmatpush1.bf16.msra.mxu0 0
        %2121 = vmatprep.subr.bf16.mxu0 0
        %2122 = vmatpush1.bf16.msra.mxu0 0
        %2123 = vmatprep.subr.bf16.mxu0 0
        %2124 = vmatpush1.bf16.msra.mxu0 0
        %2125 = vmatprep.subr.bf16.mxu0 0
        %2126 = vmatpush1.bf16.msra.mxu0 0
        %2127 = vmatprep.subr.bf16.mxu0 0
        %2128 = vmatpush1.bf16.msra.mxu0 0
        %2129 = vmatprep.mubr.bf16.mxu0 0
        %2130 = vmatmul.mubr.bf16.gmra.mrb[0].mxu0 %v2018
        %v2131 = vpop.f32.mrb[0].mxu0
        %v2132 = vadd.f32 0.0, %v2131
        %v2133 = vpop.f32.mrb[0].mxu0
        %v2134 = vpop.f32.mrb[0].mxu0
        %v2135 = vadd.f32 0.0, %v2134
        %v2136 = vpop.f32.mrb[0].mxu0
        %2137 = vmatprep.mubr.bf16.mxu0 0
        %2138 = vmatmul.mubr.bf16.gmra.mrb[0].mxu0 %v2021
        %v2139 = vpop.f32.mrb[0].mxu0
        %v2140 = vadd.f32 0.0, %v2139
        %v2141 = vpop.f32.mrb[0].mxu0
        %v2142 = vpop.f32.mrb[0].mxu0
        %v2143 = vadd.f32 0.0, %v2142
        %v2144 = vpop.f32.mrb[0].mxu0
        %2145 = vmatprep.mubr.bf16.mxu0 0
        %2146 = vmatmul.mubr.bf16.gmra.mrb[0].mxu0 %v2024
        %v2147 = vpop.f32.mrb[0].mxu0
        %v2148 = vadd.f32 0.0, %v2147
        %v2149 = vpop.f32.mrb[0].mxu0
        %v2150 = vpop.f32.mrb[0].mxu0
        %v2151 = vadd.f32 0.0, %v2150
        %v2152 = vpop.f32.mrb[0].mxu0
        %2153 = vmatprep.mubr.bf16.mxu0 0
        %2154 = vmatmul.mubr.bf16.gmra.mrb[0].mxu0 %v2027
        %v2155 = vpop.f32.mrb[0].mxu0
        %v2156 = vadd.f32 0.0, %v2155
        %v2157 = vpop.f32.mrb[0].mxu0
        %v2158 = vpop.f32.mrb[0].mxu0
        %v2159 = vadd.f32 0.0, %v2158
        %v2160 = vpop.f32.mrb[0].mxu0
        %2161 = vdwg.mxu0
        %v2162 = vadd.f32 %v2064, %v2132
        %v2163 = vadd.f32 %v2067, %v2135
        %v2164 = vadd.f32 %v2072, %v2140
        %v2165 = vadd.f32 %v2075, %v2143
        %v2166 = vadd.f32 %v2080, %v2148
        %v2167 = vadd.f32 %v2083, %v2151
        %v2168 = vadd.f32 %v2088, %v2156
        %v2169 = vadd.f32 %v2091, %v2159
        %v2170 = vadd.f32 %v1867, %v2162
        %v2171 = vadd.f32 %v1868, %v2163
        %v2172 = vadd.f32 %v1869, %v2164
        %v2173 = vadd.f32 %v1870, %v2165
        %v2174 = vadd.f32 %v1871, %v2166
        %v2175 = vadd.f32 %v1872, %v2167
        %v2176 = vadd.f32 %v1873, %v2168
        %v2177 = vadd.f32 %v1874, %v2169
        %v2178 = vld [vmem:[%s1572] sm:$0xf]
        %v2179 = vld [vmem:[%s1572 + $0x4] sm:$0x1]
        %v2180 = vld [vmem:[%s1572 + $0x8] sm:$0xf]
        %v2181 = vld [vmem:[%s1572 + $0xc] sm:$0x1]
        %v2182 = vld [vmem:[%s1572 + $0x10] sm:$0xf]
        %v2183 = vld [vmem:[%s1572 + $0x14] sm:$0x1]
        %v2184 = vld [vmem:[%s1572 + $0x18] sm:$0xf]
        %v2185 = vld [vmem:[%s1572 + $0x1c] sm:$0x1]
        %v2186 = vld [vmem:[%s1572 + $0x20] sm:$0xf]
        %v2187 = vld [vmem:[%s1572 + $0x24] sm:$0x1]
        %v2188 = vld [vmem:[%s1572 + $0x28] sm:$0xf]
        %v2189 = vld [vmem:[%s1572 + $0x2c] sm:$0x1]
        %v2190 = vld [vmem:[%s1572 + $0x30] sm:$0xf]
        %v2191 = vld [vmem:[%s1572 + $0x34] sm:$0x1]
        %v2192 = vld [vmem:[%s1572 + $0x38] sm:$0xf]
        %v2193 = vld [vmem:[%s1572 + $0x3c] sm:$0x1]
        %v2195 = vshrl.u32 %v2178, 16
        %v2197 = vrot.slane %v2195, 4
        %v2198 = vshll.u32 %v2178, 16
        %v2200 = vrot.slane %v2198, 5
        %v2201 = vor.u32 %v2197, %v2200
        %v2202 = vrot.slane %v2201, 4
        %v2204 = vshll.u32 %v2179, 16
        %v2206 = vrot.slane %v2204, 5
        %v2207 = vsel %vm1062, %v2202, %v2206
        %v2209 = vshrl.u32 %v2180, 16
        %v2211 = vrot.slane %v2209, 4
        %v2212 = vshll.u32 %v2180, 16
        %v2214 = vrot.slane %v2212, 5
        %v2215 = vor.u32 %v2211, %v2214
        %v2216 = vrot.slane %v2215, 4
        %v2218 = vshll.u32 %v2181, 16
        %v2220 = vrot.slane %v2218, 5
        %v2221 = vsel %vm1062, %v2216, %v2220
        %v2223 = vshrl.u32 %v2182, 16
        %v2225 = vrot.slane %v2223, 4
        %v2226 = vshll.u32 %v2182, 16
        %v2228 = vrot.slane %v2226, 5
        %v2229 = vor.u32 %v2225, %v2228
        %v2230 = vrot.slane %v2229, 4
        %v2232 = vshll.u32 %v2183, 16
        %v2234 = vrot.slane %v2232, 5
        %v2235 = vsel %vm1062, %v2230, %v2234
        %v2237 = vshrl.u32 %v2184, 16
        %v2239 = vrot.slane %v2237, 4
        %v2240 = vshll.u32 %v2184, 16
        %v2242 = vrot.slane %v2240, 5
        %v2243 = vor.u32 %v2239, %v2242
        %v2244 = vrot.slane %v2243, 4
        %v2246 = vshll.u32 %v2185, 16
        %v2248 = vrot.slane %v2246, 5
        %v2249 = vsel %vm1062, %v2244, %v2248
        %v2251 = vshrl.u32 %v2186, 16
        %v2253 = vrot.slane %v2251, 4
        %v2254 = vshll.u32 %v2186, 16
        %v2256 = vrot.slane %v2254, 5
        %v2257 = vor.u32 %v2253, %v2256
        %v2258 = vrot.slane %v2257, 4
        %v2260 = vshll.u32 %v2187, 16
        %v2262 = vrot.slane %v2260, 5
        %v2263 = vsel %vm1062, %v2258, %v2262
        %v2265 = vshrl.u32 %v2188, 16
        %v2267 = vrot.slane %v2265, 4
        %v2268 = vshll.u32 %v2188, 16
        %v2270 = vrot.slane %v2268, 5
        %v2271 = vor.u32 %v2267, %v2270
        %v2272 = vrot.slane %v2271, 4
        %v2274 = vshll.u32 %v2189, 16
        %v2276 = vrot.slane %v2274, 5
        %v2277 = vsel %vm1062, %v2272, %v2276
        %v2279 = vshrl.u32 %v2190, 16
        %v2281 = vrot.slane %v2279, 4
        %v2282 = vshll.u32 %v2190, 16
        %v2284 = vrot.slane %v2282, 5
        %v2285 = vor.u32 %v2281, %v2284
        %v2286 = vrot.slane %v2285, 4
        %v2288 = vshll.u32 %v2191, 16
        %v2290 = vrot.slane %v2288, 5
        %v2291 = vsel %vm1062, %v2286, %v2290
        %v2293 = vshrl.u32 %v2192, 16
        %v2295 = vrot.slane %v2293, 4
        %v2296 = vshll.u32 %v2192, 16
        %v2298 = vrot.slane %v2296, 5
        %v2299 = vor.u32 %v2295, %v2298
        %v2300 = vrot.slane %v2299, 4
        %v2302 = vshll.u32 %v2193, 16
        %v2304 = vrot.slane %v2302, 5
        %v2305 = vsel %vm1062, %v2300, %v2304
        %v2306 = vld [vmem:[%s1581] sm:$0xf]
        %v2307 = vld [vmem:[%s1581 + $0x4] sm:$0x1]
        %v2308 = vld [vmem:[%s1581 + $0x8] sm:$0xf]
        %v2309 = vld [vmem:[%s1581 + $0xc] sm:$0x1]
        %v2310 = vld [vmem:[%s1581 + $0x10] sm:$0xf]
        %v2311 = vld [vmem:[%s1581 + $0x14] sm:$0x1]
        %v2312 = vld [vmem:[%s1581 + $0x18] sm:$0xf]
        %v2313 = vld [vmem:[%s1581 + $0x1c] sm:$0x1]
        %v2314 = vld [vmem:[%s1581 + $0x20] sm:$0xf]
        %v2315 = vld [vmem:[%s1581 + $0x24] sm:$0x1]
        %v2316 = vld [vmem:[%s1581 + $0x28] sm:$0xf]
        %v2317 = vld [vmem:[%s1581 + $0x2c] sm:$0x1]
        %v2318 = vld [vmem:[%s1581 + $0x30] sm:$0xf]
        %v2319 = vld [vmem:[%s1581 + $0x34] sm:$0x1]
        %v2320 = vld [vmem:[%s1581 + $0x38] sm:$0xf]
        %v2321 = vld [vmem:[%s1581 + $0x3c] sm:$0x1]
        %v2323 = vshrl.u32 %v2306, 16
        %v2325 = vrot.slane %v2323, 4
        %v2326 = vshll.u32 %v2306, 16
        %v2328 = vrot.slane %v2326, 5
        %v2329 = vor.u32 %v2325, %v2328
        %v2330 = vrot.slane %v2329, 4
        %v2332 = vshll.u32 %v2307, 16
        %v2334 = vrot.slane %v2332, 5
        %v2335 = vsel %vm1062, %v2330, %v2334
        %v2337 = vshrl.u32 %v2308, 16
        %v2339 = vrot.slane %v2337, 4
        %v2340 = vshll.u32 %v2308, 16
        %v2342 = vrot.slane %v2340, 5
        %v2343 = vor.u32 %v2339, %v2342
        %v2344 = vrot.slane %v2343, 4
        %v2346 = vshll.u32 %v2309, 16
        %v2348 = vrot.slane %v2346, 5
        %v2349 = vsel %vm1062, %v2344, %v2348
        %v2351 = vshrl.u32 %v2310, 16
        %v2353 = vrot.slane %v2351, 4
        %v2354 = vshll.u32 %v2310, 16
        %v2356 = vrot.slane %v2354, 5
        %v2357 = vor.u32 %v2353, %v2356
        %v2358 = vrot.slane %v2357, 4
        %v2360 = vshll.u32 %v2311, 16
        %v2362 = vrot.slane %v2360, 5
        %v2363 = vsel %vm1062, %v2358, %v2362
        %v2365 = vshrl.u32 %v2312, 16
        %v2367 = vrot.slane %v2365, 4
        %v2368 = vshll.u32 %v2312, 16
        %v2370 = vrot.slane %v2368, 5
        %v2371 = vor.u32 %v2367, %v2370
        %v2372 = vrot.slane %v2371, 4
        %v2374 = vshll.u32 %v2313, 16
        %v2376 = vrot.slane %v2374, 5
        %v2377 = vsel %vm1062, %v2372, %v2376
        %v2379 = vshrl.u32 %v2314, 16
        %v2381 = vrot.slane %v2379, 4
        %v2382 = vshll.u32 %v2314, 16
        %v2384 = vrot.slane %v2382, 5
        %v2385 = vor.u32 %v2381, %v2384
        %v2386 = vrot.slane %v2385, 4
        %v2388 = vshll.u32 %v2315, 16
        %v2390 = vrot.slane %v2388, 5
        %v2391 = vsel %vm1062, %v2386, %v2390
        %v2393 = vshrl.u32 %v2316, 16
        %v2395 = vrot.slane %v2393, 4
        %v2396 = vshll.u32 %v2316, 16
        %v2398 = vrot.slane %v2396, 5
        %v2399 = vor.u32 %v2395, %v2398
        %v2400 = vrot.slane %v2399, 4
        %v2402 = vshll.u32 %v2317, 16
        %v2404 = vrot.slane %v2402, 5
        %v2405 = vsel %vm1062, %v2400, %v2404
        %v2407 = vshrl.u32 %v2318, 16
        %v2409 = vrot.slane %v2407, 4
        %v2410 = vshll.u32 %v2318, 16
        %v2412 = vrot.slane %v2410, 5
        %v2413 = vor.u32 %v2409, %v2412
        %v2414 = vrot.slane %v2413, 4
        %v2416 = vshll.u32 %v2319, 16
        %v2418 = vrot.slane %v2416, 5
        %v2419 = vsel %vm1062, %v2414, %v2418
        %v2421 = vshrl.u32 %v2320, 16
        %v2423 = vrot.slane %v2421, 4
        %v2424 = vshll.u32 %v2320, 16
        %v2426 = vrot.slane %v2424, 5
        %v2427 = vor.u32 %v2423, %v2426
        %v2428 = vrot.slane %v2427, 4
        %v2430 = vshll.u32 %v2321, 16
        %v2432 = vrot.slane %v2430, 5
        %v2433 = vsel %vm1062, %v2428, %v2432
        %s2434 = scalar_lea.vmem %s2, 20
        %v2435 = vld [vmem:[%s2434] sm:$0xf]
        %s2436 = scalar_lea.vmem %s3, 20
        %v2437 = vld [vmem:[%s2436] sm:$0xf]
        %v2438 = vunpack.c.l.b16 %v2335
        %v2439 = vunpack.c.l.b16 %v2349
        %v2440 = vunpack.c.l.b16 %v2363
        %v2441 = vunpack.c.l.b16 %v2377
        %v2442 = vunpack.c.l.b16 %v2391
        %v2443 = vunpack.c.l.b16 %v2405
        %v2444 = vunpack.c.l.b16 %v2419
        %v2445 = vunpack.c.l.b16 %v2433
        %v2446 = vpack.c.b16 %v2439, %v2438
        %v2447 = vpack.c.b16 %v2441, %v2440
        %v2448 = vpack.c.b16 %v2443, %v2442
        %v2449 = vpack.c.b16 %v2445, %v2444
        %v2451 = vsel %vm478, %v2446, 0
        %v2454 = vsel %vm478, %v2447, 0
        %v2457 = vsel %vm478, %v2448, 0
        %v2460 = vsel %vm478, %v2449, 0
        %v2463 = vsel %vm491, %v2435, 0
        %2465 = vmatprep.subr.bf16.mxu0 0
        %2466 = vmatpush1.bf16.msra.mxu0 %v2463
        %2467 = vmatprep.subr.bf16.mxu0 0
        %2468 = vmatpush1.bf16.msra.mxu0 0
        %2469 = vmatprep.subr.bf16.mxu0 0
        %2470 = vmatpush1.bf16.msra.mxu0 0
        %2471 = vmatprep.subr.bf16.mxu0 0
        %2472 = vmatpush1.bf16.msra.mxu0 0
        %2473 = vmatprep.subr.bf16.mxu0 0
        %2474 = vmatpush1.bf16.msra.mxu0 0
        %2475 = vmatprep.subr.bf16.mxu0 0
        %2476 = vmatpush1.bf16.msra.mxu0 0
        %2477 = vmatprep.subr.bf16.mxu0 0
        %2478 = vmatpush1.bf16.msra.mxu0 0
        %2479 = vmatprep.subr.bf16.mxu0 0
        %2480 = vmatpush1.bf16.msra.mxu0 0
        %2481 = vmatprep.subr.bf16.mxu0 0
        %2482 = vmatpush1.bf16.msra.mxu0 0
        %2483 = vmatprep.subr.bf16.mxu0 0
        %2484 = vmatpush1.bf16.msra.mxu0 0
        %2485 = vmatprep.subr.bf16.mxu0 0
        %2486 = vmatpush1.bf16.msra.mxu0 0
        %2487 = vmatprep.subr.bf16.mxu0 0
        %2488 = vmatpush1.bf16.msra.mxu0 0
        %2489 = vmatprep.subr.bf16.mxu0 0
        %2490 = vmatpush1.bf16.msra.mxu0 0
        %2491 = vmatprep.subr.bf16.mxu0 0
        %2492 = vmatpush1.bf16.msra.mxu0 0
        %2493 = vmatprep.subr.bf16.mxu0 0
        %2494 = vmatpush1.bf16.msra.mxu0 0
        %2495 = vmatprep.subr.bf16.mxu0 0
        %2496 = vmatpush1.bf16.msra.mxu0 0
        %2497 = vmatprep.mubr.bf16.mxu0 0
        %2498 = vmatmul.mubr.bf16.gmra.mrb[0].mxu0 %v2451
        %v2499 = vpop.f32.mrb[0].mxu0
        %v2500 = vadd.f32 0.0, %v2499
        %v2501 = vpop.f32.mrb[0].mxu0
        %v2502 = vpop.f32.mrb[0].mxu0
        %v2503 = vadd.f32 0.0, %v2502
        %v2504 = vpop.f32.mrb[0].mxu0
        %2505 = vmatprep.mubr.bf16.mxu0 0
        %2506 = vmatmul.mubr.bf16.gmra.mrb[0].mxu0 %v2454
        %v2507 = vpop.f32.mrb[0].mxu0
        %v2508 = vadd.f32 0.0, %v2507
        %v2509 = vpop.f32.mrb[0].mxu0
        %v2510 = vpop.f32.mrb[0].mxu0
        %v2511 = vadd.f32 0.0, %v2510
        %v2512 = vpop.f32.mrb[0].mxu0
        %2513 = vmatprep.mubr.bf16.mxu0 0
        %2514 = vmatmul.mubr.bf16.gmra.mrb[0].mxu0 %v2457
        %v2515 = vpop.f32.mrb[0].mxu0
        %v2516 = vadd.f32 0.0, %v2515
        %v2517 = vpop.f32.mrb[0].mxu0
        %v2518 = vpop.f32.mrb[0].mxu0
        %v2519 = vadd.f32 0.0, %v2518
        %v2520 = vpop.f32.mrb[0].mxu0
        %2521 = vmatprep.mubr.bf16.mxu0 0
        %2522 = vmatmul.mubr.bf16.gmra.mrb[0].mxu0 %v2460
        %v2523 = vpop.f32.mrb[0].mxu0
        %v2524 = vadd.f32 0.0, %v2523
        %v2525 = vpop.f32.mrb[0].mxu0
        %v2526 = vpop.f32.mrb[0].mxu0
        %v2527 = vadd.f32 0.0, %v2526
        %v2528 = vpop.f32.mrb[0].mxu0
        %2529 = vdwg.mxu0
        %v2530 = vunpack.c.l.b16 %v2207
        %v2531 = vunpack.c.l.b16 %v2221
        %v2532 = vunpack.c.l.b16 %v2235
        %v2533 = vunpack.c.l.b16 %v2249
        %v2534 = vunpack.c.l.b16 %v2263
        %v2535 = vunpack.c.l.b16 %v2277
        %v2536 = vunpack.c.l.b16 %v2291
        %v2537 = vunpack.c.l.b16 %v2305
        %v2538 = vpack.c.b16 %v2531, %v2530
        %v2539 = vpack.c.b16 %v2533, %v2532
        %v2540 = vpack.c.b16 %v2535, %v2534
        %v2541 = vpack.c.b16 %v2537, %v2536
        %v2543 = vsel %vm478, %v2538, 0
        %v2546 = vsel %vm478, %v2539, 0
        %v2549 = vsel %vm478, %v2540, 0
        %v2552 = vsel %vm478, %v2541, 0
        %2554 = vmatprep.subr.bf16.mxu0 0
        %2555 = vmatpush1.bf16.msra.mxu0 %v2463
        %2556 = vmatprep.subr.bf16.mxu0 0
        %2557 = vmatpush1.bf16.msra.mxu0 0
        %2558 = vmatprep.subr.bf16.mxu0 0
        %2559 = vmatpush1.bf16.msra.mxu0 0
        %2560 = vmatprep.subr.bf16.mxu0 0
        %2561 = vmatpush1.bf16.msra.mxu0 0
        %2562 = vmatprep.subr.bf16.mxu0 0
        %2563 = vmatpush1.bf16.msra.mxu0 0
        %2564 = vmatprep.subr.bf16.mxu0 0
        %2565 = vmatpush1.bf16.msra.mxu0 0
        %2566 = vmatprep.subr.bf16.mxu0 0
        %2567 = vmatpush1.bf16.msra.mxu0 0
        %2568 = vmatprep.subr.bf16.mxu0 0
        %2569 = vmatpush1.bf16.msra.mxu0 0
        %2570 = vmatprep.subr.bf16.mxu0 0
        %2571 = vmatpush1.bf16.msra.mxu0 0
        %2572 = vmatprep.subr.bf16.mxu0 0
        %2573 = vmatpush1.bf16.msra.mxu0 0
        %2574 = vmatprep.subr.bf16.mxu0 0
        %2575 = vmatpush1.bf16.msra.mxu0 0
        %2576 = vmatprep.subr.bf16.mxu0 0
        %2577 = vmatpush1.bf16.msra.mxu0 0
        %2578 = vmatprep.subr.bf16.mxu0 0
        %2579 = vmatpush1.bf16.msra.mxu0 0
        %2580 = vmatprep.subr.bf16.mxu0 0
        %2581 = vmatpush1.bf16.msra.mxu0 0
        %2582 = vmatprep.subr.bf16.mxu0 0
        %2583 = vmatpush1.bf16.msra.mxu0 0
        %2584 = vmatprep.subr.bf16.mxu0 0
        %2585 = vmatpush1.bf16.msra.mxu0 0
        %2586 = vmatprep.mubr.bf16.mxu0 0
        %2587 = vmatmul.mubr.bf16.gmra.mrb[0].mxu0 %v2543
        %v2588 = vpop.f32.mrb[0].mxu0
        %v2589 = vadd.f32 %v2500, %v2588
        %v2590 = vpop.f32.mrb[0].mxu0
        %v2591 = vpop.f32.mrb[0].mxu0
        %v2592 = vadd.f32 %v2503, %v2591
        %v2593 = vpop.f32.mrb[0].mxu0
        %2594 = vmatprep.mubr.bf16.mxu0 0
        %2595 = vmatmul.mubr.bf16.gmra.mrb[0].mxu0 %v2546
        %v2596 = vpop.f32.mrb[0].mxu0
        %v2597 = vadd.f32 %v2508, %v2596
        %v2598 = vpop.f32.mrb[0].mxu0
        %v2599 = vpop.f32.mrb[0].mxu0
        %v2600 = vadd.f32 %v2511, %v2599
        %v2601 = vpop.f32.mrb[0].mxu0
        %2602 = vmatprep.mubr.bf16.mxu0 0
        %2603 = vmatmul.mubr.bf16.gmra.mrb[0].mxu0 %v2549
        %v2604 = vpop.f32.mrb[0].mxu0
        %v2605 = vadd.f32 %v2516, %v2604
        %v2606 = vpop.f32.mrb[0].mxu0
        %v2607 = vpop.f32.mrb[0].mxu0
        %v2608 = vadd.f32 %v2519, %v2607
        %v2609 = vpop.f32.mrb[0].mxu0
        %2610 = vmatprep.mubr.bf16.mxu0 0
        %2611 = vmatmul.mubr.bf16.gmra.mrb[0].mxu0 %v2552
        %v2612 = vpop.f32.mrb[0].mxu0
        %v2613 = vadd.f32 %v2524, %v2612
        %v2614 = vpop.f32.mrb[0].mxu0
        %v2615 = vpop.f32.mrb[0].mxu0
        %v2616 = vadd.f32 %v2527, %v2615
        %v2617 = vpop.f32.mrb[0].mxu0
        %2618 = vdwg.mxu0
        %v2620 = vsel %vm491, %v2437, 0
        %2622 = vmatprep.subr.bf16.mxu0 0
        %2623 = vmatpush1.bf16.msra.mxu0 %v2620
        %2624 = vmatprep.subr.bf16.mxu0 0
        %2625 = vmatpush1.bf16.msra.mxu0 0
        %2626 = vmatprep.subr.bf16.mxu0 0
        %2627 = vmatpush1.bf16.msra.mxu0 0
        %2628 = vmatprep.subr.bf16.mxu0 0
        %2629 = vmatpush1.bf16.msra.mxu0 0
        %2630 = vmatprep.subr.bf16.mxu0 0
        %2631 = vmatpush1.bf16.msra.mxu0 0
        %2632 = vmatprep.subr.bf16.mxu0 0
        %2633 = vmatpush1.bf16.msra.mxu0 0
        %2634 = vmatprep.subr.bf16.mxu0 0
        %2635 = vmatpush1.bf16.msra.mxu0 0
        %2636 = vmatprep.subr.bf16.mxu0 0
        %2637 = vmatpush1.bf16.msra.mxu0 0
        %2638 = vmatprep.subr.bf16.mxu0 0
        %2639 = vmatpush1.bf16.msra.mxu0 0
        %2640 = vmatprep.subr.bf16.mxu0 0
        %2641 = vmatpush1.bf16.msra.mxu0 0
        %2642 = vmatprep.subr.bf16.mxu0 0
        %2643 = vmatpush1.bf16.msra.mxu0 0
        %2644 = vmatprep.subr.bf16.mxu0 0
        %2645 = vmatpush1.bf16.msra.mxu0 0
        %2646 = vmatprep.subr.bf16.mxu0 0
        %2647 = vmatpush1.bf16.msra.mxu0 0
        %2648 = vmatprep.subr.bf16.mxu0 0
        %2649 = vmatpush1.bf16.msra.mxu0 0
        %2650 = vmatprep.subr.bf16.mxu0 0
        %2651 = vmatpush1.bf16.msra.mxu0 0
        %2652 = vmatprep.subr.bf16.mxu0 0
        %2653 = vmatpush1.bf16.msra.mxu0 0
        %2654 = vmatprep.mubr.bf16.mxu0 0
        %2655 = vmatmul.mubr.bf16.gmra.mrb[0].mxu0 %v2543
        %v2656 = vpop.f32.mrb[0].mxu0
        %v2657 = vadd.f32 0.0, %v2656
        %v2658 = vpop.f32.mrb[0].mxu0
        %v2659 = vpop.f32.mrb[0].mxu0
        %v2660 = vadd.f32 0.0, %v2659
        %v2661 = vpop.f32.mrb[0].mxu0
        %2662 = vmatprep.mubr.bf16.mxu0 0
        %2663 = vmatmul.mubr.bf16.gmra.mrb[0].mxu0 %v2546
        %v2664 = vpop.f32.mrb[0].mxu0
        %v2665 = vadd.f32 0.0, %v2664
        %v2666 = vpop.f32.mrb[0].mxu0
        %v2667 = vpop.f32.mrb[0].mxu0
        %v2668 = vadd.f32 0.0, %v2667
        %v2669 = vpop.f32.mrb[0].mxu0
        %2670 = vmatprep.mubr.bf16.mxu0 0
        %2671 = vmatmul.mubr.bf16.gmra.mrb[0].mxu0 %v2549
        %v2672 = vpop.f32.mrb[0].mxu0
        %v2673 = vadd.f32 0.0, %v2672
        %v2674 = vpop.f32.mrb[0].mxu0
        %v2675 = vpop.f32.mrb[0].mxu0
        %v2676 = vadd.f32 0.0, %v2675
        %v2677 = vpop.f32.mrb[0].mxu0
        %2678 = vmatprep.mubr.bf16.mxu0 0
        %2679 = vmatmul.mubr.bf16.gmra.mrb[0].mxu0 %v2552
        %v2680 = vpop.f32.mrb[0].mxu0
        %v2681 = vadd.f32 0.0, %v2680
        %v2682 = vpop.f32.mrb[0].mxu0
        %v2683 = vpop.f32.mrb[0].mxu0
        %v2684 = vadd.f32 0.0, %v2683
        %v2685 = vpop.f32.mrb[0].mxu0
        %2686 = vdwg.mxu0
        %v2687 = vadd.f32 %v2589, %v2657
        %v2688 = vadd.f32 %v2592, %v2660
        %v2689 = vadd.f32 %v2597, %v2665
        %v2690 = vadd.f32 %v2600, %v2668
        %v2691 = vadd.f32 %v2605, %v2673
        %v2692 = vadd.f32 %v2608, %v2676
        %v2693 = vadd.f32 %v2613, %v2681
        %v2694 = vadd.f32 %v2616, %v2684
        %v2695 = vadd.f32 %v2170, %v2687
        %v2696 = vadd.f32 %v2171, %v2688
        %v2697 = vadd.f32 %v2172, %v2689
        %v2698 = vadd.f32 %v2173, %v2690
        %v2699 = vadd.f32 %v2174, %v2691
        %v2700 = vadd.f32 %v2175, %v2692
        %v2701 = vadd.f32 %v2176, %v2693
        %v2702 = vadd.f32 %v2177, %v2694
        %s2703 = scalar_lea.vmem %s414, 8
        %v2704 = vld [vmem:[%s2703] sm:$0xf]
        %v2705 = vld [vmem:[%s2703 + $0x8] sm:$0xf]
        %v2706 = vld [vmem:[%s2703 + $0x10] sm:$0xf]
        %v2707 = vld [vmem:[%s2703 + $0x18] sm:$0xf]
        %v2708 = vld [vmem:[%s2703 + $0x20] sm:$0xf]
        %v2709 = vld [vmem:[%s2703 + $0x28] sm:$0xf]
        %v2710 = vld [vmem:[%s2703 + $0x30] sm:$0xf]
        %v2711 = vld [vmem:[%s2703 + $0x38] sm:$0xf]
        %s2712 = scalar_lea.vmem %s419, 8
        %v2713 = vld [vmem:[%s2712] sm:$0xf]
        %v2714 = vld [vmem:[%s2712 + $0x8] sm:$0xf]
        %v2715 = vld [vmem:[%s2712 + $0x10] sm:$0xf]
        %v2716 = vld [vmem:[%s2712 + $0x18] sm:$0xf]
        %v2717 = vld [vmem:[%s2712 + $0x20] sm:$0xf]
        %v2718 = vld [vmem:[%s2712 + $0x28] sm:$0xf]
        %v2719 = vld [vmem:[%s2712 + $0x30] sm:$0xf]
        %v2720 = vld [vmem:[%s2712 + $0x38] sm:$0xf]
        %s2721 = scalar_lea.vmem %s2, 24
        %v2722 = vld [vmem:[%s2721] sm:$0xf]
        %s2723 = scalar_lea.vmem %s3, 24
        %v2724 = vld [vmem:[%s2723] sm:$0xf]
        %v2733 = vunpack.c.l.b16 %v2713
        %v2734 = vunpack.c.l.b16 %v2714
        %v2735 = vunpack.c.l.b16 %v2715
        %v2736 = vunpack.c.l.b16 %v2716
        %v2737 = vunpack.c.l.b16 %v2717
        %v2738 = vunpack.c.l.b16 %v2718
        %v2739 = vunpack.c.l.b16 %v2719
        %v2740 = vunpack.c.l.b16 %v2720
        %v2741 = vpack.c.b16 %v2734, %v2733
        %v2742 = vpack.c.b16 %v2736, %v2735
        %v2743 = vpack.c.b16 %v2738, %v2737
        %v2744 = vpack.c.b16 %v2740, %v2739
        %v2746 = vsel %vm478, %v2741, 0
        %v2749 = vsel %vm478, %v2742, 0
        %v2752 = vsel %vm478, %v2743, 0
        %v2755 = vsel %vm478, %v2744, 0
        %v2758 = vsel %vm491, %v2722, 0
        %2760 = vmatprep.subr.bf16.mxu0 0
        %2761 = vmatpush1.bf16.msra.mxu0 %v2758
        %2762 = vmatprep.subr.bf16.mxu0 0
        %2763 = vmatpush1.bf16.msra.mxu0 0
        %2764 = vmatprep.subr.bf16.mxu0 0
        %2765 = vmatpush1.bf16.msra.mxu0 0
        %2766 = vmatprep.subr.bf16.mxu0 0
        %2767 = vmatpush1.bf16.msra.mxu0 0
        %2768 = vmatprep.subr.bf16.mxu0 0
        %2769 = vmatpush1.bf16.msra.mxu0 0
        %2770 = vmatprep.subr.bf16.mxu0 0
        %2771 = vmatpush1.bf16.msra.mxu0 0
        %2772 = vmatprep.subr.bf16.mxu0 0
        %2773 = vmatpush1.bf16.msra.mxu0 0
        %2774 = vmatprep.subr.bf16.mxu0 0
        %2775 = vmatpush1.bf16.msra.mxu0 0
        %2776 = vmatprep.subr.bf16.mxu0 0
        %2777 = vmatpush1.bf16.msra.mxu0 0
        %2778 = vmatprep.subr.bf16.mxu0 0
        %2779 = vmatpush1.bf16.msra.mxu0 0
        %2780 = vmatprep.subr.bf16.mxu0 0
        %2781 = vmatpush1.bf16.msra.mxu0 0
        %2782 = vmatprep.subr.bf16.mxu0 0
        %2783 = vmatpush1.bf16.msra.mxu0 0
        %2784 = vmatprep.subr.bf16.mxu0 0
        %2785 = vmatpush1.bf16.msra.mxu0 0
        %2786 = vmatprep.subr.bf16.mxu0 0
        %2787 = vmatpush1.bf16.msra.mxu0 0
        %2788 = vmatprep.subr.bf16.mxu0 0
        %2789 = vmatpush1.bf16.msra.mxu0 0
        %2790 = vmatprep.subr.bf16.mxu0 0
        %2791 = vmatpush1.bf16.msra.mxu0 0
        %2792 = vmatprep.mubr.bf16.mxu0 0
        %2793 = vmatmul.mubr.bf16.gmra.mrb[0].mxu0 %v2746
        %v2794 = vpop.f32.mrb[0].mxu0
        %v2795 = vadd.f32 0.0, %v2794
        %v2796 = vpop.f32.mrb[0].mxu0
        %v2797 = vpop.f32.mrb[0].mxu0
        %v2798 = vadd.f32 0.0, %v2797
        %v2799 = vpop.f32.mrb[0].mxu0
        %2800 = vmatprep.mubr.bf16.mxu0 0
        %2801 = vmatmul.mubr.bf16.gmra.mrb[0].mxu0 %v2749
        %v2802 = vpop.f32.mrb[0].mxu0
        %v2803 = vadd.f32 0.0, %v2802
        %v2804 = vpop.f32.mrb[0].mxu0
        %v2805 = vpop.f32.mrb[0].mxu0
        %v2806 = vadd.f32 0.0, %v2805
        %v2807 = vpop.f32.mrb[0].mxu0
        %2808 = vmatprep.mubr.bf16.mxu0 0
        %2809 = vmatmul.mubr.bf16.gmra.mrb[0].mxu0 %v2752
        %v2810 = vpop.f32.mrb[0].mxu0
        %v2811 = vadd.f32 0.0, %v2810
        %v2812 = vpop.f32.mrb[0].mxu0
        %v2813 = vpop.f32.mrb[0].mxu0
        %v2814 = vadd.f32 0.0, %v2813
        %v2815 = vpop.f32.mrb[0].mxu0
        %2816 = vmatprep.mubr.bf16.mxu0 0
        %2817 = vmatmul.mubr.bf16.gmra.mrb[0].mxu0 %v2755
        %v2818 = vpop.f32.mrb[0].mxu0
        %v2819 = vadd.f32 0.0, %v2818
        %v2820 = vpop.f32.mrb[0].mxu0
        %v2821 = vpop.f32.mrb[0].mxu0
        %v2822 = vadd.f32 0.0, %v2821
        %v2823 = vpop.f32.mrb[0].mxu0
        %2824 = vdwg.mxu0
        %v2833 = vunpack.c.l.b16 %v2704
        %v2834 = vunpack.c.l.b16 %v2705
        %v2835 = vunpack.c.l.b16 %v2706
        %v2836 = vunpack.c.l.b16 %v2707
        %v2837 = vunpack.c.l.b16 %v2708
        %v2838 = vunpack.c.l.b16 %v2709
        %v2839 = vunpack.c.l.b16 %v2710
        %v2840 = vunpack.c.l.b16 %v2711
        %v2841 = vpack.c.b16 %v2834, %v2833
        %v2842 = vpack.c.b16 %v2836, %v2835
        %v2843 = vpack.c.b16 %v2838, %v2837
        %v2844 = vpack.c.b16 %v2840, %v2839
        %v2846 = vsel %vm478, %v2841, 0
        %v2849 = vsel %vm478, %v2842, 0
        %v2852 = vsel %vm478, %v2843, 0
        %v2855 = vsel %vm478, %v2844, 0
        %2857 = vmatprep.subr.bf16.mxu0 0
        %2858 = vmatpush1.bf16.msra.mxu0 %v2758
        %2859 = vmatprep.subr.bf16.mxu0 0
        %2860 = vmatpush1.bf16.msra.mxu0 0
        %2861 = vmatprep.subr.bf16.mxu0 0
        %2862 = vmatpush1.bf16.msra.mxu0 0
        %2863 = vmatprep.subr.bf16.mxu0 0
        %2864 = vmatpush1.bf16.msra.mxu0 0
        %2865 = vmatprep.subr.bf16.mxu0 0
        %2866 = vmatpush1.bf16.msra.mxu0 0
        %2867 = vmatprep.subr.bf16.mxu0 0
        %2868 = vmatpush1.bf16.msra.mxu0 0
        %2869 = vmatprep.subr.bf16.mxu0 0
        %2870 = vmatpush1.bf16.msra.mxu0 0
        %2871 = vmatprep.subr.bf16.mxu0 0
        %2872 = vmatpush1.bf16.msra.mxu0 0
        %2873 = vmatprep.subr.bf16.mxu0 0
        %2874 = vmatpush1.bf16.msra.mxu0 0
        %2875 = vmatprep.subr.bf16.mxu0 0
        %2876 = vmatpush1.bf16.msra.mxu0 0
        %2877 = vmatprep.subr.bf16.mxu0 0
        %2878 = vmatpush1.bf16.msra.mxu0 0
        %2879 = vmatprep.subr.bf16.mxu0 0
        %2880 = vmatpush1.bf16.msra.mxu0 0
        %2881 = vmatprep.subr.bf16.mxu0 0
        %2882 = vmatpush1.bf16.msra.mxu0 0
        %2883 = vmatprep.subr.bf16.mxu0 0
        %2884 = vmatpush1.bf16.msra.mxu0 0
        %2885 = vmatprep.subr.bf16.mxu0 0
        %2886 = vmatpush1.bf16.msra.mxu0 0
        %2887 = vmatprep.subr.bf16.mxu0 0
        %2888 = vmatpush1.bf16.msra.mxu0 0
        %2889 = vmatprep.mubr.bf16.mxu0 0
        %2890 = vmatmul.mubr.bf16.gmra.mrb[0].mxu0 %v2846
        %v2891 = vpop.f32.mrb[0].mxu0
        %v2892 = vadd.f32 %v2795, %v2891
        %v2893 = vpop.f32.mrb[0].mxu0
        %v2894 = vpop.f32.mrb[0].mxu0
        %v2895 = vadd.f32 %v2798, %v2894
        %v2896 = vpop.f32.mrb[0].mxu0
        %2897 = vmatprep.mubr.bf16.mxu0 0
        %2898 = vmatmul.mubr.bf16.gmra.mrb[0].mxu0 %v2849
        %v2899 = vpop.f32.mrb[0].mxu0
        %v2900 = vadd.f32 %v2803, %v2899
        %v2901 = vpop.f32.mrb[0].mxu0
        %v2902 = vpop.f32.mrb[0].mxu0
        %v2903 = vadd.f32 %v2806, %v2902
        %v2904 = vpop.f32.mrb[0].mxu0
        %2905 = vmatprep.mubr.bf16.mxu0 0
        %2906 = vmatmul.mubr.bf16.gmra.mrb[0].mxu0 %v2852
        %v2907 = vpop.f32.mrb[0].mxu0
        %v2908 = vadd.f32 %v2811, %v2907
        %v2909 = vpop.f32.mrb[0].mxu0
        %v2910 = vpop.f32.mrb[0].mxu0
        %v2911 = vadd.f32 %v2814, %v2910
        %v2912 = vpop.f32.mrb[0].mxu0
        %2913 = vmatprep.mubr.bf16.mxu0 0
        %2914 = vmatmul.mubr.bf16.gmra.mrb[0].mxu0 %v2855
        %v2915 = vpop.f32.mrb[0].mxu0
        %v2916 = vadd.f32 %v2819, %v2915
        %v2917 = vpop.f32.mrb[0].mxu0
        %v2918 = vpop.f32.mrb[0].mxu0
        %v2919 = vadd.f32 %v2822, %v2918
        %v2920 = vpop.f32.mrb[0].mxu0
        %2921 = vdwg.mxu0
        %v2923 = vsel %vm491, %v2724, 0
        %2925 = vmatprep.subr.bf16.mxu0 0
        %2926 = vmatpush1.bf16.msra.mxu0 %v2923
        %2927 = vmatprep.subr.bf16.mxu0 0
        %2928 = vmatpush1.bf16.msra.mxu0 0
        %2929 = vmatprep.subr.bf16.mxu0 0
        %2930 = vmatpush1.bf16.msra.mxu0 0
        %2931 = vmatprep.subr.bf16.mxu0 0
        %2932 = vmatpush1.bf16.msra.mxu0 0
        %2933 = vmatprep.subr.bf16.mxu0 0
        %2934 = vmatpush1.bf16.msra.mxu0 0
        %2935 = vmatprep.subr.bf16.mxu0 0
        %2936 = vmatpush1.bf16.msra.mxu0 0
        %2937 = vmatprep.subr.bf16.mxu0 0
        %2938 = vmatpush1.bf16.msra.mxu0 0
        %2939 = vmatprep.subr.bf16.mxu0 0
        %2940 = vmatpush1.bf16.msra.mxu0 0
        %2941 = vmatprep.subr.bf16.mxu0 0
        %2942 = vmatpush1.bf16.msra.mxu0 0
        %2943 = vmatprep.subr.bf16.mxu0 0
        %2944 = vmatpush1.bf16.msra.mxu0 0
        %2945 = vmatprep.subr.bf16.mxu0 0
        %2946 = vmatpush1.bf16.msra.mxu0 0
        %2947 = vmatprep.subr.bf16.mxu0 0
        %2948 = vmatpush1.bf16.msra.mxu0 0
        %2949 = vmatprep.subr.bf16.mxu0 0
        %2950 = vmatpush1.bf16.msra.mxu0 0
        %2951 = vmatprep.subr.bf16.mxu0 0
        %2952 = vmatpush1.bf16.msra.mxu0 0
        %2953 = vmatprep.subr.bf16.mxu0 0
        %2954 = vmatpush1.bf16.msra.mxu0 0
        %2955 = vmatprep.subr.bf16.mxu0 0
        %2956 = vmatpush1.bf16.msra.mxu0 0
        %2957 = vmatprep.mubr.bf16.mxu0 0
        %2958 = vmatmul.mubr.bf16.gmra.mrb[0].mxu0 %v2846
        %v2959 = vpop.f32.mrb[0].mxu0
        %v2960 = vadd.f32 0.0, %v2959
        %v2961 = vpop.f32.mrb[0].mxu0
        %v2962 = vpop.f32.mrb[0].mxu0
        %v2963 = vadd.f32 0.0, %v2962
        %v2964 = vpop.f32.mrb[0].mxu0
        %2965 = vmatprep.mubr.bf16.mxu0 0
        %2966 = vmatmul.mubr.bf16.gmra.mrb[0].mxu0 %v2849
        %v2967 = vpop.f32.mrb[0].mxu0
        %v2968 = vadd.f32 0.0, %v2967
        %v2969 = vpop.f32.mrb[0].mxu0
        %v2970 = vpop.f32.mrb[0].mxu0
        %v2971 = vadd.f32 0.0, %v2970
        %v2972 = vpop.f32.mrb[0].mxu0
        %2973 = vmatprep.mubr.bf16.mxu0 0
        %2974 = vmatmul.mubr.bf16.gmra.mrb[0].mxu0 %v2852
        %v2975 = vpop.f32.mrb[0].mxu0
        %v2976 = vadd.f32 0.0, %v2975
        %v2977 = vpop.f32.mrb[0].mxu0
        %v2978 = vpop.f32.mrb[0].mxu0
        %v2979 = vadd.f32 0.0, %v2978
        %v2980 = vpop.f32.mrb[0].mxu0
        %2981 = vmatprep.mubr.bf16.mxu0 0
        %2982 = vmatmul.mubr.bf16.gmra.mrb[0].mxu0 %v2855
        %v2983 = vpop.f32.mrb[0].mxu0
        %v2984 = vadd.f32 0.0, %v2983
        %v2985 = vpop.f32.mrb[0].mxu0
        %v2986 = vpop.f32.mrb[0].mxu0
        %v2987 = vadd.f32 0.0, %v2986
        %v2988 = vpop.f32.mrb[0].mxu0
        %2989 = vdwg.mxu0
        %v2990 = vadd.f32 %v2892, %v2960
        %v2991 = vadd.f32 %v2895, %v2963
        %v2992 = vadd.f32 %v2900, %v2968
        %v2993 = vadd.f32 %v2903, %v2971
        %v2994 = vadd.f32 %v2908, %v2976
        %v2995 = vadd.f32 %v2911, %v2979
        %v2996 = vadd.f32 %v2916, %v2984
        %v2997 = vadd.f32 %v2919, %v2987
        %v2998 = vadd.f32 %v2695, %v2990
        %v2999 = vadd.f32 %v2696, %v2991
        %v3000 = vadd.f32 %v2697, %v2992
        %v3001 = vadd.f32 %v2698, %v2993
        %v3002 = vadd.f32 %v2699, %v2994
        %v3003 = vadd.f32 %v2700, %v2995
        %v3004 = vadd.f32 %v2701, %v2996
        %v3005 = vadd.f32 %v2702, %v2997
        %s3006 = scalar_lea.vmem %s414, 80
        %v3007 = vld [vmem:[%s3006] sm:$0xf]
        %v3008 = vld [vmem:[%s3006 + $0x8] sm:$0xf]
        %v3009 = vld [vmem:[%s3006 + $0x10] sm:$0xf]
        %v3010 = vld [vmem:[%s3006 + $0x18] sm:$0xf]
        %v3011 = vld [vmem:[%s3006 + $0x20] sm:$0xf]
        %v3012 = vld [vmem:[%s3006 + $0x28] sm:$0xf]
        %v3013 = vld [vmem:[%s3006 + $0x30] sm:$0xf]
        %v3014 = vld [vmem:[%s3006 + $0x38] sm:$0xf]
        %s3015 = scalar_lea.vmem %s419, 80
        %v3016 = vld [vmem:[%s3015] sm:$0xf]
        %v3017 = vld [vmem:[%s3015 + $0x8] sm:$0xf]
        %v3018 = vld [vmem:[%s3015 + $0x10] sm:$0xf]
        %v3019 = vld [vmem:[%s3015 + $0x18] sm:$0xf]
        %v3020 = vld [vmem:[%s3015 + $0x20] sm:$0xf]
        %v3021 = vld [vmem:[%s3015 + $0x28] sm:$0xf]
        %v3022 = vld [vmem:[%s3015 + $0x30] sm:$0xf]
        %v3023 = vld [vmem:[%s3015 + $0x38] sm:$0xf]
        %s3024 = scalar_lea.vmem %s2, 28
        %v3025 = vld [vmem:[%s3024] sm:$0xf]
        %s3026 = scalar_lea.vmem %s3, 28
        %v3027 = vld [vmem:[%s3026] sm:$0xf]
        %v3036 = vunpack.c.l.b16 %v3016
        %v3037 = vunpack.c.l.b16 %v3017
        %v3038 = vunpack.c.l.b16 %v3018
        %v3039 = vunpack.c.l.b16 %v3019
        %v3040 = vunpack.c.l.b16 %v3020
        %v3041 = vunpack.c.l.b16 %v3021
        %v3042 = vunpack.c.l.b16 %v3022
        %v3043 = vunpack.c.l.b16 %v3023
        %v3044 = vpack.c.b16 %v3037, %v3036
        %v3045 = vpack.c.b16 %v3039, %v3038
        %v3046 = vpack.c.b16 %v3041, %v3040
        %v3047 = vpack.c.b16 %v3043, %v3042
        %v3049 = vsel %vm478, %v3044, 0
        %v3052 = vsel %vm478, %v3045, 0
        %v3055 = vsel %vm478, %v3046, 0
        %v3058 = vsel %vm478, %v3047, 0
        %v3061 = vsel %vm491, %v3025, 0
        %3063 = vmatprep.subr.bf16.mxu0 0
        %3064 = vmatpush1.bf16.msra.mxu0 %v3061
        %3065 = vmatprep.subr.bf16.mxu0 0
        %3066 = vmatpush1.bf16.msra.mxu0 0
        %3067 = vmatprep.subr.bf16.mxu0 0
        %3068 = vmatpush1.bf16.msra.mxu0 0
        %3069 = vmatprep.subr.bf16.mxu0 0
        %3070 = vmatpush1.bf16.msra.mxu0 0
        %3071 = vmatprep.subr.bf16.mxu0 0
        %3072 = vmatpush1.bf16.msra.mxu0 0
        %3073 = vmatprep.subr.bf16.mxu0 0
        %3074 = vmatpush1.bf16.msra.mxu0 0
        %3075 = vmatprep.subr.bf16.mxu0 0
        %3076 = vmatpush1.bf16.msra.mxu0 0
        %3077 = vmatprep.subr.bf16.mxu0 0
        %3078 = vmatpush1.bf16.msra.mxu0 0
        %3079 = vmatprep.subr.bf16.mxu0 0
        %3080 = vmatpush1.bf16.msra.mxu0 0
        %3081 = vmatprep.subr.bf16.mxu0 0
        %3082 = vmatpush1.bf16.msra.mxu0 0
        %3083 = vmatprep.subr.bf16.mxu0 0
        %3084 = vmatpush1.bf16.msra.mxu0 0
        %3085 = vmatprep.subr.bf16.mxu0 0
        %3086 = vmatpush1.bf16.msra.mxu0 0
        %3087 = vmatprep.subr.bf16.mxu0 0
        %3088 = vmatpush1.bf16.msra.mxu0 0
        %3089 = vmatprep.subr.bf16.mxu0 0
        %3090 = vmatpush1.bf16.msra.mxu0 0
        %3091 = vmatprep.subr.bf16.mxu0 0
        %3092 = vmatpush1.bf16.msra.mxu0 0
        %3093 = vmatprep.subr.bf16.mxu0 0
        %3094 = vmatpush1.bf16.msra.mxu0 0
        %3095 = vmatprep.mubr.bf16.mxu0 0
        %3096 = vmatmul.mubr.bf16.gmra.mrb[0].mxu0 %v3049
        %v3097 = vpop.f32.mrb[0].mxu0
        %v3098 = vadd.f32 0.0, %v3097
        %v3099 = vpop.f32.mrb[0].mxu0
        %v3100 = vpop.f32.mrb[0].mxu0
        %v3101 = vadd.f32 0.0, %v3100
        %v3102 = vpop.f32.mrb[0].mxu0
        %3103 = vmatprep.mubr.bf16.mxu0 0
        %3104 = vmatmul.mubr.bf16.gmra.mrb[0].mxu0 %v3052
        %v3105 = vpop.f32.mrb[0].mxu0
        %v3106 = vadd.f32 0.0, %v3105
        %v3107 = vpop.f32.mrb[0].mxu0
        %v3108 = vpop.f32.mrb[0].mxu0
        %v3109 = vadd.f32 0.0, %v3108
        %v3110 = vpop.f32.mrb[0].mxu0
        %3111 = vmatprep.mubr.bf16.mxu0 0
        %3112 = vmatmul.mubr.bf16.gmra.mrb[0].mxu0 %v3055
        %v3113 = vpop.f32.mrb[0].mxu0
        %v3114 = vadd.f32 0.0, %v3113
        %v3115 = vpop.f32.mrb[0].mxu0
        %v3116 = vpop.f32.mrb[0].mxu0
        %v3117 = vadd.f32 0.0, %v3116
        %v3118 = vpop.f32.mrb[0].mxu0
        %3119 = vmatprep.mubr.bf16.mxu0 0
        %3120 = vmatmul.mubr.bf16.gmra.mrb[0].mxu0 %v3058
        %v3121 = vpop.f32.mrb[0].mxu0
        %v3122 = vadd.f32 0.0, %v3121
        %v3123 = vpop.f32.mrb[0].mxu0
        %v3124 = vpop.f32.mrb[0].mxu0
        %v3125 = vadd.f32 0.0, %v3124
        %v3126 = vpop.f32.mrb[0].mxu0
        %3127 = vdwg.mxu0
        %v3136 = vunpack.c.l.b16 %v3007
        %v3137 = vunpack.c.l.b16 %v3008
        %v3138 = vunpack.c.l.b16 %v3009
        %v3139 = vunpack.c.l.b16 %v3010
        %v3140 = vunpack.c.l.b16 %v3011
        %v3141 = vunpack.c.l.b16 %v3012
        %v3142 = vunpack.c.l.b16 %v3013
        %v3143 = vunpack.c.l.b16 %v3014
        %v3144 = vpack.c.b16 %v3137, %v3136
        %v3145 = vpack.c.b16 %v3139, %v3138
        %v3146 = vpack.c.b16 %v3141, %v3140
        %v3147 = vpack.c.b16 %v3143, %v3142
        %v3149 = vsel %vm478, %v3144, 0
        %v3152 = vsel %vm478, %v3145, 0
        %v3155 = vsel %vm478, %v3146, 0
        %v3158 = vsel %vm478, %v3147, 0
        %3160 = vmatprep.subr.bf16.mxu0 0
        %3161 = vmatpush1.bf16.msra.mxu0 %v3061
        %3162 = vmatprep.subr.bf16.mxu0 0
        %3163 = vmatpush1.bf16.msra.mxu0 0
        %3164 = vmatprep.subr.bf16.mxu0 0
        %3165 = vmatpush1.bf16.msra.mxu0 0
        %3166 = vmatprep.subr.bf16.mxu0 0
        %3167 = vmatpush1.bf16.msra.mxu0 0
        %3168 = vmatprep.subr.bf16.mxu0 0
        %3169 = vmatpush1.bf16.msra.mxu0 0
        %3170 = vmatprep.subr.bf16.mxu0 0
        %3171 = vmatpush1.bf16.msra.mxu0 0
        %3172 = vmatprep.subr.bf16.mxu0 0
        %3173 = vmatpush1.bf16.msra.mxu0 0
        %3174 = vmatprep.subr.bf16.mxu0 0
        %3175 = vmatpush1.bf16.msra.mxu0 0
        %3176 = vmatprep.subr.bf16.mxu0 0
        %3177 = vmatpush1.bf16.msra.mxu0 0
        %3178 = vmatprep.subr.bf16.mxu0 0
        %3179 = vmatpush1.bf16.msra.mxu0 0
        %3180 = vmatprep.subr.bf16.mxu0 0
        %3181 = vmatpush1.bf16.msra.mxu0 0
        %3182 = vmatprep.subr.bf16.mxu0 0
        %3183 = vmatpush1.bf16.msra.mxu0 0
        %3184 = vmatprep.subr.bf16.mxu0 0
        %3185 = vmatpush1.bf16.msra.mxu0 0
        %3186 = vmatprep.subr.bf16.mxu0 0
        %3187 = vmatpush1.bf16.msra.mxu0 0
        %3188 = vmatprep.subr.bf16.mxu0 0
        %3189 = vmatpush1.bf16.msra.mxu0 0
        %3190 = vmatprep.subr.bf16.mxu0 0
        %3191 = vmatpush1.bf16.msra.mxu0 0
        %3192 = vmatprep.mubr.bf16.mxu0 0
        %3193 = vmatmul.mubr.bf16.gmra.mrb[0].mxu0 %v3149
        %v3194 = vpop.f32.mrb[0].mxu0
        %v3195 = vadd.f32 %v3098, %v3194
        %v3196 = vpop.f32.mrb[0].mxu0
        %v3197 = vpop.f32.mrb[0].mxu0
        %v3198 = vadd.f32 %v3101, %v3197
        %v3199 = vpop.f32.mrb[0].mxu0
        %3200 = vmatprep.mubr.bf16.mxu0 0
        %3201 = vmatmul.mubr.bf16.gmra.mrb[0].mxu0 %v3152
        %v3202 = vpop.f32.mrb[0].mxu0
        %v3203 = vadd.f32 %v3106, %v3202
        %v3204 = vpop.f32.mrb[0].mxu0
        %v3205 = vpop.f32.mrb[0].mxu0
        %v3206 = vadd.f32 %v3109, %v3205
        %v3207 = vpop.f32.mrb[0].mxu0
        %3208 = vmatprep.mubr.bf16.mxu0 0
        %3209 = vmatmul.mubr.bf16.gmra.mrb[0].mxu0 %v3155
        %v3210 = vpop.f32.mrb[0].mxu0
        %v3211 = vadd.f32 %v3114, %v3210
        %v3212 = vpop.f32.mrb[0].mxu0
        %v3213 = vpop.f32.mrb[0].mxu0
        %v3214 = vadd.f32 %v3117, %v3213
        %v3215 = vpop.f32.mrb[0].mxu0
        %3216 = vmatprep.mubr.bf16.mxu0 0
        %3217 = vmatmul.mubr.bf16.gmra.mrb[0].mxu0 %v3158
        %v3218 = vpop.f32.mrb[0].mxu0
        %v3219 = vadd.f32 %v3122, %v3218
        %v3220 = vpop.f32.mrb[0].mxu0
        %v3221 = vpop.f32.mrb[0].mxu0
        %v3222 = vadd.f32 %v3125, %v3221
        %v3223 = vpop.f32.mrb[0].mxu0
        %3224 = vdwg.mxu0
        %v3226 = vsel %vm491, %v3027, 0
        %3228 = vmatprep.subr.bf16.mxu0 0
        %3229 = vmatpush1.bf16.msra.mxu0 %v3226
        %3230 = vmatprep.subr.bf16.mxu0 0
        %3231 = vmatpush1.bf16.msra.mxu0 0
        %3232 = vmatprep.subr.bf16.mxu0 0
        %3233 = vmatpush1.bf16.msra.mxu0 0
        %3234 = vmatprep.subr.bf16.mxu0 0
        %3235 = vmatpush1.bf16.msra.mxu0 0
        %3236 = vmatprep.subr.bf16.mxu0 0
        %3237 = vmatpush1.bf16.msra.mxu0 0
        %3238 = vmatprep.subr.bf16.mxu0 0
        %3239 = vmatpush1.bf16.msra.mxu0 0
        %3240 = vmatprep.subr.bf16.mxu0 0
        %3241 = vmatpush1.bf16.msra.mxu0 0
        %3242 = vmatprep.subr.bf16.mxu0 0
        %3243 = vmatpush1.bf16.msra.mxu0 0
        %3244 = vmatprep.subr.bf16.mxu0 0
        %3245 = vmatpush1.bf16.msra.mxu0 0
        %3246 = vmatprep.subr.bf16.mxu0 0
        %3247 = vmatpush1.bf16.msra.mxu0 0
        %3248 = vmatprep.subr.bf16.mxu0 0
        %3249 = vmatpush1.bf16.msra.mxu0 0
        %3250 = vmatprep.subr.bf16.mxu0 0
        %3251 = vmatpush1.bf16.msra.mxu0 0
        %3252 = vmatprep.subr.bf16.mxu0 0
        %3253 = vmatpush1.bf16.msra.mxu0 0
        %3254 = vmatprep.subr.bf16.mxu0 0
        %3255 = vmatpush1.bf16.msra.mxu0 0
        %3256 = vmatprep.subr.bf16.mxu0 0
        %3257 = vmatpush1.bf16.msra.mxu0 0
        %3258 = vmatprep.subr.bf16.mxu0 0
        %3259 = vmatpush1.bf16.msra.mxu0 0
        %3260 = vmatprep.mubr.bf16.mxu0 0
        %3261 = vmatmul.mubr.bf16.gmra.mrb[0].mxu0 %v3149
        %v3262 = vpop.f32.mrb[0].mxu0
        %v3263 = vadd.f32 0.0, %v3262
        %v3264 = vpop.f32.mrb[0].mxu0
        %v3265 = vpop.f32.mrb[0].mxu0
        %v3266 = vadd.f32 0.0, %v3265
        %v3267 = vpop.f32.mrb[0].mxu0
        %3268 = vmatprep.mubr.bf16.mxu0 0
        %3269 = vmatmul.mubr.bf16.gmra.mrb[0].mxu0 %v3152
        %v3270 = vpop.f32.mrb[0].mxu0
        %v3271 = vadd.f32 0.0, %v3270
        %v3272 = vpop.f32.mrb[0].mxu0
        %v3273 = vpop.f32.mrb[0].mxu0
        %v3274 = vadd.f32 0.0, %v3273
        %v3275 = vpop.f32.mrb[0].mxu0
        %3276 = vmatprep.mubr.bf16.mxu0 0
        %3277 = vmatmul.mubr.bf16.gmra.mrb[0].mxu0 %v3155
        %v3278 = vpop.f32.mrb[0].mxu0
        %v3279 = vadd.f32 0.0, %v3278
        %v3280 = vpop.f32.mrb[0].mxu0
        %v3281 = vpop.f32.mrb[0].mxu0
        %v3282 = vadd.f32 0.0, %v3281
        %v3283 = vpop.f32.mrb[0].mxu0
        %3284 = vmatprep.mubr.bf16.mxu0 0
        %3285 = vmatmul.mubr.bf16.gmra.mrb[0].mxu0 %v3158
        %v3286 = vpop.f32.mrb[0].mxu0
        %v3287 = vadd.f32 0.0, %v3286
        %v3288 = vpop.f32.mrb[0].mxu0
        %v3289 = vpop.f32.mrb[0].mxu0
        %v3290 = vadd.f32 0.0, %v3289
        %v3291 = vpop.f32.mrb[0].mxu0
        %3292 = vdwg.mxu0
        %v3293 = vadd.f32 %v3195, %v3263
        %v3294 = vadd.f32 %v3198, %v3266
        %v3295 = vadd.f32 %v3203, %v3271
        %v3296 = vadd.f32 %v3206, %v3274
        %v3297 = vadd.f32 %v3211, %v3279
        %v3298 = vadd.f32 %v3214, %v3282
        %v3299 = vadd.f32 %v3219, %v3287
        %v3300 = vadd.f32 %v3222, %v3290
        %v3301 = vadd.f32 %v2998, %v3293
        %v3302 = vadd.f32 %v2999, %v3294
        %v3303 = vadd.f32 %v3000, %v3295
        %v3304 = vadd.f32 %v3001, %v3296
        %v3305 = vadd.f32 %v3002, %v3297
        %v3306 = vadd.f32 %v3003, %v3298
        %v3307 = vadd.f32 %v3004, %v3299
        %v3308 = vadd.f32 %v3005, %v3300
        %v3309 = vld [vmem:[%s2703] sm:$0xf]
        %v3310 = vld [vmem:[%s2703 + $0x4] sm:$0x1]
        %v3311 = vld [vmem:[%s2703 + $0x8] sm:$0xf]
        %v3312 = vld [vmem:[%s2703 + $0xc] sm:$0x1]
        %v3313 = vld [vmem:[%s2703 + $0x10] sm:$0xf]
        %v3314 = vld [vmem:[%s2703 + $0x14] sm:$0x1]
        %v3315 = vld [vmem:[%s2703 + $0x18] sm:$0xf]
        %v3316 = vld [vmem:[%s2703 + $0x1c] sm:$0x1]
        %v3317 = vld [vmem:[%s2703 + $0x20] sm:$0xf]
        %v3318 = vld [vmem:[%s2703 + $0x24] sm:$0x1]
        %v3319 = vld [vmem:[%s2703 + $0x28] sm:$0xf]
        %v3320 = vld [vmem:[%s2703 + $0x2c] sm:$0x1]
        %v3321 = vld [vmem:[%s2703 + $0x30] sm:$0xf]
        %v3322 = vld [vmem:[%s2703 + $0x34] sm:$0x1]
        %v3323 = vld [vmem:[%s2703 + $0x38] sm:$0xf]
        %v3324 = vld [vmem:[%s2703 + $0x3c] sm:$0x1]
        %v3326 = vshrl.u32 %v3309, 16
        %v3328 = vrot.slane %v3326, 4
        %v3329 = vshll.u32 %v3309, 16
        %v3331 = vrot.slane %v3329, 5
        %v3332 = vor.u32 %v3328, %v3331
        %v3333 = vrot.slane %v3332, 4
        %v3335 = vshll.u32 %v3310, 16
        %v3337 = vrot.slane %v3335, 5
        %v3338 = vsel %vm1062, %v3333, %v3337
        %v3340 = vshrl.u32 %v3311, 16
        %v3342 = vrot.slane %v3340, 4
        %v3343 = vshll.u32 %v3311, 16
        %v3345 = vrot.slane %v3343, 5
        %v3346 = vor.u32 %v3342, %v3345
        %v3347 = vrot.slane %v3346, 4
        %v3349 = vshll.u32 %v3312, 16
        %v3351 = vrot.slane %v3349, 5
        %v3352 = vsel %vm1062, %v3347, %v3351
        %v3354 = vshrl.u32 %v3313, 16
        %v3356 = vrot.slane %v3354, 4
        %v3357 = vshll.u32 %v3313, 16
        %v3359 = vrot.slane %v3357, 5
        %v3360 = vor.u32 %v3356, %v3359
        %v3361 = vrot.slane %v3360, 4
        %v3363 = vshll.u32 %v3314, 16
        %v3365 = vrot.slane %v3363, 5
        %v3366 = vsel %vm1062, %v3361, %v3365
        %v3368 = vshrl.u32 %v3315, 16
        %v3370 = vrot.slane %v3368, 4
        %v3371 = vshll.u32 %v3315, 16
        %v3373 = vrot.slane %v3371, 5
        %v3374 = vor.u32 %v3370, %v3373
        %v3375 = vrot.slane %v3374, 4
        %v3377 = vshll.u32 %v3316, 16
        %v3379 = vrot.slane %v3377, 5
        %v3380 = vsel %vm1062, %v3375, %v3379
        %v3382 = vshrl.u32 %v3317, 16
        %v3384 = vrot.slane %v3382, 4
        %v3385 = vshll.u32 %v3317, 16
        %v3387 = vrot.slane %v3385, 5
        %v3388 = vor.u32 %v3384, %v3387
        %v3389 = vrot.slane %v3388, 4
        %v3391 = vshll.u32 %v3318, 16
        %v3393 = vrot.slane %v3391, 5
        %v3394 = vsel %vm1062, %v3389, %v3393
        %v3396 = vshrl.u32 %v3319, 16
        %v3398 = vrot.slane %v3396, 4
        %v3399 = vshll.u32 %v3319, 16
        %v3401 = vrot.slane %v3399, 5
        %v3402 = vor.u32 %v3398, %v3401
        %v3403 = vrot.slane %v3402, 4
        %v3405 = vshll.u32 %v3320, 16
        %v3407 = vrot.slane %v3405, 5
        %v3408 = vsel %vm1062, %v3403, %v3407
        %v3410 = vshrl.u32 %v3321, 16
        %v3412 = vrot.slane %v3410, 4
        %v3413 = vshll.u32 %v3321, 16
        %v3415 = vrot.slane %v3413, 5
        %v3416 = vor.u32 %v3412, %v3415
        %v3417 = vrot.slane %v3416, 4
        %v3419 = vshll.u32 %v3322, 16
        %v3421 = vrot.slane %v3419, 5
        %v3422 = vsel %vm1062, %v3417, %v3421
        %v3424 = vshrl.u32 %v3323, 16
        %v3426 = vrot.slane %v3424, 4
        %v3427 = vshll.u32 %v3323, 16
        %v3429 = vrot.slane %v3427, 5
        %v3430 = vor.u32 %v3426, %v3429
        %v3431 = vrot.slane %v3430, 4
        %v3433 = vshll.u32 %v3324, 16
        %v3435 = vrot.slane %v3433, 5
        %v3436 = vsel %vm1062, %v3431, %v3435
        %v3437 = vld [vmem:[%s2712] sm:$0xf]
        %v3438 = vld [vmem:[%s2712 + $0x4] sm:$0x1]
        %v3439 = vld [vmem:[%s2712 + $0x8] sm:$0xf]
        %v3440 = vld [vmem:[%s2712 + $0xc] sm:$0x1]
        %v3441 = vld [vmem:[%s2712 + $0x10] sm:$0xf]
        %v3442 = vld [vmem:[%s2712 + $0x14] sm:$0x1]
        %v3443 = vld [vmem:[%s2712 + $0x18] sm:$0xf]
        %v3444 = vld [vmem:[%s2712 + $0x1c] sm:$0x1]
        %v3445 = vld [vmem:[%s2712 + $0x20] sm:$0xf]
        %v3446 = vld [vmem:[%s2712 + $0x24] sm:$0x1]
        %v3447 = vld [vmem:[%s2712 + $0x28] sm:$0xf]
        %v3448 = vld [vmem:[%s2712 + $0x2c] sm:$0x1]
        %v3449 = vld [vmem:[%s2712 + $0x30] sm:$0xf]
        %v3450 = vld [vmem:[%s2712 + $0x34] sm:$0x1]
        %v3451 = vld [vmem:[%s2712 + $0x38] sm:$0xf]
        %v3452 = vld [vmem:[%s2712 + $0x3c] sm:$0x1]
        %v3454 = vshrl.u32 %v3437, 16
        %v3456 = vrot.slane %v3454, 4
        %v3457 = vshll.u32 %v3437, 16
        %v3459 = vrot.slane %v3457, 5
        %v3460 = vor.u32 %v3456, %v3459
        %v3461 = vrot.slane %v3460, 4
        %v3463 = vshll.u32 %v3438, 16
        %v3465 = vrot.slane %v3463, 5
        %v3466 = vsel %vm1062, %v3461, %v3465
        %v3468 = vshrl.u32 %v3439, 16
        %v3470 = vrot.slane %v3468, 4
        %v3471 = vshll.u32 %v3439, 16
        %v3473 = vrot.slane %v3471, 5
        %v3474 = vor.u32 %v3470, %v3473
        %v3475 = vrot.slane %v3474, 4
        %v3477 = vshll.u32 %v3440, 16
        %v3479 = vrot.slane %v3477, 5
        %v3480 = vsel %vm1062, %v3475, %v3479
        %v3482 = vshrl.u32 %v3441, 16
        %v3484 = vrot.slane %v3482, 4
        %v3485 = vshll.u32 %v3441, 16
        %v3487 = vrot.slane %v3485, 5
        %v3488 = vor.u32 %v3484, %v3487
        %v3489 = vrot.slane %v3488, 4
        %v3491 = vshll.u32 %v3442, 16
        %v3493 = vrot.slane %v3491, 5
        %v3494 = vsel %vm1062, %v3489, %v3493
        %v3496 = vshrl.u32 %v3443, 16
        %v3498 = vrot.slane %v3496, 4
        %v3499 = vshll.u32 %v3443, 16
        %v3501 = vrot.slane %v3499, 5
        %v3502 = vor.u32 %v3498, %v3501
        %v3503 = vrot.slane %v3502, 4
        %v3505 = vshll.u32 %v3444, 16
        %v3507 = vrot.slane %v3505, 5
        %v3508 = vsel %vm1062, %v3503, %v3507
        %v3510 = vshrl.u32 %v3445, 16
        %v3512 = vrot.slane %v3510, 4
        %v3513 = vshll.u32 %v3445, 16
        %v3515 = vrot.slane %v3513, 5
        %v3516 = vor.u32 %v3512, %v3515
        %v3517 = vrot.slane %v3516, 4
        %v3519 = vshll.u32 %v3446, 16
        %v3521 = vrot.slane %v3519, 5
        %v3522 = vsel %vm1062, %v3517, %v3521
        %v3524 = vshrl.u32 %v3447, 16
        %v3526 = vrot.slane %v3524, 4
        %v3527 = vshll.u32 %v3447, 16
        %v3529 = vrot.slane %v3527, 5
        %v3530 = vor.u32 %v3526, %v3529
        %v3531 = vrot.slane %v3530, 4
        %v3533 = vshll.u32 %v3448, 16
        %v3535 = vrot.slane %v3533, 5
        %v3536 = vsel %vm1062, %v3531, %v3535
        %v3538 = vshrl.u32 %v3449, 16
        %v3540 = vrot.slane %v3538, 4
        %v3541 = vshll.u32 %v3449, 16
        %v3543 = vrot.slane %v3541, 5
        %v3544 = vor.u32 %v3540, %v3543
        %v3545 = vrot.slane %v3544, 4
        %v3547 = vshll.u32 %v3450, 16
        %v3549 = vrot.slane %v3547, 5
        %v3550 = vsel %vm1062, %v3545, %v3549
        %v3552 = vshrl.u32 %v3451, 16
        %v3554 = vrot.slane %v3552, 4
        %v3555 = vshll.u32 %v3451, 16
        %v3557 = vrot.slane %v3555, 5
        %v3558 = vor.u32 %v3554, %v3557
        %v3559 = vrot.slane %v3558, 4
        %v3561 = vshll.u32 %v3452, 16
        %v3563 = vrot.slane %v3561, 5
        %v3564 = vsel %vm1062, %v3559, %v3563
        %s3565 = scalar_lea.vmem %s2, 32
        %v3566 = vld [vmem:[%s3565] sm:$0xf]
        %s3567 = scalar_lea.vmem %s3, 32
        %v3568 = vld [vmem:[%s3567] sm:$0xf]
        %v3569 = vunpack.c.l.b16 %v3466
        %v3570 = vunpack.c.l.b16 %v3480
        %v3571 = vunpack.c.l.b16 %v3494
        %v3572 = vunpack.c.l.b16 %v3508
        %v3573 = vunpack.c.l.b16 %v3522
        %v3574 = vunpack.c.l.b16 %v3536
        %v3575 = vunpack.c.l.b16 %v3550
        %v3576 = vunpack.c.l.b16 %v3564
        %v3577 = vpack.c.b16 %v3570, %v3569
        %v3578 = vpack.c.b16 %v3572, %v3571
        %v3579 = vpack.c.b16 %v3574, %v3573
        %v3580 = vpack.c.b16 %v3576, %v3575
        %v3582 = vsel %vm478, %v3577, 0
        %v3585 = vsel %vm478, %v3578, 0
        %v3588 = vsel %vm478, %v3579, 0
        %v3591 = vsel %vm478, %v3580, 0
        %v3594 = vsel %vm491, %v3566, 0
        %3596 = vmatprep.subr.bf16.mxu0 0
        %3597 = vmatpush1.bf16.msra.mxu0 %v3594
        %3598 = vmatprep.subr.bf16.mxu0 0
        %3599 = vmatpush1.bf16.msra.mxu0 0
        %3600 = vmatprep.subr.bf16.mxu0 0
        %3601 = vmatpush1.bf16.msra.mxu0 0
        %3602 = vmatprep.subr.bf16.mxu0 0
        %3603 = vmatpush1.bf16.msra.mxu0 0
        %3604 = vmatprep.subr.bf16.mxu0 0
        %3605 = vmatpush1.bf16.msra.mxu0 0
        %3606 = vmatprep.subr.bf16.mxu0 0
        %3607 = vmatpush1.bf16.msra.mxu0 0
        %3608 = vmatprep.subr.bf16.mxu0 0
        %3609 = vmatpush1.bf16.msra.mxu0 0
        %3610 = vmatprep.subr.bf16.mxu0 0
        %3611 = vmatpush1.bf16.msra.mxu0 0
        %3612 = vmatprep.subr.bf16.mxu0 0
        %3613 = vmatpush1.bf16.msra.mxu0 0
        %3614 = vmatprep.subr.bf16.mxu0 0
        %3615 = vmatpush1.bf16.msra.mxu0 0
        %3616 = vmatprep.subr.bf16.mxu0 0
        %3617 = vmatpush1.bf16.msra.mxu0 0
        %3618 = vmatprep.subr.bf16.mxu0 0
        %3619 = vmatpush1.bf16.msra.mxu0 0
        %3620 = vmatprep.subr.bf16.mxu0 0
        %3621 = vmatpush1.bf16.msra.mxu0 0
        %3622 = vmatprep.subr.bf16.mxu0 0
        %3623 = vmatpush1.bf16.msra.mxu0 0
        %3624 = vmatprep.subr.bf16.mxu0 0
        %3625 = vmatpush1.bf16.msra.mxu0 0
        %3626 = vmatprep.subr.bf16.mxu0 0
        %3627 = vmatpush1.bf16.msra.mxu0 0
        %3628 = vmatprep.mubr.bf16.mxu0 0
        %3629 = vmatmul.mubr.bf16.gmra.mrb[0].mxu0 %v3582
        %v3630 = vpop.f32.mrb[0].mxu0
        %v3631 = vadd.f32 0.0, %v3630
        %v3632 = vpop.f32.mrb[0].mxu0
        %v3633 = vpop.f32.mrb[0].mxu0
        %v3634 = vadd.f32 0.0, %v3633
        %v3635 = vpop.f32.mrb[0].mxu0
        %3636 = vmatprep.mubr.bf16.mxu0 0
        %3637 = vmatmul.mubr.bf16.gmra.mrb[0].mxu0 %v3585
        %v3638 = vpop.f32.mrb[0].mxu0
        %v3639 = vadd.f32 0.0, %v3638
        %v3640 = vpop.f32.mrb[0].mxu0
        %v3641 = vpop.f32.mrb[0].mxu0
        %v3642 = vadd.f32 0.0, %v3641
        %v3643 = vpop.f32.mrb[0].mxu0
        %3644 = vmatprep.mubr.bf16.mxu0 0
        %3645 = vmatmul.mubr.bf16.gmra.mrb[0].mxu0 %v3588
        %v3646 = vpop.f32.mrb[0].mxu0
        %v3647 = vadd.f32 0.0, %v3646
        %v3648 = vpop.f32.mrb[0].mxu0
        %v3649 = vpop.f32.mrb[0].mxu0
        %v3650 = vadd.f32 0.0, %v3649
        %v3651 = vpop.f32.mrb[0].mxu0
        %3652 = vmatprep.mubr.bf16.mxu0 0
        %3653 = vmatmul.mubr.bf16.gmra.mrb[0].mxu0 %v3591
        %v3654 = vpop.f32.mrb[0].mxu0
        %v3655 = vadd.f32 0.0, %v3654
        %v3656 = vpop.f32.mrb[0].mxu0
        %v3657 = vpop.f32.mrb[0].mxu0
        %v3658 = vadd.f32 0.0, %v3657
        %v3659 = vpop.f32.mrb[0].mxu0
        %3660 = vdwg.mxu0
        %v3661 = vunpack.c.l.b16 %v3338
        %v3662 = vunpack.c.l.b16 %v3352
        %v3663 = vunpack.c.l.b16 %v3366
        %v3664 = vunpack.c.l.b16 %v3380
        %v3665 = vunpack.c.l.b16 %v3394
        %v3666 = vunpack.c.l.b16 %v3408
        %v3667 = vunpack.c.l.b16 %v3422
        %v3668 = vunpack.c.l.b16 %v3436
        %v3669 = vpack.c.b16 %v3662, %v3661
        %v3670 = vpack.c.b16 %v3664, %v3663
        %v3671 = vpack.c.b16 %v3666, %v3665
        %v3672 = vpack.c.b16 %v3668, %v3667
        %v3674 = vsel %vm478, %v3669, 0
        %v3677 = vsel %vm478, %v3670, 0
        %v3680 = vsel %vm478, %v3671, 0
        %v3683 = vsel %vm478, %v3672, 0
        %3685 = vmatprep.subr.bf16.mxu0 0
        %3686 = vmatpush1.bf16.msra.mxu0 %v3594
        %3687 = vmatprep.subr.bf16.mxu0 0
        %3688 = vmatpush1.bf16.msra.mxu0 0
        %3689 = vmatprep.subr.bf16.mxu0 0
        %3690 = vmatpush1.bf16.msra.mxu0 0
        %3691 = vmatprep.subr.bf16.mxu0 0
        %3692 = vmatpush1.bf16.msra.mxu0 0
        %3693 = vmatprep.subr.bf16.mxu0 0
        %3694 = vmatpush1.bf16.msra.mxu0 0
        %3695 = vmatprep.subr.bf16.mxu0 0
        %3696 = vmatpush1.bf16.msra.mxu0 0
        %3697 = vmatprep.subr.bf16.mxu0 0
        %3698 = vmatpush1.bf16.msra.mxu0 0
        %3699 = vmatprep.subr.bf16.mxu0 0
        %3700 = vmatpush1.bf16.msra.mxu0 0
        %3701 = vmatprep.subr.bf16.mxu0 0
        %3702 = vmatpush1.bf16.msra.mxu0 0
        %3703 = vmatprep.subr.bf16.mxu0 0
        %3704 = vmatpush1.bf16.msra.mxu0 0
        %3705 = vmatprep.subr.bf16.mxu0 0
        %3706 = vmatpush1.bf16.msra.mxu0 0
        %3707 = vmatprep.subr.bf16.mxu0 0
        %3708 = vmatpush1.bf16.msra.mxu0 0
        %3709 = vmatprep.subr.bf16.mxu0 0
        %3710 = vmatpush1.bf16.msra.mxu0 0
        %3711 = vmatprep.subr.bf16.mxu0 0
        %3712 = vmatpush1.bf16.msra.mxu0 0
        %3713 = vmatprep.subr.bf16.mxu0 0
        %3714 = vmatpush1.bf16.msra.mxu0 0
        %3715 = vmatprep.subr.bf16.mxu0 0
        %3716 = vmatpush1.bf16.msra.mxu0 0
        %3717 = vmatprep.mubr.bf16.mxu0 0
        %3718 = vmatmul.mubr.bf16.gmra.mrb[0].mxu0 %v3674
        %v3719 = vpop.f32.mrb[0].mxu0
        %v3720 = vadd.f32 %v3631, %v3719
        %v3721 = vpop.f32.mrb[0].mxu0
        %v3722 = vpop.f32.mrb[0].mxu0
        %v3723 = vadd.f32 %v3634, %v3722
        %v3724 = vpop.f32.mrb[0].mxu0
        %3725 = vmatprep.mubr.bf16.mxu0 0
        %3726 = vmatmul.mubr.bf16.gmra.mrb[0].mxu0 %v3677
        %v3727 = vpop.f32.mrb[0].mxu0
        %v3728 = vadd.f32 %v3639, %v3727
        %v3729 = vpop.f32.mrb[0].mxu0
        %v3730 = vpop.f32.mrb[0].mxu0
        %v3731 = vadd.f32 %v3642, %v3730
        %v3732 = vpop.f32.mrb[0].mxu0
        %3733 = vmatprep.mubr.bf16.mxu0 0
        %3734 = vmatmul.mubr.bf16.gmra.mrb[0].mxu0 %v3680
        %v3735 = vpop.f32.mrb[0].mxu0
        %v3736 = vadd.f32 %v3647, %v3735
        %v3737 = vpop.f32.mrb[0].mxu0
        %v3738 = vpop.f32.mrb[0].mxu0
        %v3739 = vadd.f32 %v3650, %v3738
        %v3740 = vpop.f32.mrb[0].mxu0
        %3741 = vmatprep.mubr.bf16.mxu0 0
        %3742 = vmatmul.mubr.bf16.gmra.mrb[0].mxu0 %v3683
        %v3743 = vpop.f32.mrb[0].mxu0
        %v3744 = vadd.f32 %v3655, %v3743
        %v3745 = vpop.f32.mrb[0].mxu0
        %v3746 = vpop.f32.mrb[0].mxu0
        %v3747 = vadd.f32 %v3658, %v3746
        %v3748 = vpop.f32.mrb[0].mxu0
        %3749 = vdwg.mxu0
        %v3751 = vsel %vm491, %v3568, 0
        %3753 = vmatprep.subr.bf16.mxu0 0
        %3754 = vmatpush1.bf16.msra.mxu0 %v3751
        %3755 = vmatprep.subr.bf16.mxu0 0
        %3756 = vmatpush1.bf16.msra.mxu0 0
        %3757 = vmatprep.subr.bf16.mxu0 0
        %3758 = vmatpush1.bf16.msra.mxu0 0
        %3759 = vmatprep.subr.bf16.mxu0 0
        %3760 = vmatpush1.bf16.msra.mxu0 0
        %3761 = vmatprep.subr.bf16.mxu0 0
        %3762 = vmatpush1.bf16.msra.mxu0 0
        %3763 = vmatprep.subr.bf16.mxu0 0
        %3764 = vmatpush1.bf16.msra.mxu0 0
        %3765 = vmatprep.subr.bf16.mxu0 0
        %3766 = vmatpush1.bf16.msra.mxu0 0
        %3767 = vmatprep.subr.bf16.mxu0 0
        %3768 = vmatpush1.bf16.msra.mxu0 0
        %3769 = vmatprep.subr.bf16.mxu0 0
        %3770 = vmatpush1.bf16.msra.mxu0 0
        %3771 = vmatprep.subr.bf16.mxu0 0
        %3772 = vmatpush1.bf16.msra.mxu0 0
        %3773 = vmatprep.subr.bf16.mxu0 0
        %3774 = vmatpush1.bf16.msra.mxu0 0
        %3775 = vmatprep.subr.bf16.mxu0 0
        %3776 = vmatpush1.bf16.msra.mxu0 0
        %3777 = vmatprep.subr.bf16.mxu0 0
        %3778 = vmatpush1.bf16.msra.mxu0 0
        %3779 = vmatprep.subr.bf16.mxu0 0
        %3780 = vmatpush1.bf16.msra.mxu0 0
        %3781 = vmatprep.subr.bf16.mxu0 0
        %3782 = vmatpush1.bf16.msra.mxu0 0
        %3783 = vmatprep.subr.bf16.mxu0 0
        %3784 = vmatpush1.bf16.msra.mxu0 0
        %3785 = vmatprep.mubr.bf16.mxu0 0
        %3786 = vmatmul.mubr.bf16.gmra.mrb[0].mxu0 %v3674
        %v3787 = vpop.f32.mrb[0].mxu0
        %v3788 = vadd.f32 0.0, %v3787
        %v3789 = vpop.f32.mrb[0].mxu0
        %v3790 = vpop.f32.mrb[0].mxu0
        %v3791 = vadd.f32 0.0, %v3790
        %v3792 = vpop.f32.mrb[0].mxu0
        %3793 = vmatprep.mubr.bf16.mxu0 0
        %3794 = vmatmul.mubr.bf16.gmra.mrb[0].mxu0 %v3677
        %v3795 = vpop.f32.mrb[0].mxu0
        %v3796 = vadd.f32 0.0, %v3795
        %v3797 = vpop.f32.mrb[0].mxu0
        %v3798 = vpop.f32.mrb[0].mxu0
        %v3799 = vadd.f32 0.0, %v3798
        %v3800 = vpop.f32.mrb[0].mxu0
        %3801 = vmatprep.mubr.bf16.mxu0 0
        %3802 = vmatmul.mubr.bf16.gmra.mrb[0].mxu0 %v3680
        %v3803 = vpop.f32.mrb[0].mxu0
        %v3804 = vadd.f32 0.0, %v3803
        %v3805 = vpop.f32.mrb[0].mxu0
        %v3806 = vpop.f32.mrb[0].mxu0
        %v3807 = vadd.f32 0.0, %v3806
        %v3808 = vpop.f32.mrb[0].mxu0
        %3809 = vmatprep.mubr.bf16.mxu0 0
        %3810 = vmatmul.mubr.bf16.gmra.mrb[0].mxu0 %v3683
        %v3811 = vpop.f32.mrb[0].mxu0
        %v3812 = vadd.f32 0.0, %v3811
        %v3813 = vpop.f32.mrb[0].mxu0
        %v3814 = vpop.f32.mrb[0].mxu0
        %v3815 = vadd.f32 0.0, %v3814
        %v3816 = vpop.f32.mrb[0].mxu0
        %3817 = vdwg.mxu0
        %v3818 = vadd.f32 %v3720, %v3788
        %v3819 = vadd.f32 %v3723, %v3791
        %v3820 = vadd.f32 %v3728, %v3796
        %v3821 = vadd.f32 %v3731, %v3799
        %v3822 = vadd.f32 %v3736, %v3804
        %v3823 = vadd.f32 %v3739, %v3807
        %v3824 = vadd.f32 %v3744, %v3812
        %v3825 = vadd.f32 %v3747, %v3815
        %v3826 = vadd.f32 %v3301, %v3818
        %v3827 = vadd.f32 %v3302, %v3819
        %v3828 = vadd.f32 %v3303, %v3820
        %v3829 = vadd.f32 %v3304, %v3821
        %v3830 = vadd.f32 %v3305, %v3822
        %v3831 = vadd.f32 %v3306, %v3823
        %v3832 = vadd.f32 %v3307, %v3824
        %v3833 = vadd.f32 %v3308, %v3825
        %s3834 = smul.u32 %s27, 64
        %s3835 = scalar_lea.vmem [#allocation2], %s3834
        %3836 = vst [vmem:[%s3835] sm:$0xff] %v3826
        %3837 = vst [vmem:[%s3835 + $0x8] sm:$0xff] %v3827
        %3838 = vst [vmem:[%s3835 + $0x10] sm:$0xff] %v3828
        %3839 = vst [vmem:[%s3835 + $0x18] sm:$0xff] %v3829
        %3840 = vst [vmem:[%s3835 + $0x20] sm:$0xff] %v3830
        %3841 = vst [vmem:[%s3835 + $0x28] sm:$0xff] %v3831
        %3842 = vst [vmem:[%s3835 + $0x30] sm:$0xff] %v3832
        %3843 = vst [vmem:[%s3835 + $0x38] sm:$0xff] %v3833
        %v3844 = vld [vmem:[#allocation5] sm:$0x1]
        %v3845 = vadd.f32 %v3826, %v3827
        %v3846 = vadd.f32 %v3845, %v3828
        %v3847 = vadd.f32 %v3846, %v3829
        %v3848 = vadd.f32 %v3847, %v3830
        %v3849 = vadd.f32 %v3848, %v3831
        %v3850 = vadd.f32 %v3849, %v3832
        %v3851 = vadd.f32 %v3850, %v3833
        %v3852 = vrot.slane %v3851, 4
        %v3853 = vadd.f32 %v3851, %v3852
        %v3854 = vrot.slane %v3853, 2
        %v3855 = vadd.f32 %v3853, %v3854
        %v3856 = vrot.slane %v3855, 1
        %v3857 = vadd.f32 %v3855, %v3856
        %v3858 = vadd.f32 %v3844, %v3857
        %3859 = vst [vmem:[#allocation5] sm:$0x1] %v3858
        %v3860 = vld [vmem:[#allocation5 + $0x1] sm:$0x1]
        %v3861 = vmul.f32 %v3826, %v3826
        %v3862 = vmul.f32 %v3827, %v3827
        %v3863 = vmul.f32 %v3828, %v3828
        %v3864 = vmul.f32 %v3829, %v3829
        %v3865 = vmul.f32 %v3830, %v3830
        %v3866 = vmul.f32 %v3831, %v3831
        %v3867 = vmul.f32 %v3832, %v3832
        %v3868 = vmul.f32 %v3833, %v3833
        %v3869 = vadd.f32 %v3861, %v3862
        %v3870 = vadd.f32 %v3869, %v3863
        %v3871 = vadd.f32 %v3870, %v3864
        %v3872 = vadd.f32 %v3871, %v3865
        %v3873 = vadd.f32 %v3872, %v3866
        %v3874 = vadd.f32 %v3873, %v3867
        %v3875 = vadd.f32 %v3874, %v3868
        %v3876 = vrot.slane %v3875, 4
        %v3877 = vadd.f32 %v3875, %v3876
        %v3878 = vrot.slane %v3877, 2
        %v3879 = vadd.f32 %v3877, %v3878
        %v3880 = vrot.slane %v3879, 1
        %v3881 = vadd.f32 %v3879, %v3880
        %v3882 = vadd.f32 %v3860, %v3881
        %3883 = vst [vmem:[#allocation5 + $0x1] sm:$0x1] %v3882
        %v3884 = vld [vmem:[%s1875] sm:$0xf]
        %v3885 = vld [vmem:[%s1875 + $0x8] sm:$0xf]
        %v3886 = vld [vmem:[%s1875 + $0x10] sm:$0xf]
        %v3887 = vld [vmem:[%s1875 + $0x18] sm:$0xf]
        %v3888 = vld [vmem:[%s1875 + $0x20] sm:$0xf]
        %v3889 = vld [vmem:[%s1875 + $0x28] sm:$0xf]
        %v3890 = vld [vmem:[%s1875 + $0x30] sm:$0xf]
        %v3891 = vld [vmem:[%s1875 + $0x38] sm:$0xf]
        %v3892 = vld [vmem:[%s1884] sm:$0xf]
        %v3893 = vld [vmem:[%s1884 + $0x8] sm:$0xf]
        %v3894 = vld [vmem:[%s1884 + $0x10] sm:$0xf]
        %v3895 = vld [vmem:[%s1884 + $0x18] sm:$0xf]
        %v3896 = vld [vmem:[%s1884 + $0x20] sm:$0xf]
        %v3897 = vld [vmem:[%s1884 + $0x28] sm:$0xf]
        %v3898 = vld [vmem:[%s1884 + $0x30] sm:$0xf]
        %v3899 = vld [vmem:[%s1884 + $0x38] sm:$0xf]
        %v3900 = vld [vmem:[%s8] sm:$0xf]
        %v3901 = vld [vmem:[%s9] sm:$0xf]
        %v3910 = vunpack.c.l.b16 %v3892
        %v3911 = vunpack.c.l.b16 %v3893
        %v3912 = vunpack.c.l.b16 %v3894
        %v3913 = vunpack.c.l.b16 %v3895
        %v3914 = vunpack.c.l.b16 %v3896
        %v3915 = vunpack.c.l.b16 %v3897
        %v3916 = vunpack.c.l.b16 %v3898
        %v3917 = vunpack.c.l.b16 %v3899
        %v3918 = vpack.c.b16 %v3911, %v3910
        %v3919 = vpack.c.b16 %v3913, %v3912
        %v3920 = vpack.c.b16 %v3915, %v3914
        %v3921 = vpack.c.b16 %v3917, %v3916
        %v3923 = vsel %vm478, %v3918, 0
        %v3926 = vsel %vm478, %v3919, 0
        %v3929 = vsel %vm478, %v3920, 0
        %v3932 = vsel %vm478, %v3921, 0
        %v3935 = vsel %vm491, %v3900, 0
        %3937 = vmatprep.subr.bf16.mxu0 0
        %3938 = vmatpush1.bf16.msra.mxu0 %v3935
        %3939 = vmatprep.subr.bf16.mxu0 0
        %3940 = vmatpush1.bf16.msra.mxu0 0
        %3941 = vmatprep.subr.bf16.mxu0 0
        %3942 = vmatpush1.bf16.msra.mxu0 0
        %3943 = vmatprep.subr.bf16.mxu0 0
        %3944 = vmatpush1.bf16.msra.mxu0 0
        %3945 = vmatprep.subr.bf16.mxu0 0
        %3946 = vmatpush1.bf16.msra.mxu0 0
        %3947 = vmatprep.subr.bf16.mxu0 0
        %3948 = vmatpush1.bf16.msra.mxu0 0
        %3949 = vmatprep.subr.bf16.mxu0 0
        %3950 = vmatpush1.bf16.msra.mxu0 0
        %3951 = vmatprep.subr.bf16.mxu0 0
        %3952 = vmatpush1.bf16.msra.mxu0 0
        %3953 = vmatprep.subr.bf16.mxu0 0
        %3954 = vmatpush1.bf16.msra.mxu0 0
        %3955 = vmatprep.subr.bf16.mxu0 0
        %3956 = vmatpush1.bf16.msra.mxu0 0
        %3957 = vmatprep.subr.bf16.mxu0 0
        %3958 = vmatpush1.bf16.msra.mxu0 0
        %3959 = vmatprep.subr.bf16.mxu0 0
        %3960 = vmatpush1.bf16.msra.mxu0 0
        %3961 = vmatprep.subr.bf16.mxu0 0
        %3962 = vmatpush1.bf16.msra.mxu0 0
        %3963 = vmatprep.subr.bf16.mxu0 0
        %3964 = vmatpush1.bf16.msra.mxu0 0
        %3965 = vmatprep.subr.bf16.mxu0 0
        %3966 = vmatpush1.bf16.msra.mxu0 0
        %3967 = vmatprep.subr.bf16.mxu0 0
        %3968 = vmatpush1.bf16.msra.mxu0 0
        %3969 = vmatprep.mubr.bf16.mxu0 0
        %3970 = vmatmul.mubr.bf16.gmra.mrb[0].mxu0 %v3923
        %v3971 = vpop.f32.mrb[0].mxu0
        %v3972 = vadd.f32 0.0, %v3971
        %v3973 = vpop.f32.mrb[0].mxu0
        %v3974 = vpop.f32.mrb[0].mxu0
        %v3975 = vadd.f32 0.0, %v3974
        %v3976 = vpop.f32.mrb[0].mxu0
        %3977 = vmatprep.mubr.bf16.mxu0 0
        %3978 = vmatmul.mubr.bf16.gmra.mrb[0].mxu0 %v3926
        %v3979 = vpop.f32.mrb[0].mxu0
        %v3980 = vadd.f32 0.0, %v3979
        %v3981 = vpop.f32.mrb[0].mxu0
        %v3982 = vpop.f32.mrb[0].mxu0
        %v3983 = vadd.f32 0.0, %v3982
        %v3984 = vpop.f32.mrb[0].mxu0
        %3985 = vmatprep.mubr.bf16.mxu0 0
        %3986 = vmatmul.mubr.bf16.gmra.mrb[0].mxu0 %v3929
        %v3987 = vpop.f32.mrb[0].mxu0
        %v3988 = vadd.f32 0.0, %v3987
        %v3989 = vpop.f32.mrb[0].mxu0
        %v3990 = vpop.f32.mrb[0].mxu0
        %v3991 = vadd.f32 0.0, %v3990
        %v3992 = vpop.f32.mrb[0].mxu0
        %3993 = vmatprep.mubr.bf16.mxu0 0
        %3994 = vmatmul.mubr.bf16.gmra.mrb[0].mxu0 %v3932
        %v3995 = vpop.f32.mrb[0].mxu0
        %v3996 = vadd.f32 0.0, %v3995
        %v3997 = vpop.f32.mrb[0].mxu0
        %v3998 = vpop.f32.mrb[0].mxu0
        %v3999 = vadd.f32 0.0, %v3998
        %v4000 = vpop.f32.mrb[0].mxu0
        %4001 = vdwg.mxu0
        %v4010 = vunpack.c.l.b16 %v3884
        %v4011 = vunpack.c.l.b16 %v3885
        %v4012 = vunpack.c.l.b16 %v3886
        %v4013 = vunpack.c.l.b16 %v3887
        %v4014 = vunpack.c.l.b16 %v3888
        %v4015 = vunpack.c.l.b16 %v3889
        %v4016 = vunpack.c.l.b16 %v3890
        %v4017 = vunpack.c.l.b16 %v3891
        %v4018 = vpack.c.b16 %v4011, %v4010
        %v4019 = vpack.c.b16 %v4013, %v4012
        %v4020 = vpack.c.b16 %v4015, %v4014
        %v4021 = vpack.c.b16 %v4017, %v4016
        %v4023 = vsel %vm478, %v4018, 0
        %v4026 = vsel %vm478, %v4019, 0
        %v4029 = vsel %vm478, %v4020, 0
        %v4032 = vsel %vm478, %v4021, 0
        %4034 = vmatprep.subr.bf16.mxu0 0
        %4035 = vmatpush1.bf16.msra.mxu0 %v3935
        %4036 = vmatprep.subr.bf16.mxu0 0
        %4037 = vmatpush1.bf16.msra.mxu0 0
        %4038 = vmatprep.subr.bf16.mxu0 0
        %4039 = vmatpush1.bf16.msra.mxu0 0
        %4040 = vmatprep.subr.bf16.mxu0 0
        %4041 = vmatpush1.bf16.msra.mxu0 0
        %4042 = vmatprep.subr.bf16.mxu0 0
        %4043 = vmatpush1.bf16.msra.mxu0 0
        %4044 = vmatprep.subr.bf16.mxu0 0
        %4045 = vmatpush1.bf16.msra.mxu0 0
        %4046 = vmatprep.subr.bf16.mxu0 0
        %4047 = vmatpush1.bf16.msra.mxu0 0
        %4048 = vmatprep.subr.bf16.mxu0 0
        %4049 = vmatpush1.bf16.msra.mxu0 0
        %4050 = vmatprep.subr.bf16.mxu0 0
        %4051 = vmatpush1.bf16.msra.mxu0 0
        %4052 = vmatprep.subr.bf16.mxu0 0
        %4053 = vmatpush1.bf16.msra.mxu0 0
        %4054 = vmatprep.subr.bf16.mxu0 0
        %4055 = vmatpush1.bf16.msra.mxu0 0
        %4056 = vmatprep.subr.bf16.mxu0 0
        %4057 = vmatpush1.bf16.msra.mxu0 0
        %4058 = vmatprep.subr.bf16.mxu0 0
        %4059 = vmatpush1.bf16.msra.mxu0 0
        %4060 = vmatprep.subr.bf16.mxu0 0
        %4061 = vmatpush1.bf16.msra.mxu0 0
        %4062 = vmatprep.subr.bf16.mxu0 0
        %4063 = vmatpush1.bf16.msra.mxu0 0
        %4064 = vmatprep.subr.bf16.mxu0 0
        %4065 = vmatpush1.bf16.msra.mxu0 0
        %4066 = vmatprep.mubr.bf16.mxu0 0
        %4067 = vmatmul.mubr.bf16.gmra.mrb[0].mxu0 %v4023
        %v4068 = vpop.f32.mrb[0].mxu0
        %v4069 = vadd.f32 %v3972, %v4068
        %v4070 = vpop.f32.mrb[0].mxu0
        %v4071 = vpop.f32.mrb[0].mxu0
        %v4072 = vadd.f32 %v3975, %v4071
        %v4073 = vpop.f32.mrb[0].mxu0
        %4074 = vmatprep.mubr.bf16.mxu0 0
        %4075 = vmatmul.mubr.bf16.gmra.mrb[0].mxu0 %v4026
        %v4076 = vpop.f32.mrb[0].mxu0
        %v4077 = vadd.f32 %v3980, %v4076
        %v4078 = vpop.f32.mrb[0].mxu0
        %v4079 = vpop.f32.mrb[0].mxu0
        %v4080 = vadd.f32 %v3983, %v4079
        %v4081 = vpop.f32.mrb[0].mxu0
        %4082 = vmatprep.mubr.bf16.mxu0 0
        %4083 = vmatmul.mubr.bf16.gmra.mrb[0].mxu0 %v4029
        %v4084 = vpop.f32.mrb[0].mxu0
        %v4085 = vadd.f32 %v3988, %v4084
        %v4086 = vpop.f32.mrb[0].mxu0
        %v4087 = vpop.f32.mrb[0].mxu0
        %v4088 = vadd.f32 %v3991, %v4087
        %v4089 = vpop.f32.mrb[0].mxu0
        %4090 = vmatprep.mubr.bf16.mxu0 0
        %4091 = vmatmul.mubr.bf16.gmra.mrb[0].mxu0 %v4032
        %v4092 = vpop.f32.mrb[0].mxu0
        %v4093 = vadd.f32 %v3996, %v4092
        %v4094 = vpop.f32.mrb[0].mxu0
        %v4095 = vpop.f32.mrb[0].mxu0
        %v4096 = vadd.f32 %v3999, %v4095
        %v4097 = vpop.f32.mrb[0].mxu0
        %4098 = vdwg.mxu0
        %v4100 = vsel %vm491, %v3901, 0
        %4102 = vmatprep.subr.bf16.mxu0 0
        %4103 = vmatpush1.bf16.msra.mxu0 %v4100
        %4104 = vmatprep.subr.bf16.mxu0 0
        %4105 = vmatpush1.bf16.msra.mxu0 0
        %4106 = vmatprep.subr.bf16.mxu0 0
        %4107 = vmatpush1.bf16.msra.mxu0 0
        %4108 = vmatprep.subr.bf16.mxu0 0
        %4109 = vmatpush1.bf16.msra.mxu0 0
        %4110 = vmatprep.subr.bf16.mxu0 0
        %4111 = vmatpush1.bf16.msra.mxu0 0
        %4112 = vmatprep.subr.bf16.mxu0 0
        %4113 = vmatpush1.bf16.msra.mxu0 0
        %4114 = vmatprep.subr.bf16.mxu0 0
        %4115 = vmatpush1.bf16.msra.mxu0 0
        %4116 = vmatprep.subr.bf16.mxu0 0
        %4117 = vmatpush1.bf16.msra.mxu0 0
        %4118 = vmatprep.subr.bf16.mxu0 0
        %4119 = vmatpush1.bf16.msra.mxu0 0
        %4120 = vmatprep.subr.bf16.mxu0 0
        %4121 = vmatpush1.bf16.msra.mxu0 0
        %4122 = vmatprep.subr.bf16.mxu0 0
        %4123 = vmatpush1.bf16.msra.mxu0 0
        %4124 = vmatprep.subr.bf16.mxu0 0
        %4125 = vmatpush1.bf16.msra.mxu0 0
        %4126 = vmatprep.subr.bf16.mxu0 0
        %4127 = vmatpush1.bf16.msra.mxu0 0
        %4128 = vmatprep.subr.bf16.mxu0 0
        %4129 = vmatpush1.bf16.msra.mxu0 0
        %4130 = vmatprep.subr.bf16.mxu0 0
        %4131 = vmatpush1.bf16.msra.mxu0 0
        %4132 = vmatprep.subr.bf16.mxu0 0
        %4133 = vmatpush1.bf16.msra.mxu0 0
        %4134 = vmatprep.mubr.bf16.mxu0 0
        %4135 = vmatmul.mubr.bf16.gmra.mrb[0].mxu0 %v4023
        %v4136 = vpop.f32.mrb[0].mxu0
        %v4137 = vadd.f32 0.0, %v4136
        %v4138 = vpop.f32.mrb[0].mxu0
        %v4139 = vpop.f32.mrb[0].mxu0
        %v4140 = vadd.f32 0.0, %v4139
        %v4141 = vpop.f32.mrb[0].mxu0
        %4142 = vmatprep.mubr.bf16.mxu0 0
        %4143 = vmatmul.mubr.bf16.gmra.mrb[0].mxu0 %v4026
        %v4144 = vpop.f32.mrb[0].mxu0
        %v4145 = vadd.f32 0.0, %v4144
        %v4146 = vpop.f32.mrb[0].mxu0
        %v4147 = vpop.f32.mrb[0].mxu0
        %v4148 = vadd.f32 0.0, %v4147
        %v4149 = vpop.f32.mrb[0].mxu0
        %4150 = vmatprep.mubr.bf16.mxu0 0
        %4151 = vmatmul.mubr.bf16.gmra.mrb[0].mxu0 %v4029
        %v4152 = vpop.f32.mrb[0].mxu0
        %v4153 = vadd.f32 0.0, %v4152
        %v4154 = vpop.f32.mrb[0].mxu0
        %v4155 = vpop.f32.mrb[0].mxu0
        %v4156 = vadd.f32 0.0, %v4155
        %v4157 = vpop.f32.mrb[0].mxu0
        %4158 = vmatprep.mubr.bf16.mxu0 0
        %4159 = vmatmul.mubr.bf16.gmra.mrb[0].mxu0 %v4032
        %v4160 = vpop.f32.mrb[0].mxu0
        %v4161 = vadd.f32 0.0, %v4160
        %v4162 = vpop.f32.mrb[0].mxu0
        %v4163 = vpop.f32.mrb[0].mxu0
        %v4164 = vadd.f32 0.0, %v4163
        %v4165 = vpop.f32.mrb[0].mxu0
        %4166 = vdwg.mxu0
        %v4167 = vadd.f32 %v4069, %v4137
        %v4168 = vadd.f32 %v4072, %v4140
        %v4169 = vadd.f32 %v4077, %v4145
        %v4170 = vadd.f32 %v4080, %v4148
        %v4171 = vadd.f32 %v4085, %v4153
        %v4172 = vadd.f32 %v4088, %v4156
        %v4173 = vadd.f32 %v4093, %v4161
        %v4174 = vadd.f32 %v4096, %v4164
        %v4175 = vld [vmem:[#allocation5 + $0x4] sm:$0x1]
        %v4176 = vadd.f32 %v4167, %v4168
        %v4177 = vadd.f32 %v4176, %v4169
        %v4178 = vadd.f32 %v4177, %v4170
        %v4179 = vadd.f32 %v4178, %v4171
        %v4180 = vadd.f32 %v4179, %v4172
        %v4181 = vadd.f32 %v4180, %v4173
        %v4182 = vadd.f32 %v4181, %v4174
        %v4183 = vrot.slane %v4182, 4
        %v4184 = vadd.f32 %v4182, %v4183
        %v4185 = vrot.slane %v4184, 2
        %v4186 = vadd.f32 %v4184, %v4185
        %v4187 = vrot.slane %v4186, 1
        %v4188 = vadd.f32 %v4186, %v4187
        %v4189 = vadd.f32 %v4175, %v4188
        %4190 = vst [vmem:[#allocation5 + $0x4] sm:$0x1] %v4189
        %v4191 = vld [vmem:[#allocation5 + $0x5] sm:$0x1]
        %v4192 = vmul.f32 %v4167, %v4167
        %v4193 = vmul.f32 %v4168, %v4168
        %v4194 = vmul.f32 %v4169, %v4169
        %v4195 = vmul.f32 %v4170, %v4170
        %v4196 = vmul.f32 %v4171, %v4171
        %v4197 = vmul.f32 %v4172, %v4172
        %v4198 = vmul.f32 %v4173, %v4173
        %v4199 = vmul.f32 %v4174, %v4174
        %v4200 = vadd.f32 %v4192, %v4193
        %v4201 = vadd.f32 %v4200, %v4194
        %v4202 = vadd.f32 %v4201, %v4195
        %v4203 = vadd.f32 %v4202, %v4196
        %v4204 = vadd.f32 %v4203, %v4197
        %v4205 = vadd.f32 %v4204, %v4198
        %v4206 = vadd.f32 %v4205, %v4199
        %v4207 = vrot.slane %v4206, 4
        %v4208 = vadd.f32 %v4206, %v4207
        %v4209 = vrot.slane %v4208, 2
        %v4210 = vadd.f32 %v4208, %v4209
        %v4211 = vrot.slane %v4210, 1
        %v4212 = vadd.f32 %v4210, %v4211
        %v4213 = vadd.f32 %v4191, %v4212
        %4214 = vst [vmem:[#allocation5 + $0x5] sm:$0x1] %v4213
      $region72: #{basic_block_forward.1} parent=63 // pred_fallthru
        _
      %p4215 = scmp.eq.s32.totalorder %s26, 1
      %p4216 = pnand %p4215, %p431
      %p4217 = pneg %p4216
      // Predicated region
      $region73: #{basic_block_forward.1} parent=63 // pred_check
        _
      $region74: #{basic_block_forward.1} parent=63 // pred_check_branch
        %4219 = sbr.rel (%p4216) target = $region76
      $region75: #{basic_block_forward.1} parent=63 // pred_region
        %4220 = vst [vmem:[#allocation3] sm:$0xff] 0
        %4221 = vst [vmem:[#allocation3 + $0x8] sm:$0xff] 0
        %4222 = vst [vmem:[#allocation3 + $0x10] sm:$0xff] 0
        %4223 = vst [vmem:[#allocation3 + $0x18] sm:$0xff] 0
        %4224 = vst [vmem:[#allocation3 + $0x20] sm:$0xff] 0
        %4225 = vst [vmem:[#allocation3 + $0x28] sm:$0xff] 0
        %4226 = vst [vmem:[#allocation3 + $0x30] sm:$0xff] 0
        %4227 = vst [vmem:[#allocation3 + $0x38] sm:$0xff] 0
        %4228 = vst [vmem:[#allocation3 + $0x40] sm:$0xff] 0
        %4229 = vst [vmem:[#allocation3 + $0x48] sm:$0xff] 0
        %4230 = vst [vmem:[#allocation4] sm:$0xff] 0
        %4231 = vst [vmem:[#allocation4 + $0x8] sm:$0xff] 0
        %4232 = vst [vmem:[#allocation4 + $0x10] sm:$0xff] 0
        %4233 = vst [vmem:[#allocation4 + $0x18] sm:$0xff] 0
        %4234 = vst [vmem:[#allocation4 + $0x20] sm:$0xff] 0
        %4235 = vst [vmem:[#allocation4 + $0x28] sm:$0xff] 0
        %4236 = vst [vmem:[#allocation4 + $0x30] sm:$0xff] 0
        %4237 = vst [vmem:[#allocation4 + $0x38] sm:$0xff] 0
        %4238 = vst [vmem:[#allocation4 + $0x40] sm:$0xff] 0
        %4239 = vst [vmem:[#allocation4 + $0x48] sm:$0xff] 0
      $region76: #{basic_block_forward.1} parent=63 // pred_fallthru
        _
      // Predicated region
      $region77: #{basic_block_forward.1} parent=63 // pred_check
        %p4240 = pneg %p4215
      $region78: #{basic_block_forward.1} parent=63 // pred_check_branch
        %4242 = sbr.rel (%p4240) target = $region80
      $region79: #{basic_block_forward.1} parent=63 // pred_region
        %v4243 = vld [vmem:[#allocation5] sm:$0x1]
        %v4244 = vmul.f32 %v4243, 0.0078125
        %v4245 = vld [vmem:[#allocation5 + $0x1] sm:$0x1]
        %v4246 = vmul.f32 %v4245, 0.0078125
        %v4247 = vmul.f32 %v4244, %v4244
        %v4248 = vsub.f32 %v4246, %v4247
        %v4249 = vadd.f32 %v4248, 1e-05
        %v4250 = vrsqrt.pop %v4249
        %v4251 = vld [vmem:[%s6] sm:$0x1]
        %v4252 = vmul.f32 %v4250, %v4251
        %v4253 = vld [vmem:[%s6 + $0x1] sm:$0x1]
        %v4254 = vmul.f32 %v4244, %v4252
        %v4255 = vsub.f32 %v4253, %v4254
        %s4256 = smul.u32 %s27, 64
        %s4257 = scalar_lea.vmem [#allocation2], %s4256
        %v4258 = vld [vmem:[%s4257] sm:$0xff]
        %v4259 = vld [vmem:[%s4257 + $0x8] sm:$0xff]
        %v4260 = vld [vmem:[%s4257 + $0x10] sm:$0xff]
        %v4261 = vld [vmem:[%s4257 + $0x18] sm:$0xff]
        %v4262 = vld [vmem:[%s4257 + $0x20] sm:$0xff]
        %v4263 = vld [vmem:[%s4257 + $0x28] sm:$0xff]
        %v4264 = vld [vmem:[%s4257 + $0x30] sm:$0xff]
        %v4265 = vld [vmem:[%s4257 + $0x38] sm:$0xff]
        %v4266 = vlaneseq
        %v4267 = vshrl.u32 %v4266, 7
        %v4268 = vsub.s32 0, %v4267
        %v4269 = vrot.slane %v4252, %v4268
        %v4270 = vmul.f32 %v4258, %v4269
        %v4271 = vmul.f32 %v4259, %v4269
        %v4272 = vmul.f32 %v4260, %v4269
        %v4273 = vmul.f32 %v4261, %v4269
        %v4274 = vmul.f32 %v4262, %v4269
        %v4275 = vmul.f32 %v4263, %v4269
        %v4276 = vmul.f32 %v4264, %v4269
        %v4277 = vmul.f32 %v4265, %v4269
        %v4278 = vlaneseq
        %v4279 = vshrl.u32 %v4278, 7
        %v4280 = vsub.s32 0, %v4279
        %v4281 = vrot.slane %v4255, %v4280
        %v4282 = vadd.f32 %v4270, %v4281
        %v4283 = vadd.f32 %v4271, %v4281
        %v4284 = vadd.f32 %v4272, %v4281
        %v4285 = vadd.f32 %v4273, %v4281
        %v4286 = vadd.f32 %v4274, %v4281
        %v4287 = vadd.f32 %v4275, %v4281
        %v4288 = vadd.f32 %v4276, %v4281
        %v4289 = vadd.f32 %v4277, %v4281
        %v4290 = vmax.f32 %v4282, 0.0
        %v4291 = vmax.f32 %v4283, 0.0
        %v4292 = vmax.f32 %v4284, 0.0
        %v4293 = vmax.f32 %v4285, 0.0
        %v4294 = vmax.f32 %v4286, 0.0
        %v4295 = vmax.f32 %v4287, 0.0
        %v4296 = vmax.f32 %v4288, 0.0
        %v4297 = vmax.f32 %v4289, 0.0
        %v4298 = vpack.c.bf16 %v4291, %v4290
        %v4299 = vpack.c.bf16 %v4293, %v4292
        %v4300 = vpack.c.bf16 %v4295, %v4294
        %v4301 = vpack.c.bf16 %v4297, %v4296
        %v4302 = vunpack.c.l.bf16 %v4298
        %v4303 = vunpack.c.h.bf16 %v4298
        %v4304 = vunpack.c.l.bf16 %v4299
        %v4305 = vunpack.c.h.bf16 %v4299
        %v4306 = vunpack.c.l.bf16 %v4300
        %v4307 = vunpack.c.h.bf16 %v4300
        %v4308 = vunpack.c.l.bf16 %v4301
        %v4309 = vunpack.c.h.bf16 %v4301
        %v4310 = vsub.f32 %v4290, %v4302
        %v4311 = vsub.f32 %v4291, %v4303
        %v4312 = vsub.f32 %v4292, %v4304
        %v4313 = vsub.f32 %v4293, %v4305
        %v4314 = vsub.f32 %v4294, %v4306
        %v4315 = vsub.f32 %v4295, %v4307
        %v4316 = vsub.f32 %v4296, %v4308
        %v4317 = vsub.f32 %v4297, %v4309
        %v4318 = vpack.c.bf16 %v4311, %v4310
        %v4319 = vpack.c.bf16 %v4313, %v4312
        %v4320 = vpack.c.bf16 %v4315, %v4314
        %v4321 = vpack.c.bf16 %v4317, %v4316
        %v4326 = vunpack.c.l.b16 %v4298
        %v4327 = vunpack.c.h.b16 %v4298
        %v4328 = vunpack.c.l.b16 %v4299
        %v4329 = vunpack.c.h.b16 %v4299
        %v4330 = vunpack.c.l.b16 %v4300
        %v4331 = vunpack.c.h.b16 %v4300
        %v4332 = vunpack.c.l.b16 %v4301
        %v4333 = vunpack.c.h.b16 %v4301
        %v4334 = vpack.c.b16 %v4326, %v4326
        %v4335 = vpack.c.b16 %v4327, %v4327
        %v4336 = vpack.c.b16 %v4328, %v4328
        %v4337 = vpack.c.b16 %v4329, %v4329
        %v4338 = vpack.c.b16 %v4330, %v4330
        %v4339 = vpack.c.b16 %v4331, %v4331
        %v4340 = vpack.c.b16 %v4332, %v4332
        %v4341 = vpack.c.b16 %v4333, %v4333
        %v4343 = vshrl.u32 %v4334, 16
        %v4345 = vrot.slane %v4343, 7
        %v4346 = vshll.u32 %v4334, 16
        %v4348 = vor.u32 %v4345, %v4346
        %v4350 = vshrl.u32 %v4335, 16
        %v4352 = vrot.slane %v4350, 7
        %v4353 = vshll.u32 %v4335, 16
        %v4355 = vor.u32 %v4352, %v4353
        %v4357 = vshrl.u32 %v4336, 16
        %v4359 = vrot.slane %v4357, 7
        %v4360 = vshll.u32 %v4336, 16
        %v4362 = vor.u32 %v4359, %v4360
        %v4364 = vshrl.u32 %v4337, 16
        %v4366 = vrot.slane %v4364, 7
        %v4367 = vshll.u32 %v4337, 16
        %v4369 = vor.u32 %v4366, %v4367
        %v4371 = vshrl.u32 %v4338, 16
        %v4373 = vrot.slane %v4371, 7
        %v4374 = vshll.u32 %v4338, 16
        %v4376 = vor.u32 %v4373, %v4374
        %v4378 = vshrl.u32 %v4339, 16
        %v4380 = vrot.slane %v4378, 7
        %v4381 = vshll.u32 %v4339, 16
        %v4383 = vor.u32 %v4380, %v4381
        %v4385 = vshrl.u32 %v4340, 16
        %v4387 = vrot.slane %v4385, 7
        %v4388 = vshll.u32 %v4340, 16
        %v4390 = vor.u32 %v4387, %v4388
        %v4392 = vshrl.u32 %v4341, 16
        %v4394 = vrot.slane %v4392, 7
        %v4395 = vshll.u32 %v4341, 16
        %v4397 = vor.u32 %v4394, %v4395
        %s4406 = scalar_lea.vmem [#allocation3], 8
        %vm4407 = vcmask 1044480
        %vm4408 = vsmask.f32 4354
        %vm4409 = vmand %vm4407, %vm4408
        %v4410 = vld [vmem:[%s4406] sm:$0x1f]
        %v4411 = vsel %vm4409, %v4348, %v4410
        %4412 = vst [vmem:[%s4406] sm:$0x1f] %v4411
        %v4413 = vld [vmem:[%s4406 + $0x8] sm:$0x1f]
        %v4414 = vsel %vm4409, %v4355, %v4413
        %4415 = vst [vmem:[%s4406 + $0x8] sm:$0x1f] %v4414
        %v4416 = vld [vmem:[%s4406 + $0x10] sm:$0x1f]
        %v4417 = vsel %vm4409, %v4362, %v4416
        %4418 = vst [vmem:[%s4406 + $0x10] sm:$0x1f] %v4417
        %v4419 = vld [vmem:[%s4406 + $0x18] sm:$0x1f]
        %v4420 = vsel %vm4409, %v4369, %v4419
        %4421 = vst [vmem:[%s4406 + $0x18] sm:$0x1f] %v4420
        %v4422 = vld [vmem:[%s4406 + $0x20] sm:$0x1f]
        %v4423 = vsel %vm4409, %v4376, %v4422
        %4424 = vst [vmem:[%s4406 + $0x20] sm:$0x1f] %v4423
        %v4425 = vld [vmem:[%s4406 + $0x28] sm:$0x1f]
        %v4426 = vsel %vm4409, %v4383, %v4425
        %4427 = vst [vmem:[%s4406 + $0x28] sm:$0x1f] %v4426
        %v4428 = vld [vmem:[%s4406 + $0x30] sm:$0x1f]
        %v4429 = vsel %vm4409, %v4390, %v4428
        %4430 = vst [vmem:[%s4406 + $0x30] sm:$0x1f] %v4429
        %v4431 = vld [vmem:[%s4406 + $0x38] sm:$0x1f]
        %v4432 = vsel %vm4409, %v4397, %v4431
        %4433 = vst [vmem:[%s4406 + $0x38] sm:$0x1f] %v4432
        %v4438 = vunpack.c.l.b16 %v4318
        %v4439 = vunpack.c.h.b16 %v4318
        %v4440 = vunpack.c.l.b16 %v4319
        %v4441 = vunpack.c.h.b16 %v4319
        %v4442 = vunpack.c.l.b16 %v4320
        %v4443 = vunpack.c.h.b16 %v4320
        %v4444 = vunpack.c.l.b16 %v4321
        %v4445 = vunpack.c.h.b16 %v4321
        %v4446 = vpack.c.b16 %v4438, %v4438
        %v4447 = vpack.c.b16 %v4439, %v4439
        %v4448 = vpack.c.b16 %v4440, %v4440
        %v4449 = vpack.c.b16 %v4441, %v4441
        %v4450 = vpack.c.b16 %v4442, %v4442
        %v4451 = vpack.c.b16 %v4443, %v4443
        %v4452 = vpack.c.b16 %v4444, %v4444
        %v4453 = vpack.c.b16 %v4445, %v4445
        %v4455 = vshrl.u32 %v4446, 16
        %v4457 = vrot.slane %v4455, 7
        %v4458 = vshll.u32 %v4446, 16
        %v4460 = vor.u32 %v4457, %v4458
        %v4462 = vshrl.u32 %v4447, 16
        %v4464 = vrot.slane %v4462, 7
        %v4465 = vshll.u32 %v4447, 16
        %v4467 = vor.u32 %v4464, %v4465
        %v4469 = vshrl.u32 %v4448, 16
        %v4471 = vrot.slane %v4469, 7
        %v4472 = vshll.u32 %v4448, 16
        %v4474 = vor.u32 %v4471, %v4472
        %v4476 = vshrl.u32 %v4449, 16
        %v4478 = vrot.slane %v4476, 7
        %v4479 = vshll.u32 %v4449, 16
        %v4481 = vor.u32 %v4478, %v4479
        %v4483 = vshrl.u32 %v4450, 16
        %v4485 = vrot.slane %v4483, 7
        %v4486 = vshll.u32 %v4450, 16
        %v4488 = vor.u32 %v4485, %v4486
        %v4490 = vshrl.u32 %v4451, 16
        %v4492 = vrot.slane %v4490, 7
        %v4493 = vshll.u32 %v4451, 16
        %v4495 = vor.u32 %v4492, %v4493
        %v4497 = vshrl.u32 %v4452, 16
        %v4499 = vrot.slane %v4497, 7
        %v4500 = vshll.u32 %v4452, 16
        %v4502 = vor.u32 %v4499, %v4500
        %v4504 = vshrl.u32 %v4453, 16
        %v4506 = vrot.slane %v4504, 7
        %v4507 = vshll.u32 %v4453, 16
        %v4509 = vor.u32 %v4506, %v4507
        %s4518 = scalar_lea.vmem [#allocation4], 8
        %v4519 = vld [vmem:[%s4518] sm:$0x1f]
        %v4520 = vsel %vm4409, %v4460, %v4519
        %4521 = vst [vmem:[%s4518] sm:$0x1f] %v4520
        %v4522 = vld [vmem:[%s4518 + $0x8] sm:$0x1f]
        %v4523 = vsel %vm4409, %v4467, %v4522
        %4524 = vst [vmem:[%s4518 + $0x8] sm:$0x1f] %v4523
        %v4525 = vld [vmem:[%s4518 + $0x10] sm:$0x1f]
        %v4526 = vsel %vm4409, %v4474, %v4525
        %4527 = vst [vmem:[%s4518 + $0x10] sm:$0x1f] %v4526
        %v4528 = vld [vmem:[%s4518 + $0x18] sm:$0x1f]
        %v4529 = vsel %vm4409, %v4481, %v4528
        %4530 = vst [vmem:[%s4518 + $0x18] sm:$0x1f] %v4529
        %v4531 = vld [vmem:[%s4518 + $0x20] sm:$0x1f]
        %v4532 = vsel %vm4409, %v4488, %v4531
        %4533 = vst [vmem:[%s4518 + $0x20] sm:$0x1f] %v4532
        %v4534 = vld [vmem:[%s4518 + $0x28] sm:$0x1f]
        %v4535 = vsel %vm4409, %v4495, %v4534
        %4536 = vst [vmem:[%s4518 + $0x28] sm:$0x1f] %v4535
        %v4537 = vld [vmem:[%s4518 + $0x30] sm:$0x1f]
        %v4538 = vsel %vm4409, %v4502, %v4537
        %4539 = vst [vmem:[%s4518 + $0x30] sm:$0x1f] %v4538
        %v4540 = vld [vmem:[%s4518 + $0x38] sm:$0x1f]
        %v4541 = vsel %vm4409, %v4509, %v4540
        %4542 = vst [vmem:[%s4518 + $0x38] sm:$0x1f] %v4541
        %v4543 = vld [vmem:[#allocation3] sm:$0xf]
        %v4544 = vld [vmem:[#allocation3 + $0x8] sm:$0xf]
        %v4545 = vld [vmem:[#allocation3 + $0x10] sm:$0xf]
        %v4546 = vld [vmem:[#allocation3 + $0x18] sm:$0xf]
        %v4547 = vld [vmem:[#allocation3 + $0x20] sm:$0xf]
        %v4548 = vld [vmem:[#allocation3 + $0x28] sm:$0xf]
        %v4549 = vld [vmem:[#allocation3 + $0x30] sm:$0xf]
        %v4550 = vld [vmem:[#allocation3 + $0x38] sm:$0xf]
        %v4551 = vld [vmem:[#allocation4] sm:$0xf]
        %v4552 = vld [vmem:[#allocation4 + $0x8] sm:$0xf]
        %v4553 = vld [vmem:[#allocation4 + $0x10] sm:$0xf]
        %v4554 = vld [vmem:[#allocation4 + $0x18] sm:$0xf]
        %v4555 = vld [vmem:[#allocation4 + $0x20] sm:$0xf]
        %v4556 = vld [vmem:[#allocation4 + $0x28] sm:$0xf]
        %v4557 = vld [vmem:[#allocation4 + $0x30] sm:$0xf]
        %v4558 = vld [vmem:[#allocation4 + $0x38] sm:$0xf]
        %v4559 = vld [vmem:[%s4] sm:$0xf]
        %v4560 = vld [vmem:[%s4 + $0x4] sm:$0xf]
        %v4561 = vld [vmem:[%s4 + $0x8] sm:$0xf]
        %v4562 = vld [vmem:[%s4 + $0xc] sm:$0xf]
        %v4563 = vld [vmem:[%s4 + $0x10] sm:$0xf]
        %v4564 = vld [vmem:[%s4 + $0x14] sm:$0xf]
        %v4565 = vld [vmem:[%s4 + $0x18] sm:$0xf]
        %v4566 = vld [vmem:[%s4 + $0x1c] sm:$0xf]
        %v4567 = vld [vmem:[%s4 + $0x20] sm:$0xf]
        %v4568 = vld [vmem:[%s4 + $0x24] sm:$0xf]
        %v4569 = vld [vmem:[%s4 + $0x28] sm:$0xf]
        %v4570 = vld [vmem:[%s4 + $0x2c] sm:$0xf]
        %v4571 = vld [vmem:[%s4 + $0x30] sm:$0xf]
        %v4572 = vld [vmem:[%s4 + $0x34] sm:$0xf]
        %v4573 = vld [vmem:[%s4 + $0x38] sm:$0xf]
        %v4574 = vld [vmem:[%s4 + $0x3c] sm:$0xf]
        %v4575 = vld [vmem:[%s5] sm:$0xf]
        %v4576 = vld [vmem:[%s5 + $0x4] sm:$0xf]
        %v4577 = vld [vmem:[%s5 + $0x8] sm:$0xf]
        %v4578 = vld [vmem:[%s5 + $0xc] sm:$0xf]
        %v4579 = vld [vmem:[%s5 + $0x10] sm:$0xf]
        %v4580 = vld [vmem:[%s5 + $0x14] sm:$0xf]
        %v4581 = vld [vmem:[%s5 + $0x18] sm:$0xf]
        %v4582 = vld [vmem:[%s5 + $0x1c] sm:$0xf]
        %v4583 = vld [vmem:[%s5 + $0x20] sm:$0xf]
        %v4584 = vld [vmem:[%s5 + $0x24] sm:$0xf]
        %v4585 = vld [vmem:[%s5 + $0x28] sm:$0xf]
        %v4586 = vld [vmem:[%s5 + $0x2c] sm:$0xf]
        %v4587 = vld [vmem:[%s5 + $0x30] sm:$0xf]
        %v4588 = vld [vmem:[%s5 + $0x34] sm:$0xf]
        %v4589 = vld [vmem:[%s5 + $0x38] sm:$0xf]
        %v4590 = vld [vmem:[%s5 + $0x3c] sm:$0xf]
        %v4599 = vunpack.c.l.b16 %v4551
        %v4600 = vunpack.c.l.b16 %v4552
        %v4601 = vunpack.c.l.b16 %v4553
        %v4602 = vunpack.c.l.b16 %v4554
        %v4603 = vunpack.c.l.b16 %v4555
        %v4604 = vunpack.c.l.b16 %v4556
        %v4605 = vunpack.c.l.b16 %v4557
        %v4606 = vunpack.c.l.b16 %v4558
        %v4607 = vpack.c.b16 %v4600, %v4599
        %v4608 = vpack.c.b16 %v4602, %v4601
        %v4609 = vpack.c.b16 %v4604, %v4603
        %v4610 = vpack.c.b16 %v4606, %v4605
        %v4631 = vunpack.c.l.b16 %v4559
        %v4632 = vunpack.c.l.b16 %v4560
        %v4633 = vunpack.c.l.b16 %v4561
        %v4634 = vunpack.c.l.b16 %v4562
        %v4635 = vunpack.c.l.b16 %v4563
        %v4636 = vunpack.c.l.b16 %v4564
        %v4637 = vunpack.c.l.b16 %v4565
        %v4638 = vunpack.c.l.b16 %v4566
        %v4639 = vunpack.c.l.b16 %v4567
        %v4640 = vunpack.c.l.b16 %v4568
        %v4641 = vunpack.c.l.b16 %v4569
        %v4642 = vunpack.c.l.b16 %v4570
        %v4643 = vunpack.c.l.b16 %v4571
        %v4644 = vunpack.c.l.b16 %v4572
        %v4645 = vunpack.c.l.b16 %v4573
        %v4646 = vunpack.c.l.b16 %v4574
        %v4647 = vpack.c.b16 %v4632, %v4631
        %v4648 = vpack.c.b16 %v4634, %v4633
        %v4649 = vpack.c.b16 %v4636, %v4635
        %v4650 = vpack.c.b16 %v4638, %v4637
        %v4651 = vpack.c.b16 %v4640, %v4639
        %v4652 = vpack.c.b16 %v4642, %v4641
        %v4653 = vpack.c.b16 %v4644, %v4643
        %v4654 = vpack.c.b16 %v4646, %v4645
        %4663 = vmatprep.subr.bf16.mxu0 0
        %4664 = vmatpush1.bf16.msra.mxu0 %v4647
        %4665 = vmatprep.subr.bf16.mxu0 0
        %4666 = vmatpush1.bf16.msra.mxu0 %v4648
        %4667 = vmatprep.subr.bf16.mxu0 0
        %4668 = vmatpush1.bf16.msra.mxu0 %v4649
        %4669 = vmatprep.subr.bf16.mxu0 0
        %4670 = vmatpush1.bf16.msra.mxu0 %v4650
        %4671 = vmatprep.subr.bf16.mxu0 0
        %4672 = vmatpush1.bf16.msra.mxu0 %v4651
        %4673 = vmatprep.subr.bf16.mxu0 0
        %4674 = vmatpush1.bf16.msra.mxu0 %v4652
        %4675 = vmatprep.subr.bf16.mxu0 0
        %4676 = vmatpush1.bf16.msra.mxu0 %v4653
        %4677 = vmatprep.subr.bf16.mxu0 0
        %4678 = vmatpush1.bf16.msra.mxu0 %v4654
        %4679 = vmatprep.subr.bf16.mxu0 0
        %4680 = vmatpush1.bf16.msra.mxu0 0
        %4681 = vmatprep.subr.bf16.mxu0 0
        %4682 = vmatpush1.bf16.msra.mxu0 0
        %4683 = vmatprep.subr.bf16.mxu0 0
        %4684 = vmatpush1.bf16.msra.mxu0 0
        %4685 = vmatprep.subr.bf16.mxu0 0
        %4686 = vmatpush1.bf16.msra.mxu0 0
        %4687 = vmatprep.subr.bf16.mxu0 0
        %4688 = vmatpush1.bf16.msra.mxu0 0
        %4689 = vmatprep.subr.bf16.mxu0 0
        %4690 = vmatpush1.bf16.msra.mxu0 0
        %4691 = vmatprep.subr.bf16.mxu0 0
        %4692 = vmatpush1.bf16.msra.mxu0 0
        %4693 = vmatprep.subr.bf16.mxu0 0
        %4694 = vmatpush1.bf16.msra.mxu0 0
        %4695 = vmatprep.mubr.bf16.mxu0 0
        %4696 = vmatmul.mubr.bf16.gmra.mrb[0].mxu0 %v4607
        %v4697 = vpop.f32.mrb[0].mxu0
        %v4698 = vadd.f32 0.0, %v4697
        %v4699 = vpop.f32.mrb[0].mxu0
        %v4700 = vpop.f32.mrb[0].mxu0
        %v4701 = vadd.f32 0.0, %v4700
        %v4702 = vpop.f32.mrb[0].mxu0
        %4703 = vmatprep.mubr.bf16.mxu0 0
        %4704 = vmatmul.mubr.bf16.gmra.mrb[0].mxu0 %v4608
        %v4705 = vpop.f32.mrb[0].mxu0
        %v4706 = vadd.f32 0.0, %v4705
        %v4707 = vpop.f32.mrb[0].mxu0
        %v4708 = vpop.f32.mrb[0].mxu0
        %v4709 = vadd.f32 0.0, %v4708
        %v4710 = vpop.f32.mrb[0].mxu0
        %4711 = vmatprep.mubr.bf16.mxu0 0
        %4712 = vmatmul.mubr.bf16.gmra.mrb[0].mxu0 %v4609
        %v4713 = vpop.f32.mrb[0].mxu0
        %v4714 = vadd.f32 0.0, %v4713
        %v4715 = vpop.f32.mrb[0].mxu0
        %v4716 = vpop.f32.mrb[0].mxu0
        %v4717 = vadd.f32 0.0, %v4716
        %v4718 = vpop.f32.mrb[0].mxu0
        %4719 = vmatprep.mubr.bf16.mxu0 0
        %4720 = vmatmul.mubr.bf16.gmra.mrb[0].mxu0 %v4610
        %v4721 = vpop.f32.mrb[0].mxu0
        %v4722 = vadd.f32 0.0, %v4721
        %v4723 = vpop.f32.mrb[0].mxu0
        %v4724 = vpop.f32.mrb[0].mxu0
        %v4725 = vadd.f32 0.0, %v4724
        %v4726 = vpop.f32.mrb[0].mxu0
        %4727 = vdwg.mxu0
        %v4736 = vunpack.c.l.b16 %v4543
        %v4737 = vunpack.c.l.b16 %v4544
        %v4738 = vunpack.c.l.b16 %v4545
        %v4739 = vunpack.c.l.b16 %v4546
        %v4740 = vunpack.c.l.b16 %v4547
        %v4741 = vunpack.c.l.b16 %v4548
        %v4742 = vunpack.c.l.b16 %v4549
        %v4743 = vunpack.c.l.b16 %v4550
        %v4744 = vpack.c.b16 %v4737, %v4736
        %v4745 = vpack.c.b16 %v4739, %v4738
        %v4746 = vpack.c.b16 %v4741, %v4740
        %v4747 = vpack.c.b16 %v4743, %v4742
        %4752 = vmatprep.subr.bf16.mxu0 0
        %4753 = vmatpush1.bf16.msra.mxu0 %v4647
        %4754 = vmatprep.subr.bf16.mxu0 0
        %4755 = vmatpush1.bf16.msra.mxu0 %v4648
        %4756 = vmatprep.subr.bf16.mxu0 0
        %4757 = vmatpush1.bf16.msra.mxu0 %v4649
        %4758 = vmatprep.subr.bf16.mxu0 0
        %4759 = vmatpush1.bf16.msra.mxu0 %v4650
        %4760 = vmatprep.subr.bf16.mxu0 0
        %4761 = vmatpush1.bf16.msra.mxu0 %v4651
        %4762 = vmatprep.subr.bf16.mxu0 0
        %4763 = vmatpush1.bf16.msra.mxu0 %v4652
        %4764 = vmatprep.subr.bf16.mxu0 0
        %4765 = vmatpush1.bf16.msra.mxu0 %v4653
        %4766 = vmatprep.subr.bf16.mxu0 0
        %4767 = vmatpush1.bf16.msra.mxu0 %v4654
        %4768 = vmatprep.subr.bf16.mxu0 0
        %4769 = vmatpush1.bf16.msra.mxu0 0
        %4770 = vmatprep.subr.bf16.mxu0 0
        %4771 = vmatpush1.bf16.msra.mxu0 0
        %4772 = vmatprep.subr.bf16.mxu0 0
        %4773 = vmatpush1.bf16.msra.mxu0 0
        %4774 = vmatprep.subr.bf16.mxu0 0
        %4775 = vmatpush1.bf16.msra.mxu0 0
        %4776 = vmatprep.subr.bf16.mxu0 0
        %4777 = vmatpush1.bf16.msra.mxu0 0
        %4778 = vmatprep.subr.bf16.mxu0 0
        %4779 = vmatpush1.bf16.msra.mxu0 0
        %4780 = vmatprep.subr.bf16.mxu0 0
        %4781 = vmatpush1.bf16.msra.mxu0 0
        %4782 = vmatprep.subr.bf16.mxu0 0
        %4783 = vmatpush1.bf16.msra.mxu0 0
        %4784 = vmatprep.mubr.bf16.mxu0 0
        %4785 = vmatmul.mubr.bf16.gmra.mrb[0].mxu0 %v4744
        %v4786 = vpop.f32.mrb[0].mxu0
        %v4787 = vadd.f32 %v4698, %v4786
        %v4788 = vpop.f32.mrb[0].mxu0
        %v4789 = vpop.f32.mrb[0].mxu0
        %v4790 = vadd.f32 %v4701, %v4789
        %v4791 = vpop.f32.mrb[0].mxu0
        %4792 = vmatprep.mubr.bf16.mxu0 0
        %4793 = vmatmul.mubr.bf16.gmra.mrb[0].mxu0 %v4745
        %v4794 = vpop.f32.mrb[0].mxu0
        %v4795 = vadd.f32 %v4706, %v4794
        %v4796 = vpop.f32.mrb[0].mxu0
        %v4797 = vpop.f32.mrb[0].mxu0
        %v4798 = vadd.f32 %v4709, %v4797
        %v4799 = vpop.f32.mrb[0].mxu0
        %4800 = vmatprep.mubr.bf16.mxu0 0
        %4801 = vmatmul.mubr.bf16.gmra.mrb[0].mxu0 %v4746
        %v4802 = vpop.f32.mrb[0].mxu0
        %v4803 = vadd.f32 %v4714, %v4802
        %v4804 = vpop.f32.mrb[0].mxu0
        %v4805 = vpop.f32.mrb[0].mxu0
        %v4806 = vadd.f32 %v4717, %v4805
        %v4807 = vpop.f32.mrb[0].mxu0
        %4808 = vmatprep.mubr.bf16.mxu0 0
        %4809 = vmatmul.mubr.bf16.gmra.mrb[0].mxu0 %v4747
        %v4810 = vpop.f32.mrb[0].mxu0
        %v4811 = vadd.f32 %v4722, %v4810
        %v4812 = vpop.f32.mrb[0].mxu0
        %v4813 = vpop.f32.mrb[0].mxu0
        %v4814 = vadd.f32 %v4725, %v4813
        %v4815 = vpop.f32.mrb[0].mxu0
        %4816 = vdwg.mxu0
        %v4833 = vunpack.c.l.b16 %v4575
        %v4834 = vunpack.c.l.b16 %v4576
        %v4835 = vunpack.c.l.b16 %v4577
        %v4836 = vunpack.c.l.b16 %v4578
        %v4837 = vunpack.c.l.b16 %v4579
        %v4838 = vunpack.c.l.b16 %v4580
        %v4839 = vunpack.c.l.b16 %v4581
        %v4840 = vunpack.c.l.b16 %v4582
        %v4841 = vunpack.c.l.b16 %v4583
        %v4842 = vunpack.c.l.b16 %v4584
        %v4843 = vunpack.c.l.b16 %v4585
        %v4844 = vunpack.c.l.b16 %v4586
        %v4845 = vunpack.c.l.b16 %v4587
        %v4846 = vunpack.c.l.b16 %v4588
        %v4847 = vunpack.c.l.b16 %v4589
        %v4848 = vunpack.c.l.b16 %v4590
        %v4849 = vpack.c.b16 %v4834, %v4833
        %v4850 = vpack.c.b16 %v4836, %v4835
        %v4851 = vpack.c.b16 %v4838, %v4837
        %v4852 = vpack.c.b16 %v4840, %v4839
        %v4853 = vpack.c.b16 %v4842, %v4841
        %v4854 = vpack.c.b16 %v4844, %v4843
        %v4855 = vpack.c.b16 %v4846, %v4845
        %v4856 = vpack.c.b16 %v4848, %v4847
        %4865 = vmatprep.subr.bf16.mxu0 0
        %4866 = vmatpush1.bf16.msra.mxu0 %v4849
        %4867 = vmatprep.subr.bf16.mxu0 0
        %4868 = vmatpush1.bf16.msra.mxu0 %v4850
        %4869 = vmatprep.subr.bf16.mxu0 0
        %4870 = vmatpush1.bf16.msra.mxu0 %v4851
        %4871 = vmatprep.subr.bf16.mxu0 0
        %4872 = vmatpush1.bf16.msra.mxu0 %v4852
        %4873 = vmatprep.subr.bf16.mxu0 0
        %4874 = vmatpush1.bf16.msra.mxu0 %v4853
        %4875 = vmatprep.subr.bf16.mxu0 0
        %4876 = vmatpush1.bf16.msra.mxu0 %v4854
        %4877 = vmatprep.subr.bf16.mxu0 0
        %4878 = vmatpush1.bf16.msra.mxu0 %v4855
        %4879 = vmatprep.subr.bf16.mxu0 0
        %4880 = vmatpush1.bf16.msra.mxu0 %v4856
        %4881 = vmatprep.subr.bf16.mxu0 0
        %4882 = vmatpush1.bf16.msra.mxu0 0
        %4883 = vmatprep.subr.bf16.mxu0 0
        %4884 = vmatpush1.bf16.msra.mxu0 0
        %4885 = vmatprep.subr.bf16.mxu0 0
        %4886 = vmatpush1.bf16.msra.mxu0 0
        %4887 = vmatprep.subr.bf16.mxu0 0
        %4888 = vmatpush1.bf16.msra.mxu0 0
        %4889 = vmatprep.subr.bf16.mxu0 0
        %4890 = vmatpush1.bf16.msra.mxu0 0
        %4891 = vmatprep.subr.bf16.mxu0 0
        %4892 = vmatpush1.bf16.msra.mxu0 0
        %4893 = vmatprep.subr.bf16.mxu0 0
        %4894 = vmatpush1.bf16.msra.mxu0 0
        %4895 = vmatprep.subr.bf16.mxu0 0
        %4896 = vmatpush1.bf16.msra.mxu0 0
        %4897 = vmatprep.mubr.bf16.mxu0 0
        %4898 = vmatmul.mubr.bf16.gmra.mrb[0].mxu0 %v4744
        %v4899 = vpop.f32.mrb[0].mxu0
        %v4900 = vadd.f32 0.0, %v4899
        %v4901 = vpop.f32.mrb[0].mxu0
        %v4902 = vpop.f32.mrb[0].mxu0
        %v4903 = vadd.f32 0.0, %v4902
        %v4904 = vpop.f32.mrb[0].mxu0
        %4905 = vmatprep.mubr.bf16.mxu0 0
        %4906 = vmatmul.mubr.bf16.gmra.mrb[0].mxu0 %v4745
        %v4907 = vpop.f32.mrb[0].mxu0
        %v4908 = vadd.f32 0.0, %v4907
        %v4909 = vpop.f32.mrb[0].mxu0
        %v4910 = vpop.f32.mrb[0].mxu0
        %v4911 = vadd.f32 0.0, %v4910
        %v4912 = vpop.f32.mrb[0].mxu0
        %4913 = vmatprep.mubr.bf16.mxu0 0
        %4914 = vmatmul.mubr.bf16.gmra.mrb[0].mxu0 %v4746
        %v4915 = vpop.f32.mrb[0].mxu0
        %v4916 = vadd.f32 0.0, %v4915
        %v4917 = vpop.f32.mrb[0].mxu0
        %v4918 = vpop.f32.mrb[0].mxu0
        %v4919 = vadd.f32 0.0, %v4918
        %v4920 = vpop.f32.mrb[0].mxu0
        %4921 = vmatprep.mubr.bf16.mxu0 0
        %4922 = vmatmul.mubr.bf16.gmra.mrb[0].mxu0 %v4747
        %v4923 = vpop.f32.mrb[0].mxu0
        %v4924 = vadd.f32 0.0, %v4923
        %v4925 = vpop.f32.mrb[0].mxu0
        %v4926 = vpop.f32.mrb[0].mxu0
        %v4927 = vadd.f32 0.0, %v4926
        %v4928 = vpop.f32.mrb[0].mxu0
        %4929 = vdwg.mxu0
        %v4930 = vadd.f32 %v4787, %v4900
        %v4931 = vadd.f32 %v4790, %v4903
        %v4932 = vadd.f32 %v4795, %v4908
        %v4933 = vadd.f32 %v4798, %v4911
        %v4934 = vadd.f32 %v4803, %v4916
        %v4935 = vadd.f32 %v4806, %v4919
        %v4936 = vadd.f32 %v4811, %v4924
        %v4937 = vadd.f32 %v4814, %v4927
        %v4938 = vadd.f32 %v4930, 0.0
        %v4939 = vadd.f32 %v4931, 0.0
        %v4940 = vadd.f32 %v4932, 0.0
        %v4941 = vadd.f32 %v4933, 0.0
        %v4942 = vadd.f32 %v4934, 0.0
        %v4943 = vadd.f32 %v4935, 0.0
        %v4944 = vadd.f32 %v4936, 0.0
        %v4945 = vadd.f32 %v4937, 0.0
        %v4946 = vld [vmem:[#allocation3] sm:$0x1f]
        %v4947 = vld [vmem:[#allocation3 + $0x8] sm:$0x1f]
        %v4948 = vld [vmem:[#allocation3 + $0x10] sm:$0x1f]
        %v4949 = vld [vmem:[#allocation3 + $0x18] sm:$0x1f]
        %v4950 = vld [vmem:[#allocation3 + $0x20] sm:$0x1f]
        %v4951 = vld [vmem:[#allocation3 + $0x28] sm:$0x1f]
        %v4952 = vld [vmem:[#allocation3 + $0x30] sm:$0x1f]
        %v4953 = vld [vmem:[#allocation3 + $0x38] sm:$0x1f]
        %v4962 = vunpack.c.l.b16 %v4946
        %v4963 = vunpack.c.h.b16 %v4946
        %v4964 = vunpack.c.l.b16 %v4947
        %v4965 = vunpack.c.h.b16 %v4947
        %v4966 = vunpack.c.l.b16 %v4948
        %v4967 = vunpack.c.h.b16 %v4948
        %v4968 = vunpack.c.l.b16 %v4949
        %v4969 = vunpack.c.h.b16 %v4949
        %v4970 = vunpack.c.l.b16 %v4950
        %v4971 = vunpack.c.h.b16 %v4950
        %v4972 = vunpack.c.l.b16 %v4951
        %v4973 = vunpack.c.h.b16 %v4951
        %v4974 = vunpack.c.l.b16 %v4952
        %v4975 = vunpack.c.h.b16 %v4952
        %v4976 = vunpack.c.l.b16 %v4953
        %v4977 = vunpack.c.h.b16 %v4953
        %v4978 = vpack.c.b16 %v4962, %v4962
        %v4979 = vpack.c.b16 %v4963, %v4963
        %v4980 = vpack.c.b16 %v4964, %v4964
        %v4981 = vpack.c.b16 %v4965, %v4965
        %v4982 = vpack.c.b16 %v4966, %v4966
        %v4983 = vpack.c.b16 %v4967, %v4967
        %v4984 = vpack.c.b16 %v4968, %v4968
        %v4985 = vpack.c.b16 %v4969, %v4969
        %v4986 = vpack.c.b16 %v4970, %v4970
        %v4987 = vpack.c.b16 %v4971, %v4971
        %v4988 = vpack.c.b16 %v4972, %v4972
        %v4989 = vpack.c.b16 %v4973, %v4973
        %v4990 = vpack.c.b16 %v4974, %v4974
        %v4991 = vpack.c.b16 %v4975, %v4975
        %v4992 = vpack.c.b16 %v4976, %v4976
        %v4993 = vpack.c.b16 %v4977, %v4977
        %vm4994 = vsmask.f32 3328
        %vm4995 = vsmask.f32 7440
        %vm4996 = vmor %vm4994, %vm4995
        %v4998 = vshrl.u32 %v4978, 16
        %v5000 = vrot.slane %v4998, 4
        %v5001 = vshll.u32 %v4978, 16
        %v5003 = vrot.slane %v5001, 5
        %v5004 = vor.u32 %v5000, %v5003
        %v5005 = vrot.slane %v5004, 4
        %v5007 = vshll.u32 %v4979, 16
        %v5009 = vrot.slane %v5007, 5
        %v5010 = vsel %vm4996, %v5005, %v5009
        %v5012 = vshrl.u32 %v4980, 16
        %v5014 = vrot.slane %v5012, 4
        %v5015 = vshll.u32 %v4980, 16
        %v5017 = vrot.slane %v5015, 5
        %v5018 = vor.u32 %v5014, %v5017
        %v5019 = vrot.slane %v5018, 4
        %v5021 = vshll.u32 %v4981, 16
        %v5023 = vrot.slane %v5021, 5
        %v5024 = vsel %vm4996, %v5019, %v5023
        %v5026 = vshrl.u32 %v4982, 16
        %v5028 = vrot.slane %v5026, 4
        %v5029 = vshll.u32 %v4982, 16
        %v5031 = vrot.slane %v5029, 5
        %v5032 = vor.u32 %v5028, %v5031
        %v5033 = vrot.slane %v5032, 4
        %v5035 = vshll.u32 %v4983, 16
        %v5037 = vrot.slane %v5035, 5
        %v5038 = vsel %vm4996, %v5033, %v5037
        %v5040 = vshrl.u32 %v4984, 16
        %v5042 = vrot.slane %v5040, 4
        %v5043 = vshll.u32 %v4984, 16
        %v5045 = vrot.slane %v5043, 5
        %v5046 = vor.u32 %v5042, %v5045
        %v5047 = vrot.slane %v5046, 4
        %v5049 = vshll.u32 %v4985, 16
        %v5051 = vrot.slane %v5049, 5
        %v5052 = vsel %vm4996, %v5047, %v5051
        %v5054 = vshrl.u32 %v4986, 16
        %v5056 = vrot.slane %v5054, 4
        %v5057 = vshll.u32 %v4986, 16
        %v5059 = vrot.slane %v5057, 5
        %v5060 = vor.u32 %v5056, %v5059
        %v5061 = vrot.slane %v5060, 4
        %v5063 = vshll.u32 %v4987, 16
        %v5065 = vrot.slane %v5063, 5
        %v5066 = vsel %vm4996, %v5061, %v5065
        %v5068 = vshrl.u32 %v4988, 16
        %v5070 = vrot.slane %v5068, 4
        %v5071 = vshll.u32 %v4988, 16
        %v5073 = vrot.slane %v5071, 5
        %v5074 = vor.u32 %v5070, %v5073
        %v5075 = vrot.slane %v5074, 4
        %v5077 = vshll.u32 %v4989, 16
        %v5079 = vrot.slane %v5077, 5
        %v5080 = vsel %vm4996, %v5075, %v5079
        %v5082 = vshrl.u32 %v4990, 16
        %v5084 = vrot.slane %v5082, 4
        %v5085 = vshll.u32 %v4990, 16
        %v5087 = vrot.slane %v5085, 5
        %v5088 = vor.u32 %v5084, %v5087
        %v5089 = vrot.slane %v5088, 4
        %v5091 = vshll.u32 %v4991, 16
        %v5093 = vrot.slane %v5091, 5
        %v5094 = vsel %vm4996, %v5089, %v5093
        %v5096 = vshrl.u32 %v4992, 16
        %v5098 = vrot.slane %v5096, 4
        %v5099 = vshll.u32 %v4992, 16
        %v5101 = vrot.slane %v5099, 5
        %v5102 = vor.u32 %v5098, %v5101
        %v5103 = vrot.slane %v5102, 4
        %v5105 = vshll.u32 %v4993, 16
        %v5107 = vrot.slane %v5105, 5
        %v5108 = vsel %vm4996, %v5103, %v5107
        %v5109 = vld [vmem:[#allocation4] sm:$0x1f]
        %v5110 = vld [vmem:[#allocation4 + $0x8] sm:$0x1f]
        %v5111 = vld [vmem:[#allocation4 + $0x10] sm:$0x1f]
        %v5112 = vld [vmem:[#allocation4 + $0x18] sm:$0x1f]
        %v5113 = vld [vmem:[#allocation4 + $0x20] sm:$0x1f]
        %v5114 = vld [vmem:[#allocation4 + $0x28] sm:$0x1f]
        %v5115 = vld [vmem:[#allocation4 + $0x30] sm:$0x1f]
        %v5116 = vld [vmem:[#allocation4 + $0x38] sm:$0x1f]
        %v5125 = vunpack.c.l.b16 %v5109
        %v5126 = vunpack.c.h.b16 %v5109
        %v5127 = vunpack.c.l.b16 %v5110
        %v5128 = vunpack.c.h.b16 %v5110
        %v5129 = vunpack.c.l.b16 %v5111
        %v5130 = vunpack.c.h.b16 %v5111
        %v5131 = vunpack.c.l.b16 %v5112
        %v5132 = vunpack.c.h.b16 %v5112
        %v5133 = vunpack.c.l.b16 %v5113
        %v5134 = vunpack.c.h.b16 %v5113
        %v5135 = vunpack.c.l.b16 %v5114
        %v5136 = vunpack.c.h.b16 %v5114
        %v5137 = vunpack.c.l.b16 %v5115
        %v5138 = vunpack.c.h.b16 %v5115
        %v5139 = vunpack.c.l.b16 %v5116
        %v5140 = vunpack.c.h.b16 %v5116
        %v5141 = vpack.c.b16 %v5125, %v5125
        %v5142 = vpack.c.b16 %v5126, %v5126
        %v5143 = vpack.c.b16 %v5127, %v5127
        %v5144 = vpack.c.b16 %v5128, %v5128
        %v5145 = vpack.c.b16 %v5129, %v5129
        %v5146 = vpack.c.b16 %v5130, %v5130
        %v5147 = vpack.c.b16 %v5131, %v5131
        %v5148 = vpack.c.b16 %v5132, %v5132
        %v5149 = vpack.c.b16 %v5133, %v5133
        %v5150 = vpack.c.b16 %v5134, %v5134
        %v5151 = vpack.c.b16 %v5135, %v5135
        %v5152 = vpack.c.b16 %v5136, %v5136
        %v5153 = vpack.c.b16 %v5137, %v5137
        %v5154 = vpack.c.b16 %v5138, %v5138
        %v5155 = vpack.c.b16 %v5139, %v5139
        %v5156 = vpack.c.b16 %v5140, %v5140
        %v5158 = vshrl.u32 %v5141, 16
        %v5160 = vrot.slane %v5158, 4
        %v5161 = vshll.u32 %v5141, 16
        %v5163 = vrot.slane %v5161, 5
        %v5164 = vor.u32 %v5160, %v5163
        %v5165 = vrot.slane %v5164, 4
        %v5167 = vshll.u32 %v5142, 16
        %v5169 = vrot.slane %v5167, 5
        %v5170 = vsel %vm4996, %v5165, %v5169
        %v5172 = vshrl.u32 %v5143, 16
        %v5174 = vrot.slane %v5172, 4
        %v5175 = vshll.u32 %v5143, 16
        %v5177 = vrot.slane %v5175, 5
        %v5178 = vor.u32 %v5174, %v5177
        %v5179 = vrot.slane %v5178, 4
        %v5181 = vshll.u32 %v5144, 16
        %v5183 = vrot.slane %v5181, 5
        %v5184 = vsel %vm4996, %v5179, %v5183
        %v5186 = vshrl.u32 %v5145, 16
        %v5188 = vrot.slane %v5186, 4
        %v5189 = vshll.u32 %v5145, 16
        %v5191 = vrot.slane %v5189, 5
        %v5192 = vor.u32 %v5188, %v5191
        %v5193 = vrot.slane %v5192, 4
        %v5195 = vshll.u32 %v5146, 16
        %v5197 = vrot.slane %v5195, 5
        %v5198 = vsel %vm4996, %v5193, %v5197
        %v5200 = vshrl.u32 %v5147, 16
        %v5202 = vrot.slane %v5200, 4
        %v5203 = vshll.u32 %v5147, 16
        %v5205 = vrot.slane %v5203, 5
        %v5206 = vor.u32 %v5202, %v5205
        %v5207 = vrot.slane %v5206, 4
        %v5209 = vshll.u32 %v5148, 16
        %v5211 = vrot.slane %v5209, 5
        %v5212 = vsel %vm4996, %v5207, %v5211
        %v5214 = vshrl.u32 %v5149, 16
        %v5216 = vrot.slane %v5214, 4
        %v5217 = vshll.u32 %v5149, 16
        %v5219 = vrot.slane %v5217, 5
        %v5220 = vor.u32 %v5216, %v5219
        %v5221 = vrot.slane %v5220, 4
        %v5223 = vshll.u32 %v5150, 16
        %v5225 = vrot.slane %v5223, 5
        %v5226 = vsel %vm4996, %v5221, %v5225
        %v5228 = vshrl.u32 %v5151, 16
        %v5230 = vrot.slane %v5228, 4
        %v5231 = vshll.u32 %v5151, 16
        %v5233 = vrot.slane %v5231, 5
        %v5234 = vor.u32 %v5230, %v5233
        %v5235 = vrot.slane %v5234, 4
        %v5237 = vshll.u32 %v5152, 16
        %v5239 = vrot.slane %v5237, 5
        %v5240 = vsel %vm4996, %v5235, %v5239
        %v5242 = vshrl.u32 %v5153, 16
        %v5244 = vrot.slane %v5242, 4
        %v5245 = vshll.u32 %v5153, 16
        %v5247 = vrot.slane %v5245, 5
        %v5248 = vor.u32 %v5244, %v5247
        %v5249 = vrot.slane %v5248, 4
        %v5251 = vshll.u32 %v5154, 16
        %v5253 = vrot.slane %v5251, 5
        %v5254 = vsel %vm4996, %v5249, %v5253
        %v5256 = vshrl.u32 %v5155, 16
        %v5258 = vrot.slane %v5256, 4
        %v5259 = vshll.u32 %v5155, 16
        %v5261 = vrot.slane %v5259, 5
        %v5262 = vor.u32 %v5258, %v5261
        %v5263 = vrot.slane %v5262, 4
        %v5265 = vshll.u32 %v5156, 16
        %v5267 = vrot.slane %v5265, 5
        %v5268 = vsel %vm4996, %v5263, %v5267
        %s5269 = scalar_lea.vmem %s4, 64
        %v5270 = vld [vmem:[%s5269] sm:$0xf]
        %v5271 = vld [vmem:[%s5269 + $0x4] sm:$0xf]
        %v5272 = vld [vmem:[%s5269 + $0x8] sm:$0xf]
        %v5273 = vld [vmem:[%s5269 + $0xc] sm:$0xf]
        %v5274 = vld [vmem:[%s5269 + $0x10] sm:$0xf]
        %v5275 = vld [vmem:[%s5269 + $0x14] sm:$0xf]
        %v5276 = vld [vmem:[%s5269 + $0x18] sm:$0xf]
        %v5277 = vld [vmem:[%s5269 + $0x1c] sm:$0xf]
        %v5278 = vld [vmem:[%s5269 + $0x20] sm:$0xf]
        %v5279 = vld [vmem:[%s5269 + $0x24] sm:$0xf]
        %v5280 = vld [vmem:[%s5269 + $0x28] sm:$0xf]
        %v5281 = vld [vmem:[%s5269 + $0x2c] sm:$0xf]
        %v5282 = vld [vmem:[%s5269 + $0x30] sm:$0xf]
        %v5283 = vld [vmem:[%s5269 + $0x34] sm:$0xf]
        %v5284 = vld [vmem:[%s5269 + $0x38] sm:$0xf]
        %v5285 = vld [vmem:[%s5269 + $0x3c] sm:$0xf]
        %s5286 = scalar_lea.vmem %s5, 64
        %v5287 = vld [vmem:[%s5286] sm:$0xf]
        %v5288 = vld [vmem:[%s5286 + $0x4] sm:$0xf]
        %v5289 = vld [vmem:[%s5286 + $0x8] sm:$0xf]
        %v5290 = vld [vmem:[%s5286 + $0xc] sm:$0xf]
        %v5291 = vld [vmem:[%s5286 + $0x10] sm:$0xf]
        %v5292 = vld [vmem:[%s5286 + $0x14] sm:$0xf]
        %v5293 = vld [vmem:[%s5286 + $0x18] sm:$0xf]
        %v5294 = vld [vmem:[%s5286 + $0x1c] sm:$0xf]
        %v5295 = vld [vmem:[%s5286 + $0x20] sm:$0xf]
        %v5296 = vld [vmem:[%s5286 + $0x24] sm:$0xf]
        %v5297 = vld [vmem:[%s5286 + $0x28] sm:$0xf]
        %v5298 = vld [vmem:[%s5286 + $0x2c] sm:$0xf]
        %v5299 = vld [vmem:[%s5286 + $0x30] sm:$0xf]
        %v5300 = vld [vmem:[%s5286 + $0x34] sm:$0xf]
        %v5301 = vld [vmem:[%s5286 + $0x38] sm:$0xf]
        %v5302 = vld [vmem:[%s5286 + $0x3c] sm:$0xf]
        %v5303 = vunpack.c.l.b16 %v5170
        %v5304 = vunpack.c.l.b16 %v5184
        %v5305 = vunpack.c.l.b16 %v5198
        %v5306 = vunpack.c.l.b16 %v5212
        %v5307 = vunpack.c.l.b16 %v5226
        %v5308 = vunpack.c.l.b16 %v5240
        %v5309 = vunpack.c.l.b16 %v5254
        %v5310 = vunpack.c.l.b16 %v5268
        %v5311 = vpack.c.b16 %v5304, %v5303
        %v5312 = vpack.c.b16 %v5306, %v5305
        %v5313 = vpack.c.b16 %v5308, %v5307
        %v5314 = vpack.c.b16 %v5310, %v5309
        %v5335 = vunpack.c.l.b16 %v5270
        %v5336 = vunpack.c.l.b16 %v5271
        %v5337 = vunpack.c.l.b16 %v5272
        %v5338 = vunpack.c.l.b16 %v5273
        %v5339 = vunpack.c.l.b16 %v5274
        %v5340 = vunpack.c.l.b16 %v5275
        %v5341 = vunpack.c.l.b16 %v5276
        %v5342 = vunpack.c.l.b16 %v5277
        %v5343 = vunpack.c.l.b16 %v5278
        %v5344 = vunpack.c.l.b16 %v5279
        %v5345 = vunpack.c.l.b16 %v5280
        %v5346 = vunpack.c.l.b16 %v5281
        %v5347 = vunpack.c.l.b16 %v5282
        %v5348 = vunpack.c.l.b16 %v5283
        %v5349 = vunpack.c.l.b16 %v5284
        %v5350 = vunpack.c.l.b16 %v5285
        %v5351 = vpack.c.b16 %v5336, %v5335
        %v5352 = vpack.c.b16 %v5338, %v5337
        %v5353 = vpack.c.b16 %v5340, %v5339
        %v5354 = vpack.c.b16 %v5342, %v5341
        %v5355 = vpack.c.b16 %v5344, %v5343
        %v5356 = vpack.c.b16 %v5346, %v5345
        %v5357 = vpack.c.b16 %v5348, %v5347
        %v5358 = vpack.c.b16 %v5350, %v5349
        %5367 = vmatprep.subr.bf16.mxu0 0
        %5368 = vmatpush1.bf16.msra.mxu0 %v5351
        %5369 = vmatprep.subr.bf16.mxu0 0
        %5370 = vmatpush1.bf16.msra.mxu0 %v5352
        %5371 = vmatprep.subr.bf16.mxu0 0
        %5372 = vmatpush1.bf16.msra.mxu0 %v5353
        %5373 = vmatprep.subr.bf16.mxu0 0
        %5374 = vmatpush1.bf16.msra.mxu0 %v5354
        %5375 = vmatprep.subr.bf16.mxu0 0
        %5376 = vmatpush1.bf16.msra.mxu0 %v5355
        %5377 = vmatprep.subr.bf16.mxu0 0
        %5378 = vmatpush1.bf16.msra.mxu0 %v5356
        %5379 = vmatprep.subr.bf16.mxu0 0
        %5380 = vmatpush1.bf16.msra.mxu0 %v5357
        %5381 = vmatprep.subr.bf16.mxu0 0
        %5382 = vmatpush1.bf16.msra.mxu0 %v5358
        %5383 = vmatprep.subr.bf16.mxu0 0
        %5384 = vmatpush1.bf16.msra.mxu0 0
        %5385 = vmatprep.subr.bf16.mxu0 0
        %5386 = vmatpush1.bf16.msra.mxu0 0
        %5387 = vmatprep.subr.bf16.mxu0 0
        %5388 = vmatpush1.bf16.msra.mxu0 0
        %5389 = vmatprep.subr.bf16.mxu0 0
        %5390 = vmatpush1.bf16.msra.mxu0 0
        %5391 = vmatprep.subr.bf16.mxu0 0
        %5392 = vmatpush1.bf16.msra.mxu0 0
        %5393 = vmatprep.subr.bf16.mxu0 0
        %5394 = vmatpush1.bf16.msra.mxu0 0
        %5395 = vmatprep.subr.bf16.mxu0 0
        %5396 = vmatpush1.bf16.msra.mxu0 0
        %5397 = vmatprep.subr.bf16.mxu0 0
        %5398 = vmatpush1.bf16.msra.mxu0 0
        %5399 = vmatprep.mubr.bf16.mxu0 0
        %5400 = vmatmul.mubr.bf16.gmra.mrb[0].mxu0 %v5311
        %v5401 = vpop.f32.mrb[0].mxu0
        %v5402 = vadd.f32 0.0, %v5401
        %v5403 = vpop.f32.mrb[0].mxu0
        %v5404 = vpop.f32.mrb[0].mxu0
        %v5405 = vadd.f32 0.0, %v5404
        %v5406 = vpop.f32.mrb[0].mxu0
        %5407 = vmatprep.mubr.bf16.mxu0 0
        %5408 = vmatmul.mubr.bf16.gmra.mrb[0].mxu0 %v5312
        %v5409 = vpop.f32.mrb[0].mxu0
        %v5410 = vadd.f32 0.0, %v5409
        %v5411 = vpop.f32.mrb[0].mxu0
        %v5412 = vpop.f32.mrb[0].mxu0
        %v5413 = vadd.f32 0.0, %v5412
        %v5414 = vpop.f32.mrb[0].mxu0
        %5415 = vmatprep.mubr.bf16.mxu0 0
        %5416 = vmatmul.mubr.bf16.gmra.mrb[0].mxu0 %v5313
        %v5417 = vpop.f32.mrb[0].mxu0
        %v5418 = vadd.f32 0.0, %v5417
        %v5419 = vpop.f32.mrb[0].mxu0
        %v5420 = vpop.f32.mrb[0].mxu0
        %v5421 = vadd.f32 0.0, %v5420
        %v5422 = vpop.f32.mrb[0].mxu0
        %5423 = vmatprep.mubr.bf16.mxu0 0
        %5424 = vmatmul.mubr.bf16.gmra.mrb[0].mxu0 %v5314
        %v5425 = vpop.f32.mrb[0].mxu0
        %v5426 = vadd.f32 0.0, %v5425
        %v5427 = vpop.f32.mrb[0].mxu0
        %v5428 = vpop.f32.mrb[0].mxu0
        %v5429 = vadd.f32 0.0, %v5428
        %v5430 = vpop.f32.mrb[0].mxu0
        %5431 = vdwg.mxu0
        %v5432 = vunpack.c.l.b16 %v5010
        %v5433 = vunpack.c.l.b16 %v5024
        %v5434 = vunpack.c.l.b16 %v5038
        %v5435 = vunpack.c.l.b16 %v5052
        %v5436 = vunpack.c.l.b16 %v5066
        %v5437 = vunpack.c.l.b16 %v5080
        %v5438 = vunpack.c.l.b16 %v5094
        %v5439 = vunpack.c.l.b16 %v5108
        %v5440 = vpack.c.b16 %v5433, %v5432
        %v5441 = vpack.c.b16 %v5435, %v5434
        %v5442 = vpack.c.b16 %v5437, %v5436
        %v5443 = vpack.c.b16 %v5439, %v5438
        %5448 = vmatprep.subr.bf16.mxu0 0
        %5449 = vmatpush1.bf16.msra.mxu0 %v5351
        %5450 = vmatprep.subr.bf16.mxu0 0
        %5451 = vmatpush1.bf16.msra.mxu0 %v5352
        %5452 = vmatprep.subr.bf16.mxu0 0
        %5453 = vmatpush1.bf16.msra.mxu0 %v5353
        %5454 = vmatprep.subr.bf16.mxu0 0
        %5455 = vmatpush1.bf16.msra.mxu0 %v5354
        %5456 = vmatprep.subr.bf16.mxu0 0
        %5457 = vmatpush1.bf16.msra.mxu0 %v5355
        %5458 = vmatprep.subr.bf16.mxu0 0
        %5459 = vmatpush1.bf16.msra.mxu0 %v5356
        %5460 = vmatprep.subr.bf16.mxu0 0
        %5461 = vmatpush1.bf16.msra.mxu0 %v5357
        %5462 = vmatprep.subr.bf16.mxu0 0
        %5463 = vmatpush1.bf16.msra.mxu0 %v5358
        %5464 = vmatprep.subr.bf16.mxu0 0
        %5465 = vmatpush1.bf16.msra.mxu0 0
        %5466 = vmatprep.subr.bf16.mxu0 0
        %5467 = vmatpush1.bf16.msra.mxu0 0
        %5468 = vmatprep.subr.bf16.mxu0 0
        %5469 = vmatpush1.bf16.msra.mxu0 0
        %5470 = vmatprep.subr.bf16.mxu0 0
        %5471 = vmatpush1.bf16.msra.mxu0 0
        %5472 = vmatprep.subr.bf16.mxu0 0
        %5473 = vmatpush1.bf16.msra.mxu0 0
        %5474 = vmatprep.subr.bf16.mxu0 0
        %5475 = vmatpush1.bf16.msra.mxu0 0
        %5476 = vmatprep.subr.bf16.mxu0 0
        %5477 = vmatpush1.bf16.msra.mxu0 0
        %5478 = vmatprep.subr.bf16.mxu0 0
        %5479 = vmatpush1.bf16.msra.mxu0 0
        %5480 = vmatprep.mubr.bf16.mxu0 0
        %5481 = vmatmul.mubr.bf16.gmra.mrb[0].mxu0 %v5440
        %v5482 = vpop.f32.mrb[0].mxu0
        %v5483 = vadd.f32 %v5402, %v5482
        %v5484 = vpop.f32.mrb[0].mxu0
        %v5485 = vpop.f32.mrb[0].mxu0
        %v5486 = vadd.f32 %v5405, %v5485
        %v5487 = vpop.f32.mrb[0].mxu0
        %5488 = vmatprep.mubr.bf16.mxu0 0
        %5489 = vmatmul.mubr.bf16.gmra.mrb[0].mxu0 %v5441
        %v5490 = vpop.f32.mrb[0].mxu0
        %v5491 = vadd.f32 %v5410, %v5490
        %v5492 = vpop.f32.mrb[0].mxu0
        %v5493 = vpop.f32.mrb[0].mxu0
        %v5494 = vadd.f32 %v5413, %v5493
        %v5495 = vpop.f32.mrb[0].mxu0
        %5496 = vmatprep.mubr.bf16.mxu0 0
        %5497 = vmatmul.mubr.bf16.gmra.mrb[0].mxu0 %v5442
        %v5498 = vpop.f32.mrb[0].mxu0
        %v5499 = vadd.f32 %v5418, %v5498
        %v5500 = vpop.f32.mrb[0].mxu0
        %v5501 = vpop.f32.mrb[0].mxu0
        %v5502 = vadd.f32 %v5421, %v5501
        %v5503 = vpop.f32.mrb[0].mxu0
        %5504 = vmatprep.mubr.bf16.mxu0 0
        %5505 = vmatmul.mubr.bf16.gmra.mrb[0].mxu0 %v5443
        %v5506 = vpop.f32.mrb[0].mxu0
        %v5507 = vadd.f32 %v5426, %v5506
        %v5508 = vpop.f32.mrb[0].mxu0
        %v5509 = vpop.f32.mrb[0].mxu0
        %v5510 = vadd.f32 %v5429, %v5509
        %v5511 = vpop.f32.mrb[0].mxu0
        %5512 = vdwg.mxu0
        %v5529 = vunpack.c.l.b16 %v5287
        %v5530 = vunpack.c.l.b16 %v5288
        %v5531 = vunpack.c.l.b16 %v5289
        %v5532 = vunpack.c.l.b16 %v5290
        %v5533 = vunpack.c.l.b16 %v5291
        %v5534 = vunpack.c.l.b16 %v5292
        %v5535 = vunpack.c.l.b16 %v5293
        %v5536 = vunpack.c.l.b16 %v5294
        %v5537 = vunpack.c.l.b16 %v5295
        %v5538 = vunpack.c.l.b16 %v5296
        %v5539 = vunpack.c.l.b16 %v5297
        %v5540 = vunpack.c.l.b16 %v5298
        %v5541 = vunpack.c.l.b16 %v5299
        %v5542 = vunpack.c.l.b16 %v5300
        %v5543 = vunpack.c.l.b16 %v5301
        %v5544 = vunpack.c.l.b16 %v5302
        %v5545 = vpack.c.b16 %v5530, %v5529
        %v5546 = vpack.c.b16 %v5532, %v5531
        %v5547 = vpack.c.b16 %v5534, %v5533
        %v5548 = vpack.c.b16 %v5536, %v5535
        %v5549 = vpack.c.b16 %v5538, %v5537
        %v5550 = vpack.c.b16 %v5540, %v5539
        %v5551 = vpack.c.b16 %v5542, %v5541
        %v5552 = vpack.c.b16 %v5544, %v5543
        %5561 = vmatprep.subr.bf16.mxu0 0
        %5562 = vmatpush1.bf16.msra.mxu0 %v5545
        %5563 = vmatprep.subr.bf16.mxu0 0
        %5564 = vmatpush1.bf16.msra.mxu0 %v5546
        %5565 = vmatprep.subr.bf16.mxu0 0
        %5566 = vmatpush1.bf16.msra.mxu0 %v5547
        %5567 = vmatprep.subr.bf16.mxu0 0
        %5568 = vmatpush1.bf16.msra.mxu0 %v5548
        %5569 = vmatprep.subr.bf16.mxu0 0
        %5570 = vmatpush1.bf16.msra.mxu0 %v5549
        %5571 = vmatprep.subr.bf16.mxu0 0
        %5572 = vmatpush1.bf16.msra.mxu0 %v5550
        %5573 = vmatprep.subr.bf16.mxu0 0
        %5574 = vmatpush1.bf16.msra.mxu0 %v5551
        %5575 = vmatprep.subr.bf16.mxu0 0
        %5576 = vmatpush1.bf16.msra.mxu0 %v5552
        %5577 = vmatprep.subr.bf16.mxu0 0
        %5578 = vmatpush1.bf16.msra.mxu0 0
        %5579 = vmatprep.subr.bf16.mxu0 0
        %5580 = vmatpush1.bf16.msra.mxu0 0
        %5581 = vmatprep.subr.bf16.mxu0 0
        %5582 = vmatpush1.bf16.msra.mxu0 0
        %5583 = vmatprep.subr.bf16.mxu0 0
        %5584 = vmatpush1.bf16.msra.mxu0 0
        %5585 = vmatprep.subr.bf16.mxu0 0
        %5586 = vmatpush1.bf16.msra.mxu0 0
        %5587 = vmatprep.subr.bf16.mxu0 0
        %5588 = vmatpush1.bf16.msra.mxu0 0
        %5589 = vmatprep.subr.bf16.mxu0 0
        %5590 = vmatpush1.bf16.msra.mxu0 0
        %5591 = vmatprep.subr.bf16.mxu0 0
        %5592 = vmatpush1.bf16.msra.mxu0 0
        %5593 = vmatprep.mubr.bf16.mxu0 0
        %5594 = vmatmul.mubr.bf16.gmra.mrb[0].mxu0 %v5440
        %v5595 = vpop.f32.mrb[0].mxu0
        %v5596 = vadd.f32 0.0, %v5595
        %v5597 = vpop.f32.mrb[0].mxu0
        %v5598 = vpop.f32.mrb[0].mxu0
        %v5599 = vadd.f32 0.0, %v5598
        %v5600 = vpop.f32.mrb[0].mxu0
        %5601 = vmatprep.mubr.bf16.mxu0 0
        %5602 = vmatmul.mubr.bf16.gmra.mrb[0].mxu0 %v5441
        %v5603 = vpop.f32.mrb[0].mxu0
        %v5604 = vadd.f32 0.0, %v5603
        %v5605 = vpop.f32.mrb[0].mxu0
        %v5606 = vpop.f32.mrb[0].mxu0
        %v5607 = vadd.f32 0.0, %v5606
        %v5608 = vpop.f32.mrb[0].mxu0
        %5609 = vmatprep.mubr.bf16.mxu0 0
        %5610 = vmatmul.mubr.bf16.gmra.mrb[0].mxu0 %v5442
        %v5611 = vpop.f32.mrb[0].mxu0
        %v5612 = vadd.f32 0.0, %v5611
        %v5613 = vpop.f32.mrb[0].mxu0
        %v5614 = vpop.f32.mrb[0].mxu0
        %v5615 = vadd.f32 0.0, %v5614
        %v5616 = vpop.f32.mrb[0].mxu0
        %5617 = vmatprep.mubr.bf16.mxu0 0
        %5618 = vmatmul.mubr.bf16.gmra.mrb[0].mxu0 %v5443
        %v5619 = vpop.f32.mrb[0].mxu0
        %v5620 = vadd.f32 0.0, %v5619
        %v5621 = vpop.f32.mrb[0].mxu0
        %v5622 = vpop.f32.mrb[0].mxu0
        %v5623 = vadd.f32 0.0, %v5622
        %v5624 = vpop.f32.mrb[0].mxu0
        %5625 = vdwg.mxu0
        %v5626 = vadd.f32 %v5483, %v5596
        %v5627 = vadd.f32 %v5486, %v5599
        %v5628 = vadd.f32 %v5491, %v5604
        %v5629 = vadd.f32 %v5494, %v5607
        %v5630 = vadd.f32 %v5499, %v5612
        %v5631 = vadd.f32 %v5502, %v5615
        %v5632 = vadd.f32 %v5507, %v5620
        %v5633 = vadd.f32 %v5510, %v5623
        %v5634 = vadd.f32 %v4938, %v5626
        %v5635 = vadd.f32 %v4939, %v5627
        %v5636 = vadd.f32 %v4940, %v5628
        %v5637 = vadd.f32 %v4941, %v5629
        %v5638 = vadd.f32 %v4942, %v5630
        %v5639 = vadd.f32 %v4943, %v5631
        %v5640 = vadd.f32 %v4944, %v5632
        %v5641 = vadd.f32 %v4945, %v5633
        %v5642 = vld [vmem:[#allocation3] sm:$0x1e]
        %v5643 = vld [vmem:[#allocation3 + $0x8] sm:$0x1e]
        %v5644 = vld [vmem:[#allocation3 + $0x10] sm:$0x1e]
        %v5645 = vld [vmem:[#allocation3 + $0x18] sm:$0x1e]
        %v5646 = vld [vmem:[#allocation3 + $0x20] sm:$0x1e]
        %v5647 = vld [vmem:[#allocation3 + $0x28] sm:$0x1e]
        %v5648 = vld [vmem:[#allocation3 + $0x30] sm:$0x1e]
        %v5649 = vld [vmem:[#allocation3 + $0x38] sm:$0x1e]
        %v5658 = vunpack.c.l.b16 %v5642
        %v5659 = vunpack.c.h.b16 %v5642
        %v5660 = vunpack.c.l.b16 %v5643
        %v5661 = vunpack.c.h.b16 %v5643
        %v5662 = vunpack.c.l.b16 %v5644
        %v5663 = vunpack.c.h.b16 %v5644
        %v5664 = vunpack.c.l.b16 %v5645
        %v5665 = vunpack.c.h.b16 %v5645
        %v5666 = vunpack.c.l.b16 %v5646
        %v5667 = vunpack.c.h.b16 %v5646
        %v5668 = vunpack.c.l.b16 %v5647
        %v5669 = vunpack.c.h.b16 %v5647
        %v5670 = vunpack.c.l.b16 %v5648
        %v5671 = vunpack.c.h.b16 %v5648
        %v5672 = vunpack.c.l.b16 %v5649
        %v5673 = vunpack.c.h.b16 %v5649
        %v5674 = vpack.c.b16 %v5658, %v5658
        %v5675 = vpack.c.b16 %v5659, %v5659
        %v5676 = vpack.c.b16 %v5660, %v5660
        %v5677 = vpack.c.b16 %v5661, %v5661
        %v5678 = vpack.c.b16 %v5662, %v5662
        %v5679 = vpack.c.b16 %v5663, %v5663
        %v5680 = vpack.c.b16 %v5664, %v5664
        %v5681 = vpack.c.b16 %v5665, %v5665
        %v5682 = vpack.c.b16 %v5666, %v5666
        %v5683 = vpack.c.b16 %v5667, %v5667
        %v5684 = vpack.c.b16 %v5668, %v5668
        %v5685 = vpack.c.b16 %v5669, %v5669
        %v5686 = vpack.c.b16 %v5670, %v5670
        %v5687 = vpack.c.b16 %v5671, %v5671
        %v5688 = vpack.c.b16 %v5672, %v5672
        %v5689 = vpack.c.b16 %v5673, %v5673
        %vm5690 = vcmask 1042432
        %vm5691 = vcmask 1046532
        %vm5692 = vmor %vm5690, %vm5691
        %v5693 = vrot.slane %v5674, 5
        %v5694 = vrot.slane %v5693, 4
        %v5695 = vrot.slane %v5675, 5
        %v5696 = vsel %vm5692, %v5694, %v5695
        %v5697 = vrot.slane %v5676, 5
        %v5698 = vrot.slane %v5697, 4
        %v5699 = vrot.slane %v5677, 5
        %v5700 = vsel %vm5692, %v5698, %v5699
        %v5701 = vrot.slane %v5678, 5
        %v5702 = vrot.slane %v5701, 4
        %v5703 = vrot.slane %v5679, 5
        %v5704 = vsel %vm5692, %v5702, %v5703
        %v5705 = vrot.slane %v5680, 5
        %v5706 = vrot.slane %v5705, 4
        %v5707 = vrot.slane %v5681, 5
        %v5708 = vsel %vm5692, %v5706, %v5707
        %v5709 = vrot.slane %v5682, 5
        %v5710 = vrot.slane %v5709, 4
        %v5711 = vrot.slane %v5683, 5
        %v5712 = vsel %vm5692, %v5710, %v5711
        %v5713 = vrot.slane %v5684, 5
        %v5714 = vrot.slane %v5713, 4
        %v5715 = vrot.slane %v5685, 5
        %v5716 = vsel %vm5692, %v5714, %v5715
        %v5717 = vrot.slane %v5686, 5
        %v5718 = vrot.slane %v5717, 4
        %v5719 = vrot.slane %v5687, 5
        %v5720 = vsel %vm5692, %v5718, %v5719
        %v5721 = vrot.slane %v5688, 5
        %v5722 = vrot.slane %v5721, 4
        %v5723 = vrot.slane %v5689, 5
        %v5724 = vsel %vm5692, %v5722, %v5723
        %v5725 = vld [vmem:[#allocation4] sm:$0x1e]
        %v5726 = vld [vmem:[#allocation4 + $0x8] sm:$0x1e]
        %v5727 = vld [vmem:[#allocation4 + $0x10] sm:$0x1e]
        %v5728 = vld [vmem:[#allocation4 + $0x18] sm:$0x1e]
        %v5729 = vld [vmem:[#allocation4 + $0x20] sm:$0x1e]
        %v5730 = vld [vmem:[#allocation4 + $0x28] sm:$0x1e]
        %v5731 = vld [vmem:[#allocation4 + $0x30] sm:$0x1e]
        %v5732 = vld [vmem:[#allocation4 + $0x38] sm:$0x1e]
        %v5741 = vunpack.c.l.b16 %v5725
        %v5742 = vunpack.c.h.b16 %v5725
        %v5743 = vunpack.c.l.b16 %v5726
        %v5744 = vunpack.c.h.b16 %v5726
        %v5745 = vunpack.c.l.b16 %v5727
        %v5746 = vunpack.c.h.b16 %v5727
        %v5747 = vunpack.c.l.b16 %v5728
        %v5748 = vunpack.c.h.b16 %v5728
        %v5749 = vunpack.c.l.b16 %v5729
        %v5750 = vunpack.c.h.b16 %v5729
        %v5751 = vunpack.c.l.b16 %v5730
        %v5752 = vunpack.c.h.b16 %v5730
        %v5753 = vunpack.c.l.b16 %v5731
        %v5754 = vunpack.c.h.b16 %v5731
        %v5755 = vunpack.c.l.b16 %v5732
        %v5756 = vunpack.c.h.b16 %v5732
        %v5757 = vpack.c.b16 %v5741, %v5741
        %v5758 = vpack.c.b16 %v5742, %v5742
        %v5759 = vpack.c.b16 %v5743, %v5743
        %v5760 = vpack.c.b16 %v5744, %v5744
        %v5761 = vpack.c.b16 %v5745, %v5745
        %v5762 = vpack.c.b16 %v5746, %v5746
        %v5763 = vpack.c.b16 %v5747, %v5747
        %v5764 = vpack.c.b16 %v5748, %v5748
        %v5765 = vpack.c.b16 %v5749, %v5749
        %v5766 = vpack.c.b16 %v5750, %v5750
        %v5767 = vpack.c.b16 %v5751, %v5751
        %v5768 = vpack.c.b16 %v5752, %v5752
        %v5769 = vpack.c.b16 %v5753, %v5753
        %v5770 = vpack.c.b16 %v5754, %v5754
        %v5771 = vpack.c.b16 %v5755, %v5755
        %v5772 = vpack.c.b16 %v5756, %v5756
        %v5773 = vrot.slane %v5757, 5
        %v5774 = vrot.slane %v5773, 4
        %v5775 = vrot.slane %v5758, 5
        %v5776 = vsel %vm5692, %v5774, %v5775
        %v5777 = vrot.slane %v5759, 5
        %v5778 = vrot.slane %v5777, 4
        %v5779 = vrot.slane %v5760, 5
        %v5780 = vsel %vm5692, %v5778, %v5779
        %v5781 = vrot.slane %v5761, 5
        %v5782 = vrot.slane %v5781, 4
        %v5783 = vrot.slane %v5762, 5
        %v5784 = vsel %vm5692, %v5782, %v5783
        %v5785 = vrot.slane %v5763, 5
        %v5786 = vrot.slane %v5785, 4
        %v5787 = vrot.slane %v5764, 5
        %v5788 = vsel %vm5692, %v5786, %v5787
        %v5789 = vrot.slane %v5765, 5
        %v5790 = vrot.slane %v5789, 4
        %v5791 = vrot.slane %v5766, 5
        %v5792 = vsel %vm5692, %v5790, %v5791
        %v5793 = vrot.slane %v5767, 5
        %v5794 = vrot.slane %v5793, 4
        %v5795 = vrot.slane %v5768, 5
        %v5796 = vsel %vm5692, %v5794, %v5795
        %v5797 = vrot.slane %v5769, 5
        %v5798 = vrot.slane %v5797, 4
        %v5799 = vrot.slane %v5770, 5
        %v5800 = vsel %vm5692, %v5798, %v5799
        %v5801 = vrot.slane %v5771, 5
        %v5802 = vrot.slane %v5801, 4
        %v5803 = vrot.slane %v5772, 5
        %v5804 = vsel %vm5692, %v5802, %v5803
        %s5805 = scalar_lea.vmem %s4, 128
        %v5806 = vld [vmem:[%s5805] sm:$0xf]
        %v5807 = vld [vmem:[%s5805 + $0x4] sm:$0xf]
        %v5808 = vld [vmem:[%s5805 + $0x8] sm:$0xf]
        %v5809 = vld [vmem:[%s5805 + $0xc] sm:$0xf]
        %v5810 = vld [vmem:[%s5805 + $0x10] sm:$0xf]
        %v5811 = vld [vmem:[%s5805 + $0x14] sm:$0xf]
        %v5812 = vld [vmem:[%s5805 + $0x18] sm:$0xf]
        %v5813 = vld [vmem:[%s5805 + $0x1c] sm:$0xf]
        %v5814 = vld [vmem:[%s5805 + $0x20] sm:$0xf]
        %v5815 = vld [vmem:[%s5805 + $0x24] sm:$0xf]
        %v5816 = vld [vmem:[%s5805 + $0x28] sm:$0xf]
        %v5817 = vld [vmem:[%s5805 + $0x2c] sm:$0xf]
        %v5818 = vld [vmem:[%s5805 + $0x30] sm:$0xf]
        %v5819 = vld [vmem:[%s5805 + $0x34] sm:$0xf]
        %v5820 = vld [vmem:[%s5805 + $0x38] sm:$0xf]
        %v5821 = vld [vmem:[%s5805 + $0x3c] sm:$0xf]
        %s5822 = scalar_lea.vmem %s5, 128
        %v5823 = vld [vmem:[%s5822] sm:$0xf]
        %v5824 = vld [vmem:[%s5822 + $0x4] sm:$0xf]
        %v5825 = vld [vmem:[%s5822 + $0x8] sm:$0xf]
        %v5826 = vld [vmem:[%s5822 + $0xc] sm:$0xf]
        %v5827 = vld [vmem:[%s5822 + $0x10] sm:$0xf]
        %v5828 = vld [vmem:[%s5822 + $0x14] sm:$0xf]
        %v5829 = vld [vmem:[%s5822 + $0x18] sm:$0xf]
        %v5830 = vld [vmem:[%s5822 + $0x1c] sm:$0xf]
        %v5831 = vld [vmem:[%s5822 + $0x20] sm:$0xf]
        %v5832 = vld [vmem:[%s5822 + $0x24] sm:$0xf]
        %v5833 = vld [vmem:[%s5822 + $0x28] sm:$0xf]
        %v5834 = vld [vmem:[%s5822 + $0x2c] sm:$0xf]
        %v5835 = vld [vmem:[%s5822 + $0x30] sm:$0xf]
        %v5836 = vld [vmem:[%s5822 + $0x34] sm:$0xf]
        %v5837 = vld [vmem:[%s5822 + $0x38] sm:$0xf]
        %v5838 = vld [vmem:[%s5822 + $0x3c] sm:$0xf]
        %v5839 = vunpack.c.l.b16 %v5776
        %v5840 = vunpack.c.l.b16 %v5780
        %v5841 = vunpack.c.l.b16 %v5784
        %v5842 = vunpack.c.l.b16 %v5788
        %v5843 = vunpack.c.l.b16 %v5792
        %v5844 = vunpack.c.l.b16 %v5796
        %v5845 = vunpack.c.l.b16 %v5800
        %v5846 = vunpack.c.l.b16 %v5804
        %v5847 = vpack.c.b16 %v5840, %v5839
        %v5848 = vpack.c.b16 %v5842, %v5841
        %v5849 = vpack.c.b16 %v5844, %v5843
        %v5850 = vpack.c.b16 %v5846, %v5845
        %v5871 = vunpack.c.l.b16 %v5806
        %v5872 = vunpack.c.l.b16 %v5807
        %v5873 = vunpack.c.l.b16 %v5808
        %v5874 = vunpack.c.l.b16 %v5809
        %v5875 = vunpack.c.l.b16 %v5810
        %v5876 = vunpack.c.l.b16 %v5811
        %v5877 = vunpack.c.l.b16 %v5812
        %v5878 = vunpack.c.l.b16 %v5813
        %v5879 = vunpack.c.l.b16 %v5814
        %v5880 = vunpack.c.l.b16 %v5815
        %v5881 = vunpack.c.l.b16 %v5816
        %v5882 = vunpack.c.l.b16 %v5817
        %v5883 = vunpack.c.l.b16 %v5818
        %v5884 = vunpack.c.l.b16 %v5819
        %v5885 = vunpack.c.l.b16 %v5820
        %v5886 = vunpack.c.l.b16 %v5821
        %v5887 = vpack.c.b16 %v5872, %v5871
        %v5888 = vpack.c.b16 %v5874, %v5873
        %v5889 = vpack.c.b16 %v5876, %v5875
        %v5890 = vpack.c.b16 %v5878, %v5877
        %v5891 = vpack.c.b16 %v5880, %v5879
        %v5892 = vpack.c.b16 %v5882, %v5881
        %v5893 = vpack.c.b16 %v5884, %v5883
        %v5894 = vpack.c.b16 %v5886, %v5885
        %5903 = vmatprep.subr.bf16.mxu0 0
        %5904 = vmatpush1.bf16.msra.mxu0 %v5887
        %5905 = vmatprep.subr.bf16.mxu0 0
        %5906 = vmatpush1.bf16.msra.mxu0 %v5888
        %5907 = vmatprep.subr.bf16.mxu0 0
        %5908 = vmatpush1.bf16.msra.mxu0 %v5889
        %5909 = vmatprep.subr.bf16.mxu0 0
        %5910 = vmatpush1.bf16.msra.mxu0 %v5890
        %5911 = vmatprep.subr.bf16.mxu0 0
        %5912 = vmatpush1.bf16.msra.mxu0 %v5891
        %5913 = vmatprep.subr.bf16.mxu0 0
        %5914 = vmatpush1.bf16.msra.mxu0 %v5892
        %5915 = vmatprep.subr.bf16.mxu0 0
        %5916 = vmatpush1.bf16.msra.mxu0 %v5893
        %5917 = vmatprep.subr.bf16.mxu0 0
        %5918 = vmatpush1.bf16.msra.mxu0 %v5894
        %5919 = vmatprep.subr.bf16.mxu0 0
        %5920 = vmatpush1.bf16.msra.mxu0 0
        %5921 = vmatprep.subr.bf16.mxu0 0
        %5922 = vmatpush1.bf16.msra.mxu0 0
        %5923 = vmatprep.subr.bf16.mxu0 0
        %5924 = vmatpush1.bf16.msra.mxu0 0
        %5925 = vmatprep.subr.bf16.mxu0 0
        %5926 = vmatpush1.bf16.msra.mxu0 0
        %5927 = vmatprep.subr.bf16.mxu0 0
        %5928 = vmatpush1.bf16.msra.mxu0 0
        %5929 = vmatprep.subr.bf16.mxu0 0
        %5930 = vmatpush1.bf16.msra.mxu0 0
        %5931 = vmatprep.subr.bf16.mxu0 0
        %5932 = vmatpush1.bf16.msra.mxu0 0
        %5933 = vmatprep.subr.bf16.mxu0 0
        %5934 = vmatpush1.bf16.msra.mxu0 0
        %5935 = vmatprep.mubr.bf16.mxu0 0
        %5936 = vmatmul.mubr.bf16.gmra.mrb[0].mxu0 %v5847
        %v5937 = vpop.f32.mrb[0].mxu0
        %v5938 = vadd.f32 0.0, %v5937
        %v5939 = vpop.f32.mrb[0].mxu0
        %v5940 = vpop.f32.mrb[0].mxu0
        %v5941 = vadd.f32 0.0, %v5940
        %v5942 = vpop.f32.mrb[0].mxu0
        %5943 = vmatprep.mubr.bf16.mxu0 0
        %5944 = vmatmul.mubr.bf16.gmra.mrb[0].mxu0 %v5848
        %v5945 = vpop.f32.mrb[0].mxu0
        %v5946 = vadd.f32 0.0, %v5945
        %v5947 = vpop.f32.mrb[0].mxu0
        %v5948 = vpop.f32.mrb[0].mxu0
        %v5949 = vadd.f32 0.0, %v5948
        %v5950 = vpop.f32.mrb[0].mxu0
        %5951 = vmatprep.mubr.bf16.mxu0 0
        %5952 = vmatmul.mubr.bf16.gmra.mrb[0].mxu0 %v5849
        %v5953 = vpop.f32.mrb[0].mxu0
        %v5954 = vadd.f32 0.0, %v5953
        %v5955 = vpop.f32.mrb[0].mxu0
        %v5956 = vpop.f32.mrb[0].mxu0
        %v5957 = vadd.f32 0.0, %v5956
        %v5958 = vpop.f32.mrb[0].mxu0
        %5959 = vmatprep.mubr.bf16.mxu0 0
        %5960 = vmatmul.mubr.bf16.gmra.mrb[0].mxu0 %v5850
        %v5961 = vpop.f32.mrb[0].mxu0
        %v5962 = vadd.f32 0.0, %v5961
        %v5963 = vpop.f32.mrb[0].mxu0
        %v5964 = vpop.f32.mrb[0].mxu0
        %v5965 = vadd.f32 0.0, %v5964
        %v5966 = vpop.f32.mrb[0].mxu0
        %5967 = vdwg.mxu0
        %v5968 = vunpack.c.l.b16 %v5696
        %v5969 = vunpack.c.l.b16 %v5700
        %v5970 = vunpack.c.l.b16 %v5704
        %v5971 = vunpack.c.l.b16 %v5708
        %v5972 = vunpack.c.l.b16 %v5712
        %v5973 = vunpack.c.l.b16 %v5716
        %v5974 = vunpack.c.l.b16 %v5720
        %v5975 = vunpack.c.l.b16 %v5724
        %v5976 = vpack.c.b16 %v5969, %v5968
        %v5977 = vpack.c.b16 %v5971, %v5970
        %v5978 = vpack.c.b16 %v5973, %v5972
        %v5979 = vpack.c.b16 %v5975, %v5974
        %5984 = vmatprep.subr.bf16.mxu0 0
        %5985 = vmatpush1.bf16.msra.mxu0 %v5887
        %5986 = vmatprep.subr.bf16.mxu0 0
        %5987 = vmatpush1.bf16.msra.mxu0 %v5888
        %5988 = vmatprep.subr.bf16.mxu0 0
        %5989 = vmatpush1.bf16.msra.mxu0 %v5889
        %5990 = vmatprep.subr.bf16.mxu0 0
        %5991 = vmatpush1.bf16.msra.mxu0 %v5890
        %5992 = vmatprep.subr.bf16.mxu0 0
        %5993 = vmatpush1.bf16.msra.mxu0 %v5891
        %5994 = vmatprep.subr.bf16.mxu0 0
        %5995 = vmatpush1.bf16.msra.mxu0 %v5892
        %5996 = vmatprep.subr.bf16.mxu0 0
        %5997 = vmatpush1.bf16.msra.mxu0 %v5893
        %5998 = vmatprep.subr.bf16.mxu0 0
        %5999 = vmatpush1.bf16.msra.mxu0 %v5894
        %6000 = vmatprep.subr.bf16.mxu0 0
        %6001 = vmatpush1.bf16.msra.mxu0 0
        %6002 = vmatprep.subr.bf16.mxu0 0
        %6003 = vmatpush1.bf16.msra.mxu0 0
        %6004 = vmatprep.subr.bf16.mxu0 0
        %6005 = vmatpush1.bf16.msra.mxu0 0
        %6006 = vmatprep.subr.bf16.mxu0 0
        %6007 = vmatpush1.bf16.msra.mxu0 0
        %6008 = vmatprep.subr.bf16.mxu0 0
        %6009 = vmatpush1.bf16.msra.mxu0 0
        %6010 = vmatprep.subr.bf16.mxu0 0
        %6011 = vmatpush1.bf16.msra.mxu0 0
        %6012 = vmatprep.subr.bf16.mxu0 0
        %6013 = vmatpush1.bf16.msra.mxu0 0
        %6014 = vmatprep.subr.bf16.mxu0 0
        %6015 = vmatpush1.bf16.msra.mxu0 0
        %6016 = vmatprep.mubr.bf16.mxu0 0
        %6017 = vmatmul.mubr.bf16.gmra.mrb[0].mxu0 %v5976
        %v6018 = vpop.f32.mrb[0].mxu0
        %v6019 = vadd.f32 %v5938, %v6018
        %v6020 = vpop.f32.mrb[0].mxu0
        %v6021 = vpop.f32.mrb[0].mxu0
        %v6022 = vadd.f32 %v5941, %v6021
        %v6023 = vpop.f32.mrb[0].mxu0
        %6024 = vmatprep.mubr.bf16.mxu0 0
        %6025 = vmatmul.mubr.bf16.gmra.mrb[0].mxu0 %v5977
        %v6026 = vpop.f32.mrb[0].mxu0
        %v6027 = vadd.f32 %v5946, %v6026
        %v6028 = vpop.f32.mrb[0].mxu0
        %v6029 = vpop.f32.mrb[0].mxu0
        %v6030 = vadd.f32 %v5949, %v6029
        %v6031 = vpop.f32.mrb[0].mxu0
        %6032 = vmatprep.mubr.bf16.mxu0 0
        %6033 = vmatmul.mubr.bf16.gmra.mrb[0].mxu0 %v5978
        %v6034 = vpop.f32.mrb[0].mxu0
        %v6035 = vadd.f32 %v5954, %v6034
        %v6036 = vpop.f32.mrb[0].mxu0
        %v6037 = vpop.f32.mrb[0].mxu0
        %v6038 = vadd.f32 %v5957, %v6037
        %v6039 = vpop.f32.mrb[0].mxu0
        %6040 = vmatprep.mubr.bf16.mxu0 0
        %6041 = vmatmul.mubr.bf16.gmra.mrb[0].mxu0 %v5979
        %v6042 = vpop.f32.mrb[0].mxu0
        %v6043 = vadd.f32 %v5962, %v6042
        %v6044 = vpop.f32.mrb[0].mxu0
        %v6045 = vpop.f32.mrb[0].mxu0
        %v6046 = vadd.f32 %v5965, %v6045
        %v6047 = vpop.f32.mrb[0].mxu0
        %6048 = vdwg.mxu0
        %v6065 = vunpack.c.l.b16 %v5823
        %v6066 = vunpack.c.l.b16 %v5824
        %v6067 = vunpack.c.l.b16 %v5825
        %v6068 = vunpack.c.l.b16 %v5826
        %v6069 = vunpack.c.l.b16 %v5827
        %v6070 = vunpack.c.l.b16 %v5828
        %v6071 = vunpack.c.l.b16 %v5829
        %v6072 = vunpack.c.l.b16 %v5830
        %v6073 = vunpack.c.l.b16 %v5831
        %v6074 = vunpack.c.l.b16 %v5832
        %v6075 = vunpack.c.l.b16 %v5833
        %v6076 = vunpack.c.l.b16 %v5834
        %v6077 = vunpack.c.l.b16 %v5835
        %v6078 = vunpack.c.l.b16 %v5836
        %v6079 = vunpack.c.l.b16 %v5837
        %v6080 = vunpack.c.l.b16 %v5838
        %v6081 = vpack.c.b16 %v6066, %v6065
        %v6082 = vpack.c.b16 %v6068, %v6067
        %v6083 = vpack.c.b16 %v6070, %v6069
        %v6084 = vpack.c.b16 %v6072, %v6071
        %v6085 = vpack.c.b16 %v6074, %v6073
        %v6086 = vpack.c.b16 %v6076, %v6075
        %v6087 = vpack.c.b16 %v6078, %v6077
        %v6088 = vpack.c.b16 %v6080, %v6079
        %6097 = vmatprep.subr.bf16.mxu0 0
        %6098 = vmatpush1.bf16.msra.mxu0 %v6081
        %6099 = vmatprep.subr.bf16.mxu0 0
        %6100 = vmatpush1.bf16.msra.mxu0 %v6082
        %6101 = vmatprep.subr.bf16.mxu0 0
        %6102 = vmatpush1.bf16.msra.mxu0 %v6083
        %6103 = vmatprep.subr.bf16.mxu0 0
        %6104 = vmatpush1.bf16.msra.mxu0 %v6084
        %6105 = vmatprep.subr.bf16.mxu0 0
        %6106 = vmatpush1.bf16.msra.mxu0 %v6085
        %6107 = vmatprep.subr.bf16.mxu0 0
        %6108 = vmatpush1.bf16.msra.mxu0 %v6086
        %6109 = vmatprep.subr.bf16.mxu0 0
        %6110 = vmatpush1.bf16.msra.mxu0 %v6087
        %6111 = vmatprep.subr.bf16.mxu0 0
        %6112 = vmatpush1.bf16.msra.mxu0 %v6088
        %6113 = vmatprep.subr.bf16.mxu0 0
        %6114 = vmatpush1.bf16.msra.mxu0 0
        %6115 = vmatprep.subr.bf16.mxu0 0
        %6116 = vmatpush1.bf16.msra.mxu0 0
        %6117 = vmatprep.subr.bf16.mxu0 0
        %6118 = vmatpush1.bf16.msra.mxu0 0
        %6119 = vmatprep.subr.bf16.mxu0 0
        %6120 = vmatpush1.bf16.msra.mxu0 0
        %6121 = vmatprep.subr.bf16.mxu0 0
        %6122 = vmatpush1.bf16.msra.mxu0 0
        %6123 = vmatprep.subr.bf16.mxu0 0
        %6124 = vmatpush1.bf16.msra.mxu0 0
        %6125 = vmatprep.subr.bf16.mxu0 0
        %6126 = vmatpush1.bf16.msra.mxu0 0
        %6127 = vmatprep.subr.bf16.mxu0 0
        %6128 = vmatpush1.bf16.msra.mxu0 0
        %6129 = vmatprep.mubr.bf16.mxu0 0
        %6130 = vmatmul.mubr.bf16.gmra.mrb[0].mxu0 %v5976
        %v6131 = vpop.f32.mrb[0].mxu0
        %v6132 = vadd.f32 0.0, %v6131
        %v6133 = vpop.f32.mrb[0].mxu0
        %v6134 = vpop.f32.mrb[0].mxu0
        %v6135 = vadd.f32 0.0, %v6134
        %v6136 = vpop.f32.mrb[0].mxu0
        %6137 = vmatprep.mubr.bf16.mxu0 0
        %6138 = vmatmul.mubr.bf16.gmra.mrb[0].mxu0 %v5977
        %v6139 = vpop.f32.mrb[0].mxu0
        %v6140 = vadd.f32 0.0, %v6139
        %v6141 = vpop.f32.mrb[0].mxu0
        %v6142 = vpop.f32.mrb[0].mxu0
        %v6143 = vadd.f32 0.0, %v6142
        %v6144 = vpop.f32.mrb[0].mxu0
        %6145 = vmatprep.mubr.bf16.mxu0 0
        %6146 = vmatmul.mubr.bf16.gmra.mrb[0].mxu0 %v5978
        %v6147 = vpop.f32.mrb[0].mxu0
        %v6148 = vadd.f32 0.0, %v6147
        %v6149 = vpop.f32.mrb[0].mxu0
        %v6150 = vpop.f32.mrb[0].mxu0
        %v6151 = vadd.f32 0.0, %v6150
        %v6152 = vpop.f32.mrb[0].mxu0
        %6153 = vmatprep.mubr.bf16.mxu0 0
        %6154 = vmatmul.mubr.bf16.gmra.mrb[0].mxu0 %v5979
        %v6155 = vpop.f32.mrb[0].mxu0
        %v6156 = vadd.f32 0.0, %v6155
        %v6157 = vpop.f32.mrb[0].mxu0
        %v6158 = vpop.f32.mrb[0].mxu0
        %v6159 = vadd.f32 0.0, %v6158
        %v6160 = vpop.f32.mrb[0].mxu0
        %6161 = vdwg.mxu0
        %v6162 = vadd.f32 %v6019, %v6132
        %v6163 = vadd.f32 %v6022, %v6135
        %v6164 = vadd.f32 %v6027, %v6140
        %v6165 = vadd.f32 %v6030, %v6143
        %v6166 = vadd.f32 %v6035, %v6148
        %v6167 = vadd.f32 %v6038, %v6151
        %v6168 = vadd.f32 %v6043, %v6156
        %v6169 = vadd.f32 %v6046, %v6159
        %v6170 = vadd.f32 %v5634, %v6162
        %v6171 = vadd.f32 %v5635, %v6163
        %v6172 = vadd.f32 %v5636, %v6164
        %v6173 = vadd.f32 %v5637, %v6165
        %v6174 = vadd.f32 %v5638, %v6166
        %v6175 = vadd.f32 %v5639, %v6167
        %v6176 = vadd.f32 %v5640, %v6168
        %v6177 = vadd.f32 %v5641, %v6169
        %v6178 = vld [vmem:[%s4406] sm:$0xf]
        %v6179 = vld [vmem:[%s4406 + $0x8] sm:$0xf]
        %v6180 = vld [vmem:[%s4406 + $0x10] sm:$0xf]
        %v6181 = vld [vmem:[%s4406 + $0x18] sm:$0xf]
        %v6182 = vld [vmem:[%s4406 + $0x20] sm:$0xf]
        %v6183 = vld [vmem:[%s4406 + $0x28] sm:$0xf]
        %v6184 = vld [vmem:[%s4406 + $0x30] sm:$0xf]
        %v6185 = vld [vmem:[%s4406 + $0x38] sm:$0xf]
        %v6186 = vld [vmem:[%s4518] sm:$0xf]
        %v6187 = vld [vmem:[%s4518 + $0x8] sm:$0xf]
        %v6188 = vld [vmem:[%s4518 + $0x10] sm:$0xf]
        %v6189 = vld [vmem:[%s4518 + $0x18] sm:$0xf]
        %v6190 = vld [vmem:[%s4518 + $0x20] sm:$0xf]
        %v6191 = vld [vmem:[%s4518 + $0x28] sm:$0xf]
        %v6192 = vld [vmem:[%s4518 + $0x30] sm:$0xf]
        %v6193 = vld [vmem:[%s4518 + $0x38] sm:$0xf]
        %s6194 = scalar_lea.vmem %s4, 192
        %v6195 = vld [vmem:[%s6194] sm:$0xf]
        %v6196 = vld [vmem:[%s6194 + $0x4] sm:$0xf]
        %v6197 = vld [vmem:[%s6194 + $0x8] sm:$0xf]
        %v6198 = vld [vmem:[%s6194 + $0xc] sm:$0xf]
        %v6199 = vld [vmem:[%s6194 + $0x10] sm:$0xf]
        %v6200 = vld [vmem:[%s6194 + $0x14] sm:$0xf]
        %v6201 = vld [vmem:[%s6194 + $0x18] sm:$0xf]
        %v6202 = vld [vmem:[%s6194 + $0x1c] sm:$0xf]
        %v6203 = vld [vmem:[%s6194 + $0x20] sm:$0xf]
        %v6204 = vld [vmem:[%s6194 + $0x24] sm:$0xf]
        %v6205 = vld [vmem:[%s6194 + $0x28] sm:$0xf]
        %v6206 = vld [vmem:[%s6194 + $0x2c] sm:$0xf]
        %v6207 = vld [vmem:[%s6194 + $0x30] sm:$0xf]
        %v6208 = vld [vmem:[%s6194 + $0x34] sm:$0xf]
        %v6209 = vld [vmem:[%s6194 + $0x38] sm:$0xf]
        %v6210 = vld [vmem:[%s6194 + $0x3c] sm:$0xf]
        %s6211 = scalar_lea.vmem %s5, 192
        %v6212 = vld [vmem:[%s6211] sm:$0xf]
        %v6213 = vld [vmem:[%s6211 + $0x4] sm:$0xf]
        %v6214 = vld [vmem:[%s6211 + $0x8] sm:$0xf]
        %v6215 = vld [vmem:[%s6211 + $0xc] sm:$0xf]
        %v6216 = vld [vmem:[%s6211 + $0x10] sm:$0xf]
        %v6217 = vld [vmem:[%s6211 + $0x14] sm:$0xf]
        %v6218 = vld [vmem:[%s6211 + $0x18] sm:$0xf]
        %v6219 = vld [vmem:[%s6211 + $0x1c] sm:$0xf]
        %v6220 = vld [vmem:[%s6211 + $0x20] sm:$0xf]
        %v6221 = vld [vmem:[%s6211 + $0x24] sm:$0xf]
        %v6222 = vld [vmem:[%s6211 + $0x28] sm:$0xf]
        %v6223 = vld [vmem:[%s6211 + $0x2c] sm:$0xf]
        %v6224 = vld [vmem:[%s6211 + $0x30] sm:$0xf]
        %v6225 = vld [vmem:[%s6211 + $0x34] sm:$0xf]
        %v6226 = vld [vmem:[%s6211 + $0x38] sm:$0xf]
        %v6227 = vld [vmem:[%s6211 + $0x3c] sm:$0xf]
        %v6236 = vunpack.c.l.b16 %v6186
        %v6237 = vunpack.c.l.b16 %v6187
        %v6238 = vunpack.c.l.b16 %v6188
        %v6239 = vunpack.c.l.b16 %v6189
        %v6240 = vunpack.c.l.b16 %v6190
        %v6241 = vunpack.c.l.b16 %v6191
        %v6242 = vunpack.c.l.b16 %v6192
        %v6243 = vunpack.c.l.b16 %v6193
        %v6244 = vpack.c.b16 %v6237, %v6236
        %v6245 = vpack.c.b16 %v6239, %v6238
        %v6246 = vpack.c.b16 %v6241, %v6240
        %v6247 = vpack.c.b16 %v6243, %v6242
        %v6268 = vunpack.c.l.b16 %v6195
        %v6269 = vunpack.c.l.b16 %v6196
        %v6270 = vunpack.c.l.b16 %v6197
        %v6271 = vunpack.c.l.b16 %v6198
        %v6272 = vunpack.c.l.b16 %v6199
        %v6273 = vunpack.c.l.b16 %v6200
        %v6274 = vunpack.c.l.b16 %v6201
        %v6275 = vunpack.c.l.b16 %v6202
        %v6276 = vunpack.c.l.b16 %v6203
        %v6277 = vunpack.c.l.b16 %v6204
        %v6278 = vunpack.c.l.b16 %v6205
        %v6279 = vunpack.c.l.b16 %v6206
        %v6280 = vunpack.c.l.b16 %v6207
        %v6281 = vunpack.c.l.b16 %v6208
        %v6282 = vunpack.c.l.b16 %v6209
        %v6283 = vunpack.c.l.b16 %v6210
        %v6284 = vpack.c.b16 %v6269, %v6268
        %v6285 = vpack.c.b16 %v6271, %v6270
        %v6286 = vpack.c.b16 %v6273, %v6272
        %v6287 = vpack.c.b16 %v6275, %v6274
        %v6288 = vpack.c.b16 %v6277, %v6276
        %v6289 = vpack.c.b16 %v6279, %v6278
        %v6290 = vpack.c.b16 %v6281, %v6280
        %v6291 = vpack.c.b16 %v6283, %v6282
        %6300 = vmatprep.subr.bf16.mxu0 0
        %6301 = vmatpush1.bf16.msra.mxu0 %v6284
        %6302 = vmatprep.subr.bf16.mxu0 0
        %6303 = vmatpush1.bf16.msra.mxu0 %v6285
        %6304 = vmatprep.subr.bf16.mxu0 0
        %6305 = vmatpush1.bf16.msra.mxu0 %v6286
        %6306 = vmatprep.subr.bf16.mxu0 0
        %6307 = vmatpush1.bf16.msra.mxu0 %v6287
        %6308 = vmatprep.subr.bf16.mxu0 0
        %6309 = vmatpush1.bf16.msra.mxu0 %v6288
        %6310 = vmatprep.subr.bf16.mxu0 0
        %6311 = vmatpush1.bf16.msra.mxu0 %v6289
        %6312 = vmatprep.subr.bf16.mxu0 0
        %6313 = vmatpush1.bf16.msra.mxu0 %v6290
        %6314 = vmatprep.subr.bf16.mxu0 0
        %6315 = vmatpush1.bf16.msra.mxu0 %v6291
        %6316 = vmatprep.subr.bf16.mxu0 0
        %6317 = vmatpush1.bf16.msra.mxu0 0
        %6318 = vmatprep.subr.bf16.mxu0 0
        %6319 = vmatpush1.bf16.msra.mxu0 0
        %6320 = vmatprep.subr.bf16.mxu0 0
        %6321 = vmatpush1.bf16.msra.mxu0 0
        %6322 = vmatprep.subr.bf16.mxu0 0
        %6323 = vmatpush1.bf16.msra.mxu0 0
        %6324 = vmatprep.subr.bf16.mxu0 0
        %6325 = vmatpush1.bf16.msra.mxu0 0
        %6326 = vmatprep.subr.bf16.mxu0 0
        %6327 = vmatpush1.bf16.msra.mxu0 0
        %6328 = vmatprep.subr.bf16.mxu0 0
        %6329 = vmatpush1.bf16.msra.mxu0 0
        %6330 = vmatprep.subr.bf16.mxu0 0
        %6331 = vmatpush1.bf16.msra.mxu0 0
        %6332 = vmatprep.mubr.bf16.mxu0 0
        %6333 = vmatmul.mubr.bf16.gmra.mrb[0].mxu0 %v6244
        %v6334 = vpop.f32.mrb[0].mxu0
        %v6335 = vadd.f32 0.0, %v6334
        %v6336 = vpop.f32.mrb[0].mxu0
        %v6337 = vpop.f32.mrb[0].mxu0
        %v6338 = vadd.f32 0.0, %v6337
        %v6339 = vpop.f32.mrb[0].mxu0
        %6340 = vmatprep.mubr.bf16.mxu0 0
        %6341 = vmatmul.mubr.bf16.gmra.mrb[0].mxu0 %v6245
        %v6342 = vpop.f32.mrb[0].mxu0
        %v6343 = vadd.f32 0.0, %v6342
        %v6344 = vpop.f32.mrb[0].mxu0
        %v6345 = vpop.f32.mrb[0].mxu0
        %v6346 = vadd.f32 0.0, %v6345
        %v6347 = vpop.f32.mrb[0].mxu0
        %6348 = vmatprep.mubr.bf16.mxu0 0
        %6349 = vmatmul.mubr.bf16.gmra.mrb[0].mxu0 %v6246
        %v6350 = vpop.f32.mrb[0].mxu0
        %v6351 = vadd.f32 0.0, %v6350
        %v6352 = vpop.f32.mrb[0].mxu0
        %v6353 = vpop.f32.mrb[0].mxu0
        %v6354 = vadd.f32 0.0, %v6353
        %v6355 = vpop.f32.mrb[0].mxu0
        %6356 = vmatprep.mubr.bf16.mxu0 0
        %6357 = vmatmul.mubr.bf16.gmra.mrb[0].mxu0 %v6247
        %v6358 = vpop.f32.mrb[0].mxu0
        %v6359 = vadd.f32 0.0, %v6358
        %v6360 = vpop.f32.mrb[0].mxu0
        %v6361 = vpop.f32.mrb[0].mxu0
        %v6362 = vadd.f32 0.0, %v6361
        %v6363 = vpop.f32.mrb[0].mxu0
        %6364 = vdwg.mxu0
        %v6373 = vunpack.c.l.b16 %v6178
        %v6374 = vunpack.c.l.b16 %v6179
        %v6375 = vunpack.c.l.b16 %v6180
        %v6376 = vunpack.c.l.b16 %v6181
        %v6377 = vunpack.c.l.b16 %v6182
        %v6378 = vunpack.c.l.b16 %v6183
        %v6379 = vunpack.c.l.b16 %v6184
        %v6380 = vunpack.c.l.b16 %v6185
        %v6381 = vpack.c.b16 %v6374, %v6373
        %v6382 = vpack.c.b16 %v6376, %v6375
        %v6383 = vpack.c.b16 %v6378, %v6377
        %v6384 = vpack.c.b16 %v6380, %v6379
        %6389 = vmatprep.subr.bf16.mxu0 0
        %6390 = vmatpush1.bf16.msra.mxu0 %v6284
        %6391 = vmatprep.subr.bf16.mxu0 0
        %6392 = vmatpush1.bf16.msra.mxu0 %v6285
        %6393 = vmatprep.subr.bf16.mxu0 0
        %6394 = vmatpush1.bf16.msra.mxu0 %v6286
        %6395 = vmatprep.subr.bf16.mxu0 0
        %6396 = vmatpush1.bf16.msra.mxu0 %v6287
        %6397 = vmatprep.subr.bf16.mxu0 0
        %6398 = vmatpush1.bf16.msra.mxu0 %v6288
        %6399 = vmatprep.subr.bf16.mxu0 0
        %6400 = vmatpush1.bf16.msra.mxu0 %v6289
        %6401 = vmatprep.subr.bf16.mxu0 0
        %6402 = vmatpush1.bf16.msra.mxu0 %v6290
        %6403 = vmatprep.subr.bf16.mxu0 0
        %6404 = vmatpush1.bf16.msra.mxu0 %v6291
        %6405 = vmatprep.subr.bf16.mxu0 0
        %6406 = vmatpush1.bf16.msra.mxu0 0
        %6407 = vmatprep.subr.bf16.mxu0 0
        %6408 = vmatpush1.bf16.msra.mxu0 0
        %6409 = vmatprep.subr.bf16.mxu0 0
        %6410 = vmatpush1.bf16.msra.mxu0 0
        %6411 = vmatprep.subr.bf16.mxu0 0
        %6412 = vmatpush1.bf16.msra.mxu0 0
        %6413 = vmatprep.subr.bf16.mxu0 0
        %6414 = vmatpush1.bf16.msra.mxu0 0
        %6415 = vmatprep.subr.bf16.mxu0 0
        %6416 = vmatpush1.bf16.msra.mxu0 0
        %6417 = vmatprep.subr.bf16.mxu0 0
        %6418 = vmatpush1.bf16.msra.mxu0 0
        %6419 = vmatprep.subr.bf16.mxu0 0
        %6420 = vmatpush1.bf16.msra.mxu0 0
        %6421 = vmatprep.mubr.bf16.mxu0 0
        %6422 = vmatmul.mubr.bf16.gmra.mrb[0].mxu0 %v6381
        %v6423 = vpop.f32.mrb[0].mxu0
        %v6424 = vadd.f32 %v6335, %v6423
        %v6425 = vpop.f32.mrb[0].mxu0
        %v6426 = vpop.f32.mrb[0].mxu0
        %v6427 = vadd.f32 %v6338, %v6426
        %v6428 = vpop.f32.mrb[0].mxu0
        %6429 = vmatprep.mubr.bf16.mxu0 0
        %6430 = vmatmul.mubr.bf16.gmra.mrb[0].mxu0 %v6382
        %v6431 = vpop.f32.mrb[0].mxu0
        %v6432 = vadd.f32 %v6343, %v6431
        %v6433 = vpop.f32.mrb[0].mxu0
        %v6434 = vpop.f32.mrb[0].mxu0
        %v6435 = vadd.f32 %v6346, %v6434
        %v6436 = vpop.f32.mrb[0].mxu0
        %6437 = vmatprep.mubr.bf16.mxu0 0
        %6438 = vmatmul.mubr.bf16.gmra.mrb[0].mxu0 %v6383
        %v6439 = vpop.f32.mrb[0].mxu0
        %v6440 = vadd.f32 %v6351, %v6439
        %v6441 = vpop.f32.mrb[0].mxu0
        %v6442 = vpop.f32.mrb[0].mxu0
        %v6443 = vadd.f32 %v6354, %v6442
        %v6444 = vpop.f32.mrb[0].mxu0
        %6445 = vmatprep.mubr.bf16.mxu0 0
        %6446 = vmatmul.mubr.bf16.gmra.mrb[0].mxu0 %v6384
        %v6447 = vpop.f32.mrb[0].mxu0
        %v6448 = vadd.f32 %v6359, %v6447
        %v6449 = vpop.f32.mrb[0].mxu0
        %v6450 = vpop.f32.mrb[0].mxu0
        %v6451 = vadd.f32 %v6362, %v6450
        %v6452 = vpop.f32.mrb[0].mxu0
        %6453 = vdwg.mxu0
        %v6470 = vunpack.c.l.b16 %v6212
        %v6471 = vunpack.c.l.b16 %v6213
        %v6472 = vunpack.c.l.b16 %v6214
        %v6473 = vunpack.c.l.b16 %v6215
        %v6474 = vunpack.c.l.b16 %v6216
        %v6475 = vunpack.c.l.b16 %v6217
        %v6476 = vunpack.c.l.b16 %v6218
        %v6477 = vunpack.c.l.b16 %v6219
        %v6478 = vunpack.c.l.b16 %v6220
        %v6479 = vunpack.c.l.b16 %v6221
        %v6480 = vunpack.c.l.b16 %v6222
        %v6481 = vunpack.c.l.b16 %v6223
        %v6482 = vunpack.c.l.b16 %v6224
        %v6483 = vunpack.c.l.b16 %v6225
        %v6484 = vunpack.c.l.b16 %v6226
        %v6485 = vunpack.c.l.b16 %v6227
        %v6486 = vpack.c.b16 %v6471, %v6470
        %v6487 = vpack.c.b16 %v6473, %v6472
        %v6488 = vpack.c.b16 %v6475, %v6474
        %v6489 = vpack.c.b16 %v6477, %v6476
        %v6490 = vpack.c.b16 %v6479, %v6478
        %v6491 = vpack.c.b16 %v6481, %v6480
        %v6492 = vpack.c.b16 %v6483, %v6482
        %v6493 = vpack.c.b16 %v6485, %v6484
        %6502 = vmatprep.subr.bf16.mxu0 0
        %6503 = vmatpush1.bf16.msra.mxu0 %v6486
        %6504 = vmatprep.subr.bf16.mxu0 0
        %6505 = vmatpush1.bf16.msra.mxu0 %v6487
        %6506 = vmatprep.subr.bf16.mxu0 0
        %6507 = vmatpush1.bf16.msra.mxu0 %v6488
        %6508 = vmatprep.subr.bf16.mxu0 0
        %6509 = vmatpush1.bf16.msra.mxu0 %v6489
        %6510 = vmatprep.subr.bf16.mxu0 0
        %6511 = vmatpush1.bf16.msra.mxu0 %v6490
        %6512 = vmatprep.subr.bf16.mxu0 0
        %6513 = vmatpush1.bf16.msra.mxu0 %v6491
        %6514 = vmatprep.subr.bf16.mxu0 0
        %6515 = vmatpush1.bf16.msra.mxu0 %v6492
        %6516 = vmatprep.subr.bf16.mxu0 0
        %6517 = vmatpush1.bf16.msra.mxu0 %v6493
        %6518 = vmatprep.subr.bf16.mxu0 0
        %6519 = vmatpush1.bf16.msra.mxu0 0
        %6520 = vmatprep.subr.bf16.mxu0 0
        %6521 = vmatpush1.bf16.msra.mxu0 0
        %6522 = vmatprep.subr.bf16.mxu0 0
        %6523 = vmatpush1.bf16.msra.mxu0 0
        %6524 = vmatprep.subr.bf16.mxu0 0
        %6525 = vmatpush1.bf16.msra.mxu0 0
        %6526 = vmatprep.subr.bf16.mxu0 0
        %6527 = vmatpush1.bf16.msra.mxu0 0
        %6528 = vmatprep.subr.bf16.mxu0 0
        %6529 = vmatpush1.bf16.msra.mxu0 0
        %6530 = vmatprep.subr.bf16.mxu0 0
        %6531 = vmatpush1.bf16.msra.mxu0 0
        %6532 = vmatprep.subr.bf16.mxu0 0
        %6533 = vmatpush1.bf16.msra.mxu0 0
        %6534 = vmatprep.mubr.bf16.mxu0 0
        %6535 = vmatmul.mubr.bf16.gmra.mrb[0].mxu0 %v6381
        %v6536 = vpop.f32.mrb[0].mxu0
        %v6537 = vadd.f32 0.0, %v6536
        %v6538 = vpop.f32.mrb[0].mxu0
        %v6539 = vpop.f32.mrb[0].mxu0
        %v6540 = vadd.f32 0.0, %v6539
        %v6541 = vpop.f32.mrb[0].mxu0
        %6542 = vmatprep.mubr.bf16.mxu0 0
        %6543 = vmatmul.mubr.bf16.gmra.mrb[0].mxu0 %v6382
        %v6544 = vpop.f32.mrb[0].mxu0
        %v6545 = vadd.f32 0.0, %v6544
        %v6546 = vpop.f32.mrb[0].mxu0
        %v6547 = vpop.f32.mrb[0].mxu0
        %v6548 = vadd.f32 0.0, %v6547
        %v6549 = vpop.f32.mrb[0].mxu0
        %6550 = vmatprep.mubr.bf16.mxu0 0
        %6551 = vmatmul.mubr.bf16.gmra.mrb[0].mxu0 %v6383
        %v6552 = vpop.f32.mrb[0].mxu0
        %v6553 = vadd.f32 0.0, %v6552
        %v6554 = vpop.f32.mrb[0].mxu0
        %v6555 = vpop.f32.mrb[0].mxu0
        %v6556 = vadd.f32 0.0, %v6555
        %v6557 = vpop.f32.mrb[0].mxu0
        %6558 = vmatprep.mubr.bf16.mxu0 0
        %6559 = vmatmul.mubr.bf16.gmra.mrb[0].mxu0 %v6384
        %v6560 = vpop.f32.mrb[0].mxu0
        %v6561 = vadd.f32 0.0, %v6560
        %v6562 = vpop.f32.mrb[0].mxu0
        %v6563 = vpop.f32.mrb[0].mxu0
        %v6564 = vadd.f32 0.0, %v6563
        %v6565 = vpop.f32.mrb[0].mxu0
        %6566 = vdwg.mxu0
        %v6567 = vadd.f32 %v6424, %v6537
        %v6568 = vadd.f32 %v6427, %v6540
        %v6569 = vadd.f32 %v6432, %v6545
        %v6570 = vadd.f32 %v6435, %v6548
        %v6571 = vadd.f32 %v6440, %v6553
        %v6572 = vadd.f32 %v6443, %v6556
        %v6573 = vadd.f32 %v6448, %v6561
        %v6574 = vadd.f32 %v6451, %v6564
        %v6575 = vadd.f32 %v6170, %v6567
        %v6576 = vadd.f32 %v6171, %v6568
        %v6577 = vadd.f32 %v6172, %v6569
        %v6578 = vadd.f32 %v6173, %v6570
        %v6579 = vadd.f32 %v6174, %v6571
        %v6580 = vadd.f32 %v6175, %v6572
        %v6581 = vadd.f32 %v6176, %v6573
        %v6582 = vadd.f32 %v6177, %v6574
        %v6583 = vld [vmem:[%s4406] sm:$0x1f]
        %v6584 = vld [vmem:[%s4406 + $0x8] sm:$0x1f]
        %v6585 = vld [vmem:[%s4406 + $0x10] sm:$0x1f]
        %v6586 = vld [vmem:[%s4406 + $0x18] sm:$0x1f]
        %v6587 = vld [vmem:[%s4406 + $0x20] sm:$0x1f]
        %v6588 = vld [vmem:[%s4406 + $0x28] sm:$0x1f]
        %v6589 = vld [vmem:[%s4406 + $0x30] sm:$0x1f]
        %v6590 = vld [vmem:[%s4406 + $0x38] sm:$0x1f]
        %v6599 = vunpack.c.l.b16 %v6583
        %v6600 = vunpack.c.h.b16 %v6583
        %v6601 = vunpack.c.l.b16 %v6584
        %v6602 = vunpack.c.h.b16 %v6584
        %v6603 = vunpack.c.l.b16 %v6585
        %v6604 = vunpack.c.h.b16 %v6585
        %v6605 = vunpack.c.l.b16 %v6586
        %v6606 = vunpack.c.h.b16 %v6586
        %v6607 = vunpack.c.l.b16 %v6587
        %v6608 = vunpack.c.h.b16 %v6587
        %v6609 = vunpack.c.l.b16 %v6588
        %v6610 = vunpack.c.h.b16 %v6588
        %v6611 = vunpack.c.l.b16 %v6589
        %v6612 = vunpack.c.h.b16 %v6589
        %v6613 = vunpack.c.l.b16 %v6590
        %v6614 = vunpack.c.h.b16 %v6590
        %v6615 = vpack.c.b16 %v6599, %v6599
        %v6616 = vpack.c.b16 %v6600, %v6600
        %v6617 = vpack.c.b16 %v6601, %v6601
        %v6618 = vpack.c.b16 %v6602, %v6602
        %v6619 = vpack.c.b16 %v6603, %v6603
        %v6620 = vpack.c.b16 %v6604, %v6604
        %v6621 = vpack.c.b16 %v6605, %v6605
        %v6622 = vpack.c.b16 %v6606, %v6606
        %v6623 = vpack.c.b16 %v6607, %v6607
        %v6624 = vpack.c.b16 %v6608, %v6608
        %v6625 = vpack.c.b16 %v6609, %v6609
        %v6626 = vpack.c.b16 %v6610, %v6610
        %v6627 = vpack.c.b16 %v6611, %v6611
        %v6628 = vpack.c.b16 %v6612, %v6612
        %v6629 = vpack.c.b16 %v6613, %v6613
        %v6630 = vpack.c.b16 %v6614, %v6614
        %v6632 = vshrl.u32 %v6615, 16
        %v6634 = vrot.slane %v6632, 4
        %v6635 = vshll.u32 %v6615, 16
        %v6637 = vrot.slane %v6635, 5
        %v6638 = vor.u32 %v6634, %v6637
        %v6639 = vrot.slane %v6638, 4
        %v6641 = vshll.u32 %v6616, 16
        %v6643 = vrot.slane %v6641, 5
        %v6644 = vsel %vm4996, %v6639, %v6643
        %v6646 = vshrl.u32 %v6617, 16
        %v6648 = vrot.slane %v6646, 4
        %v6649 = vshll.u32 %v6617, 16
        %v6651 = vrot.slane %v6649, 5
        %v6652 = vor.u32 %v6648, %v6651
        %v6653 = vrot.slane %v6652, 4
        %v6655 = vshll.u32 %v6618, 16
        %v6657 = vrot.slane %v6655, 5
        %v6658 = vsel %vm4996, %v6653, %v6657
        %v6660 = vshrl.u32 %v6619, 16
        %v6662 = vrot.slane %v6660, 4
        %v6663 = vshll.u32 %v6619, 16
        %v6665 = vrot.slane %v6663, 5
        %v6666 = vor.u32 %v6662, %v6665
        %v6667 = vrot.slane %v6666, 4
        %v6669 = vshll.u32 %v6620, 16
        %v6671 = vrot.slane %v6669, 5
        %v6672 = vsel %vm4996, %v6667, %v6671
        %v6674 = vshrl.u32 %v6621, 16
        %v6676 = vrot.slane %v6674, 4
        %v6677 = vshll.u32 %v6621, 16
        %v6679 = vrot.slane %v6677, 5
        %v6680 = vor.u32 %v6676, %v6679
        %v6681 = vrot.slane %v6680, 4
        %v6683 = vshll.u32 %v6622, 16
        %v6685 = vrot.slane %v6683, 5
        %v6686 = vsel %vm4996, %v6681, %v6685
        %v6688 = vshrl.u32 %v6623, 16
        %v6690 = vrot.slane %v6688, 4
        %v6691 = vshll.u32 %v6623, 16
        %v6693 = vrot.slane %v6691, 5
        %v6694 = vor.u32 %v6690, %v6693
        %v6695 = vrot.slane %v6694, 4
        %v6697 = vshll.u32 %v6624, 16
        %v6699 = vrot.slane %v6697, 5
        %v6700 = vsel %vm4996, %v6695, %v6699
        %v6702 = vshrl.u32 %v6625, 16
        %v6704 = vrot.slane %v6702, 4
        %v6705 = vshll.u32 %v6625, 16
        %v6707 = vrot.slane %v6705, 5
        %v6708 = vor.u32 %v6704, %v6707
        %v6709 = vrot.slane %v6708, 4
        %v6711 = vshll.u32 %v6626, 16
        %v6713 = vrot.slane %v6711, 5
        %v6714 = vsel %vm4996, %v6709, %v6713
        %v6716 = vshrl.u32 %v6627, 16
        %v6718 = vrot.slane %v6716, 4
        %v6719 = vshll.u32 %v6627, 16
        %v6721 = vrot.slane %v6719, 5
        %v6722 = vor.u32 %v6718, %v6721
        %v6723 = vrot.slane %v6722, 4
        %v6725 = vshll.u32 %v6628, 16
        %v6727 = vrot.slane %v6725, 5
        %v6728 = vsel %vm4996, %v6723, %v6727
        %v6730 = vshrl.u32 %v6629, 16
        %v6732 = vrot.slane %v6730, 4
        %v6733 = vshll.u32 %v6629, 16
        %v6735 = vrot.slane %v6733, 5
        %v6736 = vor.u32 %v6732, %v6735
        %v6737 = vrot.slane %v6736, 4
        %v6739 = vshll.u32 %v6630, 16
        %v6741 = vrot.slane %v6739, 5
        %v6742 = vsel %vm4996, %v6737, %v6741
        %v6743 = vld [vmem:[%s4518] sm:$0x1f]
        %v6744 = vld [vmem:[%s4518 + $0x8] sm:$0x1f]
        %v6745 = vld [vmem:[%s4518 + $0x10] sm:$0x1f]
        %v6746 = vld [vmem:[%s4518 + $0x18] sm:$0x1f]
        %v6747 = vld [vmem:[%s4518 + $0x20] sm:$0x1f]
        %v6748 = vld [vmem:[%s4518 + $0x28] sm:$0x1f]
        %v6749 = vld [vmem:[%s4518 + $0x30] sm:$0x1f]
        %v6750 = vld [vmem:[%s4518 + $0x38] sm:$0x1f]
        %v6759 = vunpack.c.l.b16 %v6743
        %v6760 = vunpack.c.h.b16 %v6743
        %v6761 = vunpack.c.l.b16 %v6744
        %v6762 = vunpack.c.h.b16 %v6744
        %v6763 = vunpack.c.l.b16 %v6745
        %v6764 = vunpack.c.h.b16 %v6745
        %v6765 = vunpack.c.l.b16 %v6746
        %v6766 = vunpack.c.h.b16 %v6746
        %v6767 = vunpack.c.l.b16 %v6747
        %v6768 = vunpack.c.h.b16 %v6747
        %v6769 = vunpack.c.l.b16 %v6748
        %v6770 = vunpack.c.h.b16 %v6748
        %v6771 = vunpack.c.l.b16 %v6749
        %v6772 = vunpack.c.h.b16 %v6749
        %v6773 = vunpack.c.l.b16 %v6750
        %v6774 = vunpack.c.h.b16 %v6750
        %v6775 = vpack.c.b16 %v6759, %v6759
        %v6776 = vpack.c.b16 %v6760, %v6760
        %v6777 = vpack.c.b16 %v6761, %v6761
        %v6778 = vpack.c.b16 %v6762, %v6762
        %v6779 = vpack.c.b16 %v6763, %v6763
        %v6780 = vpack.c.b16 %v6764, %v6764
        %v6781 = vpack.c.b16 %v6765, %v6765
        %v6782 = vpack.c.b16 %v6766, %v6766
        %v6783 = vpack.c.b16 %v6767, %v6767
        %v6784 = vpack.c.b16 %v6768, %v6768
        %v6785 = vpack.c.b16 %v6769, %v6769
        %v6786 = vpack.c.b16 %v6770, %v6770
        %v6787 = vpack.c.b16 %v6771, %v6771
        %v6788 = vpack.c.b16 %v6772, %v6772
        %v6789 = vpack.c.b16 %v6773, %v6773
        %v6790 = vpack.c.b16 %v6774, %v6774
        %v6792 = vshrl.u32 %v6775, 16
        %v6794 = vrot.slane %v6792, 4
        %v6795 = vshll.u32 %v6775, 16
        %v6797 = vrot.slane %v6795, 5
        %v6798 = vor.u32 %v6794, %v6797
        %v6799 = vrot.slane %v6798, 4
        %v6801 = vshll.u32 %v6776, 16
        %v6803 = vrot.slane %v6801, 5
        %v6804 = vsel %vm4996, %v6799, %v6803
        %v6806 = vshrl.u32 %v6777, 16
        %v6808 = vrot.slane %v6806, 4
        %v6809 = vshll.u32 %v6777, 16
        %v6811 = vrot.slane %v6809, 5
        %v6812 = vor.u32 %v6808, %v6811
        %v6813 = vrot.slane %v6812, 4
        %v6815 = vshll.u32 %v6778, 16
        %v6817 = vrot.slane %v6815, 5
        %v6818 = vsel %vm4996, %v6813, %v6817
        %v6820 = vshrl.u32 %v6779, 16
        %v6822 = vrot.slane %v6820, 4
        %v6823 = vshll.u32 %v6779, 16
        %v6825 = vrot.slane %v6823, 5
        %v6826 = vor.u32 %v6822, %v6825
        %v6827 = vrot.slane %v6826, 4
        %v6829 = vshll.u32 %v6780, 16
        %v6831 = vrot.slane %v6829, 5
        %v6832 = vsel %vm4996, %v6827, %v6831
        %v6834 = vshrl.u32 %v6781, 16
        %v6836 = vrot.slane %v6834, 4
        %v6837 = vshll.u32 %v6781, 16
        %v6839 = vrot.slane %v6837, 5
        %v6840 = vor.u32 %v6836, %v6839
        %v6841 = vrot.slane %v6840, 4
        %v6843 = vshll.u32 %v6782, 16
        %v6845 = vrot.slane %v6843, 5
        %v6846 = vsel %vm4996, %v6841, %v6845
        %v6848 = vshrl.u32 %v6783, 16
        %v6850 = vrot.slane %v6848, 4
        %v6851 = vshll.u32 %v6783, 16
        %v6853 = vrot.slane %v6851, 5
        %v6854 = vor.u32 %v6850, %v6853
        %v6855 = vrot.slane %v6854, 4
        %v6857 = vshll.u32 %v6784, 16
        %v6859 = vrot.slane %v6857, 5
        %v6860 = vsel %vm4996, %v6855, %v6859
        %v6862 = vshrl.u32 %v6785, 16
        %v6864 = vrot.slane %v6862, 4
        %v6865 = vshll.u32 %v6785, 16
        %v6867 = vrot.slane %v6865, 5
        %v6868 = vor.u32 %v6864, %v6867
        %v6869 = vrot.slane %v6868, 4
        %v6871 = vshll.u32 %v6786, 16
        %v6873 = vrot.slane %v6871, 5
        %v6874 = vsel %vm4996, %v6869, %v6873
        %v6876 = vshrl.u32 %v6787, 16
        %v6878 = vrot.slane %v6876, 4
        %v6879 = vshll.u32 %v6787, 16
        %v6881 = vrot.slane %v6879, 5
        %v6882 = vor.u32 %v6878, %v6881
        %v6883 = vrot.slane %v6882, 4
        %v6885 = vshll.u32 %v6788, 16
        %v6887 = vrot.slane %v6885, 5
        %v6888 = vsel %vm4996, %v6883, %v6887
        %v6890 = vshrl.u32 %v6789, 16
        %v6892 = vrot.slane %v6890, 4
        %v6893 = vshll.u32 %v6789, 16
        %v6895 = vrot.slane %v6893, 5
        %v6896 = vor.u32 %v6892, %v6895
        %v6897 = vrot.slane %v6896, 4
        %v6899 = vshll.u32 %v6790, 16
        %v6901 = vrot.slane %v6899, 5
        %v6902 = vsel %vm4996, %v6897, %v6901
        %s6903 = scalar_lea.vmem %s4, 256
        %v6904 = vld [vmem:[%s6903] sm:$0xf]
        %v6905 = vld [vmem:[%s6903 + $0x4] sm:$0xf]
        %v6906 = vld [vmem:[%s6903 + $0x8] sm:$0xf]
        %v6907 = vld [vmem:[%s6903 + $0xc] sm:$0xf]
        %v6908 = vld [vmem:[%s6903 + $0x10] sm:$0xf]
        %v6909 = vld [vmem:[%s6903 + $0x14] sm:$0xf]
        %v6910 = vld [vmem:[%s6903 + $0x18] sm:$0xf]
        %v6911 = vld [vmem:[%s6903 + $0x1c] sm:$0xf]
        %v6912 = vld [vmem:[%s6903 + $0x20] sm:$0xf]
        %v6913 = vld [vmem:[%s6903 + $0x24] sm:$0xf]
        %v6914 = vld [vmem:[%s6903 + $0x28] sm:$0xf]
        %v6915 = vld [vmem:[%s6903 + $0x2c] sm:$0xf]
        %v6916 = vld [vmem:[%s6903 + $0x30] sm:$0xf]
        %v6917 = vld [vmem:[%s6903 + $0x34] sm:$0xf]
        %v6918 = vld [vmem:[%s6903 + $0x38] sm:$0xf]
        %v6919 = vld [vmem:[%s6903 + $0x3c] sm:$0xf]
        %s6920 = scalar_lea.vmem %s5, 256
        %v6921 = vld [vmem:[%s6920] sm:$0xf]
        %v6922 = vld [vmem:[%s6920 + $0x4] sm:$0xf]
        %v6923 = vld [vmem:[%s6920 + $0x8] sm:$0xf]
        %v6924 = vld [vmem:[%s6920 + $0xc] sm:$0xf]
        %v6925 = vld [vmem:[%s6920 + $0x10] sm:$0xf]
        %v6926 = vld [vmem:[%s6920 + $0x14] sm:$0xf]
        %v6927 = vld [vmem:[%s6920 + $0x18] sm:$0xf]
        %v6928 = vld [vmem:[%s6920 + $0x1c] sm:$0xf]
        %v6929 = vld [vmem:[%s6920 + $0x20] sm:$0xf]
        %v6930 = vld [vmem:[%s6920 + $0x24] sm:$0xf]
        %v6931 = vld [vmem:[%s6920 + $0x28] sm:$0xf]
        %v6932 = vld [vmem:[%s6920 + $0x2c] sm:$0xf]
        %v6933 = vld [vmem:[%s6920 + $0x30] sm:$0xf]
        %v6934 = vld [vmem:[%s6920 + $0x34] sm:$0xf]
        %v6935 = vld [vmem:[%s6920 + $0x38] sm:$0xf]
        %v6936 = vld [vmem:[%s6920 + $0x3c] sm:$0xf]
        %v6937 = vunpack.c.l.b16 %v6804
        %v6938 = vunpack.c.l.b16 %v6818
        %v6939 = vunpack.c.l.b16 %v6832
        %v6940 = vunpack.c.l.b16 %v6846
        %v6941 = vunpack.c.l.b16 %v6860
        %v6942 = vunpack.c.l.b16 %v6874
        %v6943 = vunpack.c.l.b16 %v6888
        %v6944 = vunpack.c.l.b16 %v6902
        %v6945 = vpack.c.b16 %v6938, %v6937
        %v6946 = vpack.c.b16 %v6940, %v6939
        %v6947 = vpack.c.b16 %v6942, %v6941
        %v6948 = vpack.c.b16 %v6944, %v6943
        %v6969 = vunpack.c.l.b16 %v6904
        %v6970 = vunpack.c.l.b16 %v6905
        %v6971 = vunpack.c.l.b16 %v6906
        %v6972 = vunpack.c.l.b16 %v6907
        %v6973 = vunpack.c.l.b16 %v6908
        %v6974 = vunpack.c.l.b16 %v6909
        %v6975 = vunpack.c.l.b16 %v6910
        %v6976 = vunpack.c.l.b16 %v6911
        %v6977 = vunpack.c.l.b16 %v6912
        %v6978 = vunpack.c.l.b16 %v6913
        %v6979 = vunpack.c.l.b16 %v6914
        %v6980 = vunpack.c.l.b16 %v6915
        %v6981 = vunpack.c.l.b16 %v6916
        %v6982 = vunpack.c.l.b16 %v6917
        %v6983 = vunpack.c.l.b16 %v6918
        %v6984 = vunpack.c.l.b16 %v6919
        %v6985 = vpack.c.b16 %v6970, %v6969
        %v6986 = vpack.c.b16 %v6972, %v6971
        %v6987 = vpack.c.b16 %v6974, %v6973
        %v6988 = vpack.c.b16 %v6976, %v6975
        %v6989 = vpack.c.b16 %v6978, %v6977
        %v6990 = vpack.c.b16 %v6980, %v6979
        %v6991 = vpack.c.b16 %v6982, %v6981
        %v6992 = vpack.c.b16 %v6984, %v6983
        %7001 = vmatprep.subr.bf16.mxu0 0
        %7002 = vmatpush1.bf16.msra.mxu0 %v6985
        %7003 = vmatprep.subr.bf16.mxu0 0
        %7004 = vmatpush1.bf16.msra.mxu0 %v6986
        %7005 = vmatprep.subr.bf16.mxu0 0
        %7006 = vmatpush1.bf16.msra.mxu0 %v6987
        %7007 = vmatprep.subr.bf16.mxu0 0
        %7008 = vmatpush1.bf16.msra.mxu0 %v6988
        %7009 = vmatprep.subr.bf16.mxu0 0
        %7010 = vmatpush1.bf16.msra.mxu0 %v6989
        %7011 = vmatprep.subr.bf16.mxu0 0
        %7012 = vmatpush1.bf16.msra.mxu0 %v6990
        %7013 = vmatprep.subr.bf16.mxu0 0
        %7014 = vmatpush1.bf16.msra.mxu0 %v6991
        %7015 = vmatprep.subr.bf16.mxu0 0
        %7016 = vmatpush1.bf16.msra.mxu0 %v6992
        %7017 = vmatprep.subr.bf16.mxu0 0
        %7018 = vmatpush1.bf16.msra.mxu0 0
        %7019 = vmatprep.subr.bf16.mxu0 0
        %7020 = vmatpush1.bf16.msra.mxu0 0
        %7021 = vmatprep.subr.bf16.mxu0 0
        %7022 = vmatpush1.bf16.msra.mxu0 0
        %7023 = vmatprep.subr.bf16.mxu0 0
        %7024 = vmatpush1.bf16.msra.mxu0 0
        %7025 = vmatprep.subr.bf16.mxu0 0
        %7026 = vmatpush1.bf16.msra.mxu0 0
        %7027 = vmatprep.subr.bf16.mxu0 0
        %7028 = vmatpush1.bf16.msra.mxu0 0
        %7029 = vmatprep.subr.bf16.mxu0 0
        %7030 = vmatpush1.bf16.msra.mxu0 0
        %7031 = vmatprep.subr.bf16.mxu0 0
        %7032 = vmatpush1.bf16.msra.mxu0 0
        %7033 = vmatprep.mubr.bf16.mxu0 0
        %7034 = vmatmul.mubr.bf16.gmra.mrb[0].mxu0 %v6945
        %v7035 = vpop.f32.mrb[0].mxu0
        %v7036 = vadd.f32 0.0, %v7035
        %v7037 = vpop.f32.mrb[0].mxu0
        %v7038 = vpop.f32.mrb[0].mxu0
        %v7039 = vadd.f32 0.0, %v7038
        %v7040 = vpop.f32.mrb[0].mxu0
        %7041 = vmatprep.mubr.bf16.mxu0 0
        %7042 = vmatmul.mubr.bf16.gmra.mrb[0].mxu0 %v6946
        %v7043 = vpop.f32.mrb[0].mxu0
        %v7044 = vadd.f32 0.0, %v7043
        %v7045 = vpop.f32.mrb[0].mxu0
        %v7046 = vpop.f32.mrb[0].mxu0
        %v7047 = vadd.f32 0.0, %v7046
        %v7048 = vpop.f32.mrb[0].mxu0
        %7049 = vmatprep.mubr.bf16.mxu0 0
        %7050 = vmatmul.mubr.bf16.gmra.mrb[0].mxu0 %v6947
        %v7051 = vpop.f32.mrb[0].mxu0
        %v7052 = vadd.f32 0.0, %v7051
        %v7053 = vpop.f32.mrb[0].mxu0
        %v7054 = vpop.f32.mrb[0].mxu0
        %v7055 = vadd.f32 0.0, %v7054
        %v7056 = vpop.f32.mrb[0].mxu0
        %7057 = vmatprep.mubr.bf16.mxu0 0
        %7058 = vmatmul.mubr.bf16.gmra.mrb[0].mxu0 %v6948
        %v7059 = vpop.f32.mrb[0].mxu0
        %v7060 = vadd.f32 0.0, %v7059
        %v7061 = vpop.f32.mrb[0].mxu0
        %v7062 = vpop.f32.mrb[0].mxu0
        %v7063 = vadd.f32 0.0, %v7062
        %v7064 = vpop.f32.mrb[0].mxu0
        %7065 = vdwg.mxu0
        %v7066 = vunpack.c.l.b16 %v6644
        %v7067 = vunpack.c.l.b16 %v6658
        %v7068 = vunpack.c.l.b16 %v6672
        %v7069 = vunpack.c.l.b16 %v6686
        %v7070 = vunpack.c.l.b16 %v6700
        %v7071 = vunpack.c.l.b16 %v6714
        %v7072 = vunpack.c.l.b16 %v6728
        %v7073 = vunpack.c.l.b16 %v6742
        %v7074 = vpack.c.b16 %v7067, %v7066
        %v7075 = vpack.c.b16 %v7069, %v7068
        %v7076 = vpack.c.b16 %v7071, %v7070
        %v7077 = vpack.c.b16 %v7073, %v7072
        %7082 = vmatprep.subr.bf16.mxu0 0
        %7083 = vmatpush1.bf16.msra.mxu0 %v6985
        %7084 = vmatprep.subr.bf16.mxu0 0
        %7085 = vmatpush1.bf16.msra.mxu0 %v6986
        %7086 = vmatprep.subr.bf16.mxu0 0
        %7087 = vmatpush1.bf16.msra.mxu0 %v6987
        %7088 = vmatprep.subr.bf16.mxu0 0
        %7089 = vmatpush1.bf16.msra.mxu0 %v6988
        %7090 = vmatprep.subr.bf16.mxu0 0
        %7091 = vmatpush1.bf16.msra.mxu0 %v6989
        %7092 = vmatprep.subr.bf16.mxu0 0
        %7093 = vmatpush1.bf16.msra.mxu0 %v6990
        %7094 = vmatprep.subr.bf16.mxu0 0
        %7095 = vmatpush1.bf16.msra.mxu0 %v6991
        %7096 = vmatprep.subr.bf16.mxu0 0
        %7097 = vmatpush1.bf16.msra.mxu0 %v6992
        %7098 = vmatprep.subr.bf16.mxu0 0
        %7099 = vmatpush1.bf16.msra.mxu0 0
        %7100 = vmatprep.subr.bf16.mxu0 0
        %7101 = vmatpush1.bf16.msra.mxu0 0
        %7102 = vmatprep.subr.bf16.mxu0 0
        %7103 = vmatpush1.bf16.msra.mxu0 0
        %7104 = vmatprep.subr.bf16.mxu0 0
        %7105 = vmatpush1.bf16.msra.mxu0 0
        %7106 = vmatprep.subr.bf16.mxu0 0
        %7107 = vmatpush1.bf16.msra.mxu0 0
        %7108 = vmatprep.subr.bf16.mxu0 0
        %7109 = vmatpush1.bf16.msra.mxu0 0
        %7110 = vmatprep.subr.bf16.mxu0 0
        %7111 = vmatpush1.bf16.msra.mxu0 0
        %7112 = vmatprep.subr.bf16.mxu0 0
        %7113 = vmatpush1.bf16.msra.mxu0 0
        %7114 = vmatprep.mubr.bf16.mxu0 0
        %7115 = vmatmul.mubr.bf16.gmra.mrb[0].mxu0 %v7074
        %v7116 = vpop.f32.mrb[0].mxu0
        %v7117 = vadd.f32 %v7036, %v7116
        %v7118 = vpop.f32.mrb[0].mxu0
        %v7119 = vpop.f32.mrb[0].mxu0
        %v7120 = vadd.f32 %v7039, %v7119
        %v7121 = vpop.f32.mrb[0].mxu0
        %7122 = vmatprep.mubr.bf16.mxu0 0
        %7123 = vmatmul.mubr.bf16.gmra.mrb[0].mxu0 %v7075
        %v7124 = vpop.f32.mrb[0].mxu0
        %v7125 = vadd.f32 %v7044, %v7124
        %v7126 = vpop.f32.mrb[0].mxu0
        %v7127 = vpop.f32.mrb[0].mxu0
        %v7128 = vadd.f32 %v7047, %v7127
        %v7129 = vpop.f32.mrb[0].mxu0
        %7130 = vmatprep.mubr.bf16.mxu0 0
        %7131 = vmatmul.mubr.bf16.gmra.mrb[0].mxu0 %v7076
        %v7132 = vpop.f32.mrb[0].mxu0
        %v7133 = vadd.f32 %v7052, %v7132
        %v7134 = vpop.f32.mrb[0].mxu0
        %v7135 = vpop.f32.mrb[0].mxu0
        %v7136 = vadd.f32 %v7055, %v7135
        %v7137 = vpop.f32.mrb[0].mxu0
        %7138 = vmatprep.mubr.bf16.mxu0 0
        %7139 = vmatmul.mubr.bf16.gmra.mrb[0].mxu0 %v7077
        %v7140 = vpop.f32.mrb[0].mxu0
        %v7141 = vadd.f32 %v7060, %v7140
        %v7142 = vpop.f32.mrb[0].mxu0
        %v7143 = vpop.f32.mrb[0].mxu0
        %v7144 = vadd.f32 %v7063, %v7143
        %v7145 = vpop.f32.mrb[0].mxu0
        %7146 = vdwg.mxu0
        %v7163 = vunpack.c.l.b16 %v6921
        %v7164 = vunpack.c.l.b16 %v6922
        %v7165 = vunpack.c.l.b16 %v6923
        %v7166 = vunpack.c.l.b16 %v6924
        %v7167 = vunpack.c.l.b16 %v6925
        %v7168 = vunpack.c.l.b16 %v6926
        %v7169 = vunpack.c.l.b16 %v6927
        %v7170 = vunpack.c.l.b16 %v6928
        %v7171 = vunpack.c.l.b16 %v6929
        %v7172 = vunpack.c.l.b16 %v6930
        %v7173 = vunpack.c.l.b16 %v6931
        %v7174 = vunpack.c.l.b16 %v6932
        %v7175 = vunpack.c.l.b16 %v6933
        %v7176 = vunpack.c.l.b16 %v6934
        %v7177 = vunpack.c.l.b16 %v6935
        %v7178 = vunpack.c.l.b16 %v6936
        %v7179 = vpack.c.b16 %v7164, %v7163
        %v7180 = vpack.c.b16 %v7166, %v7165
        %v7181 = vpack.c.b16 %v7168, %v7167
        %v7182 = vpack.c.b16 %v7170, %v7169
        %v7183 = vpack.c.b16 %v7172, %v7171
        %v7184 = vpack.c.b16 %v7174, %v7173
        %v7185 = vpack.c.b16 %v7176, %v7175
        %v7186 = vpack.c.b16 %v7178, %v7177
        %7195 = vmatprep.subr.bf16.mxu0 0
        %7196 = vmatpush1.bf16.msra.mxu0 %v7179
        %7197 = vmatprep.subr.bf16.mxu0 0
        %7198 = vmatpush1.bf16.msra.mxu0 %v7180
        %7199 = vmatprep.subr.bf16.mxu0 0
        %7200 = vmatpush1.bf16.msra.mxu0 %v7181
        %7201 = vmatprep.subr.bf16.mxu0 0
        %7202 = vmatpush1.bf16.msra.mxu0 %v7182
        %7203 = vmatprep.subr.bf16.mxu0 0
        %7204 = vmatpush1.bf16.msra.mxu0 %v7183
        %7205 = vmatprep.subr.bf16.mxu0 0
        %7206 = vmatpush1.bf16.msra.mxu0 %v7184
        %7207 = vmatprep.subr.bf16.mxu0 0
        %7208 = vmatpush1.bf16.msra.mxu0 %v7185
        %7209 = vmatprep.subr.bf16.mxu0 0
        %7210 = vmatpush1.bf16.msra.mxu0 %v7186
        %7211 = vmatprep.subr.bf16.mxu0 0
        %7212 = vmatpush1.bf16.msra.mxu0 0
        %7213 = vmatprep.subr.bf16.mxu0 0
        %7214 = vmatpush1.bf16.msra.mxu0 0
        %7215 = vmatprep.subr.bf16.mxu0 0
        %7216 = vmatpush1.bf16.msra.mxu0 0
        %7217 = vmatprep.subr.bf16.mxu0 0
        %7218 = vmatpush1.bf16.msra.mxu0 0
        %7219 = vmatprep.subr.bf16.mxu0 0
        %7220 = vmatpush1.bf16.msra.mxu0 0
        %7221 = vmatprep.subr.bf16.mxu0 0
        %7222 = vmatpush1.bf16.msra.mxu0 0
        %7223 = vmatprep.subr.bf16.mxu0 0
        %7224 = vmatpush1.bf16.msra.mxu0 0
        %7225 = vmatprep.subr.bf16.mxu0 0
        %7226 = vmatpush1.bf16.msra.mxu0 0
        %7227 = vmatprep.mubr.bf16.mxu0 0
        %7228 = vmatmul.mubr.bf16.gmra.mrb[0].mxu0 %v7074
        %v7229 = vpop.f32.mrb[0].mxu0
        %v7230 = vadd.f32 0.0, %v7229
        %v7231 = vpop.f32.mrb[0].mxu0
        %v7232 = vpop.f32.mrb[0].mxu0
        %v7233 = vadd.f32 0.0, %v7232
        %v7234 = vpop.f32.mrb[0].mxu0
        %7235 = vmatprep.mubr.bf16.mxu0 0
        %7236 = vmatmul.mubr.bf16.gmra.mrb[0].mxu0 %v7075
        %v7237 = vpop.f32.mrb[0].mxu0
        %v7238 = vadd.f32 0.0, %v7237
        %v7239 = vpop.f32.mrb[0].mxu0
        %v7240 = vpop.f32.mrb[0].mxu0
        %v7241 = vadd.f32 0.0, %v7240
        %v7242 = vpop.f32.mrb[0].mxu0
        %7243 = vmatprep.mubr.bf16.mxu0 0
        %7244 = vmatmul.mubr.bf16.gmra.mrb[0].mxu0 %v7076
        %v7245 = vpop.f32.mrb[0].mxu0
        %v7246 = vadd.f32 0.0, %v7245
        %v7247 = vpop.f32.mrb[0].mxu0
        %v7248 = vpop.f32.mrb[0].mxu0
        %v7249 = vadd.f32 0.0, %v7248
        %v7250 = vpop.f32.mrb[0].mxu0
        %7251 = vmatprep.mubr.bf16.mxu0 0
        %7252 = vmatmul.mubr.bf16.gmra.mrb[0].mxu0 %v7077
        %v7253 = vpop.f32.mrb[0].mxu0
        %v7254 = vadd.f32 0.0, %v7253
        %v7255 = vpop.f32.mrb[0].mxu0
        %v7256 = vpop.f32.mrb[0].mxu0
        %v7257 = vadd.f32 0.0, %v7256
        %v7258 = vpop.f32.mrb[0].mxu0
        %7259 = vdwg.mxu0
        %v7260 = vadd.f32 %v7117, %v7230
        %v7261 = vadd.f32 %v7120, %v7233
        %v7262 = vadd.f32 %v7125, %v7238
        %v7263 = vadd.f32 %v7128, %v7241
        %v7264 = vadd.f32 %v7133, %v7246
        %v7265 = vadd.f32 %v7136, %v7249
        %v7266 = vadd.f32 %v7141, %v7254
        %v7267 = vadd.f32 %v7144, %v7257
        %v7268 = vadd.f32 %v6575, %v7260
        %v7269 = vadd.f32 %v6576, %v7261
        %v7270 = vadd.f32 %v6577, %v7262
        %v7271 = vadd.f32 %v6578, %v7263
        %v7272 = vadd.f32 %v6579, %v7264
        %v7273 = vadd.f32 %v6580, %v7265
        %v7274 = vadd.f32 %v6581, %v7266
        %v7275 = vadd.f32 %v6582, %v7267
        %v7276 = vld [vmem:[%s4406] sm:$0x1e]
        %v7277 = vld [vmem:[%s4406 + $0x8] sm:$0x1e]
        %v7278 = vld [vmem:[%s4406 + $0x10] sm:$0x1e]
        %v7279 = vld [vmem:[%s4406 + $0x18] sm:$0x1e]
        %v7280 = vld [vmem:[%s4406 + $0x20] sm:$0x1e]
        %v7281 = vld [vmem:[%s4406 + $0x28] sm:$0x1e]
        %v7282 = vld [vmem:[%s4406 + $0x30] sm:$0x1e]
        %v7283 = vld [vmem:[%s4406 + $0x38] sm:$0x1e]
        %v7292 = vunpack.c.l.b16 %v7276
        %v7293 = vunpack.c.h.b16 %v7276
        %v7294 = vunpack.c.l.b16 %v7277
        %v7295 = vunpack.c.h.b16 %v7277
        %v7296 = vunpack.c.l.b16 %v7278
        %v7297 = vunpack.c.h.b16 %v7278
        %v7298 = vunpack.c.l.b16 %v7279
        %v7299 = vunpack.c.h.b16 %v7279
        %v7300 = vunpack.c.l.b16 %v7280
        %v7301 = vunpack.c.h.b16 %v7280
        %v7302 = vunpack.c.l.b16 %v7281
        %v7303 = vunpack.c.h.b16 %v7281
        %v7304 = vunpack.c.l.b16 %v7282
        %v7305 = vunpack.c.h.b16 %v7282
        %v7306 = vunpack.c.l.b16 %v7283
        %v7307 = vunpack.c.h.b16 %v7283
        %v7308 = vpack.c.b16 %v7292, %v7292
        %v7309 = vpack.c.b16 %v7293, %v7293
        %v7310 = vpack.c.b16 %v7294, %v7294
        %v7311 = vpack.c.b16 %v7295, %v7295
        %v7312 = vpack.c.b16 %v7296, %v7296
        %v7313 = vpack.c.b16 %v7297, %v7297
        %v7314 = vpack.c.b16 %v7298, %v7298
        %v7315 = vpack.c.b16 %v7299, %v7299
        %v7316 = vpack.c.b16 %v7300, %v7300
        %v7317 = vpack.c.b16 %v7301, %v7301
        %v7318 = vpack.c.b16 %v7302, %v7302
        %v7319 = vpack.c.b16 %v7303, %v7303
        %v7320 = vpack.c.b16 %v7304, %v7304
        %v7321 = vpack.c.b16 %v7305, %v7305
        %v7322 = vpack.c.b16 %v7306, %v7306
        %v7323 = vpack.c.b16 %v7307, %v7307
        %v7324 = vrot.slane %v7308, 5
        %v7325 = vrot.slane %v7324, 4
        %v7326 = vrot.slane %v7309, 5
        %v7327 = vsel %vm5692, %v7325, %v7326
        %v7328 = vrot.slane %v7310, 5
        %v7329 = vrot.slane %v7328, 4
        %v7330 = vrot.slane %v7311, 5
        %v7331 = vsel %vm5692, %v7329, %v7330
        %v7332 = vrot.slane %v7312, 5
        %v7333 = vrot.slane %v7332, 4
        %v7334 = vrot.slane %v7313, 5
        %v7335 = vsel %vm5692, %v7333, %v7334
        %v7336 = vrot.slane %v7314, 5
        %v7337 = vrot.slane %v7336, 4
        %v7338 = vrot.slane %v7315, 5
        %v7339 = vsel %vm5692, %v7337, %v7338
        %v7340 = vrot.slane %v7316, 5
        %v7341 = vrot.slane %v7340, 4
        %v7342 = vrot.slane %v7317, 5
        %v7343 = vsel %vm5692, %v7341, %v7342
        %v7344 = vrot.slane %v7318, 5
        %v7345 = vrot.slane %v7344, 4
        %v7346 = vrot.slane %v7319, 5
        %v7347 = vsel %vm5692, %v7345, %v7346
        %v7348 = vrot.slane %v7320, 5
        %v7349 = vrot.slane %v7348, 4
        %v7350 = vrot.slane %v7321, 5
        %v7351 = vsel %vm5692, %v7349, %v7350
        %v7352 = vrot.slane %v7322, 5
        %v7353 = vrot.slane %v7352, 4
        %v7354 = vrot.slane %v7323, 5
        %v7355 = vsel %vm5692, %v7353, %v7354
        %v7356 = vld [vmem:[%s4518] sm:$0x1e]
        %v7357 = vld [vmem:[%s4518 + $0x8] sm:$0x1e]
        %v7358 = vld [vmem:[%s4518 + $0x10] sm:$0x1e]
        %v7359 = vld [vmem:[%s4518 + $0x18] sm:$0x1e]
        %v7360 = vld [vmem:[%s4518 + $0x20] sm:$0x1e]
        %v7361 = vld [vmem:[%s4518 + $0x28] sm:$0x1e]
        %v7362 = vld [vmem:[%s4518 + $0x30] sm:$0x1e]
        %v7363 = vld [vmem:[%s4518 + $0x38] sm:$0x1e]
        %v7372 = vunpack.c.l.b16 %v7356
        %v7373 = vunpack.c.h.b16 %v7356
        %v7374 = vunpack.c.l.b16 %v7357
        %v7375 = vunpack.c.h.b16 %v7357
        %v7376 = vunpack.c.l.b16 %v7358
        %v7377 = vunpack.c.h.b16 %v7358
        %v7378 = vunpack.c.l.b16 %v7359
        %v7379 = vunpack.c.h.b16 %v7359
        %v7380 = vunpack.c.l.b16 %v7360
        %v7381 = vunpack.c.h.b16 %v7360
        %v7382 = vunpack.c.l.b16 %v7361
        %v7383 = vunpack.c.h.b16 %v7361
        %v7384 = vunpack.c.l.b16 %v7362
        %v7385 = vunpack.c.h.b16 %v7362
        %v7386 = vunpack.c.l.b16 %v7363
        %v7387 = vunpack.c.h.b16 %v7363
        %v7388 = vpack.c.b16 %v7372, %v7372
        %v7389 = vpack.c.b16 %v7373, %v7373
        %v7390 = vpack.c.b16 %v7374, %v7374
        %v7391 = vpack.c.b16 %v7375, %v7375
        %v7392 = vpack.c.b16 %v7376, %v7376
        %v7393 = vpack.c.b16 %v7377, %v7377
        %v7394 = vpack.c.b16 %v7378, %v7378
        %v7395 = vpack.c.b16 %v7379, %v7379
        %v7396 = vpack.c.b16 %v7380, %v7380
        %v7397 = vpack.c.b16 %v7381, %v7381
        %v7398 = vpack.c.b16 %v7382, %v7382
        %v7399 = vpack.c.b16 %v7383, %v7383
        %v7400 = vpack.c.b16 %v7384, %v7384
        %v7401 = vpack.c.b16 %v7385, %v7385
        %v7402 = vpack.c.b16 %v7386, %v7386
        %v7403 = vpack.c.b16 %v7387, %v7387
        %v7404 = vrot.slane %v7388, 5
        %v7405 = vrot.slane %v7404, 4
        %v7406 = vrot.slane %v7389, 5
        %v7407 = vsel %vm5692, %v7405, %v7406
        %v7408 = vrot.slane %v7390, 5
        %v7409 = vrot.slane %v7408, 4
        %v7410 = vrot.slane %v7391, 5
        %v7411 = vsel %vm5692, %v7409, %v7410
        %v7412 = vrot.slane %v7392, 5
        %v7413 = vrot.slane %v7412, 4
        %v7414 = vrot.slane %v7393, 5
        %v7415 = vsel %vm5692, %v7413, %v7414
        %v7416 = vrot.slane %v7394, 5
        %v7417 = vrot.slane %v7416, 4
        %v7418 = vrot.slane %v7395, 5
        %v7419 = vsel %vm5692, %v7417, %v7418
        %v7420 = vrot.slane %v7396, 5
        %v7421 = vrot.slane %v7420, 4
        %v7422 = vrot.slane %v7397, 5
        %v7423 = vsel %vm5692, %v7421, %v7422
        %v7424 = vrot.slane %v7398, 5
        %v7425 = vrot.slane %v7424, 4
        %v7426 = vrot.slane %v7399, 5
        %v7427 = vsel %vm5692, %v7425, %v7426
        %v7428 = vrot.slane %v7400, 5
        %v7429 = vrot.slane %v7428, 4
        %v7430 = vrot.slane %v7401, 5
        %v7431 = vsel %vm5692, %v7429, %v7430
        %v7432 = vrot.slane %v7402, 5
        %v7433 = vrot.slane %v7432, 4
        %v7434 = vrot.slane %v7403, 5
        %v7435 = vsel %vm5692, %v7433, %v7434
        %s7436 = scalar_lea.vmem %s4, 320
        %v7437 = vld [vmem:[%s7436] sm:$0xf]
        %v7438 = vld [vmem:[%s7436 + $0x4] sm:$0xf]
        %v7439 = vld [vmem:[%s7436 + $0x8] sm:$0xf]
        %v7440 = vld [vmem:[%s7436 + $0xc] sm:$0xf]
        %v7441 = vld [vmem:[%s7436 + $0x10] sm:$0xf]
        %v7442 = vld [vmem:[%s7436 + $0x14] sm:$0xf]
        %v7443 = vld [vmem:[%s7436 + $0x18] sm:$0xf]
        %v7444 = vld [vmem:[%s7436 + $0x1c] sm:$0xf]
        %v7445 = vld [vmem:[%s7436 + $0x20] sm:$0xf]
        %v7446 = vld [vmem:[%s7436 + $0x24] sm:$0xf]
        %v7447 = vld [vmem:[%s7436 + $0x28] sm:$0xf]
        %v7448 = vld [vmem:[%s7436 + $0x2c] sm:$0xf]
        %v7449 = vld [vmem:[%s7436 + $0x30] sm:$0xf]
        %v7450 = vld [vmem:[%s7436 + $0x34] sm:$0xf]
        %v7451 = vld [vmem:[%s7436 + $0x38] sm:$0xf]
        %v7452 = vld [vmem:[%s7436 + $0x3c] sm:$0xf]
        %s7453 = scalar_lea.vmem %s5, 320
        %v7454 = vld [vmem:[%s7453] sm:$0xf]
        %v7455 = vld [vmem:[%s7453 + $0x4] sm:$0xf]
        %v7456 = vld [vmem:[%s7453 + $0x8] sm:$0xf]
        %v7457 = vld [vmem:[%s7453 + $0xc] sm:$0xf]
        %v7458 = vld [vmem:[%s7453 + $0x10] sm:$0xf]
        %v7459 = vld [vmem:[%s7453 + $0x14] sm:$0xf]
        %v7460 = vld [vmem:[%s7453 + $0x18] sm:$0xf]
        %v7461 = vld [vmem:[%s7453 + $0x1c] sm:$0xf]
        %v7462 = vld [vmem:[%s7453 + $0x20] sm:$0xf]
        %v7463 = vld [vmem:[%s7453 + $0x24] sm:$0xf]
        %v7464 = vld [vmem:[%s7453 + $0x28] sm:$0xf]
        %v7465 = vld [vmem:[%s7453 + $0x2c] sm:$0xf]
        %v7466 = vld [vmem:[%s7453 + $0x30] sm:$0xf]
        %v7467 = vld [vmem:[%s7453 + $0x34] sm:$0xf]
        %v7468 = vld [vmem:[%s7453 + $0x38] sm:$0xf]
        %v7469 = vld [vmem:[%s7453 + $0x3c] sm:$0xf]
        %v7470 = vunpack.c.l.b16 %v7407
        %v7471 = vunpack.c.l.b16 %v7411
        %v7472 = vunpack.c.l.b16 %v7415
        %v7473 = vunpack.c.l.b16 %v7419
        %v7474 = vunpack.c.l.b16 %v7423
        %v7475 = vunpack.c.l.b16 %v7427
        %v7476 = vunpack.c.l.b16 %v7431
        %v7477 = vunpack.c.l.b16 %v7435
        %v7478 = vpack.c.b16 %v7471, %v7470
        %v7479 = vpack.c.b16 %v7473, %v7472
        %v7480 = vpack.c.b16 %v7475, %v7474
        %v7481 = vpack.c.b16 %v7477, %v7476
        %v7502 = vunpack.c.l.b16 %v7437
        %v7503 = vunpack.c.l.b16 %v7438
        %v7504 = vunpack.c.l.b16 %v7439
        %v7505 = vunpack.c.l.b16 %v7440
        %v7506 = vunpack.c.l.b16 %v7441
        %v7507 = vunpack.c.l.b16 %v7442
        %v7508 = vunpack.c.l.b16 %v7443
        %v7509 = vunpack.c.l.b16 %v7444
        %v7510 = vunpack.c.l.b16 %v7445
        %v7511 = vunpack.c.l.b16 %v7446
        %v7512 = vunpack.c.l.b16 %v7447
        %v7513 = vunpack.c.l.b16 %v7448
        %v7514 = vunpack.c.l.b16 %v7449
        %v7515 = vunpack.c.l.b16 %v7450
        %v7516 = vunpack.c.l.b16 %v7451
        %v7517 = vunpack.c.l.b16 %v7452
        %v7518 = vpack.c.b16 %v7503, %v7502
        %v7519 = vpack.c.b16 %v7505, %v7504
        %v7520 = vpack.c.b16 %v7507, %v7506
        %v7521 = vpack.c.b16 %v7509, %v7508
        %v7522 = vpack.c.b16 %v7511, %v7510
        %v7523 = vpack.c.b16 %v7513, %v7512
        %v7524 = vpack.c.b16 %v7515, %v7514
        %v7525 = vpack.c.b16 %v7517, %v7516
        %7534 = vmatprep.subr.bf16.mxu0 0
        %7535 = vmatpush1.bf16.msra.mxu0 %v7518
        %7536 = vmatprep.subr.bf16.mxu0 0
        %7537 = vmatpush1.bf16.msra.mxu0 %v7519
        %7538 = vmatprep.subr.bf16.mxu0 0
        %7539 = vmatpush1.bf16.msra.mxu0 %v7520
        %7540 = vmatprep.subr.bf16.mxu0 0
        %7541 = vmatpush1.bf16.msra.mxu0 %v7521
        %7542 = vmatprep.subr.bf16.mxu0 0
        %7543 = vmatpush1.bf16.msra.mxu0 %v7522
        %7544 = vmatprep.subr.bf16.mxu0 0
        %7545 = vmatpush1.bf16.msra.mxu0 %v7523
        %7546 = vmatprep.subr.bf16.mxu0 0
        %7547 = vmatpush1.bf16.msra.mxu0 %v7524
        %7548 = vmatprep.subr.bf16.mxu0 0
        %7549 = vmatpush1.bf16.msra.mxu0 %v7525
        %7550 = vmatprep.subr.bf16.mxu0 0
        %7551 = vmatpush1.bf16.msra.mxu0 0
        %7552 = vmatprep.subr.bf16.mxu0 0
        %7553 = vmatpush1.bf16.msra.mxu0 0
        %7554 = vmatprep.subr.bf16.mxu0 0
        %7555 = vmatpush1.bf16.msra.mxu0 0
        %7556 = vmatprep.subr.bf16.mxu0 0
        %7557 = vmatpush1.bf16.msra.mxu0 0
        %7558 = vmatprep.subr.bf16.mxu0 0
        %7559 = vmatpush1.bf16.msra.mxu0 0
        %7560 = vmatprep.subr.bf16.mxu0 0
        %7561 = vmatpush1.bf16.msra.mxu0 0
        %7562 = vmatprep.subr.bf16.mxu0 0
        %7563 = vmatpush1.bf16.msra.mxu0 0
        %7564 = vmatprep.subr.bf16.mxu0 0
        %7565 = vmatpush1.bf16.msra.mxu0 0
        %7566 = vmatprep.mubr.bf16.mxu0 0
        %7567 = vmatmul.mubr.bf16.gmra.mrb[0].mxu0 %v7478
        %v7568 = vpop.f32.mrb[0].mxu0
        %v7569 = vadd.f32 0.0, %v7568
        %v7570 = vpop.f32.mrb[0].mxu0
        %v7571 = vpop.f32.mrb[0].mxu0
        %v7572 = vadd.f32 0.0, %v7571
        %v7573 = vpop.f32.mrb[0].mxu0
        %7574 = vmatprep.mubr.bf16.mxu0 0
        %7575 = vmatmul.mubr.bf16.gmra.mrb[0].mxu0 %v7479
        %v7576 = vpop.f32.mrb[0].mxu0
        %v7577 = vadd.f32 0.0, %v7576
        %v7578 = vpop.f32.mrb[0].mxu0
        %v7579 = vpop.f32.mrb[0].mxu0
        %v7580 = vadd.f32 0.0, %v7579
        %v7581 = vpop.f32.mrb[0].mxu0
        %7582 = vmatprep.mubr.bf16.mxu0 0
        %7583 = vmatmul.mubr.bf16.gmra.mrb[0].mxu0 %v7480
        %v7584 = vpop.f32.mrb[0].mxu0
        %v7585 = vadd.f32 0.0, %v7584
        %v7586 = vpop.f32.mrb[0].mxu0
        %v7587 = vpop.f32.mrb[0].mxu0
        %v7588 = vadd.f32 0.0, %v7587
        %v7589 = vpop.f32.mrb[0].mxu0
        %7590 = vmatprep.mubr.bf16.mxu0 0
        %7591 = vmatmul.mubr.bf16.gmra.mrb[0].mxu0 %v7481
        %v7592 = vpop.f32.mrb[0].mxu0
        %v7593 = vadd.f32 0.0, %v7592
        %v7594 = vpop.f32.mrb[0].mxu0
        %v7595 = vpop.f32.mrb[0].mxu0
        %v7596 = vadd.f32 0.0, %v7595
        %v7597 = vpop.f32.mrb[0].mxu0
        %7598 = vdwg.mxu0
        %v7599 = vunpack.c.l.b16 %v7327
        %v7600 = vunpack.c.l.b16 %v7331
        %v7601 = vunpack.c.l.b16 %v7335
        %v7602 = vunpack.c.l.b16 %v7339
        %v7603 = vunpack.c.l.b16 %v7343
        %v7604 = vunpack.c.l.b16 %v7347
        %v7605 = vunpack.c.l.b16 %v7351
        %v7606 = vunpack.c.l.b16 %v7355
        %v7607 = vpack.c.b16 %v7600, %v7599
        %v7608 = vpack.c.b16 %v7602, %v7601
        %v7609 = vpack.c.b16 %v7604, %v7603
        %v7610 = vpack.c.b16 %v7606, %v7605
        %7615 = vmatprep.subr.bf16.mxu0 0
        %7616 = vmatpush1.bf16.msra.mxu0 %v7518
        %7617 = vmatprep.subr.bf16.mxu0 0
        %7618 = vmatpush1.bf16.msra.mxu0 %v7519
        %7619 = vmatprep.subr.bf16.mxu0 0
        %7620 = vmatpush1.bf16.msra.mxu0 %v7520
        %7621 = vmatprep.subr.bf16.mxu0 0
        %7622 = vmatpush1.bf16.msra.mxu0 %v7521
        %7623 = vmatprep.subr.bf16.mxu0 0
        %7624 = vmatpush1.bf16.msra.mxu0 %v7522
        %7625 = vmatprep.subr.bf16.mxu0 0
        %7626 = vmatpush1.bf16.msra.mxu0 %v7523
        %7627 = vmatprep.subr.bf16.mxu0 0
        %7628 = vmatpush1.bf16.msra.mxu0 %v7524
        %7629 = vmatprep.subr.bf16.mxu0 0
        %7630 = vmatpush1.bf16.msra.mxu0 %v7525
        %7631 = vmatprep.subr.bf16.mxu0 0
        %7632 = vmatpush1.bf16.msra.mxu0 0
        %7633 = vmatprep.subr.bf16.mxu0 0
        %7634 = vmatpush1.bf16.msra.mxu0 0
        %7635 = vmatprep.subr.bf16.mxu0 0
        %7636 = vmatpush1.bf16.msra.mxu0 0
        %7637 = vmatprep.subr.bf16.mxu0 0
        %7638 = vmatpush1.bf16.msra.mxu0 0
        %7639 = vmatprep.subr.bf16.mxu0 0
        %7640 = vmatpush1.bf16.msra.mxu0 0
        %7641 = vmatprep.subr.bf16.mxu0 0
        %7642 = vmatpush1.bf16.msra.mxu0 0
        %7643 = vmatprep.subr.bf16.mxu0 0
        %7644 = vmatpush1.bf16.msra.mxu0 0
        %7645 = vmatprep.subr.bf16.mxu0 0
        %7646 = vmatpush1.bf16.msra.mxu0 0
        %7647 = vmatprep.mubr.bf16.mxu0 0
        %7648 = vmatmul.mubr.bf16.gmra.mrb[0].mxu0 %v7607
        %v7649 = vpop.f32.mrb[0].mxu0
        %v7650 = vadd.f32 %v7569, %v7649
        %v7651 = vpop.f32.mrb[0].mxu0
        %v7652 = vpop.f32.mrb[0].mxu0
        %v7653 = vadd.f32 %v7572, %v7652
        %v7654 = vpop.f32.mrb[0].mxu0
        %7655 = vmatprep.mubr.bf16.mxu0 0
        %7656 = vmatmul.mubr.bf16.gmra.mrb[0].mxu0 %v7608
        %v7657 = vpop.f32.mrb[0].mxu0
        %v7658 = vadd.f32 %v7577, %v7657
        %v7659 = vpop.f32.mrb[0].mxu0
        %v7660 = vpop.f32.mrb[0].mxu0
        %v7661 = vadd.f32 %v7580, %v7660
        %v7662 = vpop.f32.mrb[0].mxu0
        %7663 = vmatprep.mubr.bf16.mxu0 0
        %7664 = vmatmul.mubr.bf16.gmra.mrb[0].mxu0 %v7609
        %v7665 = vpop.f32.mrb[0].mxu0
        %v7666 = vadd.f32 %v7585, %v7665
        %v7667 = vpop.f32.mrb[0].mxu0
        %v7668 = vpop.f32.mrb[0].mxu0
        %v7669 = vadd.f32 %v7588, %v7668
        %v7670 = vpop.f32.mrb[0].mxu0
        %7671 = vmatprep.mubr.bf16.mxu0 0
        %7672 = vmatmul.mubr.bf16.gmra.mrb[0].mxu0 %v7610
        %v7673 = vpop.f32.mrb[0].mxu0
        %v7674 = vadd.f32 %v7593, %v7673
        %v7675 = vpop.f32.mrb[0].mxu0
        %v7676 = vpop.f32.mrb[0].mxu0
        %v7677 = vadd.f32 %v7596, %v7676
        %v7678 = vpop.f32.mrb[0].mxu0
        %7679 = vdwg.mxu0
        %v7696 = vunpack.c.l.b16 %v7454
        %v7697 = vunpack.c.l.b16 %v7455
        %v7698 = vunpack.c.l.b16 %v7456
        %v7699 = vunpack.c.l.b16 %v7457
        %v7700 = vunpack.c.l.b16 %v7458
        %v7701 = vunpack.c.l.b16 %v7459
        %v7702 = vunpack.c.l.b16 %v7460
        %v7703 = vunpack.c.l.b16 %v7461
        %v7704 = vunpack.c.l.b16 %v7462
        %v7705 = vunpack.c.l.b16 %v7463
        %v7706 = vunpack.c.l.b16 %v7464
        %v7707 = vunpack.c.l.b16 %v7465
        %v7708 = vunpack.c.l.b16 %v7466
        %v7709 = vunpack.c.l.b16 %v7467
        %v7710 = vunpack.c.l.b16 %v7468
        %v7711 = vunpack.c.l.b16 %v7469
        %v7712 = vpack.c.b16 %v7697, %v7696
        %v7713 = vpack.c.b16 %v7699, %v7698
        %v7714 = vpack.c.b16 %v7701, %v7700
        %v7715 = vpack.c.b16 %v7703, %v7702
        %v7716 = vpack.c.b16 %v7705, %v7704
        %v7717 = vpack.c.b16 %v7707, %v7706
        %v7718 = vpack.c.b16 %v7709, %v7708
        %v7719 = vpack.c.b16 %v7711, %v7710
        %7728 = vmatprep.subr.bf16.mxu0 0
        %7729 = vmatpush1.bf16.msra.mxu0 %v7712
        %7730 = vmatprep.subr.bf16.mxu0 0
        %7731 = vmatpush1.bf16.msra.mxu0 %v7713
        %7732 = vmatprep.subr.bf16.mxu0 0
        %7733 = vmatpush1.bf16.msra.mxu0 %v7714
        %7734 = vmatprep.subr.bf16.mxu0 0
        %7735 = vmatpush1.bf16.msra.mxu0 %v7715
        %7736 = vmatprep.subr.bf16.mxu0 0
        %7737 = vmatpush1.bf16.msra.mxu0 %v7716
        %7738 = vmatprep.subr.bf16.mxu0 0
        %7739 = vmatpush1.bf16.msra.mxu0 %v7717
        %7740 = vmatprep.subr.bf16.mxu0 0
        %7741 = vmatpush1.bf16.msra.mxu0 %v7718
        %7742 = vmatprep.subr.bf16.mxu0 0
        %7743 = vmatpush1.bf16.msra.mxu0 %v7719
        %7744 = vmatprep.subr.bf16.mxu0 0
        %7745 = vmatpush1.bf16.msra.mxu0 0
        %7746 = vmatprep.subr.bf16.mxu0 0
        %7747 = vmatpush1.bf16.msra.mxu0 0
        %7748 = vmatprep.subr.bf16.mxu0 0
        %7749 = vmatpush1.bf16.msra.mxu0 0
        %7750 = vmatprep.subr.bf16.mxu0 0
        %7751 = vmatpush1.bf16.msra.mxu0 0
        %7752 = vmatprep.subr.bf16.mxu0 0
        %7753 = vmatpush1.bf16.msra.mxu0 0
        %7754 = vmatprep.subr.bf16.mxu0 0
        %7755 = vmatpush1.bf16.msra.mxu0 0
        %7756 = vmatprep.subr.bf16.mxu0 0
        %7757 = vmatpush1.bf16.msra.mxu0 0
        %7758 = vmatprep.subr.bf16.mxu0 0
        %7759 = vmatpush1.bf16.msra.mxu0 0
        %7760 = vmatprep.mubr.bf16.mxu0 0
        %7761 = vmatmul.mubr.bf16.gmra.mrb[0].mxu0 %v7607
        %v7762 = vpop.f32.mrb[0].mxu0
        %v7763 = vadd.f32 0.0, %v7762
        %v7764 = vpop.f32.mrb[0].mxu0
        %v7765 = vpop.f32.mrb[0].mxu0
        %v7766 = vadd.f32 0.0, %v7765
        %v7767 = vpop.f32.mrb[0].mxu0
        %7768 = vmatprep.mubr.bf16.mxu0 0
        %7769 = vmatmul.mubr.bf16.gmra.mrb[0].mxu0 %v7608
        %v7770 = vpop.f32.mrb[0].mxu0
        %v7771 = vadd.f32 0.0, %v7770
        %v7772 = vpop.f32.mrb[0].mxu0
        %v7773 = vpop.f32.mrb[0].mxu0
        %v7774 = vadd.f32 0.0, %v7773
        %v7775 = vpop.f32.mrb[0].mxu0
        %7776 = vmatprep.mubr.bf16.mxu0 0
        %7777 = vmatmul.mubr.bf16.gmra.mrb[0].mxu0 %v7609
        %v7778 = vpop.f32.mrb[0].mxu0
        %v7779 = vadd.f32 0.0, %v7778
        %v7780 = vpop.f32.mrb[0].mxu0
        %v7781 = vpop.f32.mrb[0].mxu0
        %v7782 = vadd.f32 0.0, %v7781
        %v7783 = vpop.f32.mrb[0].mxu0
        %7784 = vmatprep.mubr.bf16.mxu0 0
        %7785 = vmatmul.mubr.bf16.gmra.mrb[0].mxu0 %v7610
        %v7786 = vpop.f32.mrb[0].mxu0
        %v7787 = vadd.f32 0.0, %v7786
        %v7788 = vpop.f32.mrb[0].mxu0
        %v7789 = vpop.f32.mrb[0].mxu0
        %v7790 = vadd.f32 0.0, %v7789
        %v7791 = vpop.f32.mrb[0].mxu0
        %7792 = vdwg.mxu0
        %v7793 = vadd.f32 %v7650, %v7763
        %v7794 = vadd.f32 %v7653, %v7766
        %v7795 = vadd.f32 %v7658, %v7771
        %v7796 = vadd.f32 %v7661, %v7774
        %v7797 = vadd.f32 %v7666, %v7779
        %v7798 = vadd.f32 %v7669, %v7782
        %v7799 = vadd.f32 %v7674, %v7787
        %v7800 = vadd.f32 %v7677, %v7790
        %v7801 = vadd.f32 %v7268, %v7793
        %v7802 = vadd.f32 %v7269, %v7794
        %v7803 = vadd.f32 %v7270, %v7795
        %v7804 = vadd.f32 %v7271, %v7796
        %v7805 = vadd.f32 %v7272, %v7797
        %v7806 = vadd.f32 %v7273, %v7798
        %v7807 = vadd.f32 %v7274, %v7799
        %v7808 = vadd.f32 %v7275, %v7800
        %s7809 = scalar_lea.vmem [#allocation3], 16
        %v7810 = vld [vmem:[%s7809] sm:$0xf]
        %v7811 = vld [vmem:[%s7809 + $0x8] sm:$0xf]
        %v7812 = vld [vmem:[%s7809 + $0x10] sm:$0xf]
        %v7813 = vld [vmem:[%s7809 + $0x18] sm:$0xf]
        %v7814 = vld [vmem:[%s7809 + $0x20] sm:$0xf]
        %v7815 = vld [vmem:[%s7809 + $0x28] sm:$0xf]
        %v7816 = vld [vmem:[%s7809 + $0x30] sm:$0xf]
        %v7817 = vld [vmem:[%s7809 + $0x38] sm:$0xf]
        %s7818 = scalar_lea.vmem [#allocation4], 16
        %v7819 = vld [vmem:[%s7818] sm:$0xf]
        %v7820 = vld [vmem:[%s7818 + $0x8] sm:$0xf]
        %v7821 = vld [vmem:[%s7818 + $0x10] sm:$0xf]
        %v7822 = vld [vmem:[%s7818 + $0x18] sm:$0xf]
        %v7823 = vld [vmem:[%s7818 + $0x20] sm:$0xf]
        %v7824 = vld [vmem:[%s7818 + $0x28] sm:$0xf]
        %v7825 = vld [vmem:[%s7818 + $0x30] sm:$0xf]
        %v7826 = vld [vmem:[%s7818 + $0x38] sm:$0xf]
        %s7827 = scalar_lea.vmem %s4, 384
        %v7828 = vld [vmem:[%s7827] sm:$0xf]
        %v7829 = vld [vmem:[%s7827 + $0x4] sm:$0xf]
        %v7830 = vld [vmem:[%s7827 + $0x8] sm:$0xf]
        %v7831 = vld [vmem:[%s7827 + $0xc] sm:$0xf]
        %v7832 = vld [vmem:[%s7827 + $0x10] sm:$0xf]
        %v7833 = vld [vmem:[%s7827 + $0x14] sm:$0xf]
        %v7834 = vld [vmem:[%s7827 + $0x18] sm:$0xf]
        %v7835 = vld [vmem:[%s7827 + $0x1c] sm:$0xf]
        %v7836 = vld [vmem:[%s7827 + $0x20] sm:$0xf]
        %v7837 = vld [vmem:[%s7827 + $0x24] sm:$0xf]
        %v7838 = vld [vmem:[%s7827 + $0x28] sm:$0xf]
        %v7839 = vld [vmem:[%s7827 + $0x2c] sm:$0xf]
        %v7840 = vld [vmem:[%s7827 + $0x30] sm:$0xf]
        %v7841 = vld [vmem:[%s7827 + $0x34] sm:$0xf]
        %v7842 = vld [vmem:[%s7827 + $0x38] sm:$0xf]
        %v7843 = vld [vmem:[%s7827 + $0x3c] sm:$0xf]
        %s7844 = scalar_lea.vmem %s5, 384
        %v7845 = vld [vmem:[%s7844] sm:$0xf]
        %v7846 = vld [vmem:[%s7844 + $0x4] sm:$0xf]
        %v7847 = vld [vmem:[%s7844 + $0x8] sm:$0xf]
        %v7848 = vld [vmem:[%s7844 + $0xc] sm:$0xf]
        %v7849 = vld [vmem:[%s7844 + $0x10] sm:$0xf]
        %v7850 = vld [vmem:[%s7844 + $0x14] sm:$0xf]
        %v7851 = vld [vmem:[%s7844 + $0x18] sm:$0xf]
        %v7852 = vld [vmem:[%s7844 + $0x1c] sm:$0xf]
        %v7853 = vld [vmem:[%s7844 + $0x20] sm:$0xf]
        %v7854 = vld [vmem:[%s7844 + $0x24] sm:$0xf]
        %v7855 = vld [vmem:[%s7844 + $0x28] sm:$0xf]
        %v7856 = vld [vmem:[%s7844 + $0x2c] sm:$0xf]
        %v7857 = vld [vmem:[%s7844 + $0x30] sm:$0xf]
        %v7858 = vld [vmem:[%s7844 + $0x34] sm:$0xf]
        %v7859 = vld [vmem:[%s7844 + $0x38] sm:$0xf]
        %v7860 = vld [vmem:[%s7844 + $0x3c] sm:$0xf]
        %v7869 = vunpack.c.l.b16 %v7819
        %v7870 = vunpack.c.l.b16 %v7820
        %v7871 = vunpack.c.l.b16 %v7821
        %v7872 = vunpack.c.l.b16 %v7822
        %v7873 = vunpack.c.l.b16 %v7823
        %v7874 = vunpack.c.l.b16 %v7824
        %v7875 = vunpack.c.l.b16 %v7825
        %v7876 = vunpack.c.l.b16 %v7826
        %v7877 = vpack.c.b16 %v7870, %v7869
        %v7878 = vpack.c.b16 %v7872, %v7871
        %v7879 = vpack.c.b16 %v7874, %v7873
        %v7880 = vpack.c.b16 %v7876, %v7875
        %v7901 = vunpack.c.l.b16 %v7828
        %v7902 = vunpack.c.l.b16 %v7829
        %v7903 = vunpack.c.l.b16 %v7830
        %v7904 = vunpack.c.l.b16 %v7831
        %v7905 = vunpack.c.l.b16 %v7832
        %v7906 = vunpack.c.l.b16 %v7833
        %v7907 = vunpack.c.l.b16 %v7834
        %v7908 = vunpack.c.l.b16 %v7835
        %v7909 = vunpack.c.l.b16 %v7836
        %v7910 = vunpack.c.l.b16 %v7837
        %v7911 = vunpack.c.l.b16 %v7838
        %v7912 = vunpack.c.l.b16 %v7839
        %v7913 = vunpack.c.l.b16 %v7840
        %v7914 = vunpack.c.l.b16 %v7841
        %v7915 = vunpack.c.l.b16 %v7842
        %v7916 = vunpack.c.l.b16 %v7843
        %v7917 = vpack.c.b16 %v7902, %v7901
        %v7918 = vpack.c.b16 %v7904, %v7903
        %v7919 = vpack.c.b16 %v7906, %v7905
        %v7920 = vpack.c.b16 %v7908, %v7907
        %v7921 = vpack.c.b16 %v7910, %v7909
        %v7922 = vpack.c.b16 %v7912, %v7911
        %v7923 = vpack.c.b16 %v7914, %v7913
        %v7924 = vpack.c.b16 %v7916, %v7915
        %7933 = vmatprep.subr.bf16.mxu0 0
        %7934 = vmatpush1.bf16.msra.mxu0 %v7917
        %7935 = vmatprep.subr.bf16.mxu0 0
        %7936 = vmatpush1.bf16.msra.mxu0 %v7918
        %7937 = vmatprep.subr.bf16.mxu0 0
        %7938 = vmatpush1.bf16.msra.mxu0 %v7919
        %7939 = vmatprep.subr.bf16.mxu0 0
        %7940 = vmatpush1.bf16.msra.mxu0 %v7920
        %7941 = vmatprep.subr.bf16.mxu0 0
        %7942 = vmatpush1.bf16.msra.mxu0 %v7921
        %7943 = vmatprep.subr.bf16.mxu0 0
        %7944 = vmatpush1.bf16.msra.mxu0 %v7922
        %7945 = vmatprep.subr.bf16.mxu0 0
        %7946 = vmatpush1.bf16.msra.mxu0 %v7923
        %7947 = vmatprep.subr.bf16.mxu0 0
        %7948 = vmatpush1.bf16.msra.mxu0 %v7924
        %7949 = vmatprep.subr.bf16.mxu0 0
        %7950 = vmatpush1.bf16.msra.mxu0 0
        %7951 = vmatprep.subr.bf16.mxu0 0
        %7952 = vmatpush1.bf16.msra.mxu0 0
        %7953 = vmatprep.subr.bf16.mxu0 0
        %7954 = vmatpush1.bf16.msra.mxu0 0
        %7955 = vmatprep.subr.bf16.mxu0 0
        %7956 = vmatpush1.bf16.msra.mxu0 0
        %7957 = vmatprep.subr.bf16.mxu0 0
        %7958 = vmatpush1.bf16.msra.mxu0 0
        %7959 = vmatprep.subr.bf16.mxu0 0
        %7960 = vmatpush1.bf16.msra.mxu0 0
        %7961 = vmatprep.subr.bf16.mxu0 0
        %7962 = vmatpush1.bf16.msra.mxu0 0
        %7963 = vmatprep.subr.bf16.mxu0 0
        %7964 = vmatpush1.bf16.msra.mxu0 0
        %7965 = vmatprep.mubr.bf16.mxu0 0
        %7966 = vmatmul.mubr.bf16.gmra.mrb[0].mxu0 %v7877
        %v7967 = vpop.f32.mrb[0].mxu0
        %v7968 = vadd.f32 0.0, %v7967
        %v7969 = vpop.f32.mrb[0].mxu0
        %v7970 = vpop.f32.mrb[0].mxu0
        %v7971 = vadd.f32 0.0, %v7970
        %v7972 = vpop.f32.mrb[0].mxu0
        %7973 = vmatprep.mubr.bf16.mxu0 0
        %7974 = vmatmul.mubr.bf16.gmra.mrb[0].mxu0 %v7878
        %v7975 = vpop.f32.mrb[0].mxu0
        %v7976 = vadd.f32 0.0, %v7975
        %v7977 = vpop.f32.mrb[0].mxu0
        %v7978 = vpop.f32.mrb[0].mxu0
        %v7979 = vadd.f32 0.0, %v7978
        %v7980 = vpop.f32.mrb[0].mxu0
        %7981 = vmatprep.mubr.bf16.mxu0 0
        %7982 = vmatmul.mubr.bf16.gmra.mrb[0].mxu0 %v7879
        %v7983 = vpop.f32.mrb[0].mxu0
        %v7984 = vadd.f32 0.0, %v7983
        %v7985 = vpop.f32.mrb[0].mxu0
        %v7986 = vpop.f32.mrb[0].mxu0
        %v7987 = vadd.f32 0.0, %v7986
        %v7988 = vpop.f32.mrb[0].mxu0
        %7989 = vmatprep.mubr.bf16.mxu0 0
        %7990 = vmatmul.mubr.bf16.gmra.mrb[0].mxu0 %v7880
        %v7991 = vpop.f32.mrb[0].mxu0
        %v7992 = vadd.f32 0.0, %v7991
        %v7993 = vpop.f32.mrb[0].mxu0
        %v7994 = vpop.f32.mrb[0].mxu0
        %v7995 = vadd.f32 0.0, %v7994
        %v7996 = vpop.f32.mrb[0].mxu0
        %7997 = vdwg.mxu0
        %v8006 = vunpack.c.l.b16 %v7810
        %v8007 = vunpack.c.l.b16 %v7811
        %v8008 = vunpack.c.l.b16 %v7812
        %v8009 = vunpack.c.l.b16 %v7813
        %v8010 = vunpack.c.l.b16 %v7814
        %v8011 = vunpack.c.l.b16 %v7815
        %v8012 = vunpack.c.l.b16 %v7816
        %v8013 = vunpack.c.l.b16 %v7817
        %v8014 = vpack.c.b16 %v8007, %v8006
        %v8015 = vpack.c.b16 %v8009, %v8008
        %v8016 = vpack.c.b16 %v8011, %v8010
        %v8017 = vpack.c.b16 %v8013, %v8012
        %8022 = vmatprep.subr.bf16.mxu0 0
        %8023 = vmatpush1.bf16.msra.mxu0 %v7917
        %8024 = vmatprep.subr.bf16.mxu0 0
        %8025 = vmatpush1.bf16.msra.mxu0 %v7918
        %8026 = vmatprep.subr.bf16.mxu0 0
        %8027 = vmatpush1.bf16.msra.mxu0 %v7919
        %8028 = vmatprep.subr.bf16.mxu0 0
        %8029 = vmatpush1.bf16.msra.mxu0 %v7920
        %8030 = vmatprep.subr.bf16.mxu0 0
        %8031 = vmatpush1.bf16.msra.mxu0 %v7921
        %8032 = vmatprep.subr.bf16.mxu0 0
        %8033 = vmatpush1.bf16.msra.mxu0 %v7922
        %8034 = vmatprep.subr.bf16.mxu0 0
        %8035 = vmatpush1.bf16.msra.mxu0 %v7923
        %8036 = vmatprep.subr.bf16.mxu0 0
        %8037 = vmatpush1.bf16.msra.mxu0 %v7924
        %8038 = vmatprep.subr.bf16.mxu0 0
        %8039 = vmatpush1.bf16.msra.mxu0 0
        %8040 = vmatprep.subr.bf16.mxu0 0
        %8041 = vmatpush1.bf16.msra.mxu0 0
        %8042 = vmatprep.subr.bf16.mxu0 0
        %8043 = vmatpush1.bf16.msra.mxu0 0
        %8044 = vmatprep.subr.bf16.mxu0 0
        %8045 = vmatpush1.bf16.msra.mxu0 0
        %8046 = vmatprep.subr.bf16.mxu0 0
        %8047 = vmatpush1.bf16.msra.mxu0 0
        %8048 = vmatprep.subr.bf16.mxu0 0
        %8049 = vmatpush1.bf16.msra.mxu0 0
        %8050 = vmatprep.subr.bf16.mxu0 0
        %8051 = vmatpush1.bf16.msra.mxu0 0
        %8052 = vmatprep.subr.bf16.mxu0 0
        %8053 = vmatpush1.bf16.msra.mxu0 0
        %8054 = vmatprep.mubr.bf16.mxu0 0
        %8055 = vmatmul.mubr.bf16.gmra.mrb[0].mxu0 %v8014
        %v8056 = vpop.f32.mrb[0].mxu0
        %v8057 = vadd.f32 %v7968, %v8056
        %v8058 = vpop.f32.mrb[0].mxu0
        %v8059 = vpop.f32.mrb[0].mxu0
        %v8060 = vadd.f32 %v7971, %v8059
        %v8061 = vpop.f32.mrb[0].mxu0
        %8062 = vmatprep.mubr.bf16.mxu0 0
        %8063 = vmatmul.mubr.bf16.gmra.mrb[0].mxu0 %v8015
        %v8064 = vpop.f32.mrb[0].mxu0
        %v8065 = vadd.f32 %v7976, %v8064
        %v8066 = vpop.f32.mrb[0].mxu0
        %v8067 = vpop.f32.mrb[0].mxu0
        %v8068 = vadd.f32 %v7979, %v8067
        %v8069 = vpop.f32.mrb[0].mxu0
        %8070 = vmatprep.mubr.bf16.mxu0 0
        %8071 = vmatmul.mubr.bf16.gmra.mrb[0].mxu0 %v8016
        %v8072 = vpop.f32.mrb[0].mxu0
        %v8073 = vadd.f32 %v7984, %v8072
        %v8074 = vpop.f32.mrb[0].mxu0
        %v8075 = vpop.f32.mrb[0].mxu0
        %v8076 = vadd.f32 %v7987, %v8075
        %v8077 = vpop.f32.mrb[0].mxu0
        %8078 = vmatprep.mubr.bf16.mxu0 0
        %8079 = vmatmul.mubr.bf16.gmra.mrb[0].mxu0 %v8017
        %v8080 = vpop.f32.mrb[0].mxu0
        %v8081 = vadd.f32 %v7992, %v8080
        %v8082 = vpop.f32.mrb[0].mxu0
        %v8083 = vpop.f32.mrb[0].mxu0
        %v8084 = vadd.f32 %v7995, %v8083
        %v8085 = vpop.f32.mrb[0].mxu0
        %8086 = vdwg.mxu0
        %v8103 = vunpack.c.l.b16 %v7845
        %v8104 = vunpack.c.l.b16 %v7846
        %v8105 = vunpack.c.l.b16 %v7847
        %v8106 = vunpack.c.l.b16 %v7848
        %v8107 = vunpack.c.l.b16 %v7849
        %v8108 = vunpack.c.l.b16 %v7850
        %v8109 = vunpack.c.l.b16 %v7851
        %v8110 = vunpack.c.l.b16 %v7852
        %v8111 = vunpack.c.l.b16 %v7853
        %v8112 = vunpack.c.l.b16 %v7854
        %v8113 = vunpack.c.l.b16 %v7855
        %v8114 = vunpack.c.l.b16 %v7856
        %v8115 = vunpack.c.l.b16 %v7857
        %v8116 = vunpack.c.l.b16 %v7858
        %v8117 = vunpack.c.l.b16 %v7859
        %v8118 = vunpack.c.l.b16 %v7860
        %v8119 = vpack.c.b16 %v8104, %v8103
        %v8120 = vpack.c.b16 %v8106, %v8105
        %v8121 = vpack.c.b16 %v8108, %v8107
        %v8122 = vpack.c.b16 %v8110, %v8109
        %v8123 = vpack.c.b16 %v8112, %v8111
        %v8124 = vpack.c.b16 %v8114, %v8113
        %v8125 = vpack.c.b16 %v8116, %v8115
        %v8126 = vpack.c.b16 %v8118, %v8117
        %8135 = vmatprep.subr.bf16.mxu0 0
        %8136 = vmatpush1.bf16.msra.mxu0 %v8119
        %8137 = vmatprep.subr.bf16.mxu0 0
        %8138 = vmatpush1.bf16.msra.mxu0 %v8120
        %8139 = vmatprep.subr.bf16.mxu0 0
        %8140 = vmatpush1.bf16.msra.mxu0 %v8121
        %8141 = vmatprep.subr.bf16.mxu0 0
        %8142 = vmatpush1.bf16.msra.mxu0 %v8122
        %8143 = vmatprep.subr.bf16.mxu0 0
        %8144 = vmatpush1.bf16.msra.mxu0 %v8123
        %8145 = vmatprep.subr.bf16.mxu0 0
        %8146 = vmatpush1.bf16.msra.mxu0 %v8124
        %8147 = vmatprep.subr.bf16.mxu0 0
        %8148 = vmatpush1.bf16.msra.mxu0 %v8125
        %8149 = vmatprep.subr.bf16.mxu0 0
        %8150 = vmatpush1.bf16.msra.mxu0 %v8126
        %8151 = vmatprep.subr.bf16.mxu0 0
        %8152 = vmatpush1.bf16.msra.mxu0 0
        %8153 = vmatprep.subr.bf16.mxu0 0
        %8154 = vmatpush1.bf16.msra.mxu0 0
        %8155 = vmatprep.subr.bf16.mxu0 0
        %8156 = vmatpush1.bf16.msra.mxu0 0
        %8157 = vmatprep.subr.bf16.mxu0 0
        %8158 = vmatpush1.bf16.msra.mxu0 0
        %8159 = vmatprep.subr.bf16.mxu0 0
        %8160 = vmatpush1.bf16.msra.mxu0 0
        %8161 = vmatprep.subr.bf16.mxu0 0
        %8162 = vmatpush1.bf16.msra.mxu0 0
        %8163 = vmatprep.subr.bf16.mxu0 0
        %8164 = vmatpush1.bf16.msra.mxu0 0
        %8165 = vmatprep.subr.bf16.mxu0 0
        %8166 = vmatpush1.bf16.msra.mxu0 0
        %8167 = vmatprep.mubr.bf16.mxu0 0
        %8168 = vmatmul.mubr.bf16.gmra.mrb[0].mxu0 %v8014
        %v8169 = vpop.f32.mrb[0].mxu0
        %v8170 = vadd.f32 0.0, %v8169
        %v8171 = vpop.f32.mrb[0].mxu0
        %v8172 = vpop.f32.mrb[0].mxu0
        %v8173 = vadd.f32 0.0, %v8172
        %v8174 = vpop.f32.mrb[0].mxu0
        %8175 = vmatprep.mubr.bf16.mxu0 0
        %8176 = vmatmul.mubr.bf16.gmra.mrb[0].mxu0 %v8015
        %v8177 = vpop.f32.mrb[0].mxu0
        %v8178 = vadd.f32 0.0, %v8177
        %v8179 = vpop.f32.mrb[0].mxu0
        %v8180 = vpop.f32.mrb[0].mxu0
        %v8181 = vadd.f32 0.0, %v8180
        %v8182 = vpop.f32.mrb[0].mxu0
        %8183 = vmatprep.mubr.bf16.mxu0 0
        %8184 = vmatmul.mubr.bf16.gmra.mrb[0].mxu0 %v8016
        %v8185 = vpop.f32.mrb[0].mxu0
        %v8186 = vadd.f32 0.0, %v8185
        %v8187 = vpop.f32.mrb[0].mxu0
        %v8188 = vpop.f32.mrb[0].mxu0
        %v8189 = vadd.f32 0.0, %v8188
        %v8190 = vpop.f32.mrb[0].mxu0
        %8191 = vmatprep.mubr.bf16.mxu0 0
        %8192 = vmatmul.mubr.bf16.gmra.mrb[0].mxu0 %v8017
        %v8193 = vpop.f32.mrb[0].mxu0
        %v8194 = vadd.f32 0.0, %v8193
        %v8195 = vpop.f32.mrb[0].mxu0
        %v8196 = vpop.f32.mrb[0].mxu0
        %v8197 = vadd.f32 0.0, %v8196
        %v8198 = vpop.f32.mrb[0].mxu0
        %8199 = vdwg.mxu0
        %v8200 = vadd.f32 %v8057, %v8170
        %v8201 = vadd.f32 %v8060, %v8173
        %v8202 = vadd.f32 %v8065, %v8178
        %v8203 = vadd.f32 %v8068, %v8181
        %v8204 = vadd.f32 %v8073, %v8186
        %v8205 = vadd.f32 %v8076, %v8189
        %v8206 = vadd.f32 %v8081, %v8194
        %v8207 = vadd.f32 %v8084, %v8197
        %v8208 = vadd.f32 %v7801, %v8200
        %v8209 = vadd.f32 %v7802, %v8201
        %v8210 = vadd.f32 %v7803, %v8202
        %v8211 = vadd.f32 %v7804, %v8203
        %v8212 = vadd.f32 %v7805, %v8204
        %v8213 = vadd.f32 %v7806, %v8205
        %v8214 = vadd.f32 %v7807, %v8206
        %v8215 = vadd.f32 %v7808, %v8207
        %v8216 = vld [vmem:[%s7809] sm:$0x1f]
        %v8217 = vld [vmem:[%s7809 + $0x8] sm:$0x1f]
        %v8218 = vld [vmem:[%s7809 + $0x10] sm:$0x1f]
        %v8219 = vld [vmem:[%s7809 + $0x18] sm:$0x1f]
        %v8220 = vld [vmem:[%s7809 + $0x20] sm:$0x1f]
        %v8221 = vld [vmem:[%s7809 + $0x28] sm:$0x1f]
        %v8222 = vld [vmem:[%s7809 + $0x30] sm:$0x1f]
        %v8223 = vld [vmem:[%s7809 + $0x38] sm:$0x1f]
        %v8232 = vunpack.c.l.b16 %v8216
        %v8233 = vunpack.c.h.b16 %v8216
        %v8234 = vunpack.c.l.b16 %v8217
        %v8235 = vunpack.c.h.b16 %v8217
        %v8236 = vunpack.c.l.b16 %v8218
        %v8237 = vunpack.c.h.b16 %v8218
        %v8238 = vunpack.c.l.b16 %v8219
        %v8239 = vunpack.c.h.b16 %v8219
        %v8240 = vunpack.c.l.b16 %v8220
        %v8241 = vunpack.c.h.b16 %v8220
        %v8242 = vunpack.c.l.b16 %v8221
        %v8243 = vunpack.c.h.b16 %v8221
        %v8244 = vunpack.c.l.b16 %v8222
        %v8245 = vunpack.c.h.b16 %v8222
        %v8246 = vunpack.c.l.b16 %v8223
        %v8247 = vunpack.c.h.b16 %v8223
        %v8248 = vpack.c.b16 %v8232, %v8232
        %v8249 = vpack.c.b16 %v8233, %v8233
        %v8250 = vpack.c.b16 %v8234, %v8234
        %v8251 = vpack.c.b16 %v8235, %v8235
        %v8252 = vpack.c.b16 %v8236, %v8236
        %v8253 = vpack.c.b16 %v8237, %v8237
        %v8254 = vpack.c.b16 %v8238, %v8238
        %v8255 = vpack.c.b16 %v8239, %v8239
        %v8256 = vpack.c.b16 %v8240, %v8240
        %v8257 = vpack.c.b16 %v8241, %v8241
        %v8258 = vpack.c.b16 %v8242, %v8242
        %v8259 = vpack.c.b16 %v8243, %v8243
        %v8260 = vpack.c.b16 %v8244, %v8244
        %v8261 = vpack.c.b16 %v8245, %v8245
        %v8262 = vpack.c.b16 %v8246, %v8246
        %v8263 = vpack.c.b16 %v8247, %v8247
        %v8265 = vshrl.u32 %v8248, 16
        %v8267 = vrot.slane %v8265, 4
        %v8268 = vshll.u32 %v8248, 16
        %v8270 = vrot.slane %v8268, 5
        %v8271 = vor.u32 %v8267, %v8270
        %v8272 = vrot.slane %v8271, 4
        %v8274 = vshll.u32 %v8249, 16
        %v8276 = vrot.slane %v8274, 5
        %v8277 = vsel %vm4996, %v8272, %v8276
        %v8279 = vshrl.u32 %v8250, 16
        %v8281 = vrot.slane %v8279, 4
        %v8282 = vshll.u32 %v8250, 16
        %v8284 = vrot.slane %v8282, 5
        %v8285 = vor.u32 %v8281, %v8284
        %v8286 = vrot.slane %v8285, 4
        %v8288 = vshll.u32 %v8251, 16
        %v8290 = vrot.slane %v8288, 5
        %v8291 = vsel %vm4996, %v8286, %v8290
        %v8293 = vshrl.u32 %v8252, 16
        %v8295 = vrot.slane %v8293, 4
        %v8296 = vshll.u32 %v8252, 16
        %v8298 = vrot.slane %v8296, 5
        %v8299 = vor.u32 %v8295, %v8298
        %v8300 = vrot.slane %v8299, 4
        %v8302 = vshll.u32 %v8253, 16
        %v8304 = vrot.slane %v8302, 5
        %v8305 = vsel %vm4996, %v8300, %v8304
        %v8307 = vshrl.u32 %v8254, 16
        %v8309 = vrot.slane %v8307, 4
        %v8310 = vshll.u32 %v8254, 16
        %v8312 = vrot.slane %v8310, 5
        %v8313 = vor.u32 %v8309, %v8312
        %v8314 = vrot.slane %v8313, 4
        %v8316 = vshll.u32 %v8255, 16
        %v8318 = vrot.slane %v8316, 5
        %v8319 = vsel %vm4996, %v8314, %v8318
        %v8321 = vshrl.u32 %v8256, 16
        %v8323 = vrot.slane %v8321, 4
        %v8324 = vshll.u32 %v8256, 16
        %v8326 = vrot.slane %v8324, 5
        %v8327 = vor.u32 %v8323, %v8326
        %v8328 = vrot.slane %v8327, 4
        %v8330 = vshll.u32 %v8257, 16
        %v8332 = vrot.slane %v8330, 5
        %v8333 = vsel %vm4996, %v8328, %v8332
        %v8335 = vshrl.u32 %v8258, 16
        %v8337 = vrot.slane %v8335, 4
        %v8338 = vshll.u32 %v8258, 16
        %v8340 = vrot.slane %v8338, 5
        %v8341 = vor.u32 %v8337, %v8340
        %v8342 = vrot.slane %v8341, 4
        %v8344 = vshll.u32 %v8259, 16
        %v8346 = vrot.slane %v8344, 5
        %v8347 = vsel %vm4996, %v8342, %v8346
        %v8349 = vshrl.u32 %v8260, 16
        %v8351 = vrot.slane %v8349, 4
        %v8352 = vshll.u32 %v8260, 16
        %v8354 = vrot.slane %v8352, 5
        %v8355 = vor.u32 %v8351, %v8354
        %v8356 = vrot.slane %v8355, 4
        %v8358 = vshll.u32 %v8261, 16
        %v8360 = vrot.slane %v8358, 5
        %v8361 = vsel %vm4996, %v8356, %v8360
        %v8363 = vshrl.u32 %v8262, 16
        %v8365 = vrot.slane %v8363, 4
        %v8366 = vshll.u32 %v8262, 16
        %v8368 = vrot.slane %v8366, 5
        %v8369 = vor.u32 %v8365, %v8368
        %v8370 = vrot.slane %v8369, 4
        %v8372 = vshll.u32 %v8263, 16
        %v8374 = vrot.slane %v8372, 5
        %v8375 = vsel %vm4996, %v8370, %v8374
        %v8376 = vld [vmem:[%s7818] sm:$0x1f]
        %v8377 = vld [vmem:[%s7818 + $0x8] sm:$0x1f]
        %v8378 = vld [vmem:[%s7818 + $0x10] sm:$0x1f]
        %v8379 = vld [vmem:[%s7818 + $0x18] sm:$0x1f]
        %v8380 = vld [vmem:[%s7818 + $0x20] sm:$0x1f]
        %v8381 = vld [vmem:[%s7818 + $0x28] sm:$0x1f]
        %v8382 = vld [vmem:[%s7818 + $0x30] sm:$0x1f]
        %v8383 = vld [vmem:[%s7818 + $0x38] sm:$0x1f]
        %v8392 = vunpack.c.l.b16 %v8376
        %v8393 = vunpack.c.h.b16 %v8376
        %v8394 = vunpack.c.l.b16 %v8377
        %v8395 = vunpack.c.h.b16 %v8377
        %v8396 = vunpack.c.l.b16 %v8378
        %v8397 = vunpack.c.h.b16 %v8378
        %v8398 = vunpack.c.l.b16 %v8379
        %v8399 = vunpack.c.h.b16 %v8379
        %v8400 = vunpack.c.l.b16 %v8380
        %v8401 = vunpack.c.h.b16 %v8380
        %v8402 = vunpack.c.l.b16 %v8381
        %v8403 = vunpack.c.h.b16 %v8381
        %v8404 = vunpack.c.l.b16 %v8382
        %v8405 = vunpack.c.h.b16 %v8382
        %v8406 = vunpack.c.l.b16 %v8383
        %v8407 = vunpack.c.h.b16 %v8383
        %v8408 = vpack.c.b16 %v8392, %v8392
        %v8409 = vpack.c.b16 %v8393, %v8393
        %v8410 = vpack.c.b16 %v8394, %v8394
        %v8411 = vpack.c.b16 %v8395, %v8395
        %v8412 = vpack.c.b16 %v8396, %v8396
        %v8413 = vpack.c.b16 %v8397, %v8397
        %v8414 = vpack.c.b16 %v8398, %v8398
        %v8415 = vpack.c.b16 %v8399, %v8399
        %v8416 = vpack.c.b16 %v8400, %v8400
        %v8417 = vpack.c.b16 %v8401, %v8401
        %v8418 = vpack.c.b16 %v8402, %v8402
        %v8419 = vpack.c.b16 %v8403, %v8403
        %v8420 = vpack.c.b16 %v8404, %v8404
        %v8421 = vpack.c.b16 %v8405, %v8405
        %v8422 = vpack.c.b16 %v8406, %v8406
        %v8423 = vpack.c.b16 %v8407, %v8407
        %v8425 = vshrl.u32 %v8408, 16
        %v8427 = vrot.slane %v8425, 4
        %v8428 = vshll.u32 %v8408, 16
        %v8430 = vrot.slane %v8428, 5
        %v8431 = vor.u32 %v8427, %v8430
        %v8432 = vrot.slane %v8431, 4
        %v8434 = vshll.u32 %v8409, 16
        %v8436 = vrot.slane %v8434, 5
        %v8437 = vsel %vm4996, %v8432, %v8436
        %v8439 = vshrl.u32 %v8410, 16
        %v8441 = vrot.slane %v8439, 4
        %v8442 = vshll.u32 %v8410, 16
        %v8444 = vrot.slane %v8442, 5
        %v8445 = vor.u32 %v8441, %v8444
        %v8446 = vrot.slane %v8445, 4
        %v8448 = vshll.u32 %v8411, 16
        %v8450 = vrot.slane %v8448, 5
        %v8451 = vsel %vm4996, %v8446, %v8450
        %v8453 = vshrl.u32 %v8412, 16
        %v8455 = vrot.slane %v8453, 4
        %v8456 = vshll.u32 %v8412, 16
        %v8458 = vrot.slane %v8456, 5
        %v8459 = vor.u32 %v8455, %v8458
        %v8460 = vrot.slane %v8459, 4
        %v8462 = vshll.u32 %v8413, 16
        %v8464 = vrot.slane %v8462, 5
        %v8465 = vsel %vm4996, %v8460, %v8464
        %v8467 = vshrl.u32 %v8414, 16
        %v8469 = vrot.slane %v8467, 4
        %v8470 = vshll.u32 %v8414, 16
        %v8472 = vrot.slane %v8470, 5
        %v8473 = vor.u32 %v8469, %v8472
        %v8474 = vrot.slane %v8473, 4
        %v8476 = vshll.u32 %v8415, 16
        %v8478 = vrot.slane %v8476, 5
        %v8479 = vsel %vm4996, %v8474, %v8478
        %v8481 = vshrl.u32 %v8416, 16
        %v8483 = vrot.slane %v8481, 4
        %v8484 = vshll.u32 %v8416, 16
        %v8486 = vrot.slane %v8484, 5
        %v8487 = vor.u32 %v8483, %v8486
        %v8488 = vrot.slane %v8487, 4
        %v8490 = vshll.u32 %v8417, 16
        %v8492 = vrot.slane %v8490, 5
        %v8493 = vsel %vm4996, %v8488, %v8492
        %v8495 = vshrl.u32 %v8418, 16
        %v8497 = vrot.slane %v8495, 4
        %v8498 = vshll.u32 %v8418, 16
        %v8500 = vrot.slane %v8498, 5
        %v8501 = vor.u32 %v8497, %v8500
        %v8502 = vrot.slane %v8501, 4
        %v8504 = vshll.u32 %v8419, 16
        %v8506 = vrot.slane %v8504, 5
        %v8507 = vsel %vm4996, %v8502, %v8506
        %v8509 = vshrl.u32 %v8420, 16
        %v8511 = vrot.slane %v8509, 4
        %v8512 = vshll.u32 %v8420, 16
        %v8514 = vrot.slane %v8512, 5
        %v8515 = vor.u32 %v8511, %v8514
        %v8516 = vrot.slane %v8515, 4
        %v8518 = vshll.u32 %v8421, 16
        %v8520 = vrot.slane %v8518, 5
        %v8521 = vsel %vm4996, %v8516, %v8520
        %v8523 = vshrl.u32 %v8422, 16
        %v8525 = vrot.slane %v8523, 4
        %v8526 = vshll.u32 %v8422, 16
        %v8528 = vrot.slane %v8526, 5
        %v8529 = vor.u32 %v8525, %v8528
        %v8530 = vrot.slane %v8529, 4
        %v8532 = vshll.u32 %v8423, 16
        %v8534 = vrot.slane %v8532, 5
        %v8535 = vsel %vm4996, %v8530, %v8534
        %s8536 = scalar_lea.vmem %s4, 448
        %v8537 = vld [vmem:[%s8536] sm:$0xf]
        %v8538 = vld [vmem:[%s8536 + $0x4] sm:$0xf]
        %v8539 = vld [vmem:[%s8536 + $0x8] sm:$0xf]
        %v8540 = vld [vmem:[%s8536 + $0xc] sm:$0xf]
        %v8541 = vld [vmem:[%s8536 + $0x10] sm:$0xf]
        %v8542 = vld [vmem:[%s8536 + $0x14] sm:$0xf]
        %v8543 = vld [vmem:[%s8536 + $0x18] sm:$0xf]
        %v8544 = vld [vmem:[%s8536 + $0x1c] sm:$0xf]
        %v8545 = vld [vmem:[%s8536 + $0x20] sm:$0xf]
        %v8546 = vld [vmem:[%s8536 + $0x24] sm:$0xf]
        %v8547 = vld [vmem:[%s8536 + $0x28] sm:$0xf]
        %v8548 = vld [vmem:[%s8536 + $0x2c] sm:$0xf]
        %v8549 = vld [vmem:[%s8536 + $0x30] sm:$0xf]
        %v8550 = vld [vmem:[%s8536 + $0x34] sm:$0xf]
        %v8551 = vld [vmem:[%s8536 + $0x38] sm:$0xf]
        %v8552 = vld [vmem:[%s8536 + $0x3c] sm:$0xf]
        %s8553 = scalar_lea.vmem %s5, 448
        %v8554 = vld [vmem:[%s8553] sm:$0xf]
        %v8555 = vld [vmem:[%s8553 + $0x4] sm:$0xf]
        %v8556 = vld [vmem:[%s8553 + $0x8] sm:$0xf]
        %v8557 = vld [vmem:[%s8553 + $0xc] sm:$0xf]
        %v8558 = vld [vmem:[%s8553 + $0x10] sm:$0xf]
        %v8559 = vld [vmem:[%s8553 + $0x14] sm:$0xf]
        %v8560 = vld [vmem:[%s8553 + $0x18] sm:$0xf]
        %v8561 = vld [vmem:[%s8553 + $0x1c] sm:$0xf]
        %v8562 = vld [vmem:[%s8553 + $0x20] sm:$0xf]
        %v8563 = vld [vmem:[%s8553 + $0x24] sm:$0xf]
        %v8564 = vld [vmem:[%s8553 + $0x28] sm:$0xf]
        %v8565 = vld [vmem:[%s8553 + $0x2c] sm:$0xf]
        %v8566 = vld [vmem:[%s8553 + $0x30] sm:$0xf]
        %v8567 = vld [vmem:[%s8553 + $0x34] sm:$0xf]
        %v8568 = vld [vmem:[%s8553 + $0x38] sm:$0xf]
        %v8569 = vld [vmem:[%s8553 + $0x3c] sm:$0xf]
        %v8570 = vunpack.c.l.b16 %v8437
        %v8571 = vunpack.c.l.b16 %v8451
        %v8572 = vunpack.c.l.b16 %v8465
        %v8573 = vunpack.c.l.b16 %v8479
        %v8574 = vunpack.c.l.b16 %v8493
        %v8575 = vunpack.c.l.b16 %v8507
        %v8576 = vunpack.c.l.b16 %v8521
        %v8577 = vunpack.c.l.b16 %v8535
        %v8578 = vpack.c.b16 %v8571, %v8570
        %v8579 = vpack.c.b16 %v8573, %v8572
        %v8580 = vpack.c.b16 %v8575, %v8574
        %v8581 = vpack.c.b16 %v8577, %v8576
        %v8602 = vunpack.c.l.b16 %v8537
        %v8603 = vunpack.c.l.b16 %v8538
        %v8604 = vunpack.c.l.b16 %v8539
        %v8605 = vunpack.c.l.b16 %v8540
        %v8606 = vunpack.c.l.b16 %v8541
        %v8607 = vunpack.c.l.b16 %v8542
        %v8608 = vunpack.c.l.b16 %v8543
        %v8609 = vunpack.c.l.b16 %v8544
        %v8610 = vunpack.c.l.b16 %v8545
        %v8611 = vunpack.c.l.b16 %v8546
        %v8612 = vunpack.c.l.b16 %v8547
        %v8613 = vunpack.c.l.b16 %v8548
        %v8614 = vunpack.c.l.b16 %v8549
        %v8615 = vunpack.c.l.b16 %v8550
        %v8616 = vunpack.c.l.b16 %v8551
        %v8617 = vunpack.c.l.b16 %v8552
        %v8618 = vpack.c.b16 %v8603, %v8602
        %v8619 = vpack.c.b16 %v8605, %v8604
        %v8620 = vpack.c.b16 %v8607, %v8606
        %v8621 = vpack.c.b16 %v8609, %v8608
        %v8622 = vpack.c.b16 %v8611, %v8610
        %v8623 = vpack.c.b16 %v8613, %v8612
        %v8624 = vpack.c.b16 %v8615, %v8614
        %v8625 = vpack.c.b16 %v8617, %v8616
        %8634 = vmatprep.subr.bf16.mxu0 0
        %8635 = vmatpush1.bf16.msra.mxu0 %v8618
        %8636 = vmatprep.subr.bf16.mxu0 0
        %8637 = vmatpush1.bf16.msra.mxu0 %v8619
        %8638 = vmatprep.subr.bf16.mxu0 0
        %8639 = vmatpush1.bf16.msra.mxu0 %v8620
        %8640 = vmatprep.subr.bf16.mxu0 0
        %8641 = vmatpush1.bf16.msra.mxu0 %v8621
        %8642 = vmatprep.subr.bf16.mxu0 0
        %8643 = vmatpush1.bf16.msra.mxu0 %v8622
        %8644 = vmatprep.subr.bf16.mxu0 0
        %8645 = vmatpush1.bf16.msra.mxu0 %v8623
        %8646 = vmatprep.subr.bf16.mxu0 0
        %8647 = vmatpush1.bf16.msra.mxu0 %v8624
        %8648 = vmatprep.subr.bf16.mxu0 0
        %8649 = vmatpush1.bf16.msra.mxu0 %v8625
        %8650 = vmatprep.subr.bf16.mxu0 0
        %8651 = vmatpush1.bf16.msra.mxu0 0
        %8652 = vmatprep.subr.bf16.mxu0 0
        %8653 = vmatpush1.bf16.msra.mxu0 0
        %8654 = vmatprep.subr.bf16.mxu0 0
        %8655 = vmatpush1.bf16.msra.mxu0 0
        %8656 = vmatprep.subr.bf16.mxu0 0
        %8657 = vmatpush1.bf16.msra.mxu0 0
        %8658 = vmatprep.subr.bf16.mxu0 0
        %8659 = vmatpush1.bf16.msra.mxu0 0
        %8660 = vmatprep.subr.bf16.mxu0 0
        %8661 = vmatpush1.bf16.msra.mxu0 0
        %8662 = vmatprep.subr.bf16.mxu0 0
        %8663 = vmatpush1.bf16.msra.mxu0 0
        %8664 = vmatprep.subr.bf16.mxu0 0
        %8665 = vmatpush1.bf16.msra.mxu0 0
        %8666 = vmatprep.mubr.bf16.mxu0 0
        %8667 = vmatmul.mubr.bf16.gmra.mrb[0].mxu0 %v8578
        %v8668 = vpop.f32.mrb[0].mxu0
        %v8669 = vadd.f32 0.0, %v8668
        %v8670 = vpop.f32.mrb[0].mxu0
        %v8671 = vpop.f32.mrb[0].mxu0
        %v8672 = vadd.f32 0.0, %v8671
        %v8673 = vpop.f32.mrb[0].mxu0
        %8674 = vmatprep.mubr.bf16.mxu0 0
        %8675 = vmatmul.mubr.bf16.gmra.mrb[0].mxu0 %v8579
        %v8676 = vpop.f32.mrb[0].mxu0
        %v8677 = vadd.f32 0.0, %v8676
        %v8678 = vpop.f32.mrb[0].mxu0
        %v8679 = vpop.f32.mrb[0].mxu0
        %v8680 = vadd.f32 0.0, %v8679
        %v8681 = vpop.f32.mrb[0].mxu0
        %8682 = vmatprep.mubr.bf16.mxu0 0
        %8683 = vmatmul.mubr.bf16.gmra.mrb[0].mxu0 %v8580
        %v8684 = vpop.f32.mrb[0].mxu0
        %v8685 = vadd.f32 0.0, %v8684
        %v8686 = vpop.f32.mrb[0].mxu0
        %v8687 = vpop.f32.mrb[0].mxu0
        %v8688 = vadd.f32 0.0, %v8687
        %v8689 = vpop.f32.mrb[0].mxu0
        %8690 = vmatprep.mubr.bf16.mxu0 0
        %8691 = vmatmul.mubr.bf16.gmra.mrb[0].mxu0 %v8581
        %v8692 = vpop.f32.mrb[0].mxu0
        %v8693 = vadd.f32 0.0, %v8692
        %v8694 = vpop.f32.mrb[0].mxu0
        %v8695 = vpop.f32.mrb[0].mxu0
        %v8696 = vadd.f32 0.0, %v8695
        %v8697 = vpop.f32.mrb[0].mxu0
        %8698 = vdwg.mxu0
        %v8699 = vunpack.c.l.b16 %v8277
        %v8700 = vunpack.c.l.b16 %v8291
        %v8701 = vunpack.c.l.b16 %v8305
        %v8702 = vunpack.c.l.b16 %v8319
        %v8703 = vunpack.c.l.b16 %v8333
        %v8704 = vunpack.c.l.b16 %v8347
        %v8705 = vunpack.c.l.b16 %v8361
        %v8706 = vunpack.c.l.b16 %v8375
        %v8707 = vpack.c.b16 %v8700, %v8699
        %v8708 = vpack.c.b16 %v8702, %v8701
        %v8709 = vpack.c.b16 %v8704, %v8703
        %v8710 = vpack.c.b16 %v8706, %v8705
        %8715 = vmatprep.subr.bf16.mxu0 0
        %8716 = vmatpush1.bf16.msra.mxu0 %v8618
        %8717 = vmatprep.subr.bf16.mxu0 0
        %8718 = vmatpush1.bf16.msra.mxu0 %v8619
        %8719 = vmatprep.subr.bf16.mxu0 0
        %8720 = vmatpush1.bf16.msra.mxu0 %v8620
        %8721 = vmatprep.subr.bf16.mxu0 0
        %8722 = vmatpush1.bf16.msra.mxu0 %v8621
        %8723 = vmatprep.subr.bf16.mxu0 0
        %8724 = vmatpush1.bf16.msra.mxu0 %v8622
        %8725 = vmatprep.subr.bf16.mxu0 0
        %8726 = vmatpush1.bf16.msra.mxu0 %v8623
        %8727 = vmatprep.subr.bf16.mxu0 0
        %8728 = vmatpush1.bf16.msra.mxu0 %v8624
        %8729 = vmatprep.subr.bf16.mxu0 0
        %8730 = vmatpush1.bf16.msra.mxu0 %v8625
        %8731 = vmatprep.subr.bf16.mxu0 0
        %8732 = vmatpush1.bf16.msra.mxu0 0
        %8733 = vmatprep.subr.bf16.mxu0 0
        %8734 = vmatpush1.bf16.msra.mxu0 0
        %8735 = vmatprep.subr.bf16.mxu0 0
        %8736 = vmatpush1.bf16.msra.mxu0 0
        %8737 = vmatprep.subr.bf16.mxu0 0
        %8738 = vmatpush1.bf16.msra.mxu0 0
        %8739 = vmatprep.subr.bf16.mxu0 0
        %8740 = vmatpush1.bf16.msra.mxu0 0
        %8741 = vmatprep.subr.bf16.mxu0 0
        %8742 = vmatpush1.bf16.msra.mxu0 0
        %8743 = vmatprep.subr.bf16.mxu0 0
        %8744 = vmatpush1.bf16.msra.mxu0 0
        %8745 = vmatprep.subr.bf16.mxu0 0
        %8746 = vmatpush1.bf16.msra.mxu0 0
        %8747 = vmatprep.mubr.bf16.mxu0 0
        %8748 = vmatmul.mubr.bf16.gmra.mrb[0].mxu0 %v8707
        %v8749 = vpop.f32.mrb[0].mxu0
        %v8750 = vadd.f32 %v8669, %v8749
        %v8751 = vpop.f32.mrb[0].mxu0
        %v8752 = vpop.f32.mrb[0].mxu0
        %v8753 = vadd.f32 %v8672, %v8752
        %v8754 = vpop.f32.mrb[0].mxu0
        %8755 = vmatprep.mubr.bf16.mxu0 0
        %8756 = vmatmul.mubr.bf16.gmra.mrb[0].mxu0 %v8708
        %v8757 = vpop.f32.mrb[0].mxu0
        %v8758 = vadd.f32 %v8677, %v8757
        %v8759 = vpop.f32.mrb[0].mxu0
        %v8760 = vpop.f32.mrb[0].mxu0
        %v8761 = vadd.f32 %v8680, %v8760
        %v8762 = vpop.f32.mrb[0].mxu0
        %8763 = vmatprep.mubr.bf16.mxu0 0
        %8764 = vmatmul.mubr.bf16.gmra.mrb[0].mxu0 %v8709
        %v8765 = vpop.f32.mrb[0].mxu0
        %v8766 = vadd.f32 %v8685, %v8765
        %v8767 = vpop.f32.mrb[0].mxu0
        %v8768 = vpop.f32.mrb[0].mxu0
        %v8769 = vadd.f32 %v8688, %v8768
        %v8770 = vpop.f32.mrb[0].mxu0
        %8771 = vmatprep.mubr.bf16.mxu0 0
        %8772 = vmatmul.mubr.bf16.gmra.mrb[0].mxu0 %v8710
        %v8773 = vpop.f32.mrb[0].mxu0
        %v8774 = vadd.f32 %v8693, %v8773
        %v8775 = vpop.f32.mrb[0].mxu0
        %v8776 = vpop.f32.mrb[0].mxu0
        %v8777 = vadd.f32 %v8696, %v8776
        %v8778 = vpop.f32.mrb[0].mxu0
        %8779 = vdwg.mxu0
        %v8796 = vunpack.c.l.b16 %v8554
        %v8797 = vunpack.c.l.b16 %v8555
        %v8798 = vunpack.c.l.b16 %v8556
        %v8799 = vunpack.c.l.b16 %v8557
        %v8800 = vunpack.c.l.b16 %v8558
        %v8801 = vunpack.c.l.b16 %v8559
        %v8802 = vunpack.c.l.b16 %v8560
        %v8803 = vunpack.c.l.b16 %v8561
        %v8804 = vunpack.c.l.b16 %v8562
        %v8805 = vunpack.c.l.b16 %v8563
        %v8806 = vunpack.c.l.b16 %v8564
        %v8807 = vunpack.c.l.b16 %v8565
        %v8808 = vunpack.c.l.b16 %v8566
        %v8809 = vunpack.c.l.b16 %v8567
        %v8810 = vunpack.c.l.b16 %v8568
        %v8811 = vunpack.c.l.b16 %v8569
        %v8812 = vpack.c.b16 %v8797, %v8796
        %v8813 = vpack.c.b16 %v8799, %v8798
        %v8814 = vpack.c.b16 %v8801, %v8800
        %v8815 = vpack.c.b16 %v8803, %v8802
        %v8816 = vpack.c.b16 %v8805, %v8804
        %v8817 = vpack.c.b16 %v8807, %v8806
        %v8818 = vpack.c.b16 %v8809, %v8808
        %v8819 = vpack.c.b16 %v8811, %v8810
        %8828 = vmatprep.subr.bf16.mxu0 0
        %8829 = vmatpush1.bf16.msra.mxu0 %v8812
        %8830 = vmatprep.subr.bf16.mxu0 0
        %8831 = vmatpush1.bf16.msra.mxu0 %v8813
        %8832 = vmatprep.subr.bf16.mxu0 0
        %8833 = vmatpush1.bf16.msra.mxu0 %v8814
        %8834 = vmatprep.subr.bf16.mxu0 0
        %8835 = vmatpush1.bf16.msra.mxu0 %v8815
        %8836 = vmatprep.subr.bf16.mxu0 0
        %8837 = vmatpush1.bf16.msra.mxu0 %v8816
        %8838 = vmatprep.subr.bf16.mxu0 0
        %8839 = vmatpush1.bf16.msra.mxu0 %v8817
        %8840 = vmatprep.subr.bf16.mxu0 0
        %8841 = vmatpush1.bf16.msra.mxu0 %v8818
        %8842 = vmatprep.subr.bf16.mxu0 0
        %8843 = vmatpush1.bf16.msra.mxu0 %v8819
        %8844 = vmatprep.subr.bf16.mxu0 0
        %8845 = vmatpush1.bf16.msra.mxu0 0
        %8846 = vmatprep.subr.bf16.mxu0 0
        %8847 = vmatpush1.bf16.msra.mxu0 0
        %8848 = vmatprep.subr.bf16.mxu0 0
        %8849 = vmatpush1.bf16.msra.mxu0 0
        %8850 = vmatprep.subr.bf16.mxu0 0
        %8851 = vmatpush1.bf16.msra.mxu0 0
        %8852 = vmatprep.subr.bf16.mxu0 0
        %8853 = vmatpush1.bf16.msra.mxu0 0
        %8854 = vmatprep.subr.bf16.mxu0 0
        %8855 = vmatpush1.bf16.msra.mxu0 0
        %8856 = vmatprep.subr.bf16.mxu0 0
        %8857 = vmatpush1.bf16.msra.mxu0 0
        %8858 = vmatprep.subr.bf16.mxu0 0
        %8859 = vmatpush1.bf16.msra.mxu0 0
        %8860 = vmatprep.mubr.bf16.mxu0 0
        %8861 = vmatmul.mubr.bf16.gmra.mrb[0].mxu0 %v8707
        %v8862 = vpop.f32.mrb[0].mxu0
        %v8863 = vadd.f32 0.0, %v8862
        %v8864 = vpop.f32.mrb[0].mxu0
        %v8865 = vpop.f32.mrb[0].mxu0
        %v8866 = vadd.f32 0.0, %v8865
        %v8867 = vpop.f32.mrb[0].mxu0
        %8868 = vmatprep.mubr.bf16.mxu0 0
        %8869 = vmatmul.mubr.bf16.gmra.mrb[0].mxu0 %v8708
        %v8870 = vpop.f32.mrb[0].mxu0
        %v8871 = vadd.f32 0.0, %v8870
        %v8872 = vpop.f32.mrb[0].mxu0
        %v8873 = vpop.f32.mrb[0].mxu0
        %v8874 = vadd.f32 0.0, %v8873
        %v8875 = vpop.f32.mrb[0].mxu0
        %8876 = vmatprep.mubr.bf16.mxu0 0
        %8877 = vmatmul.mubr.bf16.gmra.mrb[0].mxu0 %v8709
        %v8878 = vpop.f32.mrb[0].mxu0
        %v8879 = vadd.f32 0.0, %v8878
        %v8880 = vpop.f32.mrb[0].mxu0
        %v8881 = vpop.f32.mrb[0].mxu0
        %v8882 = vadd.f32 0.0, %v8881
        %v8883 = vpop.f32.mrb[0].mxu0
        %8884 = vmatprep.mubr.bf16.mxu0 0
        %8885 = vmatmul.mubr.bf16.gmra.mrb[0].mxu0 %v8710
        %v8886 = vpop.f32.mrb[0].mxu0
        %v8887 = vadd.f32 0.0, %v8886
        %v8888 = vpop.f32.mrb[0].mxu0
        %v8889 = vpop.f32.mrb[0].mxu0
        %v8890 = vadd.f32 0.0, %v8889
        %v8891 = vpop.f32.mrb[0].mxu0
        %8892 = vdwg.mxu0
        %v8893 = vadd.f32 %v8750, %v8863
        %v8894 = vadd.f32 %v8753, %v8866
        %v8895 = vadd.f32 %v8758, %v8871
        %v8896 = vadd.f32 %v8761, %v8874
        %v8897 = vadd.f32 %v8766, %v8879
        %v8898 = vadd.f32 %v8769, %v8882
        %v8899 = vadd.f32 %v8774, %v8887
        %v8900 = vadd.f32 %v8777, %v8890
        %v8901 = vadd.f32 %v8208, %v8893
        %v8902 = vadd.f32 %v8209, %v8894
        %v8903 = vadd.f32 %v8210, %v8895
        %v8904 = vadd.f32 %v8211, %v8896
        %v8905 = vadd.f32 %v8212, %v8897
        %v8906 = vadd.f32 %v8213, %v8898
        %v8907 = vadd.f32 %v8214, %v8899
        %v8908 = vadd.f32 %v8215, %v8900
        %v8909 = vld [vmem:[%s7809] sm:$0x1e]
        %v8910 = vld [vmem:[%s7809 + $0x8] sm:$0x1e]
        %v8911 = vld [vmem:[%s7809 + $0x10] sm:$0x1e]
        %v8912 = vld [vmem:[%s7809 + $0x18] sm:$0x1e]
        %v8913 = vld [vmem:[%s7809 + $0x20] sm:$0x1e]
        %v8914 = vld [vmem:[%s7809 + $0x28] sm:$0x1e]
        %v8915 = vld [vmem:[%s7809 + $0x30] sm:$0x1e]
        %v8916 = vld [vmem:[%s7809 + $0x38] sm:$0x1e]
        %v8925 = vunpack.c.l.b16 %v8909
        %v8926 = vunpack.c.h.b16 %v8909
        %v8927 = vunpack.c.l.b16 %v8910
        %v8928 = vunpack.c.h.b16 %v8910
        %v8929 = vunpack.c.l.b16 %v8911
        %v8930 = vunpack.c.h.b16 %v8911
        %v8931 = vunpack.c.l.b16 %v8912
        %v8932 = vunpack.c.h.b16 %v8912
        %v8933 = vunpack.c.l.b16 %v8913
        %v8934 = vunpack.c.h.b16 %v8913
        %v8935 = vunpack.c.l.b16 %v8914
        %v8936 = vunpack.c.h.b16 %v8914
        %v8937 = vunpack.c.l.b16 %v8915
        %v8938 = vunpack.c.h.b16 %v8915
        %v8939 = vunpack.c.l.b16 %v8916
        %v8940 = vunpack.c.h.b16 %v8916
        %v8941 = vpack.c.b16 %v8925, %v8925
        %v8942 = vpack.c.b16 %v8926, %v8926
        %v8943 = vpack.c.b16 %v8927, %v8927
        %v8944 = vpack.c.b16 %v8928, %v8928
        %v8945 = vpack.c.b16 %v8929, %v8929
        %v8946 = vpack.c.b16 %v8930, %v8930
        %v8947 = vpack.c.b16 %v8931, %v8931
        %v8948 = vpack.c.b16 %v8932, %v8932
        %v8949 = vpack.c.b16 %v8933, %v8933
        %v8950 = vpack.c.b16 %v8934, %v8934
        %v8951 = vpack.c.b16 %v8935, %v8935
        %v8952 = vpack.c.b16 %v8936, %v8936
        %v8953 = vpack.c.b16 %v8937, %v8937
        %v8954 = vpack.c.b16 %v8938, %v8938
        %v8955 = vpack.c.b16 %v8939, %v8939
        %v8956 = vpack.c.b16 %v8940, %v8940
        %v8957 = vrot.slane %v8941, 5
        %v8958 = vrot.slane %v8957, 4
        %v8959 = vrot.slane %v8942, 5
        %v8960 = vsel %vm5692, %v8958, %v8959
        %v8961 = vrot.slane %v8943, 5
        %v8962 = vrot.slane %v8961, 4
        %v8963 = vrot.slane %v8944, 5
        %v8964 = vsel %vm5692, %v8962, %v8963
        %v8965 = vrot.slane %v8945, 5
        %v8966 = vrot.slane %v8965, 4
        %v8967 = vrot.slane %v8946, 5
        %v8968 = vsel %vm5692, %v8966, %v8967
        %v8969 = vrot.slane %v8947, 5
        %v8970 = vrot.slane %v8969, 4
        %v8971 = vrot.slane %v8948, 5
        %v8972 = vsel %vm5692, %v8970, %v8971
        %v8973 = vrot.slane %v8949, 5
        %v8974 = vrot.slane %v8973, 4
        %v8975 = vrot.slane %v8950, 5
        %v8976 = vsel %vm5692, %v8974, %v8975
        %v8977 = vrot.slane %v8951, 5
        %v8978 = vrot.slane %v8977, 4
        %v8979 = vrot.slane %v8952, 5
        %v8980 = vsel %vm5692, %v8978, %v8979
        %v8981 = vrot.slane %v8953, 5
        %v8982 = vrot.slane %v8981, 4
        %v8983 = vrot.slane %v8954, 5
        %v8984 = vsel %vm5692, %v8982, %v8983
        %v8985 = vrot.slane %v8955, 5
        %v8986 = vrot.slane %v8985, 4
        %v8987 = vrot.slane %v8956, 5
        %v8988 = vsel %vm5692, %v8986, %v8987
        %v8989 = vld [vmem:[%s7818] sm:$0x1e]
        %v8990 = vld [vmem:[%s7818 + $0x8] sm:$0x1e]
        %v8991 = vld [vmem:[%s7818 + $0x10] sm:$0x1e]
        %v8992 = vld [vmem:[%s7818 + $0x18] sm:$0x1e]
        %v8993 = vld [vmem:[%s7818 + $0x20] sm:$0x1e]
        %v8994 = vld [vmem:[%s7818 + $0x28] sm:$0x1e]
        %v8995 = vld [vmem:[%s7818 + $0x30] sm:$0x1e]
        %v8996 = vld [vmem:[%s7818 + $0x38] sm:$0x1e]
        %v9005 = vunpack.c.l.b16 %v8989
        %v9006 = vunpack.c.h.b16 %v8989
        %v9007 = vunpack.c.l.b16 %v8990
        %v9008 = vunpack.c.h.b16 %v8990
        %v9009 = vunpack.c.l.b16 %v8991
        %v9010 = vunpack.c.h.b16 %v8991
        %v9011 = vunpack.c.l.b16 %v8992
        %v9012 = vunpack.c.h.b16 %v8992
        %v9013 = vunpack.c.l.b16 %v8993
        %v9014 = vunpack.c.h.b16 %v8993
        %v9015 = vunpack.c.l.b16 %v8994
        %v9016 = vunpack.c.h.b16 %v8994
        %v9017 = vunpack.c.l.b16 %v8995
        %v9018 = vunpack.c.h.b16 %v8995
        %v9019 = vunpack.c.l.b16 %v8996
        %v9020 = vunpack.c.h.b16 %v8996
        %v9021 = vpack.c.b16 %v9005, %v9005
        %v9022 = vpack.c.b16 %v9006, %v9006
        %v9023 = vpack.c.b16 %v9007, %v9007
        %v9024 = vpack.c.b16 %v9008, %v9008
        %v9025 = vpack.c.b16 %v9009, %v9009
        %v9026 = vpack.c.b16 %v9010, %v9010
        %v9027 = vpack.c.b16 %v9011, %v9011
        %v9028 = vpack.c.b16 %v9012, %v9012
        %v9029 = vpack.c.b16 %v9013, %v9013
        %v9030 = vpack.c.b16 %v9014, %v9014
        %v9031 = vpack.c.b16 %v9015, %v9015
        %v9032 = vpack.c.b16 %v9016, %v9016
        %v9033 = vpack.c.b16 %v9017, %v9017
        %v9034 = vpack.c.b16 %v9018, %v9018
        %v9035 = vpack.c.b16 %v9019, %v9019
        %v9036 = vpack.c.b16 %v9020, %v9020
        %v9037 = vrot.slane %v9021, 5
        %v9038 = vrot.slane %v9037, 4
        %v9039 = vrot.slane %v9022, 5
        %v9040 = vsel %vm5692, %v9038, %v9039
        %v9041 = vrot.slane %v9023, 5
        %v9042 = vrot.slane %v9041, 4
        %v9043 = vrot.slane %v9024, 5
        %v9044 = vsel %vm5692, %v9042, %v9043
        %v9045 = vrot.slane %v9025, 5
        %v9046 = vrot.slane %v9045, 4
        %v9047 = vrot.slane %v9026, 5
        %v9048 = vsel %vm5692, %v9046, %v9047
        %v9049 = vrot.slane %v9027, 5
        %v9050 = vrot.slane %v9049, 4
        %v9051 = vrot.slane %v9028, 5
        %v9052 = vsel %vm5692, %v9050, %v9051
        %v9053 = vrot.slane %v9029, 5
        %v9054 = vrot.slane %v9053, 4
        %v9055 = vrot.slane %v9030, 5
        %v9056 = vsel %vm5692, %v9054, %v9055
        %v9057 = vrot.slane %v9031, 5
        %v9058 = vrot.slane %v9057, 4
        %v9059 = vrot.slane %v9032, 5
        %v9060 = vsel %vm5692, %v9058, %v9059
        %v9061 = vrot.slane %v9033, 5
        %v9062 = vrot.slane %v9061, 4
        %v9063 = vrot.slane %v9034, 5
        %v9064 = vsel %vm5692, %v9062, %v9063
        %v9065 = vrot.slane %v9035, 5
        %v9066 = vrot.slane %v9065, 4
        %v9067 = vrot.slane %v9036, 5
        %v9068 = vsel %vm5692, %v9066, %v9067
        %s9069 = scalar_lea.vmem %s4, 512
        %v9070 = vld [vmem:[%s9069] sm:$0xf]
        %v9071 = vld [vmem:[%s9069 + $0x4] sm:$0xf]
        %v9072 = vld [vmem:[%s9069 + $0x8] sm:$0xf]
        %v9073 = vld [vmem:[%s9069 + $0xc] sm:$0xf]
        %v9074 = vld [vmem:[%s9069 + $0x10] sm:$0xf]
        %v9075 = vld [vmem:[%s9069 + $0x14] sm:$0xf]
        %v9076 = vld [vmem:[%s9069 + $0x18] sm:$0xf]
        %v9077 = vld [vmem:[%s9069 + $0x1c] sm:$0xf]
        %v9078 = vld [vmem:[%s9069 + $0x20] sm:$0xf]
        %v9079 = vld [vmem:[%s9069 + $0x24] sm:$0xf]
        %v9080 = vld [vmem:[%s9069 + $0x28] sm:$0xf]
        %v9081 = vld [vmem:[%s9069 + $0x2c] sm:$0xf]
        %v9082 = vld [vmem:[%s9069 + $0x30] sm:$0xf]
        %v9083 = vld [vmem:[%s9069 + $0x34] sm:$0xf]
        %v9084 = vld [vmem:[%s9069 + $0x38] sm:$0xf]
        %v9085 = vld [vmem:[%s9069 + $0x3c] sm:$0xf]
        %s9086 = scalar_lea.vmem %s5, 512
        %v9087 = vld [vmem:[%s9086] sm:$0xf]
        %v9088 = vld [vmem:[%s9086 + $0x4] sm:$0xf]
        %v9089 = vld [vmem:[%s9086 + $0x8] sm:$0xf]
        %v9090 = vld [vmem:[%s9086 + $0xc] sm:$0xf]
        %v9091 = vld [vmem:[%s9086 + $0x10] sm:$0xf]
        %v9092 = vld [vmem:[%s9086 + $0x14] sm:$0xf]
        %v9093 = vld [vmem:[%s9086 + $0x18] sm:$0xf]
        %v9094 = vld [vmem:[%s9086 + $0x1c] sm:$0xf]
        %v9095 = vld [vmem:[%s9086 + $0x20] sm:$0xf]
        %v9096 = vld [vmem:[%s9086 + $0x24] sm:$0xf]
        %v9097 = vld [vmem:[%s9086 + $0x28] sm:$0xf]
        %v9098 = vld [vmem:[%s9086 + $0x2c] sm:$0xf]
        %v9099 = vld [vmem:[%s9086 + $0x30] sm:$0xf]
        %v9100 = vld [vmem:[%s9086 + $0x34] sm:$0xf]
        %v9101 = vld [vmem:[%s9086 + $0x38] sm:$0xf]
        %v9102 = vld [vmem:[%s9086 + $0x3c] sm:$0xf]
        %v9103 = vunpack.c.l.b16 %v9040
        %v9104 = vunpack.c.l.b16 %v9044
        %v9105 = vunpack.c.l.b16 %v9048
        %v9106 = vunpack.c.l.b16 %v9052
        %v9107 = vunpack.c.l.b16 %v9056
        %v9108 = vunpack.c.l.b16 %v9060
        %v9109 = vunpack.c.l.b16 %v9064
        %v9110 = vunpack.c.l.b16 %v9068
        %v9111 = vpack.c.b16 %v9104, %v9103
        %v9112 = vpack.c.b16 %v9106, %v9105
        %v9113 = vpack.c.b16 %v9108, %v9107
        %v9114 = vpack.c.b16 %v9110, %v9109
        %v9135 = vunpack.c.l.b16 %v9070
        %v9136 = vunpack.c.l.b16 %v9071
        %v9137 = vunpack.c.l.b16 %v9072
        %v9138 = vunpack.c.l.b16 %v9073
        %v9139 = vunpack.c.l.b16 %v9074
        %v9140 = vunpack.c.l.b16 %v9075
        %v9141 = vunpack.c.l.b16 %v9076
        %v9142 = vunpack.c.l.b16 %v9077
        %v9143 = vunpack.c.l.b16 %v9078
        %v9144 = vunpack.c.l.b16 %v9079
        %v9145 = vunpack.c.l.b16 %v9080
        %v9146 = vunpack.c.l.b16 %v9081
        %v9147 = vunpack.c.l.b16 %v9082
        %v9148 = vunpack.c.l.b16 %v9083
        %v9149 = vunpack.c.l.b16 %v9084
        %v9150 = vunpack.c.l.b16 %v9085
        %v9151 = vpack.c.b16 %v9136, %v9135
        %v9152 = vpack.c.b16 %v9138, %v9137
        %v9153 = vpack.c.b16 %v9140, %v9139
        %v9154 = vpack.c.b16 %v9142, %v9141
        %v9155 = vpack.c.b16 %v9144, %v9143
        %v9156 = vpack.c.b16 %v9146, %v9145
        %v9157 = vpack.c.b16 %v9148, %v9147
        %v9158 = vpack.c.b16 %v9150, %v9149
        %9167 = vmatprep.subr.bf16.mxu0 0
        %9168 = vmatpush1.bf16.msra.mxu0 %v9151
        %9169 = vmatprep.subr.bf16.mxu0 0
        %9170 = vmatpush1.bf16.msra.mxu0 %v9152
        %9171 = vmatprep.subr.bf16.mxu0 0
        %9172 = vmatpush1.bf16.msra.mxu0 %v9153
        %9173 = vmatprep.subr.bf16.mxu0 0
        %9174 = vmatpush1.bf16.msra.mxu0 %v9154
        %9175 = vmatprep.subr.bf16.mxu0 0
        %9176 = vmatpush1.bf16.msra.mxu0 %v9155
        %9177 = vmatprep.subr.bf16.mxu0 0
        %9178 = vmatpush1.bf16.msra.mxu0 %v9156
        %9179 = vmatprep.subr.bf16.mxu0 0
        %9180 = vmatpush1.bf16.msra.mxu0 %v9157
        %9181 = vmatprep.subr.bf16.mxu0 0
        %9182 = vmatpush1.bf16.msra.mxu0 %v9158
        %9183 = vmatprep.subr.bf16.mxu0 0
        %9184 = vmatpush1.bf16.msra.mxu0 0
        %9185 = vmatprep.subr.bf16.mxu0 0
        %9186 = vmatpush1.bf16.msra.mxu0 0
        %9187 = vmatprep.subr.bf16.mxu0 0
        %9188 = vmatpush1.bf16.msra.mxu0 0
        %9189 = vmatprep.subr.bf16.mxu0 0
        %9190 = vmatpush1.bf16.msra.mxu0 0
        %9191 = vmatprep.subr.bf16.mxu0 0
        %9192 = vmatpush1.bf16.msra.mxu0 0
        %9193 = vmatprep.subr.bf16.mxu0 0
        %9194 = vmatpush1.bf16.msra.mxu0 0
        %9195 = vmatprep.subr.bf16.mxu0 0
        %9196 = vmatpush1.bf16.msra.mxu0 0
        %9197 = vmatprep.subr.bf16.mxu0 0
        %9198 = vmatpush1.bf16.msra.mxu0 0
        %9199 = vmatprep.mubr.bf16.mxu0 0
        %9200 = vmatmul.mubr.bf16.gmra.mrb[0].mxu0 %v9111
        %v9201 = vpop.f32.mrb[0].mxu0
        %v9202 = vadd.f32 0.0, %v9201
        %v9203 = vpop.f32.mrb[0].mxu0
        %v9204 = vpop.f32.mrb[0].mxu0
        %v9205 = vadd.f32 0.0, %v9204
        %v9206 = vpop.f32.mrb[0].mxu0
        %9207 = vmatprep.mubr.bf16.mxu0 0
        %9208 = vmatmul.mubr.bf16.gmra.mrb[0].mxu0 %v9112
        %v9209 = vpop.f32.mrb[0].mxu0
        %v9210 = vadd.f32 0.0, %v9209
        %v9211 = vpop.f32.mrb[0].mxu0
        %v9212 = vpop.f32.mrb[0].mxu0
        %v9213 = vadd.f32 0.0, %v9212
        %v9214 = vpop.f32.mrb[0].mxu0
        %9215 = vmatprep.mubr.bf16.mxu0 0
        %9216 = vmatmul.mubr.bf16.gmra.mrb[0].mxu0 %v9113
        %v9217 = vpop.f32.mrb[0].mxu0
        %v9218 = vadd.f32 0.0, %v9217
        %v9219 = vpop.f32.mrb[0].mxu0
        %v9220 = vpop.f32.mrb[0].mxu0
        %v9221 = vadd.f32 0.0, %v9220
        %v9222 = vpop.f32.mrb[0].mxu0
        %9223 = vmatprep.mubr.bf16.mxu0 0
        %9224 = vmatmul.mubr.bf16.gmra.mrb[0].mxu0 %v9114
        %v9225 = vpop.f32.mrb[0].mxu0
        %v9226 = vadd.f32 0.0, %v9225
        %v9227 = vpop.f32.mrb[0].mxu0
        %v9228 = vpop.f32.mrb[0].mxu0
        %v9229 = vadd.f32 0.0, %v9228
        %v9230 = vpop.f32.mrb[0].mxu0
        %9231 = vdwg.mxu0
        %v9232 = vunpack.c.l.b16 %v8960
        %v9233 = vunpack.c.l.b16 %v8964
        %v9234 = vunpack.c.l.b16 %v8968
        %v9235 = vunpack.c.l.b16 %v8972
        %v9236 = vunpack.c.l.b16 %v8976
        %v9237 = vunpack.c.l.b16 %v8980
        %v9238 = vunpack.c.l.b16 %v8984
        %v9239 = vunpack.c.l.b16 %v8988
        %v9240 = vpack.c.b16 %v9233, %v9232
        %v9241 = vpack.c.b16 %v9235, %v9234
        %v9242 = vpack.c.b16 %v9237, %v9236
        %v9243 = vpack.c.b16 %v9239, %v9238
        %9248 = vmatprep.subr.bf16.mxu0 0
        %9249 = vmatpush1.bf16.msra.mxu0 %v9151
        %9250 = vmatprep.subr.bf16.mxu0 0
        %9251 = vmatpush1.bf16.msra.mxu0 %v9152
        %9252 = vmatprep.subr.bf16.mxu0 0
        %9253 = vmatpush1.bf16.msra.mxu0 %v9153
        %9254 = vmatprep.subr.bf16.mxu0 0
        %9255 = vmatpush1.bf16.msra.mxu0 %v9154
        %9256 = vmatprep.subr.bf16.mxu0 0
        %9257 = vmatpush1.bf16.msra.mxu0 %v9155
        %9258 = vmatprep.subr.bf16.mxu0 0
        %9259 = vmatpush1.bf16.msra.mxu0 %v9156
        %9260 = vmatprep.subr.bf16.mxu0 0
        %9261 = vmatpush1.bf16.msra.mxu0 %v9157
        %9262 = vmatprep.subr.bf16.mxu0 0
        %9263 = vmatpush1.bf16.msra.mxu0 %v9158
        %9264 = vmatprep.subr.bf16.mxu0 0
        %9265 = vmatpush1.bf16.msra.mxu0 0
        %9266 = vmatprep.subr.bf16.mxu0 0
        %9267 = vmatpush1.bf16.msra.mxu0 0
        %9268 = vmatprep.subr.bf16.mxu0 0
        %9269 = vmatpush1.bf16.msra.mxu0 0
        %9270 = vmatprep.subr.bf16.mxu0 0
        %9271 = vmatpush1.bf16.msra.mxu0 0
        %9272 = vmatprep.subr.bf16.mxu0 0
        %9273 = vmatpush1.bf16.msra.mxu0 0
        %9274 = vmatprep.subr.bf16.mxu0 0
        %9275 = vmatpush1.bf16.msra.mxu0 0
        %9276 = vmatprep.subr.bf16.mxu0 0
        %9277 = vmatpush1.bf16.msra.mxu0 0
        %9278 = vmatprep.subr.bf16.mxu0 0
        %9279 = vmatpush1.bf16.msra.mxu0 0
        %9280 = vmatprep.mubr.bf16.mxu0 0
        %9281 = vmatmul.mubr.bf16.gmra.mrb[0].mxu0 %v9240
        %v9282 = vpop.f32.mrb[0].mxu0
        %v9283 = vadd.f32 %v9202, %v9282
        %v9284 = vpop.f32.mrb[0].mxu0
        %v9285 = vpop.f32.mrb[0].mxu0
        %v9286 = vadd.f32 %v9205, %v9285
        %v9287 = vpop.f32.mrb[0].mxu0
        %9288 = vmatprep.mubr.bf16.mxu0 0
        %9289 = vmatmul.mubr.bf16.gmra.mrb[0].mxu0 %v9241
        %v9290 = vpop.f32.mrb[0].mxu0
        %v9291 = vadd.f32 %v9210, %v9290
        %v9292 = vpop.f32.mrb[0].mxu0
        %v9293 = vpop.f32.mrb[0].mxu0
        %v9294 = vadd.f32 %v9213, %v9293
        %v9295 = vpop.f32.mrb[0].mxu0
        %9296 = vmatprep.mubr.bf16.mxu0 0
        %9297 = vmatmul.mubr.bf16.gmra.mrb[0].mxu0 %v9242
        %v9298 = vpop.f32.mrb[0].mxu0
        %v9299 = vadd.f32 %v9218, %v9298
        %v9300 = vpop.f32.mrb[0].mxu0
        %v9301 = vpop.f32.mrb[0].mxu0
        %v9302 = vadd.f32 %v9221, %v9301
        %v9303 = vpop.f32.mrb[0].mxu0
        %9304 = vmatprep.mubr.bf16.mxu0 0
        %9305 = vmatmul.mubr.bf16.gmra.mrb[0].mxu0 %v9243
        %v9306 = vpop.f32.mrb[0].mxu0
        %v9307 = vadd.f32 %v9226, %v9306
        %v9308 = vpop.f32.mrb[0].mxu0
        %v9309 = vpop.f32.mrb[0].mxu0
        %v9310 = vadd.f32 %v9229, %v9309
        %v9311 = vpop.f32.mrb[0].mxu0
        %9312 = vdwg.mxu0
        %v9329 = vunpack.c.l.b16 %v9087
        %v9330 = vunpack.c.l.b16 %v9088
        %v9331 = vunpack.c.l.b16 %v9089
        %v9332 = vunpack.c.l.b16 %v9090
        %v9333 = vunpack.c.l.b16 %v9091
        %v9334 = vunpack.c.l.b16 %v9092
        %v9335 = vunpack.c.l.b16 %v9093
        %v9336 = vunpack.c.l.b16 %v9094
        %v9337 = vunpack.c.l.b16 %v9095
        %v9338 = vunpack.c.l.b16 %v9096
        %v9339 = vunpack.c.l.b16 %v9097
        %v9340 = vunpack.c.l.b16 %v9098
        %v9341 = vunpack.c.l.b16 %v9099
        %v9342 = vunpack.c.l.b16 %v9100
        %v9343 = vunpack.c.l.b16 %v9101
        %v9344 = vunpack.c.l.b16 %v9102
        %v9345 = vpack.c.b16 %v9330, %v9329
        %v9346 = vpack.c.b16 %v9332, %v9331
        %v9347 = vpack.c.b16 %v9334, %v9333
        %v9348 = vpack.c.b16 %v9336, %v9335
        %v9349 = vpack.c.b16 %v9338, %v9337
        %v9350 = vpack.c.b16 %v9340, %v9339
        %v9351 = vpack.c.b16 %v9342, %v9341
        %v9352 = vpack.c.b16 %v9344, %v9343
        %9361 = vmatprep.subr.bf16.mxu0 0
        %9362 = vmatpush1.bf16.msra.mxu0 %v9345
        %9363 = vmatprep.subr.bf16.mxu0 0
        %9364 = vmatpush1.bf16.msra.mxu0 %v9346
        %9365 = vmatprep.subr.bf16.mxu0 0
        %9366 = vmatpush1.bf16.msra.mxu0 %v9347
        %9367 = vmatprep.subr.bf16.mxu0 0
        %9368 = vmatpush1.bf16.msra.mxu0 %v9348
        %9369 = vmatprep.subr.bf16.mxu0 0
        %9370 = vmatpush1.bf16.msra.mxu0 %v9349
        %9371 = vmatprep.subr.bf16.mxu0 0
        %9372 = vmatpush1.bf16.msra.mxu0 %v9350
        %9373 = vmatprep.subr.bf16.mxu0 0
        %9374 = vmatpush1.bf16.msra.mxu0 %v9351
        %9375 = vmatprep.subr.bf16.mxu0 0
        %9376 = vmatpush1.bf16.msra.mxu0 %v9352
        %9377 = vmatprep.subr.bf16.mxu0 0
        %9378 = vmatpush1.bf16.msra.mxu0 0
        %9379 = vmatprep.subr.bf16.mxu0 0
        %9380 = vmatpush1.bf16.msra.mxu0 0
        %9381 = vmatprep.subr.bf16.mxu0 0
        %9382 = vmatpush1.bf16.msra.mxu0 0
        %9383 = vmatprep.subr.bf16.mxu0 0
        %9384 = vmatpush1.bf16.msra.mxu0 0
        %9385 = vmatprep.subr.bf16.mxu0 0
        %9386 = vmatpush1.bf16.msra.mxu0 0
        %9387 = vmatprep.subr.bf16.mxu0 0
        %9388 = vmatpush1.bf16.msra.mxu0 0
        %9389 = vmatprep.subr.bf16.mxu0 0
        %9390 = vmatpush1.bf16.msra.mxu0 0
        %9391 = vmatprep.subr.bf16.mxu0 0
        %9392 = vmatpush1.bf16.msra.mxu0 0
        %9393 = vmatprep.mubr.bf16.mxu0 0
        %9394 = vmatmul.mubr.bf16.gmra.mrb[0].mxu0 %v9240
        %v9395 = vpop.f32.mrb[0].mxu0
        %v9396 = vadd.f32 0.0, %v9395
        %v9397 = vpop.f32.mrb[0].mxu0
        %v9398 = vpop.f32.mrb[0].mxu0
        %v9399 = vadd.f32 0.0, %v9398
        %v9400 = vpop.f32.mrb[0].mxu0
        %9401 = vmatprep.mubr.bf16.mxu0 0
        %9402 = vmatmul.mubr.bf16.gmra.mrb[0].mxu0 %v9241
        %v9403 = vpop.f32.mrb[0].mxu0
        %v9404 = vadd.f32 0.0, %v9403
        %v9405 = vpop.f32.mrb[0].mxu0
        %v9406 = vpop.f32.mrb[0].mxu0
        %v9407 = vadd.f32 0.0, %v9406
        %v9408 = vpop.f32.mrb[0].mxu0
        %9409 = vmatprep.mubr.bf16.mxu0 0
        %9410 = vmatmul.mubr.bf16.gmra.mrb[0].mxu0 %v9242
        %v9411 = vpop.f32.mrb[0].mxu0
        %v9412 = vadd.f32 0.0, %v9411
        %v9413 = vpop.f32.mrb[0].mxu0
        %v9414 = vpop.f32.mrb[0].mxu0
        %v9415 = vadd.f32 0.0, %v9414
        %v9416 = vpop.f32.mrb[0].mxu0
        %9417 = vmatprep.mubr.bf16.mxu0 0
        %9418 = vmatmul.mubr.bf16.gmra.mrb[0].mxu0 %v9243
        %v9419 = vpop.f32.mrb[0].mxu0
        %v9420 = vadd.f32 0.0, %v9419
        %v9421 = vpop.f32.mrb[0].mxu0
        %v9422 = vpop.f32.mrb[0].mxu0
        %v9423 = vadd.f32 0.0, %v9422
        %v9424 = vpop.f32.mrb[0].mxu0
        %9425 = vdwg.mxu0
        %v9426 = vadd.f32 %v9283, %v9396
        %v9427 = vadd.f32 %v9286, %v9399
        %v9428 = vadd.f32 %v9291, %v9404
        %v9429 = vadd.f32 %v9294, %v9407
        %v9430 = vadd.f32 %v9299, %v9412
        %v9431 = vadd.f32 %v9302, %v9415
        %v9432 = vadd.f32 %v9307, %v9420
        %v9433 = vadd.f32 %v9310, %v9423
        %v9434 = vadd.f32 %v8901, %v9426
        %v9435 = vadd.f32 %v8902, %v9427
        %v9436 = vadd.f32 %v8903, %v9428
        %v9437 = vadd.f32 %v8904, %v9429
        %v9438 = vadd.f32 %v8905, %v9430
        %v9439 = vadd.f32 %v8906, %v9431
        %v9440 = vadd.f32 %v8907, %v9432
        %v9441 = vadd.f32 %v8908, %v9433
        %9442 = vst [vmem:[%s4257] sm:$0xff] %v9434
        %9443 = vst [vmem:[%s4257 + $0x8] sm:$0xff] %v9435
        %9444 = vst [vmem:[%s4257 + $0x10] sm:$0xff] %v9436
        %9445 = vst [vmem:[%s4257 + $0x18] sm:$0xff] %v9437
        %9446 = vst [vmem:[%s4257 + $0x20] sm:$0xff] %v9438
        %9447 = vst [vmem:[%s4257 + $0x28] sm:$0xff] %v9439
        %9448 = vst [vmem:[%s4257 + $0x30] sm:$0xff] %v9440
        %9449 = vst [vmem:[%s4257 + $0x38] sm:$0xff] %v9441
        %v9450 = vld [vmem:[#allocation5 + $0x2] sm:$0x1]
        %v9451 = vadd.f32 %v9434, %v9435
        %v9452 = vadd.f32 %v9451, %v9436
        %v9453 = vadd.f32 %v9452, %v9437
        %v9454 = vadd.f32 %v9453, %v9438
        %v9455 = vadd.f32 %v9454, %v9439
        %v9456 = vadd.f32 %v9455, %v9440
        %v9457 = vadd.f32 %v9456, %v9441
        %v9458 = vrot.slane %v9457, 4
        %v9459 = vadd.f32 %v9457, %v9458
        %v9460 = vrot.slane %v9459, 2
        %v9461 = vadd.f32 %v9459, %v9460
        %v9462 = vrot.slane %v9461, 1
        %v9463 = vadd.f32 %v9461, %v9462
        %v9464 = vadd.f32 %v9450, %v9463
        %9465 = vst [vmem:[#allocation5 + $0x2] sm:$0x1] %v9464
        %v9466 = vld [vmem:[#allocation5 + $0x3] sm:$0x1]
        %v9467 = vmul.f32 %v9434, %v9434
        %v9468 = vmul.f32 %v9435, %v9435
        %v9469 = vmul.f32 %v9436, %v9436
        %v9470 = vmul.f32 %v9437, %v9437
        %v9471 = vmul.f32 %v9438, %v9438
        %v9472 = vmul.f32 %v9439, %v9439
        %v9473 = vmul.f32 %v9440, %v9440
        %v9474 = vmul.f32 %v9441, %v9441
        %v9475 = vadd.f32 %v9467, %v9468
        %v9476 = vadd.f32 %v9475, %v9469
        %v9477 = vadd.f32 %v9476, %v9470
        %v9478 = vadd.f32 %v9477, %v9471
        %v9479 = vadd.f32 %v9478, %v9472
        %v9480 = vadd.f32 %v9479, %v9473
        %v9481 = vadd.f32 %v9480, %v9474
        %v9482 = vrot.slane %v9481, 4
        %v9483 = vadd.f32 %v9481, %v9482
        %v9484 = vrot.slane %v9483, 2
        %v9485 = vadd.f32 %v9483, %v9484
        %v9486 = vrot.slane %v9485, 1
        %v9487 = vadd.f32 %v9485, %v9486
        %v9488 = vadd.f32 %v9466, %v9487
        %9489 = vst [vmem:[#allocation5 + $0x3] sm:$0x1] %v9488
      $region80: #{basic_block_forward.1} parent=63 // pred_fallthru
        _
      %p9490 = scmp.eq.s32.totalorder %s26, 2
      // Predicated region
      $region81: #{basic_block_forward.1} parent=63 // pred_check
        %p9491 = pneg %p9490
      $region82: #{basic_block_forward.1} parent=63 // pred_check_branch
        %9493 = sbr.rel (%p9491) target = $region84
      $region83: #{basic_block_forward.1} parent=63 // pred_region
        %v9494 = vld [vmem:[#allocation5 + $0x2] sm:$0x1]
        %v9495 = vmul.f32 %v9494, 0.0078125
        %v9496 = vld [vmem:[#allocation5 + $0x3] sm:$0x1]
        %v9497 = vmul.f32 %v9496, 0.0078125
        %v9498 = vmul.f32 %v9495, %v9495
        %v9499 = vsub.f32 %v9497, %v9498
        %v9500 = vadd.f32 %v9499, 1e-05
        %v9501 = vrsqrt.pop %v9500
        %v9502 = vld [vmem:[%s7] sm:$0x1]
        %v9503 = vmul.f32 %v9501, %v9502
        %v9504 = vld [vmem:[%s7 + $0x1] sm:$0x1]
        %v9505 = vmul.f32 %v9495, %v9503
        %v9506 = vsub.f32 %v9504, %v9505
        %s9507 = smul.u32 %s27, 64
        %s9508 = scalar_lea.vmem [#allocation2], %s9507
        %v9509 = vld [vmem:[%s9508] sm:$0xff]
        %v9510 = vld [vmem:[%s9508 + $0x8] sm:$0xff]
        %v9511 = vld [vmem:[%s9508 + $0x10] sm:$0xff]
        %v9512 = vld [vmem:[%s9508 + $0x18] sm:$0xff]
        %v9513 = vld [vmem:[%s9508 + $0x20] sm:$0xff]
        %v9514 = vld [vmem:[%s9508 + $0x28] sm:$0xff]
        %v9515 = vld [vmem:[%s9508 + $0x30] sm:$0xff]
        %v9516 = vld [vmem:[%s9508 + $0x38] sm:$0xff]
        %v9517 = vlaneseq
        %v9518 = vshrl.u32 %v9517, 7
        %v9519 = vsub.s32 0, %v9518
        %v9520 = vrot.slane %v9503, %v9519
        %v9521 = vmul.f32 %v9509, %v9520
        %v9522 = vmul.f32 %v9510, %v9520
        %v9523 = vmul.f32 %v9511, %v9520
        %v9524 = vmul.f32 %v9512, %v9520
        %v9525 = vmul.f32 %v9513, %v9520
        %v9526 = vmul.f32 %v9514, %v9520
        %v9527 = vmul.f32 %v9515, %v9520
        %v9528 = vmul.f32 %v9516, %v9520
        %v9529 = vlaneseq
        %v9530 = vshrl.u32 %v9529, 7
        %v9531 = vsub.s32 0, %v9530
        %v9532 = vrot.slane %v9506, %v9531
        %v9533 = vadd.f32 %v9521, %v9532
        %v9534 = vadd.f32 %v9522, %v9532
        %v9535 = vadd.f32 %v9523, %v9532
        %v9536 = vadd.f32 %v9524, %v9532
        %v9537 = vadd.f32 %v9525, %v9532
        %v9538 = vadd.f32 %v9526, %v9532
        %v9539 = vadd.f32 %v9527, %v9532
        %v9540 = vadd.f32 %v9528, %v9532
        %v9541 = vld [vmem:[#allocation5 + $0x4] sm:$0x1]
        %v9542 = vmul.f32 %v9541, 0.0078125
        %v9543 = vld [vmem:[#allocation5 + $0x5] sm:$0x1]
        %v9544 = vmul.f32 %v9543, 0.0078125
        %v9545 = vmul.f32 %v9542, %v9542
        %v9546 = vsub.f32 %v9544, %v9545
        %v9547 = vadd.f32 %v9546, 1e-05
        %v9548 = vrsqrt.pop %v9547
        %v9549 = vld [vmem:[%s10] sm:$0x1]
        %v9550 = vmul.f32 %v9548, %v9549
        %v9551 = vld [vmem:[%s10 + $0x1] sm:$0x1]
        %v9552 = vmul.f32 %v9542, %v9550
        %v9553 = vsub.f32 %v9551, %v9552
        %s9554 = scalar_lea.vmem %s414, 216
        %v9555 = vld [vmem:[%s9554] sm:$0xf]
        %v9556 = vld [vmem:[%s9554 + $0x8] sm:$0xf]
        %v9557 = vld [vmem:[%s9554 + $0x10] sm:$0xf]
        %v9558 = vld [vmem:[%s9554 + $0x18] sm:$0xf]
        %v9559 = vld [vmem:[%s9554 + $0x20] sm:$0xf]
        %v9560 = vld [vmem:[%s9554 + $0x28] sm:$0xf]
        %v9561 = vld [vmem:[%s9554 + $0x30] sm:$0xf]
        %v9562 = vld [vmem:[%s9554 + $0x38] sm:$0xf]
        %s9563 = scalar_lea.vmem %s419, 216
        %v9564 = vld [vmem:[%s9563] sm:$0xf]
        %v9565 = vld [vmem:[%s9563 + $0x8] sm:$0xf]
        %v9566 = vld [vmem:[%s9563 + $0x10] sm:$0xf]
        %v9567 = vld [vmem:[%s9563 + $0x18] sm:$0xf]
        %v9568 = vld [vmem:[%s9563 + $0x20] sm:$0xf]
        %v9569 = vld [vmem:[%s9563 + $0x28] sm:$0xf]
        %v9570 = vld [vmem:[%s9563 + $0x30] sm:$0xf]
        %v9571 = vld [vmem:[%s9563 + $0x38] sm:$0xf]
        %v9572 = vld [vmem:[%s8] sm:$0xf]
        %v9573 = vld [vmem:[%s9] sm:$0xf]
        %v9582 = vunpack.c.l.b16 %v9564
        %v9583 = vunpack.c.l.b16 %v9565
        %v9584 = vunpack.c.l.b16 %v9566
        %v9585 = vunpack.c.l.b16 %v9567
        %v9586 = vunpack.c.l.b16 %v9568
        %v9587 = vunpack.c.l.b16 %v9569
        %v9588 = vunpack.c.l.b16 %v9570
        %v9589 = vunpack.c.l.b16 %v9571
        %v9590 = vpack.c.b16 %v9583, %v9582
        %v9591 = vpack.c.b16 %v9585, %v9584
        %v9592 = vpack.c.b16 %v9587, %v9586
        %v9593 = vpack.c.b16 %v9589, %v9588
        %vm9594 = vcmask 64512
        %v9596 = vsel %vm9594, %v9590, 0
        %v9599 = vsel %vm9594, %v9591, 0
        %v9602 = vsel %vm9594, %v9592, 0
        %v9605 = vsel %vm9594, %v9593, 0
        %vm9607 = vcmask 1043456
        %v9609 = vsel %vm9607, %v9572, 0
        %9611 = vmatprep.subr.bf16.mxu0 0
        %9612 = vmatpush1.bf16.msra.mxu0 %v9609
        %9613 = vmatprep.subr.bf16.mxu0 0
        %9614 = vmatpush1.bf16.msra.mxu0 0
        %9615 = vmatprep.subr.bf16.mxu0 0
        %9616 = vmatpush1.bf16.msra.mxu0 0
        %9617 = vmatprep.subr.bf16.mxu0 0
        %9618 = vmatpush1.bf16.msra.mxu0 0
        %9619 = vmatprep.subr.bf16.mxu0 0
        %9620 = vmatpush1.bf16.msra.mxu0 0
        %9621 = vmatprep.subr.bf16.mxu0 0
        %9622 = vmatpush1.bf16.msra.mxu0 0
        %9623 = vmatprep.subr.bf16.mxu0 0
        %9624 = vmatpush1.bf16.msra.mxu0 0
        %9625 = vmatprep.subr.bf16.mxu0 0
        %9626 = vmatpush1.bf16.msra.mxu0 0
        %9627 = vmatprep.subr.bf16.mxu0 0
        %9628 = vmatpush1.bf16.msra.mxu0 0
        %9629 = vmatprep.subr.bf16.mxu0 0
        %9630 = vmatpush1.bf16.msra.mxu0 0
        %9631 = vmatprep.subr.bf16.mxu0 0
        %9632 = vmatpush1.bf16.msra.mxu0 0
        %9633 = vmatprep.subr.bf16.mxu0 0
        %9634 = vmatpush1.bf16.msra.mxu0 0
        %9635 = vmatprep.subr.bf16.mxu0 0
        %9636 = vmatpush1.bf16.msra.mxu0 0
        %9637 = vmatprep.subr.bf16.mxu0 0
        %9638 = vmatpush1.bf16.msra.mxu0 0
        %9639 = vmatprep.subr.bf16.mxu0 0
        %9640 = vmatpush1.bf16.msra.mxu0 0
        %9641 = vmatprep.subr.bf16.mxu0 0
        %9642 = vmatpush1.bf16.msra.mxu0 0
        %9643 = vmatprep.mubr.bf16.mxu0 0
        %9644 = vmatmul.mubr.bf16.gmra.mrb[0].mxu0 %v9596
        %v9645 = vpop.f32.mrb[0].mxu0
        %v9646 = vadd.f32 0.0, %v9645
        %v9647 = vpop.f32.mrb[0].mxu0
        %v9648 = vpop.f32.mrb[0].mxu0
        %v9649 = vadd.f32 0.0, %v9648
        %v9650 = vpop.f32.mrb[0].mxu0
        %9651 = vmatprep.mubr.bf16.mxu0 0
        %9652 = vmatmul.mubr.bf16.gmra.mrb[0].mxu0 %v9599
        %v9653 = vpop.f32.mrb[0].mxu0
        %v9654 = vadd.f32 0.0, %v9653
        %v9655 = vpop.f32.mrb[0].mxu0
        %v9656 = vpop.f32.mrb[0].mxu0
        %v9657 = vadd.f32 0.0, %v9656
        %v9658 = vpop.f32.mrb[0].mxu0
        %9659 = vmatprep.mubr.bf16.mxu0 0
        %9660 = vmatmul.mubr.bf16.gmra.mrb[0].mxu0 %v9602
        %v9661 = vpop.f32.mrb[0].mxu0
        %v9662 = vadd.f32 0.0, %v9661
        %v9663 = vpop.f32.mrb[0].mxu0
        %v9664 = vpop.f32.mrb[0].mxu0
        %v9665 = vadd.f32 0.0, %v9664
        %v9666 = vpop.f32.mrb[0].mxu0
        %9667 = vmatprep.mubr.bf16.mxu0 0
        %9668 = vmatmul.mubr.bf16.gmra.mrb[0].mxu0 %v9605
        %v9669 = vpop.f32.mrb[0].mxu0
        %v9670 = vadd.f32 0.0, %v9669
        %v9671 = vpop.f32.mrb[0].mxu0
        %v9672 = vpop.f32.mrb[0].mxu0
        %v9673 = vadd.f32 0.0, %v9672
        %v9674 = vpop.f32.mrb[0].mxu0
        %9675 = vdwg.mxu0
        %v9684 = vunpack.c.l.b16 %v9555
        %v9685 = vunpack.c.l.b16 %v9556
        %v9686 = vunpack.c.l.b16 %v9557
        %v9687 = vunpack.c.l.b16 %v9558
        %v9688 = vunpack.c.l.b16 %v9559
        %v9689 = vunpack.c.l.b16 %v9560
        %v9690 = vunpack.c.l.b16 %v9561
        %v9691 = vunpack.c.l.b16 %v9562
        %v9692 = vpack.c.b16 %v9685, %v9684
        %v9693 = vpack.c.b16 %v9687, %v9686
        %v9694 = vpack.c.b16 %v9689, %v9688
        %v9695 = vpack.c.b16 %v9691, %v9690
        %v9697 = vsel %vm9594, %v9692, 0
        %v9700 = vsel %vm9594, %v9693, 0
        %v9703 = vsel %vm9594, %v9694, 0
        %v9706 = vsel %vm9594, %v9695, 0
        %9708 = vmatprep.subr.bf16.mxu0 0
        %9709 = vmatpush1.bf16.msra.mxu0 %v9609
        %9710 = vmatprep.subr.bf16.mxu0 0
        %9711 = vmatpush1.bf16.msra.mxu0 0
        %9712 = vmatprep.subr.bf16.mxu0 0
        %9713 = vmatpush1.bf16.msra.mxu0 0
        %9714 = vmatprep.subr.bf16.mxu0 0
        %9715 = vmatpush1.bf16.msra.mxu0 0
        %9716 = vmatprep.subr.bf16.mxu0 0
        %9717 = vmatpush1.bf16.msra.mxu0 0
        %9718 = vmatprep.subr.bf16.mxu0 0
        %9719 = vmatpush1.bf16.msra.mxu0 0
        %9720 = vmatprep.subr.bf16.mxu0 0
        %9721 = vmatpush1.bf16.msra.mxu0 0
        %9722 = vmatprep.subr.bf16.mxu0 0
        %9723 = vmatpush1.bf16.msra.mxu0 0
        %9724 = vmatprep.subr.bf16.mxu0 0
        %9725 = vmatpush1.bf16.msra.mxu0 0
        %9726 = vmatprep.subr.bf16.mxu0 0
        %9727 = vmatpush1.bf16.msra.mxu0 0
        %9728 = vmatprep.subr.bf16.mxu0 0
        %9729 = vmatpush1.bf16.msra.mxu0 0
        %9730 = vmatprep.subr.bf16.mxu0 0
        %9731 = vmatpush1.bf16.msra.mxu0 0
        %9732 = vmatprep.subr.bf16.mxu0 0
        %9733 = vmatpush1.bf16.msra.mxu0 0
        %9734 = vmatprep.subr.bf16.mxu0 0
        %9735 = vmatpush1.bf16.msra.mxu0 0
        %9736 = vmatprep.subr.bf16.mxu0 0
        %9737 = vmatpush1.bf16.msra.mxu0 0
        %9738 = vmatprep.subr.bf16.mxu0 0
        %9739 = vmatpush1.bf16.msra.mxu0 0
        %9740 = vmatprep.mubr.bf16.mxu0 0
        %9741 = vmatmul.mubr.bf16.gmra.mrb[0].mxu0 %v9697
        %v9742 = vpop.f32.mrb[0].mxu0
        %v9743 = vadd.f32 %v9646, %v9742
        %v9744 = vpop.f32.mrb[0].mxu0
        %v9745 = vpop.f32.mrb[0].mxu0
        %v9746 = vadd.f32 %v9649, %v9745
        %v9747 = vpop.f32.mrb[0].mxu0
        %9748 = vmatprep.mubr.bf16.mxu0 0
        %9749 = vmatmul.mubr.bf16.gmra.mrb[0].mxu0 %v9700
        %v9750 = vpop.f32.mrb[0].mxu0
        %v9751 = vadd.f32 %v9654, %v9750
        %v9752 = vpop.f32.mrb[0].mxu0
        %v9753 = vpop.f32.mrb[0].mxu0
        %v9754 = vadd.f32 %v9657, %v9753
        %v9755 = vpop.f32.mrb[0].mxu0
        %9756 = vmatprep.mubr.bf16.mxu0 0
        %9757 = vmatmul.mubr.bf16.gmra.mrb[0].mxu0 %v9703
        %v9758 = vpop.f32.mrb[0].mxu0
        %v9759 = vadd.f32 %v9662, %v9758
        %v9760 = vpop.f32.mrb[0].mxu0
        %v9761 = vpop.f32.mrb[0].mxu0
        %v9762 = vadd.f32 %v9665, %v9761
        %v9763 = vpop.f32.mrb[0].mxu0
        %9764 = vmatprep.mubr.bf16.mxu0 0
        %9765 = vmatmul.mubr.bf16.gmra.mrb[0].mxu0 %v9706
        %v9766 = vpop.f32.mrb[0].mxu0
        %v9767 = vadd.f32 %v9670, %v9766
        %v9768 = vpop.f32.mrb[0].mxu0
        %v9769 = vpop.f32.mrb[0].mxu0
        %v9770 = vadd.f32 %v9673, %v9769
        %v9771 = vpop.f32.mrb[0].mxu0
        %9772 = vdwg.mxu0
        %v9774 = vsel %vm9607, %v9573, 0
        %9776 = vmatprep.subr.bf16.mxu0 0
        %9777 = vmatpush1.bf16.msra.mxu0 %v9774
        %9778 = vmatprep.subr.bf16.mxu0 0
        %9779 = vmatpush1.bf16.msra.mxu0 0
        %9780 = vmatprep.subr.bf16.mxu0 0
        %9781 = vmatpush1.bf16.msra.mxu0 0
        %9782 = vmatprep.subr.bf16.mxu0 0
        %9783 = vmatpush1.bf16.msra.mxu0 0
        %9784 = vmatprep.subr.bf16.mxu0 0
        %9785 = vmatpush1.bf16.msra.mxu0 0
        %9786 = vmatprep.subr.bf16.mxu0 0
        %9787 = vmatpush1.bf16.msra.mxu0 0
        %9788 = vmatprep.subr.bf16.mxu0 0
        %9789 = vmatpush1.bf16.msra.mxu0 0
        %9790 = vmatprep.subr.bf16.mxu0 0
        %9791 = vmatpush1.bf16.msra.mxu0 0
        %9792 = vmatprep.subr.bf16.mxu0 0
        %9793 = vmatpush1.bf16.msra.mxu0 0
        %9794 = vmatprep.subr.bf16.mxu0 0
        %9795 = vmatpush1.bf16.msra.mxu0 0
        %9796 = vmatprep.subr.bf16.mxu0 0
        %9797 = vmatpush1.bf16.msra.mxu0 0
        %9798 = vmatprep.subr.bf16.mxu0 0
        %9799 = vmatpush1.bf16.msra.mxu0 0
        %9800 = vmatprep.subr.bf16.mxu0 0
        %9801 = vmatpush1.bf16.msra.mxu0 0
        %9802 = vmatprep.subr.bf16.mxu0 0
        %9803 = vmatpush1.bf16.msra.mxu0 0
        %9804 = vmatprep.subr.bf16.mxu0 0
        %9805 = vmatpush1.bf16.msra.mxu0 0
        %9806 = vmatprep.subr.bf16.mxu0 0
        %9807 = vmatpush1.bf16.msra.mxu0 0
        %9808 = vmatprep.mubr.bf16.mxu0 0
        %9809 = vmatmul.mubr.bf16.gmra.mrb[0].mxu0 %v9697
        %v9810 = vpop.f32.mrb[0].mxu0
        %v9811 = vadd.f32 0.0, %v9810
        %v9812 = vpop.f32.mrb[0].mxu0
        %v9813 = vpop.f32.mrb[0].mxu0
        %v9814 = vadd.f32 0.0, %v9813
        %v9815 = vpop.f32.mrb[0].mxu0
        %9816 = vmatprep.mubr.bf16.mxu0 0
        %9817 = vmatmul.mubr.bf16.gmra.mrb[0].mxu0 %v9700
        %v9818 = vpop.f32.mrb[0].mxu0
        %v9819 = vadd.f32 0.0, %v9818
        %v9820 = vpop.f32.mrb[0].mxu0
        %v9821 = vpop.f32.mrb[0].mxu0
        %v9822 = vadd.f32 0.0, %v9821
        %v9823 = vpop.f32.mrb[0].mxu0
        %9824 = vmatprep.mubr.bf16.mxu0 0
        %9825 = vmatmul.mubr.bf16.gmra.mrb[0].mxu0 %v9703
        %v9826 = vpop.f32.mrb[0].mxu0
        %v9827 = vadd.f32 0.0, %v9826
        %v9828 = vpop.f32.mrb[0].mxu0
        %v9829 = vpop.f32.mrb[0].mxu0
        %v9830 = vadd.f32 0.0, %v9829
        %v9831 = vpop.f32.mrb[0].mxu0
        %9832 = vmatprep.mubr.bf16.mxu0 0
        %9833 = vmatmul.mubr.bf16.gmra.mrb[0].mxu0 %v9706
        %v9834 = vpop.f32.mrb[0].mxu0
        %v9835 = vadd.f32 0.0, %v9834
        %v9836 = vpop.f32.mrb[0].mxu0
        %v9837 = vpop.f32.mrb[0].mxu0
        %v9838 = vadd.f32 0.0, %v9837
        %v9839 = vpop.f32.mrb[0].mxu0
        %9840 = vdwg.mxu0
        %v9841 = vadd.f32 %v9743, %v9811
        %v9842 = vadd.f32 %v9746, %v9814
        %v9843 = vadd.f32 %v9751, %v9819
        %v9844 = vadd.f32 %v9754, %v9822
        %v9845 = vadd.f32 %v9759, %v9827
        %v9846 = vadd.f32 %v9762, %v9830
        %v9847 = vadd.f32 %v9767, %v9835
        %v9848 = vadd.f32 %v9770, %v9838
        %v9849 = vlaneseq
        %v9850 = vshrl.u32 %v9849, 7
        %v9851 = vsub.s32 0, %v9850
        %v9852 = vrot.slane %v9550, %v9851
        %v9853 = vmul.f32 %v9841, %v9852
        %v9854 = vmul.f32 %v9842, %v9852
        %v9855 = vmul.f32 %v9843, %v9852
        %v9856 = vmul.f32 %v9844, %v9852
        %v9857 = vmul.f32 %v9845, %v9852
        %v9858 = vmul.f32 %v9846, %v9852
        %v9859 = vmul.f32 %v9847, %v9852
        %v9860 = vmul.f32 %v9848, %v9852
        %v9861 = vlaneseq
        %v9862 = vshrl.u32 %v9861, 7
        %v9863 = vsub.s32 0, %v9862
        %v9864 = vrot.slane %v9553, %v9863
        %v9865 = vadd.f32 %v9853, %v9864
        %v9866 = vadd.f32 %v9854, %v9864
        %v9867 = vadd.f32 %v9855, %v9864
        %v9868 = vadd.f32 %v9856, %v9864
        %v9869 = vadd.f32 %v9857, %v9864
        %v9870 = vadd.f32 %v9858, %v9864
        %v9871 = vadd.f32 %v9859, %v9864
        %v9872 = vadd.f32 %v9860, %v9864
        %v9873 = vadd.f32 %v9533, %v9865
        %v9874 = vadd.f32 %v9534, %v9866
        %v9875 = vadd.f32 %v9535, %v9867
        %v9876 = vadd.f32 %v9536, %v9868
        %v9877 = vadd.f32 %v9537, %v9869
        %v9878 = vadd.f32 %v9538, %v9870
        %v9879 = vadd.f32 %v9539, %v9871
        %v9880 = vadd.f32 %v9540, %v9872
        %v9881 = vmax.f32 %v9873, 0.0
        %v9882 = vmax.f32 %v9874, 0.0
        %v9883 = vmax.f32 %v9875, 0.0
        %v9884 = vmax.f32 %v9876, 0.0
        %v9885 = vmax.f32 %v9877, 0.0
        %v9886 = vmax.f32 %v9878, 0.0
        %v9887 = vmax.f32 %v9879, 0.0
        %v9888 = vmax.f32 %v9880, 0.0
        %9889 = vst.msk [vmem:[%s426] sm:$0xff] %vm9594, %v9881
        %9890 = vst.msk [vmem:[%s426 + $0x8] sm:$0xff] %vm9594, %v9882
        %9891 = vst.msk [vmem:[%s426 + $0x10] sm:$0xff] %vm9594, %v9883
        %9892 = vst.msk [vmem:[%s426 + $0x18] sm:$0xff] %vm9594, %v9884
        %9893 = vst.msk [vmem:[%s426 + $0x20] sm:$0xff] %vm9594, %v9885
        %9894 = vst.msk [vmem:[%s426 + $0x28] sm:$0xff] %vm9594, %v9886
        %9895 = vst.msk [vmem:[%s426 + $0x30] sm:$0xff] %vm9594, %v9887
        %9896 = vst.msk [vmem:[%s426 + $0x38] sm:$0xff] %vm9594, %v9888
      $region84: #{basic_block_forward.1} parent=63 // pred_fallthru
        _
      %p9897 = scmp.eq.s32.totalorder %s26, 2
      %s9898 = scalar_select %p9897, %s27, 0
      %p9899 = scmp.lt.s32.totalorder %s9898, 1
      %s9900 = scalar_select %p9899, %s9898, 1
      %s9901 = smul.addr %s9900, 8
      %s9902 = smul.addr %s9901, 8
      %s9903 = scalar_lea.vmem %s11, %s9902
      // Predicated region
      $region85: #{basic_block_forward.1} parent=63 // pred_check
        %p9904 = pneg %p297
      $region86: #{basic_block_forward.1} parent=63 // pred_check_branch
        %9906 = sbr.rel (%p9904) target = $region88
      $region87: #{basic_block_forward.1} parent=63 // pred_region
        %p9907 = scmp.eq.s32.totalorder %s26, 2
        %s9908 = scalar_select %p9907, %s27, 0
      $region88: #{basic_block_forward.1} parent=63 // pred_fallthru
        _
    $region64: #{basic_block_forward.1} parent=5 // pred_fallthru
      _
    %p9909 = scmp.le.s32.totalorder 2, %s17
    // Predicated region
    $region89: #{basic_block_forward.1} parent=5 // pred_check
      %p9910 = pneg %p9909
    $region90: #{basic_block_forward.1} parent=5 // pred_check_branch
      %9912 = sbr.rel (%p9910) target = $region92
    $region91: #{basic_block_forward.1} parent=5 // pred_region
      %s9913 = ssub.s32 %s17, 2
      // Predicated region
      $region93: #{basic_block_forward.1} parent=91 // pred_check
        %p9914 = pneg %p303
      $region94: #{basic_block_forward.1} parent=91 // pred_check_branch
        %9916 = sbr.rel (%p9914) target = $region96
      $region95: #{basic_block_forward.1} parent=91 // pred_region
        %p9917 = scmp.eq.s32.totalorder %s28, 2
        %s9918 = scalar_select %p9917, %s29, 0
        %p9919 = scmp.lt.s32.totalorder %s9918, 1
        %s9920 = scalar_select %p9919, %s9918, 1
        %s9921 = smul.addr %s9920, 8
        %s9922 = smul.addr %s9921, 8
        %s9923 = scalar_lea.vmem %s11, %s9922
      $region96: #{basic_block_forward.1} parent=91 // pred_fallthru
        _
    $region92: #{basic_block_forward.1} parent=5 // pred_fallthru
      _
  $region6: #{basic_block_forward.1} parent=0 // loop_footer
    %s21 = sadd.s32 1, %s17
  $region7: #{basic_block_forward.1} parent=0 // loop_footer_branch
    %16 = sbr.rel target = $region3
  $region8: #{basic_block_forward.1} parent=0 // loop_exit
    _

</llo_original>
